<compile_context>
chip_gen: v7x
topology: tpu7x:2x2x1
jax: 0.10.0
libtpu: 0.0.40
codegen_flags: <defaults>
</compile_context>

<pallas_src>
import functools

import jax
import jax.numpy as jnp
from jax import lax
from jax.experimental import pallas as pl
from jax.experimental.pallas import tpu as pltpu

EPS = 1e-5      # nn.BatchNorm2d default
LANE = 128      # TPU lane width; channel padding target


def _round_up(x, m):
    return (x + m - 1) // m * m


def _vmem_limit_bytes():
    """Generation-aware VMEM limit (~3/4 of physical, capped at 100 MiB)."""
    cap = None
    try:
        info = pltpu.get_tpu_info()
        cap = getattr(info, "vmem_capacity_bytes", None)
    except Exception:
        cap = None
    if not cap:
        cap = 64 * 1024 * 1024            # conservative (v7x per-TC physical)
    return int(min(cap * 3 // 4, 100 * 1024 * 1024))


# ------------------------------ kernels ------------------------------------- #

def _conv3x3_body(h_f32, w_ref, y_ref, stats_ref, pad_ref, H, W):
    """Shared 3x3 conv body for one image tile.

    h_f32    : (H*W, Cp) f32 value, channel-padded NHWC-flattened activations
    w_ref    : (9*Cp, Cp) bf16 ref, tap-major / channel-minor packed weights
    y_ref    : (H*W, Cp) f32 out ref, raw (pre-BN) conv output
    stats_ref: (1, 2, Cp) f32 out ref, per-tile [sum, sum_of_squares]
    pad_ref  : (H+2, W+2, Cp) bf16 scratch with 1-px zero halo
    """
    Cp = y_ref.shape[-1]
    HW = H * W

    # Zero ONLY the 1-px halo border (4 thin slabs); the interior is fully
    # overwritten below.  Re-done every grid step so it stays correct even when
    # the "parallel" batch axis is sharded across TensorCores (v7x).
    zrow = jnp.zeros((1, W + 2, Cp), pad_ref.dtype)
    pad_ref[0:1, :, :] = zrow
    pad_ref[H + 1:H + 2, :, :] = zrow
    zcol = jnp.zeros((H, 1, Cp), pad_ref.dtype)
    pad_ref[1:H + 1, 0:1, :] = zcol
    pad_ref[1:H + 1, W + 1:W + 2, :] = zcol

    # Interior: cast once to bf16 while writing into the halo scratch.
    pad_ref[1:H + 1, 1:W + 1, :] = h_f32.reshape(H, W, Cp).astype(pad_ref.dtype)

    # Implicit GEMM: 9 accumulated K=Cp matmuls on shifted windows (no im2col
    # patch matrix is ever materialized).  f32 accumulation on the MXU.
    acc = None
    for kh in range(3):
        for kw in range(3):
            win = pad_ref[kh:kh + H, kw:kw + W, :].reshape(HW, Cp)
            r0 = (kh * 3 + kw) * Cp
            d = jnp.dot(win, w_ref[r0:r0 + Cp, :],
                        preferred_element_type=jnp.float32)
            acc = d if acc is None else acc + d

    y_ref[...] = acc

    # One-pass BN partial statistics for this tile (finalized in the wrapper).
    s = jnp.sum(acc, axis=0, keepdims=True)            # (1, Cp)
    ss = jnp.sum(acc * acc, axis=0, keepdims=True)     # (1, Cp)
    stats_ref[...] = jnp.concatenate([s, ss], axis=0).reshape(1, 2, Cp)


def _conv1_kernel(x_ref, w_ref, y_ref, stats_ref, pad_ref, *, H, W):
    """conv1: raw input -> raw conv output + partial BN stats."""
    _conv3x3_body(x_ref[...], w_ref, y_ref, stats_ref, pad_ref, H, W)


def _conv2_kernel(h_ref, scale_ref, shift_ref, w_ref, y_ref, stats_ref, pad_ref,
                  *, H, W):
    """bn1 (as scale/shift) + relu + conv2 -> raw conv output + partial stats."""
    h = jnp.maximum(h_ref[...] * scale_ref[...] + shift_ref[...], 0.0)
    _conv3x3_body(h, w_ref, y_ref, stats_ref, pad_ref, H, W)


def _bn_add_relu_kernel(y_ref, scale_ref, shift_ref, res_ref, o_ref):
    """bn2 (as scale/shift) + identity residual + relu (purely elementwise)."""
    o_ref[...] = jnp.maximum(
        y_ref[...] * scale_ref[...] + shift_ref[...] + res_ref[...], 0.0)


# ------------------------------ wrappers ------------------------------------ #

def _pack_conv_weight(w_oihw, cp):
    """PyTorch (Cout, Cin, 3, 3) -> (9*cp, cp) bf16, tap-major / channel-minor."""
    cout, cin = w_oihw.shape[:2]
    w = jnp.transpose(w_oihw, (2, 3, 1, 0))                     # -> HWIO
    w = jnp.pad(w, ((0, 0), (0, 0), (0, cp - cin), (0, cp - cout)))
    return w.reshape(9 * cp, cp).astype(jnp.bfloat16)


def _pack_bn(gamma, beta, cp):
    """Pad BN affine to Cp lanes with ZEROS so padded lanes stay exactly 0."""
    c = gamma.shape[-1]
    g = jnp.pad(gamma.astype(jnp.float32), (0, cp - c))
    b = jnp.pad(beta.astype(jnp.float32), (0, cp - c))
    return g, b


def _finalize_bn(stats, gamma_p, beta_p, count):
    """(N_tiles, 2, Cp) partial sums -> fused BN scale/shift (tiny JAX math)."""
    s = jnp.sum(stats[:, 0, :], axis=0)                 # (Cp,)
    ss = jnp.sum(stats[:, 1, :], axis=0)                # (Cp,)
    mean = s / count
    var = jnp.maximum(ss / count - mean * mean, 0.0)    # biased variance
    scale = gamma_p * lax.rsqrt(var + EPS)
    shift = beta_p - mean * scale
    return scale.reshape(1, -1), shift.reshape(1, -1)


def _conv_call(x2d, w_packed, scale, shift, *, N, H, W, Cp, vmem_limit):
    """One gridded pallas_call: [optional bn+relu] + 3x3 conv + partial stats."""
    HW = H * W
    cparams = pltpu.CompilerParams(
        dimension_semantics=("parallel",),              # no cross-step carry
        vmem_limit_bytes=vmem_limit)

    if scale is None:
        kernel = functools.partial(_conv1_kernel, H=H, W=W)
        operands = (x2d, w_packed)
        in_specs = [
            pl.BlockSpec((HW, Cp), lambda i: (i, 0)),
            pl.BlockSpec((9 * Cp, Cp), lambda i: (0, 0)),   # weights resident
        ]
    else:
        kernel = functools.partial(_conv2_kernel, H=H, W=W)
        operands = (x2d, scale, shift, w_packed)
        in_specs = [
            pl.BlockSpec((HW, Cp), lambda i: (i, 0)),
            pl.BlockSpec((1, Cp), lambda i: (0, 0)),
            pl.BlockSpec((1, Cp), lambda i: (0, 0)),
            pl.BlockSpec((9 * Cp, Cp), lambda i: (0, 0)),
        ]

    y, stats = pl.pallas_call(
        kernel,
        grid=(N,),
        out_shape=(jax.ShapeDtypeStruct((N * HW, Cp), jnp.float32),
                   jax.ShapeDtypeStruct((N, 2, Cp), jnp.float32)),
        in_specs=in_specs,
        out_specs=(pl.BlockSpec((HW, Cp), lambda i: (i, 0)),
                   pl.BlockSpec((1, 2, Cp), lambda i: (i, 0, 0))),
        scratch_shapes=[pltpu.VMEM((H + 2, W + 2, Cp), jnp.bfloat16)],
        compiler_params=cparams,
    )(*operands)
    return y, stats


@jax.jit
def basic_block_forward(x_nchw, w1_oihw, g1, b1, w2_oihw, g2, b2):
    """BasicBlock(in_c, out_c, stride=1, expansion=1, downsample=None).forward."""
    N, Cin, H, W = x_nchw.shape
    Cmid = w1_oihw.shape[0]
    Cout = w2_oihw.shape[0]
    assert Cin == w1_oihw.shape[1] and Cmid == w2_oihw.shape[1]
    assert Cin == Cout, "identity residual requires in_channels == out_channels"

    Cp = _round_up(max(Cin, Cmid, Cout), LANE)     # lane-dense channel padding
    HW = H * W
    count = jnp.float32(N * HW)
    vmem_limit = _vmem_limit_bytes()

    # Layout plumbing (wrapper side): NCHW -> channel-padded (N*H*W, Cp) f32.
    x2d = jnp.pad(jnp.transpose(x_nchw, (0, 2, 3, 1)),
                  ((0, 0), (0, 0), (0, 0), (0, Cp - Cin)))
    x2d = x2d.reshape(N * HW, Cp).astype(jnp.float32)

    w1p = _pack_conv_weight(w1_oihw, Cp)
    w2p = _pack_conv_weight(w2_oihw, Cp)
    g1p, b1p = _pack_bn(g1, b1, Cp)
    g2p, b2p = _pack_bn(g2, b2, Cp)

    # Pass 1: conv1 (raw) + per-tile BN1 partial stats.
    y1, st1 = _conv_call(x2d, w1p, None, None,
                         N=N, H=H, W=W, Cp=Cp, vmem_limit=vmem_limit)
    sc1, sh1 = _finalize_bn(st1, g1p, b1p, count)

    # Pass 2: bn1 + relu + conv2 (raw) + per-tile BN2 partial stats.
    y2, st2 = _conv_call(y1, w2p, sc1, sh1,
                         N=N, H=H, W=W, Cp=Cp, vmem_limit=vmem_limit)
    sc2, sh2 = _finalize_bn(st2, g2p, b2p, count)

    # Pass 3: bn2 + identity residual + relu (elementwise, lane-dense).
    out2d = pl.pallas_call(
        _bn_add_relu_kernel,
        grid=(N,),
        out_shape=jax.ShapeDtypeStruct((N * HW, Cp), jnp.float32),
        in_specs=[pl.BlockSpec((HW, Cp), lambda i: (i, 0)),
                  pl.BlockSpec((1, Cp), lambda i: (0, 0)),
                  pl.BlockSpec((1, Cp), lambda i: (0, 0)),
                  pl.BlockSpec((HW, Cp), lambda i: (i, 0))],
        out_specs=pl.BlockSpec((HW, Cp), lambda i: (i, 0)),
        compiler_params=pltpu.CompilerParams(
            dimension_semantics=("parallel",),
            vmem_limit_bytes=vmem_limit),
    )(y2, sc2, sh2, x2d)

    # Strip channel padding, restore PyTorch NCHW layout.
    out = out2d[:, :Cout].reshape(N, H, W, Cout)
    return jnp.transpose(out, (0, 3, 1, 2))


# ------------------------------ reference ----------------------------------- #

def _ref_forward(x_nchw, w1_oihw, g1, b1, w2_oihw, g2, b2):
    x = jnp.transpose(x_nchw, (0, 2, 3, 1))

    def conv(h, w_oihw):
        w_hwio = jnp.transpose(w_oihw, (2, 3, 1, 0))
        return lax.conv_general_dilated(
            h, w_hwio, (1, 1), 'SAME',
            dimension_numbers=('NHWC', 'HWIO', 'NHWC'))

    def bn(h, g, b):
        m = jnp.mean(h, axis=(0, 1, 2), keepdims=True)
        v = jnp.mean((h - m) ** 2, axis=(0, 1, 2), keepdims=True)
        return (h - m) / jnp.sqrt(v + EPS) * g + b

    h = jax.nn.relu(bn(conv(x, w1_oihw), g1, b1))
    o = bn(conv(h, w2_oihw), g2, b2) + x
    return jnp.transpose(jax.nn.relu(o), (0, 3, 1, 2))


# -------------------------------- main --------------------------------------- #

if __name__ == "__main__":
    N, Cin, H, W = 2, 4, 16, 16
    Cout = 4   # expansion=1, stride=1, downsample=None => identity == x

    key = jax.random.PRNGKey(0)
    kx, k1, k2 = jax.random.split(key, 3)

    x = jax.random.normal(kx, (N, Cin, H, W), jnp.float32)

    # PyTorch weight layout (Cout, Cin, kh, kw); BN affine deterministic.
    w1_t = jax.random.normal(k1, (Cout, Cin, 3, 3), jnp.float32) * 0.2
    w2_t = jax.random.normal(k2, (Cout, Cout, 3, 3), jnp.float32) * 0.2
    g1 = 1.0 + 0.05 * jnp.arange(Cout, dtype=jnp.float32)
    b1 = 0.01 * jnp.arange(Cout, dtype=jnp.float32)
    g2 = 1.0 - 0.03 * jnp.arange(Cout, dtype=jnp.float32)
    b2 = -0.02 * jnp.arange(Cout, dtype=jnp.float32)

    out = basic_block_forward(x, w1_t, g1, b1, w2_t, g2, b2)
    out = jax.block_until_ready(out)

    ref = _ref_forward(x, w1_t, g1, b1, w2_t, g2, b2)
    assert out.shape == (N, Cout, H, W), out.shape
    # bf16 MXU operands with f32 accumulation -> relaxed tolerance vs f32 ref.
    max_err = float(jnp.max(jnp.abs(out - ref)))
    assert jnp.allclose(out, ref, rtol=5e-2, atol=5e-2), max_err

    print("KERNEL_OK")
</pallas_src>

<mosaic_0001>
module attributes {stable_mosaic.version = 11 : i64} {
  func.func @_conv1_kernel(%arg0: i32, %arg1: memref<256x128xf32, #tpu.memory_space<vmem>>, %arg2: memref<1152x128xbf16, #tpu.memory_space<vmem>>, %arg3: memref<256x128xf32, #tpu.memory_space<vmem>>, %arg4: memref<1x2x128xf32, #tpu.memory_space<vmem>>, %arg5: memref<18x18x128xbf16, #tpu.memory_space<vmem>>) attributes {dimension_semantics = [#tpu.dimension_semantics<parallel>], iteration_bounds = array<i64: 2>, scalar_prefetch = 0 : i64, scratch_operands = 1 : i64, tpu.core_type = #tpu.core_type<tc>, window_params = [{transform_indices = @transform_0, window_bounds = array<i64: 256, 128>}, {pipeline_mode = #tpu.pipeline_mode<synchronous>, transform_indices = @transform_1, window_bounds = array<i64: 1152, 128>}, {transform_indices = @transform_2, window_bounds = array<i64: 256, 128>}, {transform_indices = @transform_3, window_bounds = array<i64: 1, 2, 128>}]} {
    %c0 = arith.constant 0 : index
    %c0_0 = arith.constant 0 : index
    %0 = vector.load %arg1[%c0, %c0_0] : memref<256x128xf32, #tpu.memory_space<vmem>>, vector<256x128xf32>
    %cst = arith.constant 0.000000e+00 : bf16
    %1 = vector.broadcast %cst : bf16 to vector<1x18x128xbf16>
    %c0_1 = arith.constant 0 : index
    %c0_2 = arith.constant 0 : index
    %c0_3 = arith.constant 0 : index
    %2 = vector.load %arg5[%c0_1, %c0_2, %c0_3] : memref<18x18x128xbf16, #tpu.memory_space<vmem>>, vector<1x18x128xbf16>
    tpu.vector_store %arg5[%c0_1, %c0_2, %c0_3], %1 {strides = array<i32>} : memref<18x18x128xbf16, #tpu.memory_space<vmem>>, vector<1x18x128xbf16>,
    %c17 = arith.constant 17 : index
    %c0_4 = arith.constant 0 : index
    %c0_5 = arith.constant 0 : index
    %3 = vector.load %arg5[%c17, %c0_4, %c0_5] : memref<18x18x128xbf16, #tpu.memory_space<vmem>>, vector<1x18x128xbf16>
    tpu.vector_store %arg5[%c17, %c0_4, %c0_5], %1 {strides = array<i32>} : memref<18x18x128xbf16, #tpu.memory_space<vmem>>, vector<1x18x128xbf16>,
    %cst_6 = arith.constant 0.000000e+00 : bf16
    %4 = vector.broadcast %cst_6 : bf16 to vector<16x1x128xbf16>
    %c1 = arith.constant 1 : index
    %c0_7 = arith.constant 0 : index
    %c0_8 = arith.constant 0 : index
    %5 = vector.load %arg5[%c1, %c0_7, %c0_8] : memref<18x18x128xbf16, #tpu.memory_space<vmem>>, vector<16x1x128xbf16>
    tpu.vector_store %arg5[%c1, %c0_7, %c0_8], %4 {strides = array<i32>} : memref<18x18x128xbf16, #tpu.memory_space<vmem>>, vector<16x1x128xbf16>,
    %c1_9 = arith.constant 1 : index
    %c17_10 = arith.constant 17 : index
    %c0_11 = arith.constant 0 : index
    %6 = vector.load %arg5[%c1_9, %c17_10, %c0_11] : memref<18x18x128xbf16, #tpu.memory_space<vmem>>, vector<16x1x128xbf16>
    tpu.vector_store %arg5[%c1_9, %c17_10, %c0_11], %4 {strides = array<i32>} : memref<18x18x128xbf16, #tpu.memory_space<vmem>>, vector<16x1x128xbf16>,
    %7 = vector.shape_cast %0 : vector<256x128xf32> to vector<16x16x128xf32>
    %8 = arith.truncf %7 : vector<16x16x128xf32> to vector<16x16x128xbf16>
    %c1_12 = arith.constant 1 : index
    %c1_13 = arith.constant 1 : index
    %c0_14 = arith.constant 0 : index
    %9 = vector.load %arg5[%c1_12, %c1_13, %c0_14] : memref<18x18x128xbf16, #tpu.memory_space<vmem>>, vector<16x16x128xbf16>
    tpu.vector_store %arg5[%c1_12, %c1_13, %c0_14], %8 {strides = array<i32>} : memref<18x18x128xbf16, #tpu.memory_space<vmem>>, vector<16x16x128xbf16>,
    %c0_15 = arith.constant 0 : index
    %c0_16 = arith.constant 0 : index
    %c0_17 = arith.constant 0 : index
    %10 = vector.load %arg5[%c0_15, %c0_16, %c0_17] : memref<18x18x128xbf16, #tpu.memory_space<vmem>>, vector<16x16x128xbf16>
    %11 = vector.shape_cast %10 : vector<16x16x128xbf16> to vector<256x128xbf16>
    %c0_18 = arith.constant 0 : index
    %c0_19 = arith.constant 0 : index
    %12 = vector.load %arg2[%c0_18, %c0_19] : memref<1152x128xbf16, #tpu.memory_space<vmem>>, vector<128x128xbf16>
    %cst_20 = arith.constant dense<0.000000e+00> : vector<256x128xf32>
    %13 = tpu.matmul %11, %12, %cst_20 {dimension_numbers = #tpu.dot_dimension_numbers<[1], [0], [0], [1], [0, 0, 1, 1], [], []>} : vector<256x128xbf16>, vector<128x128xbf16>, vector<256x128xf32> -> vector<256x128xf32>
    %c0_21 = arith.constant 0 : index
    %c1_22 = arith.constant 1 : index
    %c0_23 = arith.constant 0 : index
    %14 = vector.load %arg5[%c0_21, %c1_22, %c0_23] : memref<18x18x128xbf16, #tpu.memory_space<vmem>>, vector<16x16x128xbf16>
    %15 = vector.shape_cast %14 : vector<16x16x128xbf16> to vector<256x128xbf16>
    %c128 = arith.constant 128 : index
    %c0_24 = arith.constant 0 : index
    %16 = vector.load %arg2[%c128, %c0_24] : memref<1152x128xbf16, #tpu.memory_space<vmem>>, vector<128x128xbf16>
    %cst_25 = arith.constant dense<0.000000e+00> : vector<256x128xf32>
    %17 = tpu.matmul %15, %16, %cst_25 {dimension_numbers = #tpu.dot_dimension_numbers<[1], [0], [0], [1], [0, 0, 1, 1], [], []>} : vector<256x128xbf16>, vector<128x128xbf16>, vector<256x128xf32> -> vector<256x128xf32>
    %18 = arith.addf %13, %17 : vector<256x128xf32>
    %c0_26 = arith.constant 0 : index
    %c2 = arith.constant 2 : index
    %c0_27 = arith.constant 0 : index
    %19 = vector.load %arg5[%c0_26, %c2, %c0_27] : memref<18x18x128xbf16, #tpu.memory_space<vmem>>, vector<16x16x128xbf16>
    %20 = vector.shape_cast %19 : vector<16x16x128xbf16> to vector<256x128xbf16>
    %c256 = arith.constant 256 : index
    %c0_28 = arith.constant 0 : index
    %21 = vector.load %arg2[%c256, %c0_28] : memref<1152x128xbf16, #tpu.memory_space<vmem>>, vector<128x128xbf16>
    %cst_29 = arith.constant dense<0.000000e+00> : vector<256x128xf32>
    %22 = tpu.matmul %20, %21, %cst_29 {dimension_numbers = #tpu.dot_dimension_numbers<[1], [0], [0], [1], [0, 0, 1, 1], [], []>} : vector<256x128xbf16>, vector<128x128xbf16>, vector<256x128xf32> -> vector<256x128xf32>
    %23 = arith.addf %18, %22 : vector<256x128xf32>
    %c1_30 = arith.constant 1 : index
    %c0_31 = arith.constant 0 : index
    %c0_32 = arith.constant 0 : index
    %24 = vector.load %arg5[%c1_30, %c0_31, %c0_32] : memref<18x18x128xbf16, #tpu.memory_space<vmem>>, vector<16x16x128xbf16>
    %25 = vector.shape_cast %24 : vector<16x16x128xbf16> to vector<256x128xbf16>
    %c384 = arith.constant 384 : index
    %c0_33 = arith.constant 0 : index
    %26 = vector.load %arg2[%c384, %c0_33] : memref<1152x128xbf16, #tpu.memory_space<vmem>>, vector<128x128xbf16>
    %cst_34 = arith.constant dense<0.000000e+00> : vector<256x128xf32>
    %27 = tpu.matmul %25, %26, %cst_34 {dimension_numbers = #tpu.dot_dimension_numbers<[1], [0], [0], [1], [0, 0, 1, 1], [], []>} : vector<256x128xbf16>, vector<128x128xbf16>, vector<256x128xf32> -> vector<256x128xf32>
    %28 = arith.addf %23, %27 : vector<256x128xf32>
    %c1_35 = arith.constant 1 : index
    %c1_36 = arith.constant 1 : index
    %c0_37 = arith.constant 0 : index
    %29 = vector.load %arg5[%c1_35, %c1_36, %c0_37] : memref<18x18x128xbf16, #tpu.memory_space<vmem>>, vector<16x16x128xbf16>
    %30 = vector.shape_cast %29 : vector<16x16x128xbf16> to vector<256x128xbf16>
    %c512 = arith.constant 512 : index
    %c0_38 = arith.constant 0 : index
    %31 = vector.load %arg2[%c512, %c0_38] : memref<1152x128xbf16, #tpu.memory_space<vmem>>, vector<128x128xbf16>
    %cst_39 = arith.constant dense<0.000000e+00> : vector<256x128xf32>
    %32 = tpu.matmul %30, %31, %cst_39 {dimension_numbers = #tpu.dot_dimension_numbers<[1], [0], [0], [1], [0, 0, 1, 1], [], []>} : vector<256x128xbf16>, vector<128x128xbf16>, vector<256x128xf32> -> vector<256x128xf32>
    %33 = arith.addf %28, %32 : vector<256x128xf32>
    %c1_40 = arith.constant 1 : index
    %c2_41 = arith.constant 2 : index
    %c0_42 = arith.constant 0 : index
    %34 = vector.load %arg5[%c1_40, %c2_41, %c0_42] : memref<18x18x128xbf16, #tpu.memory_space<vmem>>, vector<16x16x128xbf16>
    %35 = vector.shape_cast %34 : vector<16x16x128xbf16> to vector<256x128xbf16>
    %c640 = arith.constant 640 : index
    %c0_43 = arith.constant 0 : index
    %36 = vector.load %arg2[%c640, %c0_43] : memref<1152x128xbf16, #tpu.memory_space<vmem>>, vector<128x128xbf16>
    %cst_44 = arith.constant dense<0.000000e+00> : vector<256x128xf32>
    %37 = tpu.matmul %35, %36, %cst_44 {dimension_numbers = #tpu.dot_dimension_numbers<[1], [0], [0], [1], [0, 0, 1, 1], [], []>} : vector<256x128xbf16>, vector<128x128xbf16>, vector<256x128xf32> -> vector<256x128xf32>
    %38 = arith.addf %33, %37 : vector<256x128xf32>
    %c2_45 = arith.constant 2 : index
    %c0_46 = arith.constant 0 : index
    %c0_47 = arith.constant 0 : index
    %39 = vector.load %arg5[%c2_45, %c0_46, %c0_47] : memref<18x18x128xbf16, #tpu.memory_space<vmem>>, vector<16x16x128xbf16>
    %40 = vector.shape_cast %39 : vector<16x16x128xbf16> to vector<256x128xbf16>
    %c768 = arith.constant 768 : index
    %c0_48 = arith.constant 0 : index
    %41 = vector.load %arg2[%c768, %c0_48] : memref<1152x128xbf16, #tpu.memory_space<vmem>>, vector<128x128xbf16>
    %cst_49 = arith.constant dense<0.000000e+00> : vector<256x128xf32>
    %42 = tpu.matmul %40, %41, %cst_49 {dimension_numbers = #tpu.dot_dimension_numbers<[1], [0], [0], [1], [0, 0, 1, 1], [], []>} : vector<256x128xbf16>, vector<128x128xbf16>, vector<256x128xf32> -> vector<256x128xf32>
    %43 = arith.addf %38, %42 : vector<256x128xf32>
    %c2_50 = arith.constant 2 : index
    %c1_51 = arith.constant 1 : index
    %c0_52 = arith.constant 0 : index
    %44 = vector.load %arg5[%c2_50, %c1_51, %c0_52] : memref<18x18x128xbf16, #tpu.memory_space<vmem>>, vector<16x16x128xbf16>
    %45 = vector.shape_cast %44 : vector<16x16x128xbf16> to vector<256x128xbf16>
    %c896 = arith.constant 896 : index
    %c0_53 = arith.constant 0 : index
    %46 = vector.load %arg2[%c896, %c0_53] : memref<1152x128xbf16, #tpu.memory_space<vmem>>, vector<128x128xbf16>
    %cst_54 = arith.constant dense<0.000000e+00> : vector<256x128xf32>
    %47 = tpu.matmul %45, %46, %cst_54 {dimension_numbers = #tpu.dot_dimension_numbers<[1], [0], [0], [1], [0, 0, 1, 1], [], []>} : vector<256x128xbf16>, vector<128x128xbf16>, vector<256x128xf32> -> vector<256x128xf32>
    %48 = arith.addf %43, %47 : vector<256x128xf32>
    %c2_55 = arith.constant 2 : index
    %c2_56 = arith.constant 2 : index
    %c0_57 = arith.constant 0 : index
    %49 = vector.load %arg5[%c2_55, %c2_56, %c0_57] : memref<18x18x128xbf16, #tpu.memory_space<vmem>>, vector<16x16x128xbf16>
    %50 = vector.shape_cast %49 : vector<16x16x128xbf16> to vector<256x128xbf16>
    %c1024 = arith.constant 1024 : index
    %c0_58 = arith.constant 0 : index
    %51 = vector.load %arg2[%c1024, %c0_58] : memref<1152x128xbf16, #tpu.memory_space<vmem>>, vector<128x128xbf16>
    %cst_59 = arith.constant dense<0.000000e+00> : vector<256x128xf32>
    %52 = tpu.matmul %50, %51, %cst_59 {dimension_numbers = #tpu.dot_dimension_numbers<[1], [0], [0], [1], [0, 0, 1, 1], [], []>} : vector<256x128xbf16>, vector<128x128xbf16>, vector<256x128xf32> -> vector<256x128xf32>
    %53 = arith.addf %48, %52 : vector<256x128xf32>
    %c0_60 = arith.constant 0 : index
    %c0_61 = arith.constant 0 : index
    %54 = vector.load %arg3[%c0_60, %c0_61] : memref<256x128xf32, #tpu.memory_space<vmem>>, vector<256x128xf32>
    tpu.vector_store %arg3[%c0_60, %c0_61], %53 {strides = array<i32>} : memref<256x128xf32, #tpu.memory_space<vmem>>, vector<256x128xf32>,
    %cst_62 = arith.constant dense<0.000000e+00> : vector<128xf32>
    %55 = vector.multi_reduction <add>, %53, %cst_62 [0] : vector<256x128xf32> to vector<128xf32>
    %56 = vector.shape_cast %55 : vector<128xf32> to vector<1x128xf32>
    %57 = arith.mulf %53, %53 : vector<256x128xf32>
    %cst_63 = arith.constant dense<0.000000e+00> : vector<128xf32>
    %58 = vector.multi_reduction <add>, %57, %cst_63 [0] : vector<256x128xf32> to vector<128xf32>
    %59 = vector.shape_cast %58 : vector<128xf32> to vector<1x128xf32>
    %60 = tpu.concatenate %56, %59 in 0 : vector<1x128xf32>, vector<1x128xf32> -> vector<2x128xf32>
    %61 = vector.shape_cast %60 : vector<2x128xf32> to vector<1x2x128xf32>
    %c0_64 = arith.constant 0 : index
    %c0_65 = arith.constant 0 : index
    %c0_66 = arith.constant 0 : index
    %62 = vector.load %arg4[%c0_64, %c0_65, %c0_66] : memref<1x2x128xf32, #tpu.memory_space<vmem>>, vector<1x2x128xf32>
    tpu.vector_store %arg4[%c0_64, %c0_65, %c0_66], %61 {strides = array<i32>} : memref<1x2x128xf32, #tpu.memory_space<vmem>>, vector<1x2x128xf32>,
    return
  }
  func.func @transform_0(%arg0: i32) -> (i32, i32) {
    %c0_i32 = arith.constant 0 : i32
    %c0_i32_0 = arith.constant 0 : i32
    return %arg0, %c0_i32 : i32, i32
  }
  func.func @transform_1(%arg0: i32) -> (i32, i32) {
    %c0_i32 = arith.constant 0 : i32
    %c0_i32_0 = arith.constant 0 : i32
    %c0_i32_1 = arith.constant 0 : i32
    return %c0_i32, %c0_i32_0 : i32, i32
  }
  func.func @transform_2(%arg0: i32) -> (i32, i32) {
    %c0_i32 = arith.constant 0 : i32
    %c0_i32_0 = arith.constant 0 : i32
    return %arg0, %c0_i32 : i32, i32
  }
  func.func @transform_3(%arg0: i32) -> (i32, i32, i32) {
    %c0_i32 = arith.constant 0 : i32
    %c0_i32_0 = arith.constant 0 : i32
    %c0_i32_1 = arith.constant 0 : i32
    return %arg0, %c0_i32, %c0_i32_0 : i32, i32, i32
  }
}

module attributes {stable_mosaic.version = 11 : i64} {
  func.func @_conv2_kernel(%arg0: i32, %arg1: memref<256x128xf32, #tpu.memory_space<vmem>>, %arg2: memref<1x128xf32, #tpu.memory_space<vmem>>, %arg3: memref<1x128xf32, #tpu.memory_space<vmem>>, %arg4: memref<1152x128xbf16, #tpu.memory_space<vmem>>, %arg5: memref<256x128xf32, #tpu.memory_space<vmem>>, %arg6: memref<1x2x128xf32, #tpu.memory_space<vmem>>, %arg7: memref<18x18x128xbf16, #tpu.memory_space<vmem>>) attributes {dimension_semantics = [#tpu.dimension_semantics<parallel>], iteration_bounds = array<i64: 2>, scalar_prefetch = 0 : i64, scratch_operands = 1 : i64, tpu.core_type = #tpu.core_type<tc>, window_params = [{transform_indices = @transform_0, window_bounds = array<i64: 256, 128>}, {pipeline_mode = #tpu.pipeline_mode<synchronous>, transform_indices = @transform_1, window_bounds = array<i64: 1, 128>}, {pipeline_mode = #tpu.pipeline_mode<synchronous>, transform_indices = @transform_2, window_bounds = array<i64: 1, 128>}, {pipeline_mode = #tpu.pipeline_mode<synchronous>, transform_indices = @transform_3, window_bounds = array<i64: 1152, 128>}, {transform_indices = @transform_4, window_bounds = array<i64: 256, 128>}, {transform_indices = @transform_5, window_bounds = array<i64: 1, 2, 128>}]} {
    %c0 = arith.constant 0 : index
    %c0_0 = arith.constant 0 : index
    %0 = vector.load %arg1[%c0, %c0_0] : memref<256x128xf32, #tpu.memory_space<vmem>>, vector<256x128xf32>
    %c0_1 = arith.constant 0 : index
    %c0_2 = arith.constant 0 : index
    %1 = vector.load %arg2[%c0_1, %c0_2] : memref<1x128xf32, #tpu.memory_space<vmem>>, vector<1x128xf32>
    %2 = vector.broadcast %1 : vector<1x128xf32> to vector<256x128xf32>
    %3 = arith.mulf %0, %2 : vector<256x128xf32>
    %c0_3 = arith.constant 0 : index
    %c0_4 = arith.constant 0 : index
    %4 = vector.load %arg3[%c0_3, %c0_4] : memref<1x128xf32, #tpu.memory_space<vmem>>, vector<1x128xf32>
    %5 = vector.broadcast %4 : vector<1x128xf32> to vector<256x128xf32>
    %6 = arith.addf %3, %5 : vector<256x128xf32>
    %cst = arith.constant 0.000000e+00 : f32
    %7 = vector.broadcast %cst : f32 to vector<256x128xf32>
    %8 = arith.maximumf %6, %7 : vector<256x128xf32>
    %cst_5 = arith.constant 0.000000e+00 : bf16
    %9 = vector.broadcast %cst_5 : bf16 to vector<1x18x128xbf16>
    %c0_6 = arith.constant 0 : index
    %c0_7 = arith.constant 0 : index
    %c0_8 = arith.constant 0 : index
    %10 = vector.load %arg7[%c0_6, %c0_7, %c0_8] : memref<18x18x128xbf16, #tpu.memory_space<vmem>>, vector<1x18x128xbf16>
    tpu.vector_store %arg7[%c0_6, %c0_7, %c0_8], %9 {strides = array<i32>} : memref<18x18x128xbf16, #tpu.memory_space<vmem>>, vector<1x18x128xbf16>,
    %c17 = arith.constant 17 : index
    %c0_9 = arith.constant 0 : index
    %c0_10 = arith.constant 0 : index
    %11 = vector.load %arg7[%c17, %c0_9, %c0_10] : memref<18x18x128xbf16, #tpu.memory_space<vmem>>, vector<1x18x128xbf16>
    tpu.vector_store %arg7[%c17, %c0_9, %c0_10], %9 {strides = array<i32>} : memref<18x18x128xbf16, #tpu.memory_space<vmem>>, vector<1x18x128xbf16>,
    %cst_11 = arith.constant 0.000000e+00 : bf16
    %12 = vector.broadcast %cst_11 : bf16 to vector<16x1x128xbf16>
    %c1 = arith.constant 1 : index
    %c0_12 = arith.constant 0 : index
    %c0_13 = arith.constant 0 : index
    %13 = vector.load %arg7[%c1, %c0_12, %c0_13] : memref<18x18x128xbf16, #tpu.memory_space<vmem>>, vector<16x1x128xbf16>
    tpu.vector_store %arg7[%c1, %c0_12, %c0_13], %12 {strides = array<i32>} : memref<18x18x128xbf16, #tpu.memory_space<vmem>>, vector<16x1x128xbf16>,
    %c1_14 = arith.constant 1 : index
    %c17_15 = arith.constant 17 : index
    %c0_16 = arith.constant 0 : index
    %14 = vector.load %arg7[%c1_14, %c17_15, %c0_16] : memref<18x18x128xbf16, #tpu.memory_space<vmem>>, vector<16x1x128xbf16>
    tpu.vector_store %arg7[%c1_14, %c17_15, %c0_16], %12 {strides = array<i32>} : memref<18x18x128xbf16, #tpu.memory_space<vmem>>, vector<16x1x128xbf16>,
    %15 = vector.shape_cast %8 : vector<256x128xf32> to vector<16x16x128xf32>
    %16 = arith.truncf %15 : vector<16x16x128xf32> to vector<16x16x128xbf16>
    %c1_17 = arith.constant 1 : index
    %c1_18 = arith.constant 1 : index
    %c0_19 = arith.constant 0 : index
    %17 = vector.load %arg7[%c1_17, %c1_18, %c0_19] : memref<18x18x128xbf16, #tpu.memory_space<vmem>>, vector<16x16x128xbf16>
    tpu.vector_store %arg7[%c1_17, %c1_18, %c0_19], %16 {strides = array<i32>} : memref<18x18x128xbf16, #tpu.memory_space<vmem>>, vector<16x16x128xbf16>,
    %c0_20 = arith.constant 0 : index
    %c0_21 = arith.constant 0 : index
    %c0_22 = arith.constant 0 : index
    %18 = vector.load %arg7[%c0_20, %c0_21, %c0_22] : memref<18x18x128xbf16, #tpu.memory_space<vmem>>, vector<16x16x128xbf16>
    %19 = vector.shape_cast %18 : vector<16x16x128xbf16> to vector<256x128xbf16>
    %c0_23 = arith.constant 0 : index
    %c0_24 = arith.constant 0 : index
    %20 = vector.load %arg4[%c0_23, %c0_24] : memref<1152x128xbf16, #tpu.memory_space<vmem>>, vector<128x128xbf16>
    %cst_25 = arith.constant dense<0.000000e+00> : vector<256x128xf32>
    %21 = tpu.matmul %19, %20, %cst_25 {dimension_numbers = #tpu.dot_dimension_numbers<[1], [0], [0], [1], [0, 0, 1, 1], [], []>} : vector<256x128xbf16>, vector<128x128xbf16>, vector<256x128xf32> -> vector<256x128xf32>
    %c0_26 = arith.constant 0 : index
    %c1_27 = arith.constant 1 : index
    %c0_28 = arith.constant 0 : index
    %22 = vector.load %arg7[%c0_26, %c1_27, %c0_28] : memref<18x18x128xbf16, #tpu.memory_space<vmem>>, vector<16x16x128xbf16>
    %23 = vector.shape_cast %22 : vector<16x16x128xbf16> to vector<256x128xbf16>
    %c128 = arith.constant 128 : index
    %c0_29 = arith.constant 0 : index
    %24 = vector.load %arg4[%c128, %c0_29] : memref<1152x128xbf16, #tpu.memory_space<vmem>>, vector<128x128xbf16>
    %cst_30 = arith.constant dense<0.000000e+00> : vector<256x128xf32>
    %25 = tpu.matmul %23, %24, %cst_30 {dimension_numbers = #tpu.dot_dimension_numbers<[1], [0], [0], [1], [0, 0, 1, 1], [], []>} : vector<256x128xbf16>, vector<128x128xbf16>, vector<256x128xf32> -> vector<256x128xf32>
    %26 = arith.addf %21, %25 : vector<256x128xf32>
    %c0_31 = arith.constant 0 : index
    %c2 = arith.constant 2 : index
    %c0_32 = arith.constant 0 : index
    %27 = vector.load %arg7[%c0_31, %c2, %c0_32] : memref<18x18x128xbf16, #tpu.memory_space<vmem>>, vector<16x16x128xbf16>
    %28 = vector.shape_cast %27 : vector<16x16x128xbf16> to vector<256x128xbf16>
    %c256 = arith.constant 256 : index
    %c0_33 = arith.constant 0 : index
    %29 = vector.load %arg4[%c256, %c0_33] : memref<1152x128xbf16, #tpu.memory_space<vmem>>, vector<128x128xbf16>
    %cst_34 = arith.constant dense<0.000000e+00> : vector<256x128xf32>
    %30 = tpu.matmul %28, %29, %cst_34 {dimension_numbers = #tpu.dot_dimension_numbers<[1], [0], [0], [1], [0, 0, 1, 1], [], []>} : vector<256x128xbf16>, vector<128x128xbf16>, vector<256x128xf32> -> vector<256x128xf32>
    %31 = arith.addf %26, %30 : vector<256x128xf32>
    %c1_35 = arith.constant 1 : index
    %c0_36 = arith.constant 0 : index
    %c0_37 = arith.constant 0 : index
    %32 = vector.load %arg7[%c1_35, %c0_36, %c0_37] : memref<18x18x128xbf16, #tpu.memory_space<vmem>>, vector<16x16x128xbf16>
    %33 = vector.shape_cast %32 : vector<16x16x128xbf16> to vector<256x128xbf16>
    %c384 = arith.constant 384 : index
    %c0_38 = arith.constant 0 : index
    %34 = vector.load %arg4[%c384, %c0_38] : memref<1152x128xbf16, #tpu.memory_space<vmem>>, vector<128x128xbf16>
    %cst_39 = arith.constant dense<0.000000e+00> : vector<256x128xf32>
    %35 = tpu.matmul %33, %34, %cst_39 {dimension_numbers = #tpu.dot_dimension_numbers<[1], [0], [0], [1], [0, 0, 1, 1], [], []>} : vector<256x128xbf16>, vector<128x128xbf16>, vector<256x128xf32> -> vector<256x128xf32>
    %36 = arith.addf %31, %35 : vector<256x128xf32>
    %c1_40 = arith.constant 1 : index
    %c1_41 = arith.constant 1 : index
    %c0_42 = arith.constant 0 : index
    %37 = vector.load %arg7[%c1_40, %c1_41, %c0_42] : memref<18x18x128xbf16, #tpu.memory_space<vmem>>, vector<16x16x128xbf16>
    %38 = vector.shape_cast %37 : vector<16x16x128xbf16> to vector<256x128xbf16>
    %c512 = arith.constant 512 : index
    %c0_43 = arith.constant 0 : index
    %39 = vector.load %arg4[%c512, %c0_43] : memref<1152x128xbf16, #tpu.memory_space<vmem>>, vector<128x128xbf16>
    %cst_44 = arith.constant dense<0.000000e+00> : vector<256x128xf32>
    %40 = tpu.matmul %38, %39, %cst_44 {dimension_numbers = #tpu.dot_dimension_numbers<[1], [0], [0], [1], [0, 0, 1, 1], [], []>} : vector<256x128xbf16>, vector<128x128xbf16>, vector<256x128xf32> -> vector<256x128xf32>
    %41 = arith.addf %36, %40 : vector<256x128xf32>
    %c1_45 = arith.constant 1 : index
    %c2_46 = arith.constant 2 : index
    %c0_47 = arith.constant 0 : index
    %42 = vector.load %arg7[%c1_45, %c2_46, %c0_47] : memref<18x18x128xbf16, #tpu.memory_space<vmem>>, vector<16x16x128xbf16>
    %43 = vector.shape_cast %42 : vector<16x16x128xbf16> to vector<256x128xbf16>
    %c640 = arith.constant 640 : index
    %c0_48 = arith.constant 0 : index
    %44 = vector.load %arg4[%c640, %c0_48] : memref<1152x128xbf16, #tpu.memory_space<vmem>>, vector<128x128xbf16>
    %cst_49 = arith.constant dense<0.000000e+00> : vector<256x128xf32>
    %45 = tpu.matmul %43, %44, %cst_49 {dimension_numbers = #tpu.dot_dimension_numbers<[1], [0], [0], [1], [0, 0, 1, 1], [], []>} : vector<256x128xbf16>, vector<128x128xbf16>, vector<256x128xf32> -> vector<256x128xf32>
    %46 = arith.addf %41, %45 : vector<256x128xf32>
    %c2_50 = arith.constant 2 : index
    %c0_51 = arith.constant 0 : index
    %c0_52 = arith.constant 0 : index
    %47 = vector.load %arg7[%c2_50, %c0_51, %c0_52] : memref<18x18x128xbf16, #tpu.memory_space<vmem>>, vector<16x16x128xbf16>
    %48 = vector.shape_cast %47 : vector<16x16x128xbf16> to vector<256x128xbf16>
    %c768 = arith.constant 768 : index
    %c0_53 = arith.constant 0 : index
    %49 = vector.load %arg4[%c768, %c0_53] : memref<1152x128xbf16, #tpu.memory_space<vmem>>, vector<128x128xbf16>
    %cst_54 = arith.constant dense<0.000000e+00> : vector<256x128xf32>
    %50 = tpu.matmul %48, %49, %cst_54 {dimension_numbers = #tpu.dot_dimension_numbers<[1], [0], [0], [1], [0, 0, 1, 1], [], []>} : vector<256x128xbf16>, vector<128x128xbf16>, vector<256x128xf32> -> vector<256x128xf32>
    %51 = arith.addf %46, %50 : vector<256x128xf32>
    %c2_55 = arith.constant 2 : index
    %c1_56 = arith.constant 1 : index
    %c0_57 = arith.constant 0 : index
    %52 = vector.load %arg7[%c2_55, %c1_56, %c0_57] : memref<18x18x128xbf16, #tpu.memory_space<vmem>>, vector<16x16x128xbf16>
    %53 = vector.shape_cast %52 : vector<16x16x128xbf16> to vector<256x128xbf16>
    %c896 = arith.constant 896 : index
    %c0_58 = arith.constant 0 : index
    %54 = vector.load %arg4[%c896, %c0_58] : memref<1152x128xbf16, #tpu.memory_space<vmem>>, vector<128x128xbf16>
    %cst_59 = arith.constant dense<0.000000e+00> : vector<256x128xf32>
    %55 = tpu.matmul %53, %54, %cst_59 {dimension_numbers = #tpu.dot_dimension_numbers<[1], [0], [0], [1], [0, 0, 1, 1], [], []>} : vector<256x128xbf16>, vector<128x128xbf16>, vector<256x128xf32> -> vector<256x128xf32>
    %56 = arith.addf %51, %55 : vector<256x128xf32>
    %c2_60 = arith.constant 2 : index
    %c2_61 = arith.constant 2 : index
    %c0_62 = arith.constant 0 : index
    %57 = vector.load %arg7[%c2_60, %c2_61, %c0_62] : memref<18x18x128xbf16, #tpu.memory_space<vmem>>, vector<16x16x128xbf16>
    %58 = vector.shape_cast %57 : vector<16x16x128xbf16> to vector<256x128xbf16>
    %c1024 = arith.constant 1024 : index
    %c0_63 = arith.constant 0 : index
    %59 = vector.load %arg4[%c1024, %c0_63] : memref<1152x128xbf16, #tpu.memory_space<vmem>>, vector<128x128xbf16>
    %cst_64 = arith.constant dense<0.000000e+00> : vector<256x128xf32>
    %60 = tpu.matmul %58, %59, %cst_64 {dimension_numbers = #tpu.dot_dimension_numbers<[1], [0], [0], [1], [0, 0, 1, 1], [], []>} : vector<256x128xbf16>, vector<128x128xbf16>, vector<256x128xf32> -> vector<256x128xf32>
    %61 = arith.addf %56, %60 : vector<256x128xf32>
    %c0_65 = arith.constant 0 : index
    %c0_66 = arith.constant 0 : index
    %62 = vector.load %arg5[%c0_65, %c0_66] : memref<256x128xf32, #tpu.memory_space<vmem>>, vector<256x128xf32>
    tpu.vector_store %arg5[%c0_65, %c0_66], %61 {strides = array<i32>} : memref<256x128xf32, #tpu.memory_space<vmem>>, vector<256x128xf32>,
    %cst_67 = arith.constant dense<0.000000e+00> : vector<128xf32>
    %63 = vector.multi_reduction <add>, %61, %cst_67 [0] : vector<256x128xf32> to vector<128xf32>
    %64 = vector.shape_cast %63 : vector<128xf32> to vector<1x128xf32>
    %65 = arith.mulf %61, %61 : vector<256x128xf32>
    %cst_68 = arith.constant dense<0.000000e+00> : vector<128xf32>
    %66 = vector.multi_reduction <add>, %65, %cst_68 [0] : vector<256x128xf32> to vector<128xf32>
    %67 = vector.shape_cast %66 : vector<128xf32> to vector<1x128xf32>
    %68 = tpu.concatenate %64, %67 in 0 : vector<1x128xf32>, vector<1x128xf32> -> vector<2x128xf32>
    %69 = vector.shape_cast %68 : vector<2x128xf32> to vector<1x2x128xf32>
    %c0_69 = arith.constant 0 : index
    %c0_70 = arith.constant 0 : index
    %c0_71 = arith.constant 0 : index
    %70 = vector.load %arg6[%c0_69, %c0_70, %c0_71] : memref<1x2x128xf32, #tpu.memory_space<vmem>>, vector<1x2x128xf32>
    tpu.vector_store %arg6[%c0_69, %c0_70, %c0_71], %69 {strides = array<i32>} : memref<1x2x128xf32, #tpu.memory_space<vmem>>, vector<1x2x128xf32>,
    return
  }
  func.func @transform_0(%arg0: i32) -> (i32, i32) {
    %c0_i32 = arith.constant 0 : i32
    %c0_i32_0 = arith.constant 0 : i32
    return %arg0, %c0_i32 : i32, i32
  }
  func.func @transform_1(%arg0: i32) -> (i32, i32) {
    %c0_i32 = arith.constant 0 : i32
    %c0_i32_0 = arith.constant 0 : i32
    %c0_i32_1 = arith.constant 0 : i32
    return %c0_i32, %c0_i32_0 : i32, i32
  }
  func.func @transform_2(%arg0: i32) -> (i32, i32) {
    %c0_i32 = arith.constant 0 : i32
    %c0_i32_0 = arith.constant 0 : i32
    %c0_i32_1 = arith.constant 0 : i32
    return %c0_i32, %c0_i32_0 : i32, i32
  }
  func.func @transform_3(%arg0: i32) -> (i32, i32) {
    %c0_i32 = arith.constant 0 : i32
    %c0_i32_0 = arith.constant 0 : i32
    %c0_i32_1 = arith.constant 0 : i32
    return %c0_i32, %c0_i32_0 : i32, i32
  }
  func.func @transform_4(%arg0: i32) -> (i32, i32) {
    %c0_i32 = arith.constant 0 : i32
    %c0_i32_0 = arith.constant 0 : i32
    return %arg0, %c0_i32 : i32, i32
  }
  func.func @transform_5(%arg0: i32) -> (i32, i32, i32) {
    %c0_i32 = arith.constant 0 : i32
    %c0_i32_0 = arith.constant 0 : i32
    %c0_i32_1 = arith.constant 0 : i32
    return %arg0, %c0_i32, %c0_i32_0 : i32, i32, i32
  }
}

module attributes {stable_mosaic.version = 11 : i64} {
  func.func @_bn_add_relu_kernel(%arg0: i32, %arg1: memref<256x128xf32, #tpu.memory_space<vmem>>, %arg2: memref<1x128xf32, #tpu.memory_space<vmem>>, %arg3: memref<1x128xf32, #tpu.memory_space<vmem>>, %arg4: memref<256x128xf32, #tpu.memory_space<vmem>>, %arg5: memref<256x128xf32, #tpu.memory_space<vmem>>) attributes {dimension_semantics = [#tpu.dimension_semantics<parallel>], iteration_bounds = array<i64: 2>, scalar_prefetch = 0 : i64, scratch_operands = 0 : i64, tpu.core_type = #tpu.core_type<tc>, window_params = [{transform_indices = @transform_0, window_bounds = array<i64: 256, 128>}, {pipeline_mode = #tpu.pipeline_mode<synchronous>, transform_indices = @transform_1, window_bounds = array<i64: 1, 128>}, {pipeline_mode = #tpu.pipeline_mode<synchronous>, transform_indices = @transform_2, window_bounds = array<i64: 1, 128>}, {transform_indices = @transform_3, window_bounds = array<i64: 256, 128>}, {transform_indices = @transform_4, window_bounds = array<i64: 256, 128>}]} {
    %c0 = arith.constant 0 : index
    %c0_0 = arith.constant 0 : index
    %0 = vector.load %arg1[%c0, %c0_0] : memref<256x128xf32, #tpu.memory_space<vmem>>, vector<256x128xf32>
    %c0_1 = arith.constant 0 : index
    %c0_2 = arith.constant 0 : index
    %1 = vector.load %arg2[%c0_1, %c0_2] : memref<1x128xf32, #tpu.memory_space<vmem>>, vector<1x128xf32>
    %2 = vector.broadcast %1 : vector<1x128xf32> to vector<256x128xf32>
    %3 = arith.mulf %0, %2 : vector<256x128xf32>
    %c0_3 = arith.constant 0 : index
    %c0_4 = arith.constant 0 : index
    %4 = vector.load %arg3[%c0_3, %c0_4] : memref<1x128xf32, #tpu.memory_space<vmem>>, vector<1x128xf32>
    %5 = vector.broadcast %4 : vector<1x128xf32> to vector<256x128xf32>
    %6 = arith.addf %3, %5 : vector<256x128xf32>
    %c0_5 = arith.constant 0 : index
    %c0_6 = arith.constant 0 : index
    %7 = vector.load %arg4[%c0_5, %c0_6] : memref<256x128xf32, #tpu.memory_space<vmem>>, vector<256x128xf32>
    %8 = arith.addf %6, %7 : vector<256x128xf32>
    %cst = arith.constant 0.000000e+00 : f32
    %9 = vector.broadcast %cst : f32 to vector<256x128xf32>
    %10 = arith.maximumf %8, %9 : vector<256x128xf32>
    %c0_7 = arith.constant 0 : index
    %c0_8 = arith.constant 0 : index
    %11 = vector.load %arg5[%c0_7, %c0_8] : memref<256x128xf32, #tpu.memory_space<vmem>>, vector<256x128xf32>
    tpu.vector_store %arg5[%c0_7, %c0_8], %10 {strides = array<i32>} : memref<256x128xf32, #tpu.memory_space<vmem>>, vector<256x128xf32>,
    return
  }
  func.func @transform_0(%arg0: i32) -> (i32, i32) {
    %c0_i32 = arith.constant 0 : i32
    %c0_i32_0 = arith.constant 0 : i32
    return %arg0, %c0_i32 : i32, i32
  }
  func.func @transform_1(%arg0: i32) -> (i32, i32) {
    %c0_i32 = arith.constant 0 : i32
    %c0_i32_0 = arith.constant 0 : i32
    %c0_i32_1 = arith.constant 0 : i32
    return %c0_i32, %c0_i32_0 : i32, i32
  }
  func.func @transform_2(%arg0: i32) -> (i32, i32) {
    %c0_i32 = arith.constant 0 : i32
    %c0_i32_0 = arith.constant 0 : i32
    %c0_i32_1 = arith.constant 0 : i32
    return %c0_i32, %c0_i32_0 : i32, i32
  }
  func.func @transform_3(%arg0: i32) -> (i32, i32) {
    %c0_i32 = arith.constant 0 : i32
    %c0_i32_0 = arith.constant 0 : i32
    return %arg0, %c0_i32 : i32, i32
  }
  func.func @transform_4(%arg0: i32) -> (i32, i32) {
    %c0_i32 = arith.constant 0 : i32
    %c0_i32_0 = arith.constant 0 : i32
    return %arg0, %c0_i32 : i32, i32
  }
}

</mosaic_0001>

<llo_original>
// kernel: basic_block_forward.5
$region0: #{basic_block_forward.5}
  #allocation0 [shape = 'u32[]', space=smem, size = 0x4, offset = 0x4, fixed_abs, tag = 'smem constant byte address 0x4 - core index']
  #allocation1 [shape = 'u32[144,128]{1,0:T(1,128)}', space=vmem, size = 0x12000, scoped, tag = 'internal scratch']
  %s0 = inlined_call_operand.vmem [shape: f32[512,128], index: 0, kind: input, shape index: {}]
  %s1 = inlined_call_operand.vmem [shape: f32[1,128], index: 1, kind: input, shape index: {}]
  %s2 = inlined_call_operand.vmem [shape: f32[1,128], index: 2, kind: input, shape index: {}]
  %s3 = inlined_call_operand.vmem [shape: f32[512,128], index: 3, kind: input, shape index: {}]
  %s4 = inlined_call_operand.vmem [shape: f32[512,128], index: 4, kind: output, shape index: {}]
  %s5 = sld [smem:[#allocation0]]
  $region49: #{basic_block_forward.5} parent=0
    _
  %s7 = ssub.s32 1, %s5
  %s8 = scalar_select 0, %s7, %s5
  loop: start=0, step=1, limit=4
  $region2: #{basic_block_forward.5} parent=0 // loop_pre_header
    _
  $region3: #{basic_block_forward.5} parent=0 // loop_header
    %s10 = sphi 0, %s14
    %p11 = scmp.ge.s32.totalorder %s10, 4
    %s20 = sphi 0, %s22
    %s23 = sphi 0, %s20
    %s24 = sphi 0, %s23
    %s40 = sphi 0, %s24
    %s44 = sphi 0, %s44
    %s46 = sphi 0, %s44
    %s47 = sphi 0, %s46
    %s61 = sphi 0, %s47
    %s65 = sphi 0, %s65
    %s67 = sphi 0, %s65
    %s68 = sphi 0, %s67
    %s82 = sphi 0, %s68
    %s88 = sphi 0, %s90
    %s91 = sphi 0, %s88
    %s92 = sphi 0, %s91
    %s108 = sphi 0, %s92
    %s114 = sphi 0, %s116
    %s117 = sphi 0, %s114
    %s118 = sphi 0, %s117
    %s134 = sphi 0, %s118
  $region4: #{basic_block_forward.5} parent=0 // loop_header_branch
    %13 = sbr.rel (%p11) target = $region8
  $region5: #{basic_block_forward.5} parent=0 // loop_body
    %s15 = ssub.s32 %s10, 1
    %s16 = ssub.s32 %s10, 2
    %s17 = sadd.s32 %s10, 1
    %s18 = ssub.s32 %s10, %s17
    %p19 = scmp.eq.s32.totalorder %s18, 0
    %s21 = sadd.s32 %s20, 1
    %s22 = scalar_select %p19, %s20, %s21
    %p25 = pneg %p19
    %p26 = scmp.eq.s32.totalorder %s10, 1
    %p27 = por %p25, %p26
    %p28 = scmp.ne.s32.totalorder %s20, %s23
    %p29 = scmp.eq.s32.totalorder %s10, 0
    %p30 = por %p28, %p29
    %p31 = scmp.ne.s32.totalorder %s20, %s23
    %p32 = scmp.eq.s32.totalorder %s15, 1
    %p33 = por %p31, %p32
    %p34 = scmp.ne.s32.totalorder %s23, %s24
    %p35 = scmp.eq.s32.totalorder %s15, 0
    %p36 = por %p34, %p35
    %p37 = scmp.ne.s32.totalorder %s23, %s24
    %p38 = scmp.eq.s32.totalorder %s16, 1
    %p39 = por %p37, %p38
    %p41 = scmp.ne.s32.totalorder %s24, %s40
    %p42 = scmp.eq.s32.totalorder %s16, 0
    %p43 = por %p41, %p42
    %s45 = sadd.s32 %s44, 1
    %p48 = scmp.eq.s32.totalorder %s10, 1
    %p49 = scmp.ne.s32.totalorder %s44, %s46
    %p50 = scmp.eq.s32.totalorder %s10, 0
    %p51 = por %p49, %p50
    %p52 = scmp.ne.s32.totalorder %s44, %s46
    %p53 = scmp.eq.s32.totalorder %s15, 1
    %p54 = por %p52, %p53
    %p55 = scmp.ne.s32.totalorder %s46, %s47
    %p56 = scmp.eq.s32.totalorder %s15, 0
    %p57 = por %p55, %p56
    %p58 = scmp.ne.s32.totalorder %s46, %s47
    %p59 = scmp.eq.s32.totalorder %s16, 1
    %p60 = por %p58, %p59
    %p62 = scmp.ne.s32.totalorder %s47, %s61
    %p63 = scmp.eq.s32.totalorder %s16, 0
    %p64 = por %p62, %p63
    %s66 = sadd.s32 %s65, 1
    %p69 = scmp.eq.s32.totalorder %s10, 1
    %p70 = scmp.ne.s32.totalorder %s65, %s67
    %p71 = scmp.eq.s32.totalorder %s10, 0
    %p72 = por %p70, %p71
    %p73 = scmp.ne.s32.totalorder %s65, %s67
    %p74 = scmp.eq.s32.totalorder %s15, 1
    %p75 = por %p73, %p74
    %p76 = scmp.ne.s32.totalorder %s67, %s68
    %p77 = scmp.eq.s32.totalorder %s15, 0
    %p78 = por %p76, %p77
    %p79 = scmp.ne.s32.totalorder %s67, %s68
    %p80 = scmp.eq.s32.totalorder %s16, 1
    %p81 = por %p79, %p80
    %p83 = scmp.ne.s32.totalorder %s68, %s82
    %p84 = scmp.eq.s32.totalorder %s16, 0
    %p85 = por %p83, %p84
    %s86 = ssub.s32 %s10, %s17
    %p87 = scmp.eq.s32.totalorder %s86, 0
    %s89 = sadd.s32 %s88, 1
    %s90 = scalar_select %p87, %s88, %s89
    %p93 = pneg %p87
    %p94 = scmp.eq.s32.totalorder %s10, 1
    %p95 = por %p93, %p94
    %p96 = scmp.ne.s32.totalorder %s88, %s91
    %p97 = scmp.eq.s32.totalorder %s10, 0
    %p98 = por %p96, %p97
    %p99 = scmp.ne.s32.totalorder %s88, %s91
    %p100 = scmp.eq.s32.totalorder %s15, 1
    %p101 = por %p99, %p100
    %p102 = scmp.ne.s32.totalorder %s91, %s92
    %p103 = scmp.eq.s32.totalorder %s15, 0
    %p104 = por %p102, %p103
    %p105 = scmp.ne.s32.totalorder %s91, %s92
    %p106 = scmp.eq.s32.totalorder %s16, 1
    %p107 = por %p105, %p106
    %p109 = scmp.ne.s32.totalorder %s92, %s108
    %p110 = scmp.eq.s32.totalorder %s16, 0
    %p111 = por %p109, %p110
    %s112 = ssub.s32 %s10, %s17
    %p113 = scmp.eq.s32.totalorder %s112, 0
    %s115 = sadd.s32 %s114, 1
    %s116 = scalar_select %p113, %s114, %s115
    %p119 = pneg %p113
    %p120 = scmp.eq.s32.totalorder %s10, 1
    %p121 = por %p119, %p120
    %p122 = scmp.ne.s32.totalorder %s114, %s117
    %p123 = scmp.eq.s32.totalorder %s10, 0
    %p124 = por %p122, %p123
    %p125 = scmp.ne.s32.totalorder %s114, %s117
    %p126 = scmp.eq.s32.totalorder %s15, 1
    %p127 = por %p125, %p126
    %p128 = scmp.ne.s32.totalorder %s117, %s118
    %p129 = scmp.eq.s32.totalorder %s15, 0
    %p130 = por %p128, %p129
    %p131 = scmp.ne.s32.totalorder %s117, %s118
    %p132 = scmp.eq.s32.totalorder %s16, 1
    %p133 = por %p131, %p132
    %p135 = scmp.ne.s32.totalorder %s118, %s134
    %p136 = scmp.eq.s32.totalorder %s16, 0
    %p137 = por %p135, %p136
    %p138 = scmp.le.s32.totalorder 1, %s10
    %p139 = scmp.lt.s32.totalorder %s10, 3
    %p140 = pnand %p138, %p139
    %p141 = pneg %p140
    // Predicated region
    $region9: #{basic_block_forward.5} parent=5 // pred_check
      _
    $region10: #{basic_block_forward.5} parent=5 // pred_check_branch
      %143 = sbr.rel (%p140) target = $region12
    $region11: #{basic_block_forward.5} parent=5 // pred_region
      %s144 = ssub.s32 %s10, 1
      // Predicated region
      $region13: #{basic_block_forward.5} parent=11 // pred_check
        %p145 = pneg %p57
      $region14: #{basic_block_forward.5} parent=11 // pred_check_branch
        %147 = sbr.rel (%p145) target = $region16
      $region15: #{basic_block_forward.5} parent=11 // pred_region
        _
      $region16: #{basic_block_forward.5} parent=11 // pred_fallthru
        _
      // Predicated region
      $region17: #{basic_block_forward.5} parent=11 // pred_check
        %p148 = pneg %p78
      $region18: #{basic_block_forward.5} parent=11 // pred_check_branch
        %150 = sbr.rel (%p148) target = $region20
      $region19: #{basic_block_forward.5} parent=11 // pred_region
        _
      $region20: #{basic_block_forward.5} parent=11 // pred_fallthru
        _
    $region12: #{basic_block_forward.5} parent=5 // pred_fallthru
      _
    %p151 = scmp.lt.s32.totalorder %s10, 2
    // Predicated region
    $region21: #{basic_block_forward.5} parent=5 // pred_check
      %p152 = pneg %p151
    $region22: #{basic_block_forward.5} parent=5 // pred_check_branch
      %154 = sbr.rel (%p152) target = $region24
    $region23: #{basic_block_forward.5} parent=5 // pred_region
      // Predicated region
      $region25: #{basic_block_forward.5} parent=23 // pred_check
        %p155 = pneg %p30
      $region26: #{basic_block_forward.5} parent=23 // pred_check_branch
        %157 = sbr.rel (%p155) target = $region28
      $region27: #{basic_block_forward.5} parent=23 // pred_region
        %s158 = smul.u32 32, %s10
        %p159 = scmp.lt.s32.totalorder %s158, 63
        %s160 = scalar_select %p159, %s158, 63
        %s161 = smul.addr %s160, 8
        %s162 = scalar_lea.vmem %s0, %s161
        %s163 = smul.u32 32, %s10
      $region28: #{basic_block_forward.5} parent=23 // pred_fallthru
        _
      // Predicated region
      $region29: #{basic_block_forward.5} parent=23 // pred_check
        %p164 = pneg %p98
      $region30: #{basic_block_forward.5} parent=23 // pred_check_branch
        %166 = sbr.rel (%p164) target = $region32
      $region31: #{basic_block_forward.5} parent=23 // pred_region
        %s167 = smul.u32 32, %s10
        %p168 = scmp.lt.s32.totalorder %s167, 63
        %s169 = scalar_select %p168, %s167, 63
        %s170 = smul.addr %s169, 8
        %s171 = scalar_lea.vmem %s3, %s170
        %s172 = smul.u32 32, %s10
      $region32: #{basic_block_forward.5} parent=23 // pred_fallthru
        _
    $region24: #{basic_block_forward.5} parent=5 // pred_fallthru
      _
    %p173 = scmp.le.s32.totalorder 1, %s10
    %p174 = scmp.lt.s32.totalorder %s10, 3
    %p175 = pnand %p173, %p174
    %p176 = pneg %p175
    // Predicated region
    $region33: #{basic_block_forward.5} parent=5 // pred_check
      _
    $region34: #{basic_block_forward.5} parent=5 // pred_check_branch
      %178 = sbr.rel (%p175) target = $region36
    $region35: #{basic_block_forward.5} parent=5 // pred_region
      %s179 = ssub.s32 %s10, 1
      %s180 = smul.u32 32, %s15
      %p181 = scmp.lt.s32.totalorder %s180, 63
      %s182 = scalar_select %p181, %s180, 63
      %s183 = smul.addr %s182, 8
      %s184 = scalar_lea.vmem %s0, %s183
      %p185 = pneg %p36
      %p186 = pneg %p33
      %p187 = pneg %p57
      %p188 = pneg %p54
      %p189 = pneg %p78
      %p190 = pneg %p75
      %s191 = smul.u32 32, %s15
      %p192 = scmp.lt.s32.totalorder %s191, 63
      %s193 = scalar_select %p192, %s191, 63
      %s194 = smul.addr %s193, 8
      %s195 = scalar_lea.vmem %s3, %s194
      %p196 = pneg %p104
      %p197 = pneg %p101
      %p198 = pneg %p130
      %p199 = pneg %p127
      %s200 = smul.u32 32, %s15
      %p201 = scmp.lt.s32.totalorder %s200, 63
      %s202 = scalar_select %p201, %s200, 63
      %s203 = smul.addr %s202, 8
      %s204 = scalar_lea.vmem %s4, %s203
      %s205 = smul.u32 32, %s15
      %p206 = scmp.lt.s32.totalorder %s205, 63
      %s207 = scalar_select %p206, %s205, 63
      %s208 = smul.addr %s207, 8
      %s209 = scalar_lea.vmem %s0, %s208
      %s210 = smul.u32 32, %s15
      %s211 = smul.u32 32, %s15
      %p212 = scmp.lt.s32.totalorder %s211, 63
      %s213 = scalar_select %p212, %s211, 63
      %s214 = smul.addr %s213, 8
      %s215 = scalar_lea.vmem %s3, %s214
      %s216 = smul.u32 32, %s15
      %s217 = smul.u32 32, %s15
      %p218 = scmp.lt.s32.totalorder %s217, 63
      %s219 = scalar_select %p218, %s217, 63
      %s220 = smul.addr %s219, 8
      %s221 = scalar_lea.vmem %s4, %s220
      %s222 = smul.u32 32, %s15
      %v223 = vld [vmem:[%s209] sm:$0xff]
      %v224 = vld [vmem:[%s209 + $0x8] sm:$0xff]
      %v225 = vld [vmem:[%s209 + $0x10] sm:$0xff]
      %v226 = vld [vmem:[%s209 + $0x18] sm:$0xff]
      %v227 = vld [vmem:[%s209 + $0x20] sm:$0xff]
      %v228 = vld [vmem:[%s209 + $0x28] sm:$0xff]
      %v229 = vld [vmem:[%s209 + $0x30] sm:$0xff]
      %v230 = vld [vmem:[%s209 + $0x38] sm:$0xff]
      %v231 = vld [vmem:[%s209 + $0x40] sm:$0xff]
      %v232 = vld [vmem:[%s209 + $0x48] sm:$0xff]
      %v233 = vld [vmem:[%s209 + $0x50] sm:$0xff]
      %v234 = vld [vmem:[%s209 + $0x58] sm:$0xff]
      %v235 = vld [vmem:[%s209 + $0x60] sm:$0xff]
      %v236 = vld [vmem:[%s209 + $0x68] sm:$0xff]
      %v237 = vld [vmem:[%s209 + $0x70] sm:$0xff]
      %v238 = vld [vmem:[%s209 + $0x78] sm:$0xff]
      %v239 = vld [vmem:[%s209 + $0x80] sm:$0xff]
      %v240 = vld [vmem:[%s209 + $0x88] sm:$0xff]
      %v241 = vld [vmem:[%s209 + $0x90] sm:$0xff]
      %v242 = vld [vmem:[%s209 + $0x98] sm:$0xff]
      %v243 = vld [vmem:[%s209 + $0xa0] sm:$0xff]
      %v244 = vld [vmem:[%s209 + $0xa8] sm:$0xff]
      %v245 = vld [vmem:[%s209 + $0xb0] sm:$0xff]
      %v246 = vld [vmem:[%s209 + $0xb8] sm:$0xff]
      %v247 = vld [vmem:[%s209 + $0xc0] sm:$0xff]
      %v248 = vld [vmem:[%s209 + $0xc8] sm:$0xff]
      %v249 = vld [vmem:[%s209 + $0xd0] sm:$0xff]
      %v250 = vld [vmem:[%s209 + $0xd8] sm:$0xff]
      %v251 = vld [vmem:[%s209 + $0xe0] sm:$0xff]
      %v252 = vld [vmem:[%s209 + $0xe8] sm:$0xff]
      %v253 = vld [vmem:[%s209 + $0xf0] sm:$0xff]
      %v254 = vld [vmem:[%s209 + $0xf8] sm:$0xff]
      %v255 = vld [vmem:[%s1] sm:$0x1]
      %v257 = vlaneseq
      %v258 = vshrl.u32 %v257, 7
      %v259 = vsub.s32 0, %v258
      %v260 = vrot.slane %v255, %v259
      %v262 = vmul.f32 %v223, %v260
      %v263 = vmul.f32 %v224, %v260
      %v264 = vmul.f32 %v225, %v260
      %v265 = vmul.f32 %v226, %v260
      %v266 = vmul.f32 %v227, %v260
      %v267 = vmul.f32 %v228, %v260
      %v268 = vmul.f32 %v229, %v260
      %v269 = vmul.f32 %v230, %v260
      %v270 = vmul.f32 %v231, %v260
      %v271 = vmul.f32 %v232, %v260
      %v272 = vmul.f32 %v233, %v260
      %v273 = vmul.f32 %v234, %v260
      %v274 = vmul.f32 %v235, %v260
      %v275 = vmul.f32 %v236, %v260
      %v276 = vmul.f32 %v237, %v260
      %v277 = vmul.f32 %v238, %v260
      %v278 = vmul.f32 %v239, %v260
      %v279 = vmul.f32 %v240, %v260
      %v280 = vmul.f32 %v241, %v260
      %v281 = vmul.f32 %v242, %v260
      %v282 = vmul.f32 %v243, %v260
      %v283 = vmul.f32 %v244, %v260
      %v284 = vmul.f32 %v245, %v260
      %v285 = vmul.f32 %v246, %v260
      %v286 = vmul.f32 %v247, %v260
      %v287 = vmul.f32 %v248, %v260
      %v288 = vmul.f32 %v249, %v260
      %v289 = vmul.f32 %v250, %v260
      %v290 = vmul.f32 %v251, %v260
      %v291 = vmul.f32 %v252, %v260
      %v292 = vmul.f32 %v253, %v260
      %v293 = vmul.f32 %v254, %v260
      %v294 = vld [vmem:[%s2] sm:$0x1]
      %v296 = vlaneseq
      %v297 = vshrl.u32 %v296, 7
      %v298 = vsub.s32 0, %v297
      %v299 = vrot.slane %v294, %v298
      %v301 = vadd.f32 %v262, %v299
      %v302 = vadd.f32 %v263, %v299
      %v303 = vadd.f32 %v264, %v299
      %v304 = vadd.f32 %v265, %v299
      %v305 = vadd.f32 %v266, %v299
      %v306 = vadd.f32 %v267, %v299
      %v307 = vadd.f32 %v268, %v299
      %v308 = vadd.f32 %v269, %v299
      %v309 = vadd.f32 %v270, %v299
      %v310 = vadd.f32 %v271, %v299
      %v311 = vadd.f32 %v272, %v299
      %v312 = vadd.f32 %v273, %v299
      %v313 = vadd.f32 %v274, %v299
      %v314 = vadd.f32 %v275, %v299
      %v315 = vadd.f32 %v276, %v299
      %v316 = vadd.f32 %v277, %v299
      %v317 = vadd.f32 %v278, %v299
      %v318 = vadd.f32 %v279, %v299
      %v319 = vadd.f32 %v280, %v299
      %v320 = vadd.f32 %v281, %v299
      %v321 = vadd.f32 %v282, %v299
      %v322 = vadd.f32 %v283, %v299
      %v323 = vadd.f32 %v284, %v299
      %v324 = vadd.f32 %v285, %v299
      %v325 = vadd.f32 %v286, %v299
      %v326 = vadd.f32 %v287, %v299
      %v327 = vadd.f32 %v288, %v299
      %v328 = vadd.f32 %v289, %v299
      %v329 = vadd.f32 %v290, %v299
      %v330 = vadd.f32 %v291, %v299
      %v331 = vadd.f32 %v292, %v299
      %v332 = vadd.f32 %v293, %v299
      %v333 = vld [vmem:[%s215] sm:$0xff]
      %v334 = vld [vmem:[%s215 + $0x8] sm:$0xff]
      %v335 = vld [vmem:[%s215 + $0x10] sm:$0xff]
      %v336 = vld [vmem:[%s215 + $0x18] sm:$0xff]
      %v337 = vld [vmem:[%s215 + $0x20] sm:$0xff]
      %v338 = vld [vmem:[%s215 + $0x28] sm:$0xff]
      %v339 = vld [vmem:[%s215 + $0x30] sm:$0xff]
      %v340 = vld [vmem:[%s215 + $0x38] sm:$0xff]
      %v341 = vld [vmem:[%s215 + $0x40] sm:$0xff]
      %v342 = vld [vmem:[%s215 + $0x48] sm:$0xff]
      %v343 = vld [vmem:[%s215 + $0x50] sm:$0xff]
      %v344 = vld [vmem:[%s215 + $0x58] sm:$0xff]
      %v345 = vld [vmem:[%s215 + $0x60] sm:$0xff]
      %v346 = vld [vmem:[%s215 + $0x68] sm:$0xff]
      %v347 = vld [vmem:[%s215 + $0x70] sm:$0xff]
      %v348 = vld [vmem:[%s215 + $0x78] sm:$0xff]
      %v349 = vld [vmem:[%s215 + $0x80] sm:$0xff]
      %v350 = vld [vmem:[%s215 + $0x88] sm:$0xff]
      %v351 = vld [vmem:[%s215 + $0x90] sm:$0xff]
      %v352 = vld [vmem:[%s215 + $0x98] sm:$0xff]
      %v353 = vld [vmem:[%s215 + $0xa0] sm:$0xff]
      %v354 = vld [vmem:[%s215 + $0xa8] sm:$0xff]
      %v355 = vld [vmem:[%s215 + $0xb0] sm:$0xff]
      %v356 = vld [vmem:[%s215 + $0xb8] sm:$0xff]
      %v357 = vld [vmem:[%s215 + $0xc0] sm:$0xff]
      %v358 = vld [vmem:[%s215 + $0xc8] sm:$0xff]
      %v359 = vld [vmem:[%s215 + $0xd0] sm:$0xff]
      %v360 = vld [vmem:[%s215 + $0xd8] sm:$0xff]
      %v361 = vld [vmem:[%s215 + $0xe0] sm:$0xff]
      %v362 = vld [vmem:[%s215 + $0xe8] sm:$0xff]
      %v363 = vld [vmem:[%s215 + $0xf0] sm:$0xff]
      %v364 = vld [vmem:[%s215 + $0xf8] sm:$0xff]
      %v365 = vadd.f32 %v301, %v333
      %v366 = vadd.f32 %v302, %v334
      %v367 = vadd.f32 %v303, %v335
      %v368 = vadd.f32 %v304, %v336
      %v369 = vadd.f32 %v305, %v337
      %v370 = vadd.f32 %v306, %v338
      %v371 = vadd.f32 %v307, %v339
      %v372 = vadd.f32 %v308, %v340
      %v373 = vadd.f32 %v309, %v341
      %v374 = vadd.f32 %v310, %v342
      %v375 = vadd.f32 %v311, %v343
      %v376 = vadd.f32 %v312, %v344
      %v377 = vadd.f32 %v313, %v345
      %v378 = vadd.f32 %v314, %v346
      %v379 = vadd.f32 %v315, %v347
      %v380 = vadd.f32 %v316, %v348
      %v381 = vadd.f32 %v317, %v349
      %v382 = vadd.f32 %v318, %v350
      %v383 = vadd.f32 %v319, %v351
      %v384 = vadd.f32 %v320, %v352
      %v385 = vadd.f32 %v321, %v353
      %v386 = vadd.f32 %v322, %v354
      %v387 = vadd.f32 %v323, %v355
      %v388 = vadd.f32 %v324, %v356
      %v389 = vadd.f32 %v325, %v357
      %v390 = vadd.f32 %v326, %v358
      %v391 = vadd.f32 %v327, %v359
      %v392 = vadd.f32 %v328, %v360
      %v393 = vadd.f32 %v329, %v361
      %v394 = vadd.f32 %v330, %v362
      %v395 = vadd.f32 %v331, %v363
      %v396 = vadd.f32 %v332, %v364
      %v397 = vmax.f32 %v365, 0.0
      %v398 = vmax.f32 %v366, 0.0
      %v399 = vmax.f32 %v367, 0.0
      %v400 = vmax.f32 %v368, 0.0
      %v401 = vmax.f32 %v369, 0.0
      %v402 = vmax.f32 %v370, 0.0
      %v403 = vmax.f32 %v371, 0.0
      %v404 = vmax.f32 %v372, 0.0
      %v405 = vmax.f32 %v373, 0.0
      %v406 = vmax.f32 %v374, 0.0
      %v407 = vmax.f32 %v375, 0.0
      %v408 = vmax.f32 %v376, 0.0
      %v409 = vmax.f32 %v377, 0.0
      %v410 = vmax.f32 %v378, 0.0
      %v411 = vmax.f32 %v379, 0.0
      %v412 = vmax.f32 %v380, 0.0
      %v413 = vmax.f32 %v381, 0.0
      %v414 = vmax.f32 %v382, 0.0
      %v415 = vmax.f32 %v383, 0.0
      %v416 = vmax.f32 %v384, 0.0
      %v417 = vmax.f32 %v385, 0.0
      %v418 = vmax.f32 %v386, 0.0
      %v419 = vmax.f32 %v387, 0.0
      %v420 = vmax.f32 %v388, 0.0
      %v421 = vmax.f32 %v389, 0.0
      %v422 = vmax.f32 %v390, 0.0
      %v423 = vmax.f32 %v391, 0.0
      %v424 = vmax.f32 %v392, 0.0
      %v425 = vmax.f32 %v393, 0.0
      %v426 = vmax.f32 %v394, 0.0
      %v427 = vmax.f32 %v395, 0.0
      %v428 = vmax.f32 %v396, 0.0
      %429 = vst [vmem:[%s221] sm:$0xff] %v397
      %430 = vst [vmem:[%s221 + $0x8] sm:$0xff] %v398
      %431 = vst [vmem:[%s221 + $0x10] sm:$0xff] %v399
      %432 = vst [vmem:[%s221 + $0x18] sm:$0xff] %v400
      %433 = vst [vmem:[%s221 + $0x20] sm:$0xff] %v401
      %434 = vst [vmem:[%s221 + $0x28] sm:$0xff] %v402
      %435 = vst [vmem:[%s221 + $0x30] sm:$0xff] %v403
      %436 = vst [vmem:[%s221 + $0x38] sm:$0xff] %v404
      %437 = vst [vmem:[%s221 + $0x40] sm:$0xff] %v405
      %438 = vst [vmem:[%s221 + $0x48] sm:$0xff] %v406
      %439 = vst [vmem:[%s221 + $0x50] sm:$0xff] %v407
      %440 = vst [vmem:[%s221 + $0x58] sm:$0xff] %v408
      %441 = vst [vmem:[%s221 + $0x60] sm:$0xff] %v409
      %442 = vst [vmem:[%s221 + $0x68] sm:$0xff] %v410
      %443 = vst [vmem:[%s221 + $0x70] sm:$0xff] %v411
      %444 = vst [vmem:[%s221 + $0x78] sm:$0xff] %v412
      %445 = vst [vmem:[%s221 + $0x80] sm:$0xff] %v413
      %446 = vst [vmem:[%s221 + $0x88] sm:$0xff] %v414
      %447 = vst [vmem:[%s221 + $0x90] sm:$0xff] %v415
      %448 = vst [vmem:[%s221 + $0x98] sm:$0xff] %v416
      %449 = vst [vmem:[%s221 + $0xa0] sm:$0xff] %v417
      %450 = vst [vmem:[%s221 + $0xa8] sm:$0xff] %v418
      %451 = vst [vmem:[%s221 + $0xb0] sm:$0xff] %v419
      %452 = vst [vmem:[%s221 + $0xb8] sm:$0xff] %v420
      %453 = vst [vmem:[%s221 + $0xc0] sm:$0xff] %v421
      %454 = vst [vmem:[%s221 + $0xc8] sm:$0xff] %v422
      %455 = vst [vmem:[%s221 + $0xd0] sm:$0xff] %v423
      %456 = vst [vmem:[%s221 + $0xd8] sm:$0xff] %v424
      %457 = vst [vmem:[%s221 + $0xe0] sm:$0xff] %v425
      %458 = vst [vmem:[%s221 + $0xe8] sm:$0xff] %v426
      %459 = vst [vmem:[%s221 + $0xf0] sm:$0xff] %v427
      %460 = vst [vmem:[%s221 + $0xf8] sm:$0xff] %v428
      %s461 = smul.u32 32, %s15
      %p462 = scmp.lt.s32.totalorder %s461, 63
      %s463 = scalar_select %p462, %s461, 63
      %s464 = smul.addr %s463, 8
      %s465 = scalar_lea.vmem %s4, %s464
      // Predicated region
      $region37: #{basic_block_forward.5} parent=35 // pred_check
        %p466 = pneg %p127
      $region38: #{basic_block_forward.5} parent=35 // pred_check_branch
        %468 = sbr.rel (%p466) target = $region40
      $region39: #{basic_block_forward.5} parent=35 // pred_region
        %s469 = smul.u32 32, %s15
      $region40: #{basic_block_forward.5} parent=35 // pred_fallthru
        _
    $region36: #{basic_block_forward.5} parent=5 // pred_fallthru
      _
    %p470 = scmp.le.s32.totalorder 2, %s10
    // Predicated region
    $region41: #{basic_block_forward.5} parent=5 // pred_check
      %p471 = pneg %p470
    $region42: #{basic_block_forward.5} parent=5 // pred_check_branch
      %473 = sbr.rel (%p471) target = $region44
    $region43: #{basic_block_forward.5} parent=5 // pred_region
      %s474 = ssub.s32 %s10, 2
      // Predicated region
      $region45: #{basic_block_forward.5} parent=43 // pred_check
        %p475 = pneg %p133
      $region46: #{basic_block_forward.5} parent=43 // pred_check_branch
        %477 = sbr.rel (%p475) target = $region48
      $region47: #{basic_block_forward.5} parent=43 // pred_region
        %s478 = smul.u32 32, %s16
        %p479 = scmp.lt.s32.totalorder %s478, 63
        %s480 = scalar_select %p479, %s478, 63
        %s481 = smul.addr %s480, 8
        %s482 = scalar_lea.vmem %s4, %s481
      $region48: #{basic_block_forward.5} parent=43 // pred_fallthru
        _
    $region44: #{basic_block_forward.5} parent=5 // pred_fallthru
      _
  $region6: #{basic_block_forward.5} parent=0 // loop_footer
    %s14 = sadd.s32 1, %s10
  $region7: #{basic_block_forward.5} parent=0 // loop_footer_branch
    %9 = sbr.rel target = $region3
  $region8: #{basic_block_forward.5} parent=0 // loop_exit
    _

// kernel: basic_block_forward.3
$region0: #{basic_block_forward.3}
  #allocation0 [shape = 'u32[]', space=smem, size = 0x4, offset = 0x4, fixed_abs, tag = 'smem constant byte address 0x4 - core index']
  #allocation1 [shape = 'u32[144,128]{1,0:T(1,128)}', space=vmem, size = 0x12000, scoped, tag = 'internal scratch']
  #allocation2 [shape = 'bf16[18,18,128]{2,1,0:T(8,128)(2,1)}', space=vmem, size = 0x1b000, scoped, tag = 'scratch operand']
  %s0 = inlined_call_operand.vmem [shape: f32[512,128], index: 0, kind: input, shape index: {}]
  %s1 = inlined_call_operand.vmem [shape: bf16[1152,128], index: 1, kind: input, shape index: {}]
  %s2 = inlined_call_operand.vmem [shape: f32[512,128], index: 2, kind: output, shape index: {0}]
  %s3 = inlined_call_operand.vmem [shape: f32[2,2,128], index: 3, kind: output, shape index: {1}]
  %4 = xla_tuple %s2, %s3
  %s5 = sld [smem:[#allocation0]]
  $region49: #{basic_block_forward.3} parent=0
    _
  %s7 = ssub.s32 1, %s5
  %s8 = scalar_select 0, %s7, %s5
  loop: start=0, step=1, limit=4
  $region2: #{basic_block_forward.3} parent=0 // loop_pre_header
    _
  $region3: #{basic_block_forward.3} parent=0 // loop_header
    %s10 = sphi 0, %s14
    %p11 = scmp.ge.s32.totalorder %s10, 4
    %s20 = sphi 0, %s22
    %s23 = sphi 0, %s20
    %s24 = sphi 0, %s23
    %s40 = sphi 0, %s24
    %s44 = sphi 0, %s44
    %s46 = sphi 0, %s44
    %s47 = sphi 0, %s46
    %s61 = sphi 0, %s47
    %s67 = sphi 0, %s69
    %s70 = sphi 0, %s67
    %s71 = sphi 0, %s70
    %s87 = sphi 0, %s71
    %s93 = sphi 0, %s95
    %s96 = sphi 0, %s93
    %s97 = sphi 0, %s96
    %s113 = sphi 0, %s97
  $region4: #{basic_block_forward.3} parent=0 // loop_header_branch
    %13 = sbr.rel (%p11) target = $region8
  $region5: #{basic_block_forward.3} parent=0 // loop_body
    %s15 = ssub.s32 %s10, 1
    %s16 = ssub.s32 %s10, 2
    %s17 = sadd.s32 %s10, 1
    %s18 = ssub.s32 %s10, %s17
    %p19 = scmp.eq.s32.totalorder %s18, 0
    %s21 = sadd.s32 %s20, 1
    %s22 = scalar_select %p19, %s20, %s21
    %p25 = pneg %p19
    %p26 = scmp.eq.s32.totalorder %s10, 1
    %p27 = por %p25, %p26
    %p28 = scmp.ne.s32.totalorder %s20, %s23
    %p29 = scmp.eq.s32.totalorder %s10, 0
    %p30 = por %p28, %p29
    %p31 = scmp.ne.s32.totalorder %s20, %s23
    %p32 = scmp.eq.s32.totalorder %s15, 1
    %p33 = por %p31, %p32
    %p34 = scmp.ne.s32.totalorder %s23, %s24
    %p35 = scmp.eq.s32.totalorder %s15, 0
    %p36 = por %p34, %p35
    %p37 = scmp.ne.s32.totalorder %s23, %s24
    %p38 = scmp.eq.s32.totalorder %s16, 1
    %p39 = por %p37, %p38
    %p41 = scmp.ne.s32.totalorder %s24, %s40
    %p42 = scmp.eq.s32.totalorder %s16, 0
    %p43 = por %p41, %p42
    %s45 = sadd.s32 %s44, 1
    %p48 = scmp.eq.s32.totalorder %s10, 1
    %p49 = scmp.ne.s32.totalorder %s44, %s46
    %p50 = scmp.eq.s32.totalorder %s10, 0
    %p51 = por %p49, %p50
    %p52 = scmp.ne.s32.totalorder %s44, %s46
    %p53 = scmp.eq.s32.totalorder %s15, 1
    %p54 = por %p52, %p53
    %p55 = scmp.ne.s32.totalorder %s46, %s47
    %p56 = scmp.eq.s32.totalorder %s15, 0
    %p57 = por %p55, %p56
    %p58 = scmp.ne.s32.totalorder %s46, %s47
    %p59 = scmp.eq.s32.totalorder %s16, 1
    %p60 = por %p58, %p59
    %p62 = scmp.ne.s32.totalorder %s47, %s61
    %p63 = scmp.eq.s32.totalorder %s16, 0
    %p64 = por %p62, %p63
    %s65 = ssub.s32 %s10, %s17
    %p66 = scmp.eq.s32.totalorder %s65, 0
    %s68 = sadd.s32 %s67, 1
    %s69 = scalar_select %p66, %s67, %s68
    %p72 = pneg %p66
    %p73 = scmp.eq.s32.totalorder %s10, 1
    %p74 = por %p72, %p73
    %p75 = scmp.ne.s32.totalorder %s67, %s70
    %p76 = scmp.eq.s32.totalorder %s10, 0
    %p77 = por %p75, %p76
    %p78 = scmp.ne.s32.totalorder %s67, %s70
    %p79 = scmp.eq.s32.totalorder %s15, 1
    %p80 = por %p78, %p79
    %p81 = scmp.ne.s32.totalorder %s70, %s71
    %p82 = scmp.eq.s32.totalorder %s15, 0
    %p83 = por %p81, %p82
    %p84 = scmp.ne.s32.totalorder %s70, %s71
    %p85 = scmp.eq.s32.totalorder %s16, 1
    %p86 = por %p84, %p85
    %p88 = scmp.ne.s32.totalorder %s71, %s87
    %p89 = scmp.eq.s32.totalorder %s16, 0
    %p90 = por %p88, %p89
    %s91 = ssub.s32 %s10, %s17
    %p92 = scmp.eq.s32.totalorder %s91, 0
    %s94 = sadd.s32 %s93, 1
    %s95 = scalar_select %p92, %s93, %s94
    %p98 = pneg %p92
    %p99 = scmp.eq.s32.totalorder %s10, 1
    %p100 = por %p98, %p99
    %p101 = scmp.ne.s32.totalorder %s93, %s96
    %p102 = scmp.eq.s32.totalorder %s10, 0
    %p103 = por %p101, %p102
    %p104 = scmp.ne.s32.totalorder %s93, %s96
    %p105 = scmp.eq.s32.totalorder %s15, 1
    %p106 = por %p104, %p105
    %p107 = scmp.ne.s32.totalorder %s96, %s97
    %p108 = scmp.eq.s32.totalorder %s15, 0
    %p109 = por %p107, %p108
    %p110 = scmp.ne.s32.totalorder %s96, %s97
    %p111 = scmp.eq.s32.totalorder %s16, 1
    %p112 = por %p110, %p111
    %p114 = scmp.ne.s32.totalorder %s97, %s113
    %p115 = scmp.eq.s32.totalorder %s16, 0
    %p116 = por %p114, %p115
    %p117 = scmp.le.s32.totalorder 1, %s10
    %p118 = scmp.lt.s32.totalorder %s10, 3
    %p119 = pnand %p117, %p118
    %p120 = pneg %p119
    // Predicated region
    $region9: #{basic_block_forward.3} parent=5 // pred_check
      _
    $region10: #{basic_block_forward.3} parent=5 // pred_check_branch
      %122 = sbr.rel (%p119) target = $region12
    $region11: #{basic_block_forward.3} parent=5 // pred_region
      %s123 = ssub.s32 %s10, 1
      // Predicated region
      $region13: #{basic_block_forward.3} parent=11 // pred_check
        %p124 = pneg %p57
      $region14: #{basic_block_forward.3} parent=11 // pred_check_branch
        %126 = sbr.rel (%p124) target = $region16
      $region15: #{basic_block_forward.3} parent=11 // pred_region
        _
      $region16: #{basic_block_forward.3} parent=11 // pred_fallthru
        _
    $region12: #{basic_block_forward.3} parent=5 // pred_fallthru
      _
    %p127 = scmp.lt.s32.totalorder %s10, 2
    // Predicated region
    $region17: #{basic_block_forward.3} parent=5 // pred_check
      %p128 = pneg %p127
    $region18: #{basic_block_forward.3} parent=5 // pred_check_branch
      %130 = sbr.rel (%p128) target = $region20
    $region19: #{basic_block_forward.3} parent=5 // pred_region
      // Predicated region
      $region21: #{basic_block_forward.3} parent=19 // pred_check
        %p131 = pneg %p30
      $region22: #{basic_block_forward.3} parent=19 // pred_check_branch
        %133 = sbr.rel (%p131) target = $region24
      $region23: #{basic_block_forward.3} parent=19 // pred_region
        %s134 = smul.u32 32, %s10
        %p135 = scmp.lt.s32.totalorder %s134, 63
        %s136 = scalar_select %p135, %s134, 63
        %s137 = smul.addr %s136, 8
        %s138 = scalar_lea.vmem %s0, %s137
        %s139 = smul.u32 32, %s10
      $region24: #{basic_block_forward.3} parent=19 // pred_fallthru
        _
    $region20: #{basic_block_forward.3} parent=5 // pred_fallthru
      _
    %p140 = scmp.le.s32.totalorder 1, %s10
    %p141 = scmp.lt.s32.totalorder %s10, 3
    %p142 = pnand %p140, %p141
    %p143 = pneg %p142
    // Predicated region
    $region25: #{basic_block_forward.3} parent=5 // pred_check
      _
    $region26: #{basic_block_forward.3} parent=5 // pred_check_branch
      %145 = sbr.rel (%p142) target = $region28
    $region27: #{basic_block_forward.3} parent=5 // pred_region
      %s146 = ssub.s32 %s10, 1
      %s147 = smul.u32 32, %s15
      %p148 = scmp.lt.s32.totalorder %s147, 63
      %s149 = scalar_select %p148, %s147, 63
      %s150 = smul.addr %s149, 8
      %s151 = scalar_lea.vmem %s0, %s150
      %p152 = pneg %p36
      %p153 = pneg %p33
      %p154 = pneg %p57
      %p155 = pneg %p54
      %p156 = pneg %p83
      %p157 = pneg %p80
      %s158 = smul.u32 32, %s15
      %p159 = scmp.lt.s32.totalorder %s158, 63
      %s160 = scalar_select %p159, %s158, 63
      %s161 = smul.addr %s160, 8
      %s162 = scalar_lea.vmem %s2, %s161
      %p163 = pneg %p109
      %p164 = pneg %p106
      %p165 = scmp.lt.s32.totalorder %s15, 1
      %s166 = scalar_select %p165, %s15, 1
      %s167 = smul.addr %s166, 2
      %s168 = scalar_lea.vmem %s3, %s167
      %s169 = smul.u32 32, %s15
      %p170 = scmp.lt.s32.totalorder %s169, 63
      %s171 = scalar_select %p170, %s169, 63
      %s172 = smul.addr %s171, 8
      %s173 = scalar_lea.vmem %s0, %s172
      %s174 = smul.u32 32, %s15
      %s175 = smul.u32 32, %s15
      %p176 = scmp.lt.s32.totalorder %s175, 63
      %s177 = scalar_select %p176, %s175, 63
      %s178 = smul.addr %s177, 8
      %s179 = scalar_lea.vmem %s2, %s178
      %s180 = smul.u32 32, %s15
      %p181 = scmp.lt.s32.totalorder %s15, 1
      %s182 = scalar_select %p181, %s15, 1
      %s183 = smul.addr %s182, 2
      %s184 = scalar_lea.vmem %s3, %s183
      %v186 = vld [vmem:[%s173] sm:$0xff]
      %v187 = vld [vmem:[%s173 + $0x8] sm:$0xff]
      %v188 = vld [vmem:[%s173 + $0x10] sm:$0xff]
      %v189 = vld [vmem:[%s173 + $0x18] sm:$0xff]
      %v190 = vld [vmem:[%s173 + $0x20] sm:$0xff]
      %v191 = vld [vmem:[%s173 + $0x28] sm:$0xff]
      %v192 = vld [vmem:[%s173 + $0x30] sm:$0xff]
      %v193 = vld [vmem:[%s173 + $0x38] sm:$0xff]
      %v194 = vld [vmem:[%s173 + $0x40] sm:$0xff]
      %v195 = vld [vmem:[%s173 + $0x48] sm:$0xff]
      %v196 = vld [vmem:[%s173 + $0x50] sm:$0xff]
      %v197 = vld [vmem:[%s173 + $0x58] sm:$0xff]
      %v198 = vld [vmem:[%s173 + $0x60] sm:$0xff]
      %v199 = vld [vmem:[%s173 + $0x68] sm:$0xff]
      %v200 = vld [vmem:[%s173 + $0x70] sm:$0xff]
      %v201 = vld [vmem:[%s173 + $0x78] sm:$0xff]
      %v202 = vld [vmem:[%s173 + $0x80] sm:$0xff]
      %v203 = vld [vmem:[%s173 + $0x88] sm:$0xff]
      %v204 = vld [vmem:[%s173 + $0x90] sm:$0xff]
      %v205 = vld [vmem:[%s173 + $0x98] sm:$0xff]
      %v206 = vld [vmem:[%s173 + $0xa0] sm:$0xff]
      %v207 = vld [vmem:[%s173 + $0xa8] sm:$0xff]
      %v208 = vld [vmem:[%s173 + $0xb0] sm:$0xff]
      %v209 = vld [vmem:[%s173 + $0xb8] sm:$0xff]
      %v210 = vld [vmem:[%s173 + $0xc0] sm:$0xff]
      %v211 = vld [vmem:[%s173 + $0xc8] sm:$0xff]
      %v212 = vld [vmem:[%s173 + $0xd0] sm:$0xff]
      %v213 = vld [vmem:[%s173 + $0xd8] sm:$0xff]
      %v214 = vld [vmem:[%s173 + $0xe0] sm:$0xff]
      %v215 = vld [vmem:[%s173 + $0xe8] sm:$0xff]
      %v216 = vld [vmem:[%s173 + $0xf0] sm:$0xff]
      %v217 = vld [vmem:[%s173 + $0xf8] sm:$0xff]
      %218 = vst [vmem:[#allocation2] sm:$0xf] 0
      %219 = vst [vmem:[#allocation2 + $0x4] sm:$0xf] 0
      %220 = vst [vmem:[#allocation2 + $0x8] sm:$0x1] 0
      %s221 = scalar_lea.vmem [#allocation2], 204
      %222 = vst [vmem:[%s221] sm:$0xf] 0
      %223 = vst [vmem:[%s221 + $0x4] sm:$0xf] 0
      %224 = vst [vmem:[%s221 + $0x8] sm:$0x1] 0
      %s225 = scalar_lea.vmem [#allocation2], 12
      %vm226 = vcmask 1040384
      %vm227 = vsmask.f32 256
      %vm228 = vmand %vm226, %vm227
      %v229 = vld [vmem:[%s225] sm:$0x1]
      %v230 = vsel %vm228, 0, %v229
      %231 = vst [vmem:[%s225] sm:$0x1] %v230
      %v232 = vld [vmem:[%s225 + $0xc] sm:$0x1]
      %v233 = vsel %vm228, 0, %v232
      %234 = vst [vmem:[%s225 + $0xc] sm:$0x1] %v233
      %v235 = vld [vmem:[%s225 + $0x18] sm:$0x1]
      %v236 = vsel %vm228, 0, %v235
      %237 = vst [vmem:[%s225 + $0x18] sm:$0x1] %v236
      %v238 = vld [vmem:[%s225 + $0x24] sm:$0x1]
      %v239 = vsel %vm228, 0, %v238
      %240 = vst [vmem:[%s225 + $0x24] sm:$0x1] %v239
      %v241 = vld [vmem:[%s225 + $0x30] sm:$0x1]
      %v242 = vsel %vm228, 0, %v241
      %243 = vst [vmem:[%s225 + $0x30] sm:$0x1] %v242
      %v244 = vld [vmem:[%s225 + $0x3c] sm:$0x1]
      %v245 = vsel %vm228, 0, %v244
      %246 = vst [vmem:[%s225 + $0x3c] sm:$0x1] %v245
      %v247 = vld [vmem:[%s225 + $0x48] sm:$0x1]
      %v248 = vsel %vm228, 0, %v247
      %249 = vst [vmem:[%s225 + $0x48] sm:$0x1] %v248
      %v250 = vld [vmem:[%s225 + $0x54] sm:$0x1]
      %v251 = vsel %vm228, 0, %v250
      %252 = vst [vmem:[%s225 + $0x54] sm:$0x1] %v251
      %v253 = vld [vmem:[%s225 + $0x60] sm:$0x1]
      %v254 = vsel %vm228, 0, %v253
      %255 = vst [vmem:[%s225 + $0x60] sm:$0x1] %v254
      %v256 = vld [vmem:[%s225 + $0x6c] sm:$0x1]
      %v257 = vsel %vm228, 0, %v256
      %258 = vst [vmem:[%s225 + $0x6c] sm:$0x1] %v257
      %v259 = vld [vmem:[%s225 + $0x78] sm:$0x1]
      %v260 = vsel %vm228, 0, %v259
      %261 = vst [vmem:[%s225 + $0x78] sm:$0x1] %v260
      %v262 = vld [vmem:[%s225 + $0x84] sm:$0x1]
      %v263 = vsel %vm228, 0, %v262
      %264 = vst [vmem:[%s225 + $0x84] sm:$0x1] %v263
      %v265 = vld [vmem:[%s225 + $0x90] sm:$0x1]
      %v266 = vsel %vm228, 0, %v265
      %267 = vst [vmem:[%s225 + $0x90] sm:$0x1] %v266
      %v268 = vld [vmem:[%s225 + $0x9c] sm:$0x1]
      %v269 = vsel %vm228, 0, %v268
      %270 = vst [vmem:[%s225 + $0x9c] sm:$0x1] %v269
      %v271 = vld [vmem:[%s225 + $0xa8] sm:$0x1]
      %v272 = vsel %vm228, 0, %v271
      %273 = vst [vmem:[%s225 + $0xa8] sm:$0x1] %v272
      %v274 = vld [vmem:[%s225 + $0xb4] sm:$0x1]
      %v275 = vsel %vm228, 0, %v274
      %276 = vst [vmem:[%s225 + $0xb4] sm:$0x1] %v275
      %vm277 = vsmask.f32 7938
      %vm278 = vmand %vm226, %vm277
      %v279 = vld [vmem:[%s225 + $0x8] sm:$0x1]
      %v280 = vsel %vm278, 0, %v279
      %281 = vst [vmem:[%s225 + $0x8] sm:$0x1] %v280
      %v282 = vld [vmem:[%s225 + $0x14] sm:$0x1]
      %v283 = vsel %vm278, 0, %v282
      %284 = vst [vmem:[%s225 + $0x14] sm:$0x1] %v283
      %v285 = vld [vmem:[%s225 + $0x20] sm:$0x1]
      %v286 = vsel %vm278, 0, %v285
      %287 = vst [vmem:[%s225 + $0x20] sm:$0x1] %v286
      %v288 = vld [vmem:[%s225 + $0x2c] sm:$0x1]
      %v289 = vsel %vm278, 0, %v288
      %290 = vst [vmem:[%s225 + $0x2c] sm:$0x1] %v289
      %v291 = vld [vmem:[%s225 + $0x38] sm:$0x1]
      %v292 = vsel %vm278, 0, %v291
      %293 = vst [vmem:[%s225 + $0x38] sm:$0x1] %v292
      %v294 = vld [vmem:[%s225 + $0x44] sm:$0x1]
      %v295 = vsel %vm278, 0, %v294
      %296 = vst [vmem:[%s225 + $0x44] sm:$0x1] %v295
      %v297 = vld [vmem:[%s225 + $0x50] sm:$0x1]
      %v298 = vsel %vm278, 0, %v297
      %299 = vst [vmem:[%s225 + $0x50] sm:$0x1] %v298
      %v300 = vld [vmem:[%s225 + $0x5c] sm:$0x1]
      %v301 = vsel %vm278, 0, %v300
      %302 = vst [vmem:[%s225 + $0x5c] sm:$0x1] %v301
      %v303 = vld [vmem:[%s225 + $0x68] sm:$0x1]
      %v304 = vsel %vm278, 0, %v303
      %305 = vst [vmem:[%s225 + $0x68] sm:$0x1] %v304
      %v306 = vld [vmem:[%s225 + $0x74] sm:$0x1]
      %v307 = vsel %vm278, 0, %v306
      %308 = vst [vmem:[%s225 + $0x74] sm:$0x1] %v307
      %v309 = vld [vmem:[%s225 + $0x80] sm:$0x1]
      %v310 = vsel %vm278, 0, %v309
      %311 = vst [vmem:[%s225 + $0x80] sm:$0x1] %v310
      %v312 = vld [vmem:[%s225 + $0x8c] sm:$0x1]
      %v313 = vsel %vm278, 0, %v312
      %314 = vst [vmem:[%s225 + $0x8c] sm:$0x1] %v313
      %v315 = vld [vmem:[%s225 + $0x98] sm:$0x1]
      %v316 = vsel %vm278, 0, %v315
      %317 = vst [vmem:[%s225 + $0x98] sm:$0x1] %v316
      %v318 = vld [vmem:[%s225 + $0xa4] sm:$0x1]
      %v319 = vsel %vm278, 0, %v318
      %320 = vst [vmem:[%s225 + $0xa4] sm:$0x1] %v319
      %v321 = vld [vmem:[%s225 + $0xb0] sm:$0x1]
      %v322 = vsel %vm278, 0, %v321
      %323 = vst [vmem:[%s225 + $0xb0] sm:$0x1] %v322
      %v324 = vld [vmem:[%s225 + $0xbc] sm:$0x1]
      %v325 = vsel %vm278, 0, %v324
      %326 = vst [vmem:[%s225 + $0xbc] sm:$0x1] %v325
      %v327 = vpack.c.bf16 %v187, %v186
      %v328 = vpack.c.bf16 %v189, %v188
      %v329 = vpack.c.bf16 %v191, %v190
      %v330 = vpack.c.bf16 %v193, %v192
      %v331 = vpack.c.bf16 %v195, %v194
      %v332 = vpack.c.bf16 %v197, %v196
      %v333 = vpack.c.bf16 %v199, %v198
      %v334 = vpack.c.bf16 %v201, %v200
      %v335 = vpack.c.bf16 %v203, %v202
      %v336 = vpack.c.bf16 %v205, %v204
      %v337 = vpack.c.bf16 %v207, %v206
      %v338 = vpack.c.bf16 %v209, %v208
      %v339 = vpack.c.bf16 %v211, %v210
      %v340 = vpack.c.bf16 %v213, %v212
      %v341 = vpack.c.bf16 %v215, %v214
      %v342 = vpack.c.bf16 %v217, %v216
      %v359 = vunpack.c.l.b16 %v327
      %v360 = vunpack.c.h.b16 %v327
      %v361 = vunpack.c.l.b16 %v328
      %v362 = vunpack.c.h.b16 %v328
      %v363 = vunpack.c.l.b16 %v329
      %v364 = vunpack.c.h.b16 %v329
      %v365 = vunpack.c.l.b16 %v330
      %v366 = vunpack.c.h.b16 %v330
      %v367 = vunpack.c.l.b16 %v331
      %v368 = vunpack.c.h.b16 %v331
      %v369 = vunpack.c.l.b16 %v332
      %v370 = vunpack.c.h.b16 %v332
      %v371 = vunpack.c.l.b16 %v333
      %v372 = vunpack.c.h.b16 %v333
      %v373 = vunpack.c.l.b16 %v334
      %v374 = vunpack.c.h.b16 %v334
      %v375 = vunpack.c.l.b16 %v335
      %v376 = vunpack.c.h.b16 %v335
      %v377 = vunpack.c.l.b16 %v336
      %v378 = vunpack.c.h.b16 %v336
      %v379 = vunpack.c.l.b16 %v337
      %v380 = vunpack.c.h.b16 %v337
      %v381 = vunpack.c.l.b16 %v338
      %v382 = vunpack.c.h.b16 %v338
      %v383 = vunpack.c.l.b16 %v339
      %v384 = vunpack.c.h.b16 %v339
      %v385 = vunpack.c.l.b16 %v340
      %v386 = vunpack.c.h.b16 %v340
      %v387 = vunpack.c.l.b16 %v341
      %v388 = vunpack.c.h.b16 %v341
      %v389 = vunpack.c.l.b16 %v342
      %v390 = vunpack.c.h.b16 %v342
      %v391 = vpack.c.b16 %v359, %v359
      %v392 = vpack.c.b16 %v360, %v360
      %v393 = vpack.c.b16 %v361, %v361
      %v394 = vpack.c.b16 %v362, %v362
      %v395 = vpack.c.b16 %v363, %v363
      %v396 = vpack.c.b16 %v364, %v364
      %v397 = vpack.c.b16 %v365, %v365
      %v398 = vpack.c.b16 %v366, %v366
      %v399 = vpack.c.b16 %v367, %v367
      %v400 = vpack.c.b16 %v368, %v368
      %v401 = vpack.c.b16 %v369, %v369
      %v402 = vpack.c.b16 %v370, %v370
      %v403 = vpack.c.b16 %v371, %v371
      %v404 = vpack.c.b16 %v372, %v372
      %v405 = vpack.c.b16 %v373, %v373
      %v406 = vpack.c.b16 %v374, %v374
      %v407 = vpack.c.b16 %v375, %v375
      %v408 = vpack.c.b16 %v376, %v376
      %v409 = vpack.c.b16 %v377, %v377
      %v410 = vpack.c.b16 %v378, %v378
      %v411 = vpack.c.b16 %v379, %v379
      %v412 = vpack.c.b16 %v380, %v380
      %v413 = vpack.c.b16 %v381, %v381
      %v414 = vpack.c.b16 %v382, %v382
      %v415 = vpack.c.b16 %v383, %v383
      %v416 = vpack.c.b16 %v384, %v384
      %v417 = vpack.c.b16 %v385, %v385
      %v418 = vpack.c.b16 %v386, %v386
      %v419 = vpack.c.b16 %v387, %v387
      %v420 = vpack.c.b16 %v388, %v388
      %v421 = vpack.c.b16 %v389, %v389
      %v422 = vpack.c.b16 %v390, %v390
      %vm423 = vsmask.f32 4368
      %vm424 = vmor %vm227, %vm423
      %v426 = vshrl.u32 %v391, 16
      %v428 = vrot.slane %v426, 7
      %v429 = vshll.u32 %v391, 16
      %v431 = vor.u32 %v428, %v429
      %v432 = vrot.slane %v428, 4
      %v434 = vshrl.u32 %v392, 16
      %v436 = vrot.slane %v434, 7
      %v437 = vshll.u32 %v392, 16
      %v439 = vor.u32 %v436, %v437
      %v440 = vsel %vm424, %v432, %v439
      %v441 = vrot.slane %v436, 4
      %v443 = vshrl.u32 %v393, 16
      %v445 = vrot.slane %v443, 7
      %v446 = vshll.u32 %v393, 16
      %v448 = vor.u32 %v445, %v446
      %v449 = vrot.slane %v445, 4
      %v451 = vshrl.u32 %v394, 16
      %v453 = vrot.slane %v451, 7
      %v454 = vshll.u32 %v394, 16
      %v456 = vor.u32 %v453, %v454
      %v457 = vsel %vm424, %v449, %v456
      %v458 = vrot.slane %v453, 4
      %v460 = vshrl.u32 %v395, 16
      %v462 = vrot.slane %v460, 7
      %v463 = vshll.u32 %v395, 16
      %v465 = vor.u32 %v462, %v463
      %v466 = vrot.slane %v462, 4
      %v468 = vshrl.u32 %v396, 16
      %v470 = vrot.slane %v468, 7
      %v471 = vshll.u32 %v396, 16
      %v473 = vor.u32 %v470, %v471
      %v474 = vsel %vm424, %v466, %v473
      %v475 = vrot.slane %v470, 4
      %v477 = vshrl.u32 %v397, 16
      %v479 = vrot.slane %v477, 7
      %v480 = vshll.u32 %v397, 16
      %v482 = vor.u32 %v479, %v480
      %v483 = vrot.slane %v479, 4
      %v485 = vshrl.u32 %v398, 16
      %v487 = vrot.slane %v485, 7
      %v488 = vshll.u32 %v398, 16
      %v490 = vor.u32 %v487, %v488
      %v491 = vsel %vm424, %v483, %v490
      %v492 = vrot.slane %v487, 4
      %v494 = vshrl.u32 %v399, 16
      %v496 = vrot.slane %v494, 7
      %v497 = vshll.u32 %v399, 16
      %v499 = vor.u32 %v496, %v497
      %v500 = vrot.slane %v496, 4
      %v502 = vshrl.u32 %v400, 16
      %v504 = vrot.slane %v502, 7
      %v505 = vshll.u32 %v400, 16
      %v507 = vor.u32 %v504, %v505
      %v508 = vsel %vm424, %v500, %v507
      %v509 = vrot.slane %v504, 4
      %v511 = vshrl.u32 %v401, 16
      %v513 = vrot.slane %v511, 7
      %v514 = vshll.u32 %v401, 16
      %v516 = vor.u32 %v513, %v514
      %v517 = vrot.slane %v513, 4
      %v519 = vshrl.u32 %v402, 16
      %v521 = vrot.slane %v519, 7
      %v522 = vshll.u32 %v402, 16
      %v524 = vor.u32 %v521, %v522
      %v525 = vsel %vm424, %v517, %v524
      %v526 = vrot.slane %v521, 4
      %v528 = vshrl.u32 %v403, 16
      %v530 = vrot.slane %v528, 7
      %v531 = vshll.u32 %v403, 16
      %v533 = vor.u32 %v530, %v531
      %v534 = vrot.slane %v530, 4
      %v536 = vshrl.u32 %v404, 16
      %v538 = vrot.slane %v536, 7
      %v539 = vshll.u32 %v404, 16
      %v541 = vor.u32 %v538, %v539
      %v542 = vsel %vm424, %v534, %v541
      %v543 = vrot.slane %v538, 4
      %v545 = vshrl.u32 %v405, 16
      %v547 = vrot.slane %v545, 7
      %v548 = vshll.u32 %v405, 16
      %v550 = vor.u32 %v547, %v548
      %v551 = vrot.slane %v547, 4
      %v553 = vshrl.u32 %v406, 16
      %v555 = vrot.slane %v553, 7
      %v556 = vshll.u32 %v406, 16
      %v558 = vor.u32 %v555, %v556
      %v559 = vsel %vm424, %v551, %v558
      %v560 = vrot.slane %v555, 4
      %v562 = vshrl.u32 %v407, 16
      %v564 = vrot.slane %v562, 7
      %v565 = vshll.u32 %v407, 16
      %v567 = vor.u32 %v564, %v565
      %v568 = vrot.slane %v564, 4
      %v570 = vshrl.u32 %v408, 16
      %v572 = vrot.slane %v570, 7
      %v573 = vshll.u32 %v408, 16
      %v575 = vor.u32 %v572, %v573
      %v576 = vsel %vm424, %v568, %v575
      %v577 = vrot.slane %v572, 4
      %v579 = vshrl.u32 %v409, 16
      %v581 = vrot.slane %v579, 7
      %v582 = vshll.u32 %v409, 16
      %v584 = vor.u32 %v581, %v582
      %v585 = vrot.slane %v581, 4
      %v587 = vshrl.u32 %v410, 16
      %v589 = vrot.slane %v587, 7
      %v590 = vshll.u32 %v410, 16
      %v592 = vor.u32 %v589, %v590
      %v593 = vsel %vm424, %v585, %v592
      %v594 = vrot.slane %v589, 4
      %v596 = vshrl.u32 %v411, 16
      %v598 = vrot.slane %v596, 7
      %v599 = vshll.u32 %v411, 16
      %v601 = vor.u32 %v598, %v599
      %v602 = vrot.slane %v598, 4
      %v604 = vshrl.u32 %v412, 16
      %v606 = vrot.slane %v604, 7
      %v607 = vshll.u32 %v412, 16
      %v609 = vor.u32 %v606, %v607
      %v610 = vsel %vm424, %v602, %v609
      %v611 = vrot.slane %v606, 4
      %v613 = vshrl.u32 %v413, 16
      %v615 = vrot.slane %v613, 7
      %v616 = vshll.u32 %v413, 16
      %v618 = vor.u32 %v615, %v616
      %v619 = vrot.slane %v615, 4
      %v621 = vshrl.u32 %v414, 16
      %v623 = vrot.slane %v621, 7
      %v624 = vshll.u32 %v414, 16
      %v626 = vor.u32 %v623, %v624
      %v627 = vsel %vm424, %v619, %v626
      %v628 = vrot.slane %v623, 4
      %v630 = vshrl.u32 %v415, 16
      %v632 = vrot.slane %v630, 7
      %v633 = vshll.u32 %v415, 16
      %v635 = vor.u32 %v632, %v633
      %v636 = vrot.slane %v632, 4
      %v638 = vshrl.u32 %v416, 16
      %v640 = vrot.slane %v638, 7
      %v641 = vshll.u32 %v416, 16
      %v643 = vor.u32 %v640, %v641
      %v644 = vsel %vm424, %v636, %v643
      %v645 = vrot.slane %v640, 4
      %v647 = vshrl.u32 %v417, 16
      %v649 = vrot.slane %v647, 7
      %v650 = vshll.u32 %v417, 16
      %v652 = vor.u32 %v649, %v650
      %v653 = vrot.slane %v649, 4
      %v655 = vshrl.u32 %v418, 16
      %v657 = vrot.slane %v655, 7
      %v658 = vshll.u32 %v418, 16
      %v660 = vor.u32 %v657, %v658
      %v661 = vsel %vm424, %v653, %v660
      %v662 = vrot.slane %v657, 4
      %v664 = vshrl.u32 %v419, 16
      %v666 = vrot.slane %v664, 7
      %v667 = vshll.u32 %v419, 16
      %v669 = vor.u32 %v666, %v667
      %v670 = vrot.slane %v666, 4
      %v672 = vshrl.u32 %v420, 16
      %v674 = vrot.slane %v672, 7
      %v675 = vshll.u32 %v420, 16
      %v677 = vor.u32 %v674, %v675
      %v678 = vsel %vm424, %v670, %v677
      %v679 = vrot.slane %v674, 4
      %v681 = vshrl.u32 %v421, 16
      %v683 = vrot.slane %v681, 7
      %v684 = vshll.u32 %v421, 16
      %v686 = vor.u32 %v683, %v684
      %v687 = vrot.slane %v683, 4
      %v689 = vshrl.u32 %v422, 16
      %v691 = vrot.slane %v689, 7
      %v692 = vshll.u32 %v422, 16
      %v694 = vor.u32 %v691, %v692
      %v695 = vsel %vm424, %v687, %v694
      %v696 = vrot.slane %v691, 4
      %vm745 = vcmask 1043456
      %vm746 = vmand %vm745, %vm277
      %v747 = vld [vmem:[%s225] sm:$0xf]
      %v748 = vsel %vm746, %v431, %v747
      %749 = vst [vmem:[%s225] sm:$0xf] %v748
      %750 = vst [vmem:[%s225 + $0x4] sm:$0xf] %v440
      %v751 = vld [vmem:[%s225 + $0x8] sm:$0x1]
      %v752 = vsel %vm228, %v441, %v751
      %753 = vst [vmem:[%s225 + $0x8] sm:$0x1] %v752
      %v754 = vld [vmem:[%s225 + $0xc] sm:$0xf]
      %v755 = vsel %vm746, %v448, %v754
      %756 = vst [vmem:[%s225 + $0xc] sm:$0xf] %v755
      %757 = vst [vmem:[%s225 + $0x10] sm:$0xf] %v457
      %v758 = vld [vmem:[%s225 + $0x14] sm:$0x1]
      %v759 = vsel %vm228, %v458, %v758
      %760 = vst [vmem:[%s225 + $0x14] sm:$0x1] %v759
      %v761 = vld [vmem:[%s225 + $0x18] sm:$0xf]
      %v762 = vsel %vm746, %v465, %v761
      %763 = vst [vmem:[%s225 + $0x18] sm:$0xf] %v762
      %764 = vst [vmem:[%s225 + $0x1c] sm:$0xf] %v474
      %v765 = vld [vmem:[%s225 + $0x20] sm:$0x1]
      %v766 = vsel %vm228, %v475, %v765
      %767 = vst [vmem:[%s225 + $0x20] sm:$0x1] %v766
      %v768 = vld [vmem:[%s225 + $0x24] sm:$0xf]
      %v769 = vsel %vm746, %v482, %v768
      %770 = vst [vmem:[%s225 + $0x24] sm:$0xf] %v769
      %771 = vst [vmem:[%s225 + $0x28] sm:$0xf] %v491
      %v772 = vld [vmem:[%s225 + $0x2c] sm:$0x1]
      %v773 = vsel %vm228, %v492, %v772
      %774 = vst [vmem:[%s225 + $0x2c] sm:$0x1] %v773
      %v775 = vld [vmem:[%s225 + $0x30] sm:$0xf]
      %v776 = vsel %vm746, %v499, %v775
      %777 = vst [vmem:[%s225 + $0x30] sm:$0xf] %v776
      %778 = vst [vmem:[%s225 + $0x34] sm:$0xf] %v508
      %v779 = vld [vmem:[%s225 + $0x38] sm:$0x1]
      %v780 = vsel %vm228, %v509, %v779
      %781 = vst [vmem:[%s225 + $0x38] sm:$0x1] %v780
      %v782 = vld [vmem:[%s225 + $0x3c] sm:$0xf]
      %v783 = vsel %vm746, %v516, %v782
      %784 = vst [vmem:[%s225 + $0x3c] sm:$0xf] %v783
      %785 = vst [vmem:[%s225 + $0x40] sm:$0xf] %v525
      %v786 = vld [vmem:[%s225 + $0x44] sm:$0x1]
      %v787 = vsel %vm228, %v526, %v786
      %788 = vst [vmem:[%s225 + $0x44] sm:$0x1] %v787
      %v789 = vld [vmem:[%s225 + $0x48] sm:$0xf]
      %v790 = vsel %vm746, %v533, %v789
      %791 = vst [vmem:[%s225 + $0x48] sm:$0xf] %v790
      %792 = vst [vmem:[%s225 + $0x4c] sm:$0xf] %v542
      %v793 = vld [vmem:[%s225 + $0x50] sm:$0x1]
      %v794 = vsel %vm228, %v543, %v793
      %795 = vst [vmem:[%s225 + $0x50] sm:$0x1] %v794
      %v796 = vld [vmem:[%s225 + $0x54] sm:$0xf]
      %v797 = vsel %vm746, %v550, %v796
      %798 = vst [vmem:[%s225 + $0x54] sm:$0xf] %v797
      %799 = vst [vmem:[%s225 + $0x58] sm:$0xf] %v559
      %v800 = vld [vmem:[%s225 + $0x5c] sm:$0x1]
      %v801 = vsel %vm228, %v560, %v800
      %802 = vst [vmem:[%s225 + $0x5c] sm:$0x1] %v801
      %v803 = vld [vmem:[%s225 + $0x60] sm:$0xf]
      %v804 = vsel %vm746, %v567, %v803
      %805 = vst [vmem:[%s225 + $0x60] sm:$0xf] %v804
      %806 = vst [vmem:[%s225 + $0x64] sm:$0xf] %v576
      %v807 = vld [vmem:[%s225 + $0x68] sm:$0x1]
      %v808 = vsel %vm228, %v577, %v807
      %809 = vst [vmem:[%s225 + $0x68] sm:$0x1] %v808
      %v810 = vld [vmem:[%s225 + $0x6c] sm:$0xf]
      %v811 = vsel %vm746, %v584, %v810
      %812 = vst [vmem:[%s225 + $0x6c] sm:$0xf] %v811
      %813 = vst [vmem:[%s225 + $0x70] sm:$0xf] %v593
      %v814 = vld [vmem:[%s225 + $0x74] sm:$0x1]
      %v815 = vsel %vm228, %v594, %v814
      %816 = vst [vmem:[%s225 + $0x74] sm:$0x1] %v815
      %v817 = vld [vmem:[%s225 + $0x78] sm:$0xf]
      %v818 = vsel %vm746, %v601, %v817
      %819 = vst [vmem:[%s225 + $0x78] sm:$0xf] %v818
      %820 = vst [vmem:[%s225 + $0x7c] sm:$0xf] %v610
      %v821 = vld [vmem:[%s225 + $0x80] sm:$0x1]
      %v822 = vsel %vm228, %v611, %v821
      %823 = vst [vmem:[%s225 + $0x80] sm:$0x1] %v822
      %v824 = vld [vmem:[%s225 + $0x84] sm:$0xf]
      %v825 = vsel %vm746, %v618, %v824
      %826 = vst [vmem:[%s225 + $0x84] sm:$0xf] %v825
      %827 = vst [vmem:[%s225 + $0x88] sm:$0xf] %v627
      %v828 = vld [vmem:[%s225 + $0x8c] sm:$0x1]
      %v829 = vsel %vm228, %v628, %v828
      %830 = vst [vmem:[%s225 + $0x8c] sm:$0x1] %v829
      %v831 = vld [vmem:[%s225 + $0x90] sm:$0xf]
      %v832 = vsel %vm746, %v635, %v831
      %833 = vst [vmem:[%s225 + $0x90] sm:$0xf] %v832
      %834 = vst [vmem:[%s225 + $0x94] sm:$0xf] %v644
      %v835 = vld [vmem:[%s225 + $0x98] sm:$0x1]
      %v836 = vsel %vm228, %v645, %v835
      %837 = vst [vmem:[%s225 + $0x98] sm:$0x1] %v836
      %v838 = vld [vmem:[%s225 + $0x9c] sm:$0xf]
      %v839 = vsel %vm746, %v652, %v838
      %840 = vst [vmem:[%s225 + $0x9c] sm:$0xf] %v839
      %841 = vst [vmem:[%s225 + $0xa0] sm:$0xf] %v661
      %v842 = vld [vmem:[%s225 + $0xa4] sm:$0x1]
      %v843 = vsel %vm228, %v662, %v842
      %844 = vst [vmem:[%s225 + $0xa4] sm:$0x1] %v843
      %v845 = vld [vmem:[%s225 + $0xa8] sm:$0xf]
      %v846 = vsel %vm746, %v669, %v845
      %847 = vst [vmem:[%s225 + $0xa8] sm:$0xf] %v846
      %848 = vst [vmem:[%s225 + $0xac] sm:$0xf] %v678
      %v849 = vld [vmem:[%s225 + $0xb0] sm:$0x1]
      %v850 = vsel %vm228, %v679, %v849
      %851 = vst [vmem:[%s225 + $0xb0] sm:$0x1] %v850
      %v852 = vld [vmem:[%s225 + $0xb4] sm:$0xf]
      %v853 = vsel %vm746, %v686, %v852
      %854 = vst [vmem:[%s225 + $0xb4] sm:$0xf] %v853
      %855 = vst [vmem:[%s225 + $0xb8] sm:$0xf] %v695
      %v856 = vld [vmem:[%s225 + $0xbc] sm:$0x1]
      %v857 = vsel %vm228, %v696, %v856
      %858 = vst [vmem:[%s225 + $0xbc] sm:$0x1] %v857
      %v859 = vld [vmem:[#allocation2] sm:$0xf]
      %v860 = vld [vmem:[#allocation2 + $0x4] sm:$0xf]
      %v861 = vld [vmem:[#allocation2 + $0xc] sm:$0xf]
      %v862 = vld [vmem:[#allocation2 + $0x10] sm:$0xf]
      %v863 = vld [vmem:[#allocation2 + $0x18] sm:$0xf]
      %v864 = vld [vmem:[#allocation2 + $0x1c] sm:$0xf]
      %v865 = vld [vmem:[#allocation2 + $0x24] sm:$0xf]
      %v866 = vld [vmem:[#allocation2 + $0x28] sm:$0xf]
      %v867 = vld [vmem:[#allocation2 + $0x30] sm:$0xf]
      %v868 = vld [vmem:[#allocation2 + $0x34] sm:$0xf]
      %v869 = vld [vmem:[#allocation2 + $0x3c] sm:$0xf]
      %v870 = vld [vmem:[#allocation2 + $0x40] sm:$0xf]
      %v871 = vld [vmem:[#allocation2 + $0x48] sm:$0xf]
      %v872 = vld [vmem:[#allocation2 + $0x4c] sm:$0xf]
      %v873 = vld [vmem:[#allocation2 + $0x54] sm:$0xf]
      %v874 = vld [vmem:[#allocation2 + $0x58] sm:$0xf]
      %v875 = vld [vmem:[#allocation2 + $0x60] sm:$0xf]
      %v876 = vld [vmem:[#allocation2 + $0x64] sm:$0xf]
      %v877 = vld [vmem:[#allocation2 + $0x6c] sm:$0xf]
      %v878 = vld [vmem:[#allocation2 + $0x70] sm:$0xf]
      %v879 = vld [vmem:[#allocation2 + $0x78] sm:$0xf]
      %v880 = vld [vmem:[#allocation2 + $0x7c] sm:$0xf]
      %v881 = vld [vmem:[#allocation2 + $0x84] sm:$0xf]
      %v882 = vld [vmem:[#allocation2 + $0x88] sm:$0xf]
      %v883 = vld [vmem:[#allocation2 + $0x90] sm:$0xf]
      %v884 = vld [vmem:[#allocation2 + $0x94] sm:$0xf]
      %v885 = vld [vmem:[#allocation2 + $0x9c] sm:$0xf]
      %v886 = vld [vmem:[#allocation2 + $0xa0] sm:$0xf]
      %v887 = vld [vmem:[#allocation2 + $0xa8] sm:$0xf]
      %v888 = vld [vmem:[#allocation2 + $0xac] sm:$0xf]
      %v889 = vld [vmem:[#allocation2 + $0xb4] sm:$0xf]
      %v890 = vld [vmem:[#allocation2 + $0xb8] sm:$0xf]
      %v891 = vld [vmem:[%s1] sm:$0xf]
      %v892 = vld [vmem:[%s1 + $0x4] sm:$0xf]
      %v893 = vld [vmem:[%s1 + $0x8] sm:$0xf]
      %v894 = vld [vmem:[%s1 + $0xc] sm:$0xf]
      %v895 = vld [vmem:[%s1 + $0x10] sm:$0xf]
      %v896 = vld [vmem:[%s1 + $0x14] sm:$0xf]
      %v897 = vld [vmem:[%s1 + $0x18] sm:$0xf]
      %v898 = vld [vmem:[%s1 + $0x1c] sm:$0xf]
      %v899 = vld [vmem:[%s1 + $0x20] sm:$0xf]
      %v900 = vld [vmem:[%s1 + $0x24] sm:$0xf]
      %v901 = vld [vmem:[%s1 + $0x28] sm:$0xf]
      %v902 = vld [vmem:[%s1 + $0x2c] sm:$0xf]
      %v903 = vld [vmem:[%s1 + $0x30] sm:$0xf]
      %v904 = vld [vmem:[%s1 + $0x34] sm:$0xf]
      %v905 = vld [vmem:[%s1 + $0x38] sm:$0xf]
      %v906 = vld [vmem:[%s1 + $0x3c] sm:$0xf]
      %v907 = vld [vmem:[#allocation2 + $0x8] sm:$0x1]
      %v908 = vld [vmem:[#allocation2 + $0x14] sm:$0x1]
      %v909 = vld [vmem:[#allocation2 + $0x20] sm:$0x1]
      %v910 = vld [vmem:[#allocation2 + $0x2c] sm:$0x1]
      %v911 = vld [vmem:[#allocation2 + $0x38] sm:$0x1]
      %v912 = vld [vmem:[#allocation2 + $0x44] sm:$0x1]
      %v913 = vld [vmem:[#allocation2 + $0x50] sm:$0x1]
      %v914 = vld [vmem:[#allocation2 + $0x5c] sm:$0x1]
      %v915 = vld [vmem:[#allocation2 + $0x68] sm:$0x1]
      %v916 = vld [vmem:[#allocation2 + $0x74] sm:$0x1]
      %v917 = vld [vmem:[#allocation2 + $0x80] sm:$0x1]
      %v918 = vld [vmem:[#allocation2 + $0x8c] sm:$0x1]
      %v919 = vld [vmem:[#allocation2 + $0x98] sm:$0x1]
      %v920 = vld [vmem:[#allocation2 + $0xa4] sm:$0x1]
      %v921 = vld [vmem:[#allocation2 + $0xb0] sm:$0x1]
      %v922 = vld [vmem:[#allocation2 + $0xbc] sm:$0x1]
      %vm923 = vsmask.f32 3328
      %vm924 = vsmask.f32 7440
      %vm925 = vmor %vm923, %vm924
      %v927 = vshrl.u32 %v859, 16
      %v929 = vrot.slane %v927, 4
      %v930 = vshll.u32 %v859, 16
      %v932 = vrot.slane %v930, 5
      %v933 = vor.u32 %v929, %v932
      %v934 = vrot.slane %v933, 4
      %v936 = vshll.u32 %v860, 16
      %v938 = vrot.slane %v936, 5
      %v939 = vsel %vm925, %v934, %v938
      %v940 = vshrl.u32 %v860, 16
      %v942 = vrot.slane %v940, 4
      %v943 = vor.u32 %v942, %v938
      %v944 = vrot.slane %v943, 4
      %v946 = vshll.u32 %v907, 16
      %v948 = vrot.slane %v946, 5
      %v949 = vsel %vm925, %v944, %v948
      %v951 = vshrl.u32 %v861, 16
      %v953 = vrot.slane %v951, 4
      %v954 = vshll.u32 %v861, 16
      %v956 = vrot.slane %v954, 5
      %v957 = vor.u32 %v953, %v956
      %v958 = vrot.slane %v957, 4
      %v960 = vshll.u32 %v862, 16
      %v962 = vrot.slane %v960, 5
      %v963 = vsel %vm925, %v958, %v962
      %v964 = vshrl.u32 %v862, 16
      %v966 = vrot.slane %v964, 4
      %v967 = vor.u32 %v966, %v962
      %v968 = vrot.slane %v967, 4
      %v970 = vshll.u32 %v908, 16
      %v972 = vrot.slane %v970, 5
      %v973 = vsel %vm925, %v968, %v972
      %v975 = vshrl.u32 %v863, 16
      %v977 = vrot.slane %v975, 4
      %v978 = vshll.u32 %v863, 16
      %v980 = vrot.slane %v978, 5
      %v981 = vor.u32 %v977, %v980
      %v982 = vrot.slane %v981, 4
      %v984 = vshll.u32 %v864, 16
      %v986 = vrot.slane %v984, 5
      %v987 = vsel %vm925, %v982, %v986
      %v988 = vshrl.u32 %v864, 16
      %v990 = vrot.slane %v988, 4
      %v991 = vor.u32 %v990, %v986
      %v992 = vrot.slane %v991, 4
      %v994 = vshll.u32 %v909, 16
      %v996 = vrot.slane %v994, 5
      %v997 = vsel %vm925, %v992, %v996
      %v999 = vshrl.u32 %v865, 16
      %v1001 = vrot.slane %v999, 4
      %v1002 = vshll.u32 %v865, 16
      %v1004 = vrot.slane %v1002, 5
      %v1005 = vor.u32 %v1001, %v1004
      %v1006 = vrot.slane %v1005, 4
      %v1008 = vshll.u32 %v866, 16
      %v1010 = vrot.slane %v1008, 5
      %v1011 = vsel %vm925, %v1006, %v1010
      %v1012 = vshrl.u32 %v866, 16
      %v1014 = vrot.slane %v1012, 4
      %v1015 = vor.u32 %v1014, %v1010
      %v1016 = vrot.slane %v1015, 4
      %v1018 = vshll.u32 %v910, 16
      %v1020 = vrot.slane %v1018, 5
      %v1021 = vsel %vm925, %v1016, %v1020
      %v1023 = vshrl.u32 %v867, 16
      %v1025 = vrot.slane %v1023, 4
      %v1026 = vshll.u32 %v867, 16
      %v1028 = vrot.slane %v1026, 5
      %v1029 = vor.u32 %v1025, %v1028
      %v1030 = vrot.slane %v1029, 4
      %v1032 = vshll.u32 %v868, 16
      %v1034 = vrot.slane %v1032, 5
      %v1035 = vsel %vm925, %v1030, %v1034
      %v1036 = vshrl.u32 %v868, 16
      %v1038 = vrot.slane %v1036, 4
      %v1039 = vor.u32 %v1038, %v1034
      %v1040 = vrot.slane %v1039, 4
      %v1042 = vshll.u32 %v911, 16
      %v1044 = vrot.slane %v1042, 5
      %v1045 = vsel %vm925, %v1040, %v1044
      %v1047 = vshrl.u32 %v869, 16
      %v1049 = vrot.slane %v1047, 4
      %v1050 = vshll.u32 %v869, 16
      %v1052 = vrot.slane %v1050, 5
      %v1053 = vor.u32 %v1049, %v1052
      %v1054 = vrot.slane %v1053, 4
      %v1056 = vshll.u32 %v870, 16
      %v1058 = vrot.slane %v1056, 5
      %v1059 = vsel %vm925, %v1054, %v1058
      %v1060 = vshrl.u32 %v870, 16
      %v1062 = vrot.slane %v1060, 4
      %v1063 = vor.u32 %v1062, %v1058
      %v1064 = vrot.slane %v1063, 4
      %v1066 = vshll.u32 %v912, 16
      %v1068 = vrot.slane %v1066, 5
      %v1069 = vsel %vm925, %v1064, %v1068
      %v1071 = vshrl.u32 %v871, 16
      %v1073 = vrot.slane %v1071, 4
      %v1074 = vshll.u32 %v871, 16
      %v1076 = vrot.slane %v1074, 5
      %v1077 = vor.u32 %v1073, %v1076
      %v1078 = vrot.slane %v1077, 4
      %v1080 = vshll.u32 %v872, 16
      %v1082 = vrot.slane %v1080, 5
      %v1083 = vsel %vm925, %v1078, %v1082
      %v1084 = vshrl.u32 %v872, 16
      %v1086 = vrot.slane %v1084, 4
      %v1087 = vor.u32 %v1086, %v1082
      %v1088 = vrot.slane %v1087, 4
      %v1090 = vshll.u32 %v913, 16
      %v1092 = vrot.slane %v1090, 5
      %v1093 = vsel %vm925, %v1088, %v1092
      %v1095 = vshrl.u32 %v873, 16
      %v1097 = vrot.slane %v1095, 4
      %v1098 = vshll.u32 %v873, 16
      %v1100 = vrot.slane %v1098, 5
      %v1101 = vor.u32 %v1097, %v1100
      %v1102 = vrot.slane %v1101, 4
      %v1104 = vshll.u32 %v874, 16
      %v1106 = vrot.slane %v1104, 5
      %v1107 = vsel %vm925, %v1102, %v1106
      %v1108 = vshrl.u32 %v874, 16
      %v1110 = vrot.slane %v1108, 4
      %v1111 = vor.u32 %v1110, %v1106
      %v1112 = vrot.slane %v1111, 4
      %v1114 = vshll.u32 %v914, 16
      %v1116 = vrot.slane %v1114, 5
      %v1117 = vsel %vm925, %v1112, %v1116
      %v1119 = vshrl.u32 %v875, 16
      %v1121 = vrot.slane %v1119, 4
      %v1122 = vshll.u32 %v875, 16
      %v1124 = vrot.slane %v1122, 5
      %v1125 = vor.u32 %v1121, %v1124
      %v1126 = vrot.slane %v1125, 4
      %v1128 = vshll.u32 %v876, 16
      %v1130 = vrot.slane %v1128, 5
      %v1131 = vsel %vm925, %v1126, %v1130
      %v1132 = vshrl.u32 %v876, 16
      %v1134 = vrot.slane %v1132, 4
      %v1135 = vor.u32 %v1134, %v1130
      %v1136 = vrot.slane %v1135, 4
      %v1138 = vshll.u32 %v915, 16
      %v1140 = vrot.slane %v1138, 5
      %v1141 = vsel %vm925, %v1136, %v1140
      %v1143 = vshrl.u32 %v877, 16
      %v1145 = vrot.slane %v1143, 4
      %v1146 = vshll.u32 %v877, 16
      %v1148 = vrot.slane %v1146, 5
      %v1149 = vor.u32 %v1145, %v1148
      %v1150 = vrot.slane %v1149, 4
      %v1152 = vshll.u32 %v878, 16
      %v1154 = vrot.slane %v1152, 5
      %v1155 = vsel %vm925, %v1150, %v1154
      %v1156 = vshrl.u32 %v878, 16
      %v1158 = vrot.slane %v1156, 4
      %v1159 = vor.u32 %v1158, %v1154
      %v1160 = vrot.slane %v1159, 4
      %v1162 = vshll.u32 %v916, 16
      %v1164 = vrot.slane %v1162, 5
      %v1165 = vsel %vm925, %v1160, %v1164
      %v1167 = vshrl.u32 %v879, 16
      %v1169 = vrot.slane %v1167, 4
      %v1170 = vshll.u32 %v879, 16
      %v1172 = vrot.slane %v1170, 5
      %v1173 = vor.u32 %v1169, %v1172
      %v1174 = vrot.slane %v1173, 4
      %v1176 = vshll.u32 %v880, 16
      %v1178 = vrot.slane %v1176, 5
      %v1179 = vsel %vm925, %v1174, %v1178
      %v1180 = vshrl.u32 %v880, 16
      %v1182 = vrot.slane %v1180, 4
      %v1183 = vor.u32 %v1182, %v1178
      %v1184 = vrot.slane %v1183, 4
      %v1186 = vshll.u32 %v917, 16
      %v1188 = vrot.slane %v1186, 5
      %v1189 = vsel %vm925, %v1184, %v1188
      %v1191 = vshrl.u32 %v881, 16
      %v1193 = vrot.slane %v1191, 4
      %v1194 = vshll.u32 %v881, 16
      %v1196 = vrot.slane %v1194, 5
      %v1197 = vor.u32 %v1193, %v1196
      %v1198 = vrot.slane %v1197, 4
      %v1200 = vshll.u32 %v882, 16
      %v1202 = vrot.slane %v1200, 5
      %v1203 = vsel %vm925, %v1198, %v1202
      %v1204 = vshrl.u32 %v882, 16
      %v1206 = vrot.slane %v1204, 4
      %v1207 = vor.u32 %v1206, %v1202
      %v1208 = vrot.slane %v1207, 4
      %v1210 = vshll.u32 %v918, 16
      %v1212 = vrot.slane %v1210, 5
      %v1213 = vsel %vm925, %v1208, %v1212
      %v1215 = vshrl.u32 %v883, 16
      %v1217 = vrot.slane %v1215, 4
      %v1218 = vshll.u32 %v883, 16
      %v1220 = vrot.slane %v1218, 5
      %v1221 = vor.u32 %v1217, %v1220
      %v1222 = vrot.slane %v1221, 4
      %v1224 = vshll.u32 %v884, 16
      %v1226 = vrot.slane %v1224, 5
      %v1227 = vsel %vm925, %v1222, %v1226
      %v1228 = vshrl.u32 %v884, 16
      %v1230 = vrot.slane %v1228, 4
      %v1231 = vor.u32 %v1230, %v1226
      %v1232 = vrot.slane %v1231, 4
      %v1234 = vshll.u32 %v919, 16
      %v1236 = vrot.slane %v1234, 5
      %v1237 = vsel %vm925, %v1232, %v1236
      %v1239 = vshrl.u32 %v885, 16
      %v1241 = vrot.slane %v1239, 4
      %v1242 = vshll.u32 %v885, 16
      %v1244 = vrot.slane %v1242, 5
      %v1245 = vor.u32 %v1241, %v1244
      %v1246 = vrot.slane %v1245, 4
      %v1248 = vshll.u32 %v886, 16
      %v1250 = vrot.slane %v1248, 5
      %v1251 = vsel %vm925, %v1246, %v1250
      %v1252 = vshrl.u32 %v886, 16
      %v1254 = vrot.slane %v1252, 4
      %v1255 = vor.u32 %v1254, %v1250
      %v1256 = vrot.slane %v1255, 4
      %v1258 = vshll.u32 %v920, 16
      %v1260 = vrot.slane %v1258, 5
      %v1261 = vsel %vm925, %v1256, %v1260
      %v1263 = vshrl.u32 %v887, 16
      %v1265 = vrot.slane %v1263, 4
      %v1266 = vshll.u32 %v887, 16
      %v1268 = vrot.slane %v1266, 5
      %v1269 = vor.u32 %v1265, %v1268
      %v1270 = vrot.slane %v1269, 4
      %v1272 = vshll.u32 %v888, 16
      %v1274 = vrot.slane %v1272, 5
      %v1275 = vsel %vm925, %v1270, %v1274
      %v1276 = vshrl.u32 %v888, 16
      %v1278 = vrot.slane %v1276, 4
      %v1279 = vor.u32 %v1278, %v1274
      %v1280 = vrot.slane %v1279, 4
      %v1282 = vshll.u32 %v921, 16
      %v1284 = vrot.slane %v1282, 5
      %v1285 = vsel %vm925, %v1280, %v1284
      %v1287 = vshrl.u32 %v889, 16
      %v1289 = vrot.slane %v1287, 4
      %v1290 = vshll.u32 %v889, 16
      %v1292 = vrot.slane %v1290, 5
      %v1293 = vor.u32 %v1289, %v1292
      %v1294 = vrot.slane %v1293, 4
      %v1296 = vshll.u32 %v890, 16
      %v1298 = vrot.slane %v1296, 5
      %v1299 = vsel %vm925, %v1294, %v1298
      %v1300 = vshrl.u32 %v890, 16
      %v1302 = vrot.slane %v1300, 4
      %v1303 = vor.u32 %v1302, %v1298
      %v1304 = vrot.slane %v1303, 4
      %v1306 = vshll.u32 %v922, 16
      %v1308 = vrot.slane %v1306, 5
      %v1309 = vsel %vm925, %v1304, %v1308
      %v1310 = vld [vmem:[%s1 + $0x40] sm:$0xf]
      %v1311 = vld [vmem:[%s1 + $0x44] sm:$0xf]
      %v1312 = vld [vmem:[%s1 + $0x48] sm:$0xf]
      %v1313 = vld [vmem:[%s1 + $0x4c] sm:$0xf]
      %v1314 = vld [vmem:[%s1 + $0x50] sm:$0xf]
      %v1315 = vld [vmem:[%s1 + $0x54] sm:$0xf]
      %v1316 = vld [vmem:[%s1 + $0x58] sm:$0xf]
      %v1317 = vld [vmem:[%s1 + $0x5c] sm:$0xf]
      %v1318 = vld [vmem:[%s1 + $0x60] sm:$0xf]
      %v1319 = vld [vmem:[%s1 + $0x64] sm:$0xf]
      %v1320 = vld [vmem:[%s1 + $0x68] sm:$0xf]
      %v1321 = vld [vmem:[%s1 + $0x6c] sm:$0xf]
      %v1322 = vld [vmem:[%s1 + $0x70] sm:$0xf]
      %v1323 = vld [vmem:[%s1 + $0x74] sm:$0xf]
      %v1324 = vld [vmem:[%s1 + $0x78] sm:$0xf]
      %v1325 = vld [vmem:[%s1 + $0x7c] sm:$0xf]
      %v1326 = vunpack.c.l.b16 %v939
      %v1327 = vunpack.c.l.b16 %v949
      %v1328 = vunpack.c.l.b16 %v963
      %v1329 = vunpack.c.l.b16 %v973
      %v1330 = vunpack.c.l.b16 %v987
      %v1331 = vunpack.c.l.b16 %v997
      %v1332 = vunpack.c.l.b16 %v1011
      %v1333 = vunpack.c.l.b16 %v1021
      %v1334 = vunpack.c.l.b16 %v1035
      %v1335 = vunpack.c.l.b16 %v1045
      %v1336 = vunpack.c.l.b16 %v1059
      %v1337 = vunpack.c.l.b16 %v1069
      %v1338 = vunpack.c.l.b16 %v1083
      %v1339 = vunpack.c.l.b16 %v1093
      %v1340 = vunpack.c.l.b16 %v1107
      %v1341 = vunpack.c.l.b16 %v1117
      %v1342 = vunpack.c.l.b16 %v1131
      %v1343 = vunpack.c.l.b16 %v1141
      %v1344 = vunpack.c.l.b16 %v1155
      %v1345 = vunpack.c.l.b16 %v1165
      %v1346 = vunpack.c.l.b16 %v1179
      %v1347 = vunpack.c.l.b16 %v1189
      %v1348 = vunpack.c.l.b16 %v1203
      %v1349 = vunpack.c.l.b16 %v1213
      %v1350 = vunpack.c.l.b16 %v1227
      %v1351 = vunpack.c.l.b16 %v1237
      %v1352 = vunpack.c.l.b16 %v1251
      %v1353 = vunpack.c.l.b16 %v1261
      %v1354 = vunpack.c.l.b16 %v1275
      %v1355 = vunpack.c.l.b16 %v1285
      %v1356 = vunpack.c.l.b16 %v1299
      %v1357 = vunpack.c.l.b16 %v1309
      %v1358 = vpack.c.b16 %v1327, %v1326
      %v1359 = vpack.c.b16 %v1329, %v1328
      %v1360 = vpack.c.b16 %v1331, %v1330
      %v1361 = vpack.c.b16 %v1333, %v1332
      %v1362 = vpack.c.b16 %v1335, %v1334
      %v1363 = vpack.c.b16 %v1337, %v1336
      %v1364 = vpack.c.b16 %v1339, %v1338
      %v1365 = vpack.c.b16 %v1341, %v1340
      %v1366 = vpack.c.b16 %v1343, %v1342
      %v1367 = vpack.c.b16 %v1345, %v1344
      %v1368 = vpack.c.b16 %v1347, %v1346
      %v1369 = vpack.c.b16 %v1349, %v1348
      %v1370 = vpack.c.b16 %v1351, %v1350
      %v1371 = vpack.c.b16 %v1353, %v1352
      %v1372 = vpack.c.b16 %v1355, %v1354
      %v1373 = vpack.c.b16 %v1357, %v1356
      %v1406 = vunpack.c.l.b16 %v1310
      %v1407 = vunpack.c.l.b16 %v1311
      %v1408 = vunpack.c.l.b16 %v1312
      %v1409 = vunpack.c.l.b16 %v1313
      %v1410 = vunpack.c.l.b16 %v1314
      %v1411 = vunpack.c.l.b16 %v1315
      %v1412 = vunpack.c.l.b16 %v1316
      %v1413 = vunpack.c.l.b16 %v1317
      %v1414 = vunpack.c.l.b16 %v1318
      %v1415 = vunpack.c.l.b16 %v1319
      %v1416 = vunpack.c.l.b16 %v1320
      %v1417 = vunpack.c.l.b16 %v1321
      %v1418 = vunpack.c.l.b16 %v1322
      %v1419 = vunpack.c.l.b16 %v1323
      %v1420 = vunpack.c.l.b16 %v1324
      %v1421 = vunpack.c.l.b16 %v1325
      %v1422 = vpack.c.b16 %v1407, %v1406
      %v1423 = vpack.c.b16 %v1409, %v1408
      %v1424 = vpack.c.b16 %v1411, %v1410
      %v1425 = vpack.c.b16 %v1413, %v1412
      %v1426 = vpack.c.b16 %v1415, %v1414
      %v1427 = vpack.c.b16 %v1417, %v1416
      %v1428 = vpack.c.b16 %v1419, %v1418
      %v1429 = vpack.c.b16 %v1421, %v1420
      %1438 = vmatprep.subr.bf16.mxu0 0
      %1439 = vmatpush1.bf16.msra.mxu0 %v1422
      %1440 = vmatprep.subr.bf16.mxu0 0
      %1441 = vmatpush1.bf16.msra.mxu0 %v1423
      %1442 = vmatprep.subr.bf16.mxu0 0
      %1443 = vmatpush1.bf16.msra.mxu0 %v1424
      %1444 = vmatprep.subr.bf16.mxu0 0
      %1445 = vmatpush1.bf16.msra.mxu0 %v1425
      %1446 = vmatprep.subr.bf16.mxu0 0
      %1447 = vmatpush1.bf16.msra.mxu0 %v1426
      %1448 = vmatprep.subr.bf16.mxu0 0
      %1449 = vmatpush1.bf16.msra.mxu0 %v1427
      %1450 = vmatprep.subr.bf16.mxu0 0
      %1451 = vmatpush1.bf16.msra.mxu0 %v1428
      %1452 = vmatprep.subr.bf16.mxu0 0
      %1453 = vmatpush1.bf16.msra.mxu0 %v1429
      %1454 = vmatprep.subr.bf16.mxu0 0
      %1455 = vmatpush1.bf16.msra.mxu0 0
      %1456 = vmatprep.subr.bf16.mxu0 0
      %1457 = vmatpush1.bf16.msra.mxu0 0
      %1458 = vmatprep.subr.bf16.mxu0 0
      %1459 = vmatpush1.bf16.msra.mxu0 0
      %1460 = vmatprep.subr.bf16.mxu0 0
      %1461 = vmatpush1.bf16.msra.mxu0 0
      %1462 = vmatprep.subr.bf16.mxu0 0
      %1463 = vmatpush1.bf16.msra.mxu0 0
      %1464 = vmatprep.subr.bf16.mxu0 0
      %1465 = vmatpush1.bf16.msra.mxu0 0
      %1466 = vmatprep.subr.bf16.mxu0 0
      %1467 = vmatpush1.bf16.msra.mxu0 0
      %1468 = vmatprep.subr.bf16.mxu0 0
      %1469 = vmatpush1.bf16.msra.mxu0 0
      %1470 = vmatprep.mubr.bf16.mxu0 0
      %1471 = vmatmul.mubr.bf16.gmra.mrb[0].mxu0 %v1358
      %v1472 = vpop.f32.mrb[0].mxu0
      %v1473 = vadd.f32 0.0, %v1472
      %v1474 = vpop.f32.mrb[0].mxu0
      %v1475 = vpop.f32.mrb[0].mxu0
      %v1476 = vadd.f32 0.0, %v1475
      %v1477 = vpop.f32.mrb[0].mxu0
      %1478 = vmatprep.mubr.bf16.mxu0 0
      %1479 = vmatmul.mubr.bf16.gmra.mrb[0].mxu0 %v1359
      %v1480 = vpop.f32.mrb[0].mxu0
      %v1481 = vadd.f32 0.0, %v1480
      %v1482 = vpop.f32.mrb[0].mxu0
      %v1483 = vpop.f32.mrb[0].mxu0
      %v1484 = vadd.f32 0.0, %v1483
      %v1485 = vpop.f32.mrb[0].mxu0
      %1486 = vmatprep.mubr.bf16.mxu0 0
      %1487 = vmatmul.mubr.bf16.gmra.mrb[0].mxu0 %v1360
      %v1488 = vpop.f32.mrb[0].mxu0
      %v1489 = vadd.f32 0.0, %v1488
      %v1490 = vpop.f32.mrb[0].mxu0
      %v1491 = vpop.f32.mrb[0].mxu0
      %v1492 = vadd.f32 0.0, %v1491
      %v1493 = vpop.f32.mrb[0].mxu0
      %1494 = vmatprep.mubr.bf16.mxu0 0
      %1495 = vmatmul.mubr.bf16.gmra.mrb[0].mxu0 %v1361
      %v1496 = vpop.f32.mrb[0].mxu0
      %v1497 = vadd.f32 0.0, %v1496
      %v1498 = vpop.f32.mrb[0].mxu0
      %v1499 = vpop.f32.mrb[0].mxu0
      %v1500 = vadd.f32 0.0, %v1499
      %v1501 = vpop.f32.mrb[0].mxu0
      %1502 = vmatprep.mubr.bf16.mxu0 0
      %1503 = vmatmul.mubr.bf16.gmra.mrb[0].mxu0 %v1362
      %v1504 = vpop.f32.mrb[0].mxu0
      %v1505 = vadd.f32 0.0, %v1504
      %v1506 = vpop.f32.mrb[0].mxu0
      %v1507 = vpop.f32.mrb[0].mxu0
      %v1508 = vadd.f32 0.0, %v1507
      %v1509 = vpop.f32.mrb[0].mxu0
      %1510 = vmatprep.mubr.bf16.mxu0 0
      %1511 = vmatmul.mubr.bf16.gmra.mrb[0].mxu0 %v1363
      %v1512 = vpop.f32.mrb[0].mxu0
      %v1513 = vadd.f32 0.0, %v1512
      %v1514 = vpop.f32.mrb[0].mxu0
      %v1515 = vpop.f32.mrb[0].mxu0
      %v1516 = vadd.f32 0.0, %v1515
      %v1517 = vpop.f32.mrb[0].mxu0
      %1518 = vmatprep.mubr.bf16.mxu0 0
      %1519 = vmatmul.mubr.bf16.gmra.mrb[0].mxu0 %v1364
      %v1520 = vpop.f32.mrb[0].mxu0
      %v1521 = vadd.f32 0.0, %v1520
      %v1522 = vpop.f32.mrb[0].mxu0
      %v1523 = vpop.f32.mrb[0].mxu0
      %v1524 = vadd.f32 0.0, %v1523
      %v1525 = vpop.f32.mrb[0].mxu0
      %1526 = vmatprep.mubr.bf16.mxu0 0
      %1527 = vmatmul.mubr.bf16.gmra.mrb[0].mxu0 %v1365
      %v1528 = vpop.f32.mrb[0].mxu0
      %v1529 = vadd.f32 0.0, %v1528
      %v1530 = vpop.f32.mrb[0].mxu0
      %v1531 = vpop.f32.mrb[0].mxu0
      %v1532 = vadd.f32 0.0, %v1531
      %v1533 = vpop.f32.mrb[0].mxu0
      %1534 = vmatprep.mubr.bf16.mxu0 0
      %1535 = vmatmul.mubr.bf16.gmra.mrb[0].mxu0 %v1366
      %v1536 = vpop.f32.mrb[0].mxu0
      %v1537 = vadd.f32 0.0, %v1536
      %v1538 = vpop.f32.mrb[0].mxu0
      %v1539 = vpop.f32.mrb[0].mxu0
      %v1540 = vadd.f32 0.0, %v1539
      %v1541 = vpop.f32.mrb[0].mxu0
      %1542 = vmatprep.mubr.bf16.mxu0 0
      %1543 = vmatmul.mubr.bf16.gmra.mrb[0].mxu0 %v1367
      %v1544 = vpop.f32.mrb[0].mxu0
      %v1545 = vadd.f32 0.0, %v1544
      %v1546 = vpop.f32.mrb[0].mxu0
      %v1547 = vpop.f32.mrb[0].mxu0
      %v1548 = vadd.f32 0.0, %v1547
      %v1549 = vpop.f32.mrb[0].mxu0
      %1550 = vmatprep.mubr.bf16.mxu0 0
      %1551 = vmatmul.mubr.bf16.gmra.mrb[0].mxu0 %v1368
      %v1552 = vpop.f32.mrb[0].mxu0
      %v1553 = vadd.f32 0.0, %v1552
      %v1554 = vpop.f32.mrb[0].mxu0
      %v1555 = vpop.f32.mrb[0].mxu0
      %v1556 = vadd.f32 0.0, %v1555
      %v1557 = vpop.f32.mrb[0].mxu0
      %1558 = vmatprep.mubr.bf16.mxu0 0
      %1559 = vmatmul.mubr.bf16.gmra.mrb[0].mxu0 %v1369
      %v1560 = vpop.f32.mrb[0].mxu0
      %v1561 = vadd.f32 0.0, %v1560
      %v1562 = vpop.f32.mrb[0].mxu0
      %v1563 = vpop.f32.mrb[0].mxu0
      %v1564 = vadd.f32 0.0, %v1563
      %v1565 = vpop.f32.mrb[0].mxu0
      %1566 = vmatprep.mubr.bf16.mxu0 0
      %1567 = vmatmul.mubr.bf16.gmra.mrb[0].mxu0 %v1370
      %v1568 = vpop.f32.mrb[0].mxu0
      %v1569 = vadd.f32 0.0, %v1568
      %v1570 = vpop.f32.mrb[0].mxu0
      %v1571 = vpop.f32.mrb[0].mxu0
      %v1572 = vadd.f32 0.0, %v1571
      %v1573 = vpop.f32.mrb[0].mxu0
      %1574 = vmatprep.mubr.bf16.mxu0 0
      %1575 = vmatmul.mubr.bf16.gmra.mrb[0].mxu0 %v1371
      %v1576 = vpop.f32.mrb[0].mxu0
      %v1577 = vadd.f32 0.0, %v1576
      %v1578 = vpop.f32.mrb[0].mxu0
      %v1579 = vpop.f32.mrb[0].mxu0
      %v1580 = vadd.f32 0.0, %v1579
      %v1581 = vpop.f32.mrb[0].mxu0
      %1582 = vmatprep.mubr.bf16.mxu0 0
      %1583 = vmatmul.mubr.bf16.gmra.mrb[0].mxu0 %v1372
      %v1584 = vpop.f32.mrb[0].mxu0
      %v1585 = vadd.f32 0.0, %v1584
      %v1586 = vpop.f32.mrb[0].mxu0
      %v1587 = vpop.f32.mrb[0].mxu0
      %v1588 = vadd.f32 0.0, %v1587
      %v1589 = vpop.f32.mrb[0].mxu0
      %1590 = vmatprep.mubr.bf16.mxu0 0
      %1591 = vmatmul.mubr.bf16.gmra.mrb[0].mxu0 %v1373
      %v1592 = vpop.f32.mrb[0].mxu0
      %v1593 = vadd.f32 0.0, %v1592
      %v1594 = vpop.f32.mrb[0].mxu0
      %v1595 = vpop.f32.mrb[0].mxu0
      %v1596 = vadd.f32 0.0, %v1595
      %v1597 = vpop.f32.mrb[0].mxu0
      %1598 = vdwg.mxu0
      %v1631 = vunpack.c.l.b16 %v859
      %v1632 = vunpack.c.l.b16 %v860
      %v1633 = vunpack.c.l.b16 %v861
      %v1634 = vunpack.c.l.b16 %v862
      %v1635 = vunpack.c.l.b16 %v863
      %v1636 = vunpack.c.l.b16 %v864
      %v1637 = vunpack.c.l.b16 %v865
      %v1638 = vunpack.c.l.b16 %v866
      %v1639 = vunpack.c.l.b16 %v867
      %v1640 = vunpack.c.l.b16 %v868
      %v1641 = vunpack.c.l.b16 %v869
      %v1642 = vunpack.c.l.b16 %v870
      %v1643 = vunpack.c.l.b16 %v871
      %v1644 = vunpack.c.l.b16 %v872
      %v1645 = vunpack.c.l.b16 %v873
      %v1646 = vunpack.c.l.b16 %v874
      %v1647 = vunpack.c.l.b16 %v875
      %v1648 = vunpack.c.l.b16 %v876
      %v1649 = vunpack.c.l.b16 %v877
      %v1650 = vunpack.c.l.b16 %v878
      %v1651 = vunpack.c.l.b16 %v879
      %v1652 = vunpack.c.l.b16 %v880
      %v1653 = vunpack.c.l.b16 %v881
      %v1654 = vunpack.c.l.b16 %v882
      %v1655 = vunpack.c.l.b16 %v883
      %v1656 = vunpack.c.l.b16 %v884
      %v1657 = vunpack.c.l.b16 %v885
      %v1658 = vunpack.c.l.b16 %v886
      %v1659 = vunpack.c.l.b16 %v887
      %v1660 = vunpack.c.l.b16 %v888
      %v1661 = vunpack.c.l.b16 %v889
      %v1662 = vunpack.c.l.b16 %v890
      %v1663 = vpack.c.b16 %v1632, %v1631
      %v1664 = vpack.c.b16 %v1634, %v1633
      %v1665 = vpack.c.b16 %v1636, %v1635
      %v1666 = vpack.c.b16 %v1638, %v1637
      %v1667 = vpack.c.b16 %v1640, %v1639
      %v1668 = vpack.c.b16 %v1642, %v1641
      %v1669 = vpack.c.b16 %v1644, %v1643
      %v1670 = vpack.c.b16 %v1646, %v1645
      %v1671 = vpack.c.b16 %v1648, %v1647
      %v1672 = vpack.c.b16 %v1650, %v1649
      %v1673 = vpack.c.b16 %v1652, %v1651
      %v1674 = vpack.c.b16 %v1654, %v1653
      %v1675 = vpack.c.b16 %v1656, %v1655
      %v1676 = vpack.c.b16 %v1658, %v1657
      %v1677 = vpack.c.b16 %v1660, %v1659
      %v1678 = vpack.c.b16 %v1662, %v1661
      %v1711 = vunpack.c.l.b16 %v891
      %v1712 = vunpack.c.l.b16 %v892
      %v1713 = vunpack.c.l.b16 %v893
      %v1714 = vunpack.c.l.b16 %v894
      %v1715 = vunpack.c.l.b16 %v895
      %v1716 = vunpack.c.l.b16 %v896
      %v1717 = vunpack.c.l.b16 %v897
      %v1718 = vunpack.c.l.b16 %v898
      %v1719 = vunpack.c.l.b16 %v899
      %v1720 = vunpack.c.l.b16 %v900
      %v1721 = vunpack.c.l.b16 %v901
      %v1722 = vunpack.c.l.b16 %v902
      %v1723 = vunpack.c.l.b16 %v903
      %v1724 = vunpack.c.l.b16 %v904
      %v1725 = vunpack.c.l.b16 %v905
      %v1726 = vunpack.c.l.b16 %v906
      %v1727 = vpack.c.b16 %v1712, %v1711
      %v1728 = vpack.c.b16 %v1714, %v1713
      %v1729 = vpack.c.b16 %v1716, %v1715
      %v1730 = vpack.c.b16 %v1718, %v1717
      %v1731 = vpack.c.b16 %v1720, %v1719
      %v1732 = vpack.c.b16 %v1722, %v1721
      %v1733 = vpack.c.b16 %v1724, %v1723
      %v1734 = vpack.c.b16 %v1726, %v1725
      %1743 = vmatprep.subr.bf16.mxu0 0
      %1744 = vmatpush1.bf16.msra.mxu0 %v1727
      %1745 = vmatprep.subr.bf16.mxu0 0
      %1746 = vmatpush1.bf16.msra.mxu0 %v1728
      %1747 = vmatprep.subr.bf16.mxu0 0
      %1748 = vmatpush1.bf16.msra.mxu0 %v1729
      %1749 = vmatprep.subr.bf16.mxu0 0
      %1750 = vmatpush1.bf16.msra.mxu0 %v1730
      %1751 = vmatprep.subr.bf16.mxu0 0
      %1752 = vmatpush1.bf16.msra.mxu0 %v1731
      %1753 = vmatprep.subr.bf16.mxu0 0
      %1754 = vmatpush1.bf16.msra.mxu0 %v1732
      %1755 = vmatprep.subr.bf16.mxu0 0
      %1756 = vmatpush1.bf16.msra.mxu0 %v1733
      %1757 = vmatprep.subr.bf16.mxu0 0
      %1758 = vmatpush1.bf16.msra.mxu0 %v1734
      %1759 = vmatprep.subr.bf16.mxu0 0
      %1760 = vmatpush1.bf16.msra.mxu0 0
      %1761 = vmatprep.subr.bf16.mxu0 0
      %1762 = vmatpush1.bf16.msra.mxu0 0
      %1763 = vmatprep.subr.bf16.mxu0 0
      %1764 = vmatpush1.bf16.msra.mxu0 0
      %1765 = vmatprep.subr.bf16.mxu0 0
      %1766 = vmatpush1.bf16.msra.mxu0 0
      %1767 = vmatprep.subr.bf16.mxu0 0
      %1768 = vmatpush1.bf16.msra.mxu0 0
      %1769 = vmatprep.subr.bf16.mxu0 0
      %1770 = vmatpush1.bf16.msra.mxu0 0
      %1771 = vmatprep.subr.bf16.mxu0 0
      %1772 = vmatpush1.bf16.msra.mxu0 0
      %1773 = vmatprep.subr.bf16.mxu0 0
      %1774 = vmatpush1.bf16.msra.mxu0 0
      %1775 = vmatprep.mubr.bf16.mxu0 0
      %1776 = vmatmul.mubr.bf16.gmra.mrb[0].mxu0 %v1663
      %v1777 = vpop.f32.mrb[0].mxu0
      %v1778 = vadd.f32 %v1473, %v1777
      %v1779 = vpop.f32.mrb[0].mxu0
      %v1780 = vpop.f32.mrb[0].mxu0
      %v1781 = vadd.f32 %v1476, %v1780
      %v1782 = vpop.f32.mrb[0].mxu0
      %1783 = vmatprep.mubr.bf16.mxu0 0
      %1784 = vmatmul.mubr.bf16.gmra.mrb[0].mxu0 %v1664
      %v1785 = vpop.f32.mrb[0].mxu0
      %v1786 = vadd.f32 %v1481, %v1785
      %v1787 = vpop.f32.mrb[0].mxu0
      %v1788 = vpop.f32.mrb[0].mxu0
      %v1789 = vadd.f32 %v1484, %v1788
      %v1790 = vpop.f32.mrb[0].mxu0
      %1791 = vmatprep.mubr.bf16.mxu0 0
      %1792 = vmatmul.mubr.bf16.gmra.mrb[0].mxu0 %v1665
      %v1793 = vpop.f32.mrb[0].mxu0
      %v1794 = vadd.f32 %v1489, %v1793
      %v1795 = vpop.f32.mrb[0].mxu0
      %v1796 = vpop.f32.mrb[0].mxu0
      %v1797 = vadd.f32 %v1492, %v1796
      %v1798 = vpop.f32.mrb[0].mxu0
      %1799 = vmatprep.mubr.bf16.mxu0 0
      %1800 = vmatmul.mubr.bf16.gmra.mrb[0].mxu0 %v1666
      %v1801 = vpop.f32.mrb[0].mxu0
      %v1802 = vadd.f32 %v1497, %v1801
      %v1803 = vpop.f32.mrb[0].mxu0
      %v1804 = vpop.f32.mrb[0].mxu0
      %v1805 = vadd.f32 %v1500, %v1804
      %v1806 = vpop.f32.mrb[0].mxu0
      %1807 = vmatprep.mubr.bf16.mxu0 0
      %1808 = vmatmul.mubr.bf16.gmra.mrb[0].mxu0 %v1667
      %v1809 = vpop.f32.mrb[0].mxu0
      %v1810 = vadd.f32 %v1505, %v1809
      %v1811 = vpop.f32.mrb[0].mxu0
      %v1812 = vpop.f32.mrb[0].mxu0
      %v1813 = vadd.f32 %v1508, %v1812
      %v1814 = vpop.f32.mrb[0].mxu0
      %1815 = vmatprep.mubr.bf16.mxu0 0
      %1816 = vmatmul.mubr.bf16.gmra.mrb[0].mxu0 %v1668
      %v1817 = vpop.f32.mrb[0].mxu0
      %v1818 = vadd.f32 %v1513, %v1817
      %v1819 = vpop.f32.mrb[0].mxu0
      %v1820 = vpop.f32.mrb[0].mxu0
      %v1821 = vadd.f32 %v1516, %v1820
      %v1822 = vpop.f32.mrb[0].mxu0
      %1823 = vmatprep.mubr.bf16.mxu0 0
      %1824 = vmatmul.mubr.bf16.gmra.mrb[0].mxu0 %v1669
      %v1825 = vpop.f32.mrb[0].mxu0
      %v1826 = vadd.f32 %v1521, %v1825
      %v1827 = vpop.f32.mrb[0].mxu0
      %v1828 = vpop.f32.mrb[0].mxu0
      %v1829 = vadd.f32 %v1524, %v1828
      %v1830 = vpop.f32.mrb[0].mxu0
      %1831 = vmatprep.mubr.bf16.mxu0 0
      %1832 = vmatmul.mubr.bf16.gmra.mrb[0].mxu0 %v1670
      %v1833 = vpop.f32.mrb[0].mxu0
      %v1834 = vadd.f32 %v1529, %v1833
      %v1835 = vpop.f32.mrb[0].mxu0
      %v1836 = vpop.f32.mrb[0].mxu0
      %v1837 = vadd.f32 %v1532, %v1836
      %v1838 = vpop.f32.mrb[0].mxu0
      %1839 = vmatprep.mubr.bf16.mxu0 0
      %1840 = vmatmul.mubr.bf16.gmra.mrb[0].mxu0 %v1671
      %v1841 = vpop.f32.mrb[0].mxu0
      %v1842 = vadd.f32 %v1537, %v1841
      %v1843 = vpop.f32.mrb[0].mxu0
      %v1844 = vpop.f32.mrb[0].mxu0
      %v1845 = vadd.f32 %v1540, %v1844
      %v1846 = vpop.f32.mrb[0].mxu0
      %1847 = vmatprep.mubr.bf16.mxu0 0
      %1848 = vmatmul.mubr.bf16.gmra.mrb[0].mxu0 %v1672
      %v1849 = vpop.f32.mrb[0].mxu0
      %v1850 = vadd.f32 %v1545, %v1849
      %v1851 = vpop.f32.mrb[0].mxu0
      %v1852 = vpop.f32.mrb[0].mxu0
      %v1853 = vadd.f32 %v1548, %v1852
      %v1854 = vpop.f32.mrb[0].mxu0
      %1855 = vmatprep.mubr.bf16.mxu0 0
      %1856 = vmatmul.mubr.bf16.gmra.mrb[0].mxu0 %v1673
      %v1857 = vpop.f32.mrb[0].mxu0
      %v1858 = vadd.f32 %v1553, %v1857
      %v1859 = vpop.f32.mrb[0].mxu0
      %v1860 = vpop.f32.mrb[0].mxu0
      %v1861 = vadd.f32 %v1556, %v1860
      %v1862 = vpop.f32.mrb[0].mxu0
      %1863 = vmatprep.mubr.bf16.mxu0 0
      %1864 = vmatmul.mubr.bf16.gmra.mrb[0].mxu0 %v1674
      %v1865 = vpop.f32.mrb[0].mxu0
      %v1866 = vadd.f32 %v1561, %v1865
      %v1867 = vpop.f32.mrb[0].mxu0
      %v1868 = vpop.f32.mrb[0].mxu0
      %v1869 = vadd.f32 %v1564, %v1868
      %v1870 = vpop.f32.mrb[0].mxu0
      %1871 = vmatprep.mubr.bf16.mxu0 0
      %1872 = vmatmul.mubr.bf16.gmra.mrb[0].mxu0 %v1675
      %v1873 = vpop.f32.mrb[0].mxu0
      %v1874 = vadd.f32 %v1569, %v1873
      %v1875 = vpop.f32.mrb[0].mxu0
      %v1876 = vpop.f32.mrb[0].mxu0
      %v1877 = vadd.f32 %v1572, %v1876
      %v1878 = vpop.f32.mrb[0].mxu0
      %1879 = vmatprep.mubr.bf16.mxu0 0
      %1880 = vmatmul.mubr.bf16.gmra.mrb[0].mxu0 %v1676
      %v1881 = vpop.f32.mrb[0].mxu0
      %v1882 = vadd.f32 %v1577, %v1881
      %v1883 = vpop.f32.mrb[0].mxu0
      %v1884 = vpop.f32.mrb[0].mxu0
      %v1885 = vadd.f32 %v1580, %v1884
      %v1886 = vpop.f32.mrb[0].mxu0
      %1887 = vmatprep.mubr.bf16.mxu0 0
      %1888 = vmatmul.mubr.bf16.gmra.mrb[0].mxu0 %v1677
      %v1889 = vpop.f32.mrb[0].mxu0
      %v1890 = vadd.f32 %v1585, %v1889
      %v1891 = vpop.f32.mrb[0].mxu0
      %v1892 = vpop.f32.mrb[0].mxu0
      %v1893 = vadd.f32 %v1588, %v1892
      %v1894 = vpop.f32.mrb[0].mxu0
      %1895 = vmatprep.mubr.bf16.mxu0 0
      %1896 = vmatmul.mubr.bf16.gmra.mrb[0].mxu0 %v1678
      %v1897 = vpop.f32.mrb[0].mxu0
      %v1898 = vadd.f32 %v1593, %v1897
      %v1899 = vpop.f32.mrb[0].mxu0
      %v1900 = vpop.f32.mrb[0].mxu0
      %v1901 = vadd.f32 %v1596, %v1900
      %v1902 = vpop.f32.mrb[0].mxu0
      %1903 = vdwg.mxu0
      %v1904 = vld [vmem:[#allocation2] sm:$0xe]
      %v1905 = vld [vmem:[#allocation2 + $0xc] sm:$0xe]
      %v1906 = vld [vmem:[#allocation2 + $0x18] sm:$0xe]
      %v1907 = vld [vmem:[#allocation2 + $0x24] sm:$0xe]
      %v1908 = vld [vmem:[#allocation2 + $0x30] sm:$0xe]
      %v1909 = vld [vmem:[#allocation2 + $0x3c] sm:$0xe]
      %v1910 = vld [vmem:[#allocation2 + $0x48] sm:$0xe]
      %v1911 = vld [vmem:[#allocation2 + $0x54] sm:$0xe]
      %v1912 = vld [vmem:[#allocation2 + $0x60] sm:$0xe]
      %v1913 = vld [vmem:[#allocation2 + $0x6c] sm:$0xe]
      %v1914 = vld [vmem:[#allocation2 + $0x78] sm:$0xe]
      %v1915 = vld [vmem:[#allocation2 + $0x84] sm:$0xe]
      %v1916 = vld [vmem:[#allocation2 + $0x90] sm:$0xe]
      %v1917 = vld [vmem:[#allocation2 + $0x9c] sm:$0xe]
      %v1918 = vld [vmem:[#allocation2 + $0xa8] sm:$0xe]
      %v1919 = vld [vmem:[#allocation2 + $0xb4] sm:$0xe]
      %vm1952 = vcmask 1042432
      %vm1953 = vcmask 1046532
      %vm1954 = vmor %vm1952, %vm1953
      %v1955 = vrot.slane %v1904, 5
      %v1956 = vrot.slane %v1955, 4
      %v1957 = vrot.slane %v860, 5
      %v1958 = vsel %vm1954, %v1956, %v1957
      %v1959 = vrot.slane %v1957, 4
      %v1960 = vrot.slane %v907, 5
      %v1961 = vsel %vm1954, %v1959, %v1960
      %v1962 = vrot.slane %v1905, 5
      %v1963 = vrot.slane %v1962, 4
      %v1964 = vrot.slane %v862, 5
      %v1965 = vsel %vm1954, %v1963, %v1964
      %v1966 = vrot.slane %v1964, 4
      %v1967 = vrot.slane %v908, 5
      %v1968 = vsel %vm1954, %v1966, %v1967
      %v1969 = vrot.slane %v1906, 5
      %v1970 = vrot.slane %v1969, 4
      %v1971 = vrot.slane %v864, 5
      %v1972 = vsel %vm1954, %v1970, %v1971
      %v1973 = vrot.slane %v1971, 4
      %v1974 = vrot.slane %v909, 5
      %v1975 = vsel %vm1954, %v1973, %v1974
      %v1976 = vrot.slane %v1907, 5
      %v1977 = vrot.slane %v1976, 4
      %v1978 = vrot.slane %v866, 5
      %v1979 = vsel %vm1954, %v1977, %v1978
      %v1980 = vrot.slane %v1978, 4
      %v1981 = vrot.slane %v910, 5
      %v1982 = vsel %vm1954, %v1980, %v1981
      %v1983 = vrot.slane %v1908, 5
      %v1984 = vrot.slane %v1983, 4
      %v1985 = vrot.slane %v868, 5
      %v1986 = vsel %vm1954, %v1984, %v1985
      %v1987 = vrot.slane %v1985, 4
      %v1988 = vrot.slane %v911, 5
      %v1989 = vsel %vm1954, %v1987, %v1988
      %v1990 = vrot.slane %v1909, 5
      %v1991 = vrot.slane %v1990, 4
      %v1992 = vrot.slane %v870, 5
      %v1993 = vsel %vm1954, %v1991, %v1992
      %v1994 = vrot.slane %v1992, 4
      %v1995 = vrot.slane %v912, 5
      %v1996 = vsel %vm1954, %v1994, %v1995
      %v1997 = vrot.slane %v1910, 5
      %v1998 = vrot.slane %v1997, 4
      %v1999 = vrot.slane %v872, 5
      %v2000 = vsel %vm1954, %v1998, %v1999
      %v2001 = vrot.slane %v1999, 4
      %v2002 = vrot.slane %v913, 5
      %v2003 = vsel %vm1954, %v2001, %v2002
      %v2004 = vrot.slane %v1911, 5
      %v2005 = vrot.slane %v2004, 4
      %v2006 = vrot.slane %v874, 5
      %v2007 = vsel %vm1954, %v2005, %v2006
      %v2008 = vrot.slane %v2006, 4
      %v2009 = vrot.slane %v914, 5
      %v2010 = vsel %vm1954, %v2008, %v2009
      %v2011 = vrot.slane %v1912, 5
      %v2012 = vrot.slane %v2011, 4
      %v2013 = vrot.slane %v876, 5
      %v2014 = vsel %vm1954, %v2012, %v2013
      %v2015 = vrot.slane %v2013, 4
      %v2016 = vrot.slane %v915, 5
      %v2017 = vsel %vm1954, %v2015, %v2016
      %v2018 = vrot.slane %v1913, 5
      %v2019 = vrot.slane %v2018, 4
      %v2020 = vrot.slane %v878, 5
      %v2021 = vsel %vm1954, %v2019, %v2020
      %v2022 = vrot.slane %v2020, 4
      %v2023 = vrot.slane %v916, 5
      %v2024 = vsel %vm1954, %v2022, %v2023
      %v2025 = vrot.slane %v1914, 5
      %v2026 = vrot.slane %v2025, 4
      %v2027 = vrot.slane %v880, 5
      %v2028 = vsel %vm1954, %v2026, %v2027
      %v2029 = vrot.slane %v2027, 4
      %v2030 = vrot.slane %v917, 5
      %v2031 = vsel %vm1954, %v2029, %v2030
      %v2032 = vrot.slane %v1915, 5
      %v2033 = vrot.slane %v2032, 4
      %v2034 = vrot.slane %v882, 5
      %v2035 = vsel %vm1954, %v2033, %v2034
      %v2036 = vrot.slane %v2034, 4
      %v2037 = vrot.slane %v918, 5
      %v2038 = vsel %vm1954, %v2036, %v2037
      %v2039 = vrot.slane %v1916, 5
      %v2040 = vrot.slane %v2039, 4
      %v2041 = vrot.slane %v884, 5
      %v2042 = vsel %vm1954, %v2040, %v2041
      %v2043 = vrot.slane %v2041, 4
      %v2044 = vrot.slane %v919, 5
      %v2045 = vsel %vm1954, %v2043, %v2044
      %v2046 = vrot.slane %v1917, 5
      %v2047 = vrot.slane %v2046, 4
      %v2048 = vrot.slane %v886, 5
      %v2049 = vsel %vm1954, %v2047, %v2048
      %v2050 = vrot.slane %v2048, 4
      %v2051 = vrot.slane %v920, 5
      %v2052 = vsel %vm1954, %v2050, %v2051
      %v2053 = vrot.slane %v1918, 5
      %v2054 = vrot.slane %v2053, 4
      %v2055 = vrot.slane %v888, 5
      %v2056 = vsel %vm1954, %v2054, %v2055
      %v2057 = vrot.slane %v2055, 4
      %v2058 = vrot.slane %v921, 5
      %v2059 = vsel %vm1954, %v2057, %v2058
      %v2060 = vrot.slane %v1919, 5
      %v2061 = vrot.slane %v2060, 4
      %v2062 = vrot.slane %v890, 5
      %v2063 = vsel %vm1954, %v2061, %v2062
      %v2064 = vrot.slane %v2062, 4
      %v2065 = vrot.slane %v922, 5
      %v2066 = vsel %vm1954, %v2064, %v2065
      %v2067 = vld [vmem:[%s1 + $0x80] sm:$0xf]
      %v2068 = vld [vmem:[%s1 + $0x84] sm:$0xf]
      %v2069 = vld [vmem:[%s1 + $0x88] sm:$0xf]
      %v2070 = vld [vmem:[%s1 + $0x8c] sm:$0xf]
      %v2071 = vld [vmem:[%s1 + $0x90] sm:$0xf]
      %v2072 = vld [vmem:[%s1 + $0x94] sm:$0xf]
      %v2073 = vld [vmem:[%s1 + $0x98] sm:$0xf]
      %v2074 = vld [vmem:[%s1 + $0x9c] sm:$0xf]
      %v2075 = vld [vmem:[%s1 + $0xa0] sm:$0xf]
      %v2076 = vld [vmem:[%s1 + $0xa4] sm:$0xf]
      %v2077 = vld [vmem:[%s1 + $0xa8] sm:$0xf]
      %v2078 = vld [vmem:[%s1 + $0xac] sm:$0xf]
      %v2079 = vld [vmem:[%s1 + $0xb0] sm:$0xf]
      %v2080 = vld [vmem:[%s1 + $0xb4] sm:$0xf]
      %v2081 = vld [vmem:[%s1 + $0xb8] sm:$0xf]
      %v2082 = vld [vmem:[%s1 + $0xbc] sm:$0xf]
      %v2083 = vunpack.c.l.b16 %v1958
      %v2084 = vunpack.c.l.b16 %v1961
      %v2085 = vunpack.c.l.b16 %v1965
      %v2086 = vunpack.c.l.b16 %v1968
      %v2087 = vunpack.c.l.b16 %v1972
      %v2088 = vunpack.c.l.b16 %v1975
      %v2089 = vunpack.c.l.b16 %v1979
      %v2090 = vunpack.c.l.b16 %v1982
      %v2091 = vunpack.c.l.b16 %v1986
      %v2092 = vunpack.c.l.b16 %v1989
      %v2093 = vunpack.c.l.b16 %v1993
      %v2094 = vunpack.c.l.b16 %v1996
      %v2095 = vunpack.c.l.b16 %v2000
      %v2096 = vunpack.c.l.b16 %v2003
      %v2097 = vunpack.c.l.b16 %v2007
      %v2098 = vunpack.c.l.b16 %v2010
      %v2099 = vunpack.c.l.b16 %v2014
      %v2100 = vunpack.c.l.b16 %v2017
      %v2101 = vunpack.c.l.b16 %v2021
      %v2102 = vunpack.c.l.b16 %v2024
      %v2103 = vunpack.c.l.b16 %v2028
      %v2104 = vunpack.c.l.b16 %v2031
      %v2105 = vunpack.c.l.b16 %v2035
      %v2106 = vunpack.c.l.b16 %v2038
      %v2107 = vunpack.c.l.b16 %v2042
      %v2108 = vunpack.c.l.b16 %v2045
      %v2109 = vunpack.c.l.b16 %v2049
      %v2110 = vunpack.c.l.b16 %v2052
      %v2111 = vunpack.c.l.b16 %v2056
      %v2112 = vunpack.c.l.b16 %v2059
      %v2113 = vunpack.c.l.b16 %v2063
      %v2114 = vunpack.c.l.b16 %v2066
      %v2115 = vpack.c.b16 %v2084, %v2083
      %v2116 = vpack.c.b16 %v2086, %v2085
      %v2117 = vpack.c.b16 %v2088, %v2087
      %v2118 = vpack.c.b16 %v2090, %v2089
      %v2119 = vpack.c.b16 %v2092, %v2091
      %v2120 = vpack.c.b16 %v2094, %v2093
      %v2121 = vpack.c.b16 %v2096, %v2095
      %v2122 = vpack.c.b16 %v2098, %v2097
      %v2123 = vpack.c.b16 %v2100, %v2099
      %v2124 = vpack.c.b16 %v2102, %v2101
      %v2125 = vpack.c.b16 %v2104, %v2103
      %v2126 = vpack.c.b16 %v2106, %v2105
      %v2127 = vpack.c.b16 %v2108, %v2107
      %v2128 = vpack.c.b16 %v2110, %v2109
      %v2129 = vpack.c.b16 %v2112, %v2111
      %v2130 = vpack.c.b16 %v2114, %v2113
      %v2163 = vunpack.c.l.b16 %v2067
      %v2164 = vunpack.c.l.b16 %v2068
      %v2165 = vunpack.c.l.b16 %v2069
      %v2166 = vunpack.c.l.b16 %v2070
      %v2167 = vunpack.c.l.b16 %v2071
      %v2168 = vunpack.c.l.b16 %v2072
      %v2169 = vunpack.c.l.b16 %v2073
      %v2170 = vunpack.c.l.b16 %v2074
      %v2171 = vunpack.c.l.b16 %v2075
      %v2172 = vunpack.c.l.b16 %v2076
      %v2173 = vunpack.c.l.b16 %v2077
      %v2174 = vunpack.c.l.b16 %v2078
      %v2175 = vunpack.c.l.b16 %v2079
      %v2176 = vunpack.c.l.b16 %v2080
      %v2177 = vunpack.c.l.b16 %v2081
      %v2178 = vunpack.c.l.b16 %v2082
      %v2179 = vpack.c.b16 %v2164, %v2163
      %v2180 = vpack.c.b16 %v2166, %v2165
      %v2181 = vpack.c.b16 %v2168, %v2167
      %v2182 = vpack.c.b16 %v2170, %v2169
      %v2183 = vpack.c.b16 %v2172, %v2171
      %v2184 = vpack.c.b16 %v2174, %v2173
      %v2185 = vpack.c.b16 %v2176, %v2175
      %v2186 = vpack.c.b16 %v2178, %v2177
      %2195 = vmatprep.subr.bf16.mxu0 0
      %2196 = vmatpush1.bf16.msra.mxu0 %v2179
      %2197 = vmatprep.subr.bf16.mxu0 0
      %2198 = vmatpush1.bf16.msra.mxu0 %v2180
      %2199 = vmatprep.subr.bf16.mxu0 0
      %2200 = vmatpush1.bf16.msra.mxu0 %v2181
      %2201 = vmatprep.subr.bf16.mxu0 0
      %2202 = vmatpush1.bf16.msra.mxu0 %v2182
      %2203 = vmatprep.subr.bf16.mxu0 0
      %2204 = vmatpush1.bf16.msra.mxu0 %v2183
      %2205 = vmatprep.subr.bf16.mxu0 0
      %2206 = vmatpush1.bf16.msra.mxu0 %v2184
      %2207 = vmatprep.subr.bf16.mxu0 0
      %2208 = vmatpush1.bf16.msra.mxu0 %v2185
      %2209 = vmatprep.subr.bf16.mxu0 0
      %2210 = vmatpush1.bf16.msra.mxu0 %v2186
      %2211 = vmatprep.subr.bf16.mxu0 0
      %2212 = vmatpush1.bf16.msra.mxu0 0
      %2213 = vmatprep.subr.bf16.mxu0 0
      %2214 = vmatpush1.bf16.msra.mxu0 0
      %2215 = vmatprep.subr.bf16.mxu0 0
      %2216 = vmatpush1.bf16.msra.mxu0 0
      %2217 = vmatprep.subr.bf16.mxu0 0
      %2218 = vmatpush1.bf16.msra.mxu0 0
      %2219 = vmatprep.subr.bf16.mxu0 0
      %2220 = vmatpush1.bf16.msra.mxu0 0
      %2221 = vmatprep.subr.bf16.mxu0 0
      %2222 = vmatpush1.bf16.msra.mxu0 0
      %2223 = vmatprep.subr.bf16.mxu0 0
      %2224 = vmatpush1.bf16.msra.mxu0 0
      %2225 = vmatprep.subr.bf16.mxu0 0
      %2226 = vmatpush1.bf16.msra.mxu0 0
      %2227 = vmatprep.mubr.bf16.mxu0 0
      %2228 = vmatmul.mubr.bf16.gmra.mrb[0].mxu0 %v2115
      %v2229 = vpop.f32.mrb[0].mxu0
      %v2230 = vadd.f32 0.0, %v2229
      %v2231 = vpop.f32.mrb[0].mxu0
      %v2232 = vpop.f32.mrb[0].mxu0
      %v2233 = vadd.f32 0.0, %v2232
      %v2234 = vpop.f32.mrb[0].mxu0
      %2235 = vmatprep.mubr.bf16.mxu0 0
      %2236 = vmatmul.mubr.bf16.gmra.mrb[0].mxu0 %v2116
      %v2237 = vpop.f32.mrb[0].mxu0
      %v2238 = vadd.f32 0.0, %v2237
      %v2239 = vpop.f32.mrb[0].mxu0
      %v2240 = vpop.f32.mrb[0].mxu0
      %v2241 = vadd.f32 0.0, %v2240
      %v2242 = vpop.f32.mrb[0].mxu0
      %2243 = vmatprep.mubr.bf16.mxu0 0
      %2244 = vmatmul.mubr.bf16.gmra.mrb[0].mxu0 %v2117
      %v2245 = vpop.f32.mrb[0].mxu0
      %v2246 = vadd.f32 0.0, %v2245
      %v2247 = vpop.f32.mrb[0].mxu0
      %v2248 = vpop.f32.mrb[0].mxu0
      %v2249 = vadd.f32 0.0, %v2248
      %v2250 = vpop.f32.mrb[0].mxu0
      %2251 = vmatprep.mubr.bf16.mxu0 0
      %2252 = vmatmul.mubr.bf16.gmra.mrb[0].mxu0 %v2118
      %v2253 = vpop.f32.mrb[0].mxu0
      %v2254 = vadd.f32 0.0, %v2253
      %v2255 = vpop.f32.mrb[0].mxu0
      %v2256 = vpop.f32.mrb[0].mxu0
      %v2257 = vadd.f32 0.0, %v2256
      %v2258 = vpop.f32.mrb[0].mxu0
      %2259 = vmatprep.mubr.bf16.mxu0 0
      %2260 = vmatmul.mubr.bf16.gmra.mrb[0].mxu0 %v2119
      %v2261 = vpop.f32.mrb[0].mxu0
      %v2262 = vadd.f32 0.0, %v2261
      %v2263 = vpop.f32.mrb[0].mxu0
      %v2264 = vpop.f32.mrb[0].mxu0
      %v2265 = vadd.f32 0.0, %v2264
      %v2266 = vpop.f32.mrb[0].mxu0
      %2267 = vmatprep.mubr.bf16.mxu0 0
      %2268 = vmatmul.mubr.bf16.gmra.mrb[0].mxu0 %v2120
      %v2269 = vpop.f32.mrb[0].mxu0
      %v2270 = vadd.f32 0.0, %v2269
      %v2271 = vpop.f32.mrb[0].mxu0
      %v2272 = vpop.f32.mrb[0].mxu0
      %v2273 = vadd.f32 0.0, %v2272
      %v2274 = vpop.f32.mrb[0].mxu0
      %2275 = vmatprep.mubr.bf16.mxu0 0
      %2276 = vmatmul.mubr.bf16.gmra.mrb[0].mxu0 %v2121
      %v2277 = vpop.f32.mrb[0].mxu0
      %v2278 = vadd.f32 0.0, %v2277
      %v2279 = vpop.f32.mrb[0].mxu0
      %v2280 = vpop.f32.mrb[0].mxu0
      %v2281 = vadd.f32 0.0, %v2280
      %v2282 = vpop.f32.mrb[0].mxu0
      %2283 = vmatprep.mubr.bf16.mxu0 0
      %2284 = vmatmul.mubr.bf16.gmra.mrb[0].mxu0 %v2122
      %v2285 = vpop.f32.mrb[0].mxu0
      %v2286 = vadd.f32 0.0, %v2285
      %v2287 = vpop.f32.mrb[0].mxu0
      %v2288 = vpop.f32.mrb[0].mxu0
      %v2289 = vadd.f32 0.0, %v2288
      %v2290 = vpop.f32.mrb[0].mxu0
      %2291 = vmatprep.mubr.bf16.mxu0 0
      %2292 = vmatmul.mubr.bf16.gmra.mrb[0].mxu0 %v2123
      %v2293 = vpop.f32.mrb[0].mxu0
      %v2294 = vadd.f32 0.0, %v2293
      %v2295 = vpop.f32.mrb[0].mxu0
      %v2296 = vpop.f32.mrb[0].mxu0
      %v2297 = vadd.f32 0.0, %v2296
      %v2298 = vpop.f32.mrb[0].mxu0
      %2299 = vmatprep.mubr.bf16.mxu0 0
      %2300 = vmatmul.mubr.bf16.gmra.mrb[0].mxu0 %v2124
      %v2301 = vpop.f32.mrb[0].mxu0
      %v2302 = vadd.f32 0.0, %v2301
      %v2303 = vpop.f32.mrb[0].mxu0
      %v2304 = vpop.f32.mrb[0].mxu0
      %v2305 = vadd.f32 0.0, %v2304
      %v2306 = vpop.f32.mrb[0].mxu0
      %2307 = vmatprep.mubr.bf16.mxu0 0
      %2308 = vmatmul.mubr.bf16.gmra.mrb[0].mxu0 %v2125
      %v2309 = vpop.f32.mrb[0].mxu0
      %v2310 = vadd.f32 0.0, %v2309
      %v2311 = vpop.f32.mrb[0].mxu0
      %v2312 = vpop.f32.mrb[0].mxu0
      %v2313 = vadd.f32 0.0, %v2312
      %v2314 = vpop.f32.mrb[0].mxu0
      %2315 = vmatprep.mubr.bf16.mxu0 0
      %2316 = vmatmul.mubr.bf16.gmra.mrb[0].mxu0 %v2126
      %v2317 = vpop.f32.mrb[0].mxu0
      %v2318 = vadd.f32 0.0, %v2317
      %v2319 = vpop.f32.mrb[0].mxu0
      %v2320 = vpop.f32.mrb[0].mxu0
      %v2321 = vadd.f32 0.0, %v2320
      %v2322 = vpop.f32.mrb[0].mxu0
      %2323 = vmatprep.mubr.bf16.mxu0 0
      %2324 = vmatmul.mubr.bf16.gmra.mrb[0].mxu0 %v2127
      %v2325 = vpop.f32.mrb[0].mxu0
      %v2326 = vadd.f32 0.0, %v2325
      %v2327 = vpop.f32.mrb[0].mxu0
      %v2328 = vpop.f32.mrb[0].mxu0
      %v2329 = vadd.f32 0.0, %v2328
      %v2330 = vpop.f32.mrb[0].mxu0
      %2331 = vmatprep.mubr.bf16.mxu0 0
      %2332 = vmatmul.mubr.bf16.gmra.mrb[0].mxu0 %v2128
      %v2333 = vpop.f32.mrb[0].mxu0
      %v2334 = vadd.f32 0.0, %v2333
      %v2335 = vpop.f32.mrb[0].mxu0
      %v2336 = vpop.f32.mrb[0].mxu0
      %v2337 = vadd.f32 0.0, %v2336
      %v2338 = vpop.f32.mrb[0].mxu0
      %2339 = vmatprep.mubr.bf16.mxu0 0
      %2340 = vmatmul.mubr.bf16.gmra.mrb[0].mxu0 %v2129
      %v2341 = vpop.f32.mrb[0].mxu0
      %v2342 = vadd.f32 0.0, %v2341
      %v2343 = vpop.f32.mrb[0].mxu0
      %v2344 = vpop.f32.mrb[0].mxu0
      %v2345 = vadd.f32 0.0, %v2344
      %v2346 = vpop.f32.mrb[0].mxu0
      %2347 = vmatprep.mubr.bf16.mxu0 0
      %2348 = vmatmul.mubr.bf16.gmra.mrb[0].mxu0 %v2130
      %v2349 = vpop.f32.mrb[0].mxu0
      %v2350 = vadd.f32 0.0, %v2349
      %v2351 = vpop.f32.mrb[0].mxu0
      %v2352 = vpop.f32.mrb[0].mxu0
      %v2353 = vadd.f32 0.0, %v2352
      %v2354 = vpop.f32.mrb[0].mxu0
      %2355 = vdwg.mxu0
      %v2356 = vadd.f32 %v1778, %v2230
      %v2357 = vadd.f32 %v1781, %v2233
      %v2358 = vadd.f32 %v1786, %v2238
      %v2359 = vadd.f32 %v1789, %v2241
      %v2360 = vadd.f32 %v1794, %v2246
      %v2361 = vadd.f32 %v1797, %v2249
      %v2362 = vadd.f32 %v1802, %v2254
      %v2363 = vadd.f32 %v1805, %v2257
      %v2364 = vadd.f32 %v1810, %v2262
      %v2365 = vadd.f32 %v1813, %v2265
      %v2366 = vadd.f32 %v1818, %v2270
      %v2367 = vadd.f32 %v1821, %v2273
      %v2368 = vadd.f32 %v1826, %v2278
      %v2369 = vadd.f32 %v1829, %v2281
      %v2370 = vadd.f32 %v1834, %v2286
      %v2371 = vadd.f32 %v1837, %v2289
      %v2372 = vadd.f32 %v1842, %v2294
      %v2373 = vadd.f32 %v1845, %v2297
      %v2374 = vadd.f32 %v1850, %v2302
      %v2375 = vadd.f32 %v1853, %v2305
      %v2376 = vadd.f32 %v1858, %v2310
      %v2377 = vadd.f32 %v1861, %v2313
      %v2378 = vadd.f32 %v1866, %v2318
      %v2379 = vadd.f32 %v1869, %v2321
      %v2380 = vadd.f32 %v1874, %v2326
      %v2381 = vadd.f32 %v1877, %v2329
      %v2382 = vadd.f32 %v1882, %v2334
      %v2383 = vadd.f32 %v1885, %v2337
      %v2384 = vadd.f32 %v1890, %v2342
      %v2385 = vadd.f32 %v1893, %v2345
      %v2386 = vadd.f32 %v1898, %v2350
      %v2387 = vadd.f32 %v1901, %v2353
      %v2388 = vld [vmem:[%s225] sm:$0xf]
      %v2389 = vld [vmem:[%s225 + $0x4] sm:$0xf]
      %v2390 = vld [vmem:[%s225 + $0xc] sm:$0xf]
      %v2391 = vld [vmem:[%s225 + $0x10] sm:$0xf]
      %v2392 = vld [vmem:[%s225 + $0x18] sm:$0xf]
      %v2393 = vld [vmem:[%s225 + $0x1c] sm:$0xf]
      %v2394 = vld [vmem:[%s225 + $0x24] sm:$0xf]
      %v2395 = vld [vmem:[%s225 + $0x28] sm:$0xf]
      %v2396 = vld [vmem:[%s225 + $0x30] sm:$0xf]
      %v2397 = vld [vmem:[%s225 + $0x34] sm:$0xf]
      %v2398 = vld [vmem:[%s225 + $0x3c] sm:$0xf]
      %v2399 = vld [vmem:[%s225 + $0x40] sm:$0xf]
      %v2400 = vld [vmem:[%s225 + $0x48] sm:$0xf]
      %v2401 = vld [vmem:[%s225 + $0x4c] sm:$0xf]
      %v2402 = vld [vmem:[%s225 + $0x54] sm:$0xf]
      %v2403 = vld [vmem:[%s225 + $0x58] sm:$0xf]
      %v2404 = vld [vmem:[%s225 + $0x60] sm:$0xf]
      %v2405 = vld [vmem:[%s225 + $0x64] sm:$0xf]
      %v2406 = vld [vmem:[%s225 + $0x6c] sm:$0xf]
      %v2407 = vld [vmem:[%s225 + $0x70] sm:$0xf]
      %v2408 = vld [vmem:[%s225 + $0x78] sm:$0xf]
      %v2409 = vld [vmem:[%s225 + $0x7c] sm:$0xf]
      %v2410 = vld [vmem:[%s225 + $0x84] sm:$0xf]
      %v2411 = vld [vmem:[%s225 + $0x88] sm:$0xf]
      %v2412 = vld [vmem:[%s225 + $0x90] sm:$0xf]
      %v2413 = vld [vmem:[%s225 + $0x94] sm:$0xf]
      %v2414 = vld [vmem:[%s225 + $0x9c] sm:$0xf]
      %v2415 = vld [vmem:[%s225 + $0xa0] sm:$0xf]
      %v2416 = vld [vmem:[%s225 + $0xa8] sm:$0xf]
      %v2417 = vld [vmem:[%s225 + $0xac] sm:$0xf]
      %v2418 = vld [vmem:[%s225 + $0xb4] sm:$0xf]
      %v2419 = vld [vmem:[%s225 + $0xb8] sm:$0xf]
      %v2420 = vld [vmem:[%s1 + $0xc0] sm:$0xf]
      %v2421 = vld [vmem:[%s1 + $0xc4] sm:$0xf]
      %v2422 = vld [vmem:[%s1 + $0xc8] sm:$0xf]
      %v2423 = vld [vmem:[%s1 + $0xcc] sm:$0xf]
      %v2424 = vld [vmem:[%s1 + $0xd0] sm:$0xf]
      %v2425 = vld [vmem:[%s1 + $0xd4] sm:$0xf]
      %v2426 = vld [vmem:[%s1 + $0xd8] sm:$0xf]
      %v2427 = vld [vmem:[%s1 + $0xdc] sm:$0xf]
      %v2428 = vld [vmem:[%s1 + $0xe0] sm:$0xf]
      %v2429 = vld [vmem:[%s1 + $0xe4] sm:$0xf]
      %v2430 = vld [vmem:[%s1 + $0xe8] sm:$0xf]
      %v2431 = vld [vmem:[%s1 + $0xec] sm:$0xf]
      %v2432 = vld [vmem:[%s1 + $0xf0] sm:$0xf]
      %v2433 = vld [vmem:[%s1 + $0xf4] sm:$0xf]
      %v2434 = vld [vmem:[%s1 + $0xf8] sm:$0xf]
      %v2435 = vld [vmem:[%s1 + $0xfc] sm:$0xf]
      %v2468 = vunpack.c.l.b16 %v2388
      %v2469 = vunpack.c.l.b16 %v2389
      %v2470 = vunpack.c.l.b16 %v2390
      %v2471 = vunpack.c.l.b16 %v2391
      %v2472 = vunpack.c.l.b16 %v2392
      %v2473 = vunpack.c.l.b16 %v2393
      %v2474 = vunpack.c.l.b16 %v2394
      %v2475 = vunpack.c.l.b16 %v2395
      %v2476 = vunpack.c.l.b16 %v2396
      %v2477 = vunpack.c.l.b16 %v2397
      %v2478 = vunpack.c.l.b16 %v2398
      %v2479 = vunpack.c.l.b16 %v2399
      %v2480 = vunpack.c.l.b16 %v2400
      %v2481 = vunpack.c.l.b16 %v2401
      %v2482 = vunpack.c.l.b16 %v2402
      %v2483 = vunpack.c.l.b16 %v2403
      %v2484 = vunpack.c.l.b16 %v2404
      %v2485 = vunpack.c.l.b16 %v2405
      %v2486 = vunpack.c.l.b16 %v2406
      %v2487 = vunpack.c.l.b16 %v2407
      %v2488 = vunpack.c.l.b16 %v2408
      %v2489 = vunpack.c.l.b16 %v2409
      %v2490 = vunpack.c.l.b16 %v2410
      %v2491 = vunpack.c.l.b16 %v2411
      %v2492 = vunpack.c.l.b16 %v2412
      %v2493 = vunpack.c.l.b16 %v2413
      %v2494 = vunpack.c.l.b16 %v2414
      %v2495 = vunpack.c.l.b16 %v2415
      %v2496 = vunpack.c.l.b16 %v2416
      %v2497 = vunpack.c.l.b16 %v2417
      %v2498 = vunpack.c.l.b16 %v2418
      %v2499 = vunpack.c.l.b16 %v2419
      %v2500 = vpack.c.b16 %v2469, %v2468
      %v2501 = vpack.c.b16 %v2471, %v2470
      %v2502 = vpack.c.b16 %v2473, %v2472
      %v2503 = vpack.c.b16 %v2475, %v2474
      %v2504 = vpack.c.b16 %v2477, %v2476
      %v2505 = vpack.c.b16 %v2479, %v2478
      %v2506 = vpack.c.b16 %v2481, %v2480
      %v2507 = vpack.c.b16 %v2483, %v2482
      %v2508 = vpack.c.b16 %v2485, %v2484
      %v2509 = vpack.c.b16 %v2487, %v2486
      %v2510 = vpack.c.b16 %v2489, %v2488
      %v2511 = vpack.c.b16 %v2491, %v2490
      %v2512 = vpack.c.b16 %v2493, %v2492
      %v2513 = vpack.c.b16 %v2495, %v2494
      %v2514 = vpack.c.b16 %v2497, %v2496
      %v2515 = vpack.c.b16 %v2499, %v2498
      %v2548 = vunpack.c.l.b16 %v2420
      %v2549 = vunpack.c.l.b16 %v2421
      %v2550 = vunpack.c.l.b16 %v2422
      %v2551 = vunpack.c.l.b16 %v2423
      %v2552 = vunpack.c.l.b16 %v2424
      %v2553 = vunpack.c.l.b16 %v2425
      %v2554 = vunpack.c.l.b16 %v2426
      %v2555 = vunpack.c.l.b16 %v2427
      %v2556 = vunpack.c.l.b16 %v2428
      %v2557 = vunpack.c.l.b16 %v2429
      %v2558 = vunpack.c.l.b16 %v2430
      %v2559 = vunpack.c.l.b16 %v2431
      %v2560 = vunpack.c.l.b16 %v2432
      %v2561 = vunpack.c.l.b16 %v2433
      %v2562 = vunpack.c.l.b16 %v2434
      %v2563 = vunpack.c.l.b16 %v2435
      %v2564 = vpack.c.b16 %v2549, %v2548
      %v2565 = vpack.c.b16 %v2551, %v2550
      %v2566 = vpack.c.b16 %v2553, %v2552
      %v2567 = vpack.c.b16 %v2555, %v2554
      %v2568 = vpack.c.b16 %v2557, %v2556
      %v2569 = vpack.c.b16 %v2559, %v2558
      %v2570 = vpack.c.b16 %v2561, %v2560
      %v2571 = vpack.c.b16 %v2563, %v2562
      %2580 = vmatprep.subr.bf16.mxu0 0
      %2581 = vmatpush1.bf16.msra.mxu0 %v2564
      %2582 = vmatprep.subr.bf16.mxu0 0
      %2583 = vmatpush1.bf16.msra.mxu0 %v2565
      %2584 = vmatprep.subr.bf16.mxu0 0
      %2585 = vmatpush1.bf16.msra.mxu0 %v2566
      %2586 = vmatprep.subr.bf16.mxu0 0
      %2587 = vmatpush1.bf16.msra.mxu0 %v2567
      %2588 = vmatprep.subr.bf16.mxu0 0
      %2589 = vmatpush1.bf16.msra.mxu0 %v2568
      %2590 = vmatprep.subr.bf16.mxu0 0
      %2591 = vmatpush1.bf16.msra.mxu0 %v2569
      %2592 = vmatprep.subr.bf16.mxu0 0
      %2593 = vmatpush1.bf16.msra.mxu0 %v2570
      %2594 = vmatprep.subr.bf16.mxu0 0
      %2595 = vmatpush1.bf16.msra.mxu0 %v2571
      %2596 = vmatprep.subr.bf16.mxu0 0
      %2597 = vmatpush1.bf16.msra.mxu0 0
      %2598 = vmatprep.subr.bf16.mxu0 0
      %2599 = vmatpush1.bf16.msra.mxu0 0
      %2600 = vmatprep.subr.bf16.mxu0 0
      %2601 = vmatpush1.bf16.msra.mxu0 0
      %2602 = vmatprep.subr.bf16.mxu0 0
      %2603 = vmatpush1.bf16.msra.mxu0 0
      %2604 = vmatprep.subr.bf16.mxu0 0
      %2605 = vmatpush1.bf16.msra.mxu0 0
      %2606 = vmatprep.subr.bf16.mxu0 0
      %2607 = vmatpush1.bf16.msra.mxu0 0
      %2608 = vmatprep.subr.bf16.mxu0 0
      %2609 = vmatpush1.bf16.msra.mxu0 0
      %2610 = vmatprep.subr.bf16.mxu0 0
      %2611 = vmatpush1.bf16.msra.mxu0 0
      %2612 = vmatprep.mubr.bf16.mxu0 0
      %2613 = vmatmul.mubr.bf16.gmra.mrb[0].mxu0 %v2500
      %v2614 = vpop.f32.mrb[0].mxu0
      %v2615 = vadd.f32 0.0, %v2614
      %v2616 = vpop.f32.mrb[0].mxu0
      %v2617 = vpop.f32.mrb[0].mxu0
      %v2618 = vadd.f32 0.0, %v2617
      %v2619 = vpop.f32.mrb[0].mxu0
      %2620 = vmatprep.mubr.bf16.mxu0 0
      %2621 = vmatmul.mubr.bf16.gmra.mrb[0].mxu0 %v2501
      %v2622 = vpop.f32.mrb[0].mxu0
      %v2623 = vadd.f32 0.0, %v2622
      %v2624 = vpop.f32.mrb[0].mxu0
      %v2625 = vpop.f32.mrb[0].mxu0
      %v2626 = vadd.f32 0.0, %v2625
      %v2627 = vpop.f32.mrb[0].mxu0
      %2628 = vmatprep.mubr.bf16.mxu0 0
      %2629 = vmatmul.mubr.bf16.gmra.mrb[0].mxu0 %v2502
      %v2630 = vpop.f32.mrb[0].mxu0
      %v2631 = vadd.f32 0.0, %v2630
      %v2632 = vpop.f32.mrb[0].mxu0
      %v2633 = vpop.f32.mrb[0].mxu0
      %v2634 = vadd.f32 0.0, %v2633
      %v2635 = vpop.f32.mrb[0].mxu0
      %2636 = vmatprep.mubr.bf16.mxu0 0
      %2637 = vmatmul.mubr.bf16.gmra.mrb[0].mxu0 %v2503
      %v2638 = vpop.f32.mrb[0].mxu0
      %v2639 = vadd.f32 0.0, %v2638
      %v2640 = vpop.f32.mrb[0].mxu0
      %v2641 = vpop.f32.mrb[0].mxu0
      %v2642 = vadd.f32 0.0, %v2641
      %v2643 = vpop.f32.mrb[0].mxu0
      %2644 = vmatprep.mubr.bf16.mxu0 0
      %2645 = vmatmul.mubr.bf16.gmra.mrb[0].mxu0 %v2504
      %v2646 = vpop.f32.mrb[0].mxu0
      %v2647 = vadd.f32 0.0, %v2646
      %v2648 = vpop.f32.mrb[0].mxu0
      %v2649 = vpop.f32.mrb[0].mxu0
      %v2650 = vadd.f32 0.0, %v2649
      %v2651 = vpop.f32.mrb[0].mxu0
      %2652 = vmatprep.mubr.bf16.mxu0 0
      %2653 = vmatmul.mubr.bf16.gmra.mrb[0].mxu0 %v2505
      %v2654 = vpop.f32.mrb[0].mxu0
      %v2655 = vadd.f32 0.0, %v2654
      %v2656 = vpop.f32.mrb[0].mxu0
      %v2657 = vpop.f32.mrb[0].mxu0
      %v2658 = vadd.f32 0.0, %v2657
      %v2659 = vpop.f32.mrb[0].mxu0
      %2660 = vmatprep.mubr.bf16.mxu0 0
      %2661 = vmatmul.mubr.bf16.gmra.mrb[0].mxu0 %v2506
      %v2662 = vpop.f32.mrb[0].mxu0
      %v2663 = vadd.f32 0.0, %v2662
      %v2664 = vpop.f32.mrb[0].mxu0
      %v2665 = vpop.f32.mrb[0].mxu0
      %v2666 = vadd.f32 0.0, %v2665
      %v2667 = vpop.f32.mrb[0].mxu0
      %2668 = vmatprep.mubr.bf16.mxu0 0
      %2669 = vmatmul.mubr.bf16.gmra.mrb[0].mxu0 %v2507
      %v2670 = vpop.f32.mrb[0].mxu0
      %v2671 = vadd.f32 0.0, %v2670
      %v2672 = vpop.f32.mrb[0].mxu0
      %v2673 = vpop.f32.mrb[0].mxu0
      %v2674 = vadd.f32 0.0, %v2673
      %v2675 = vpop.f32.mrb[0].mxu0
      %2676 = vmatprep.mubr.bf16.mxu0 0
      %2677 = vmatmul.mubr.bf16.gmra.mrb[0].mxu0 %v2508
      %v2678 = vpop.f32.mrb[0].mxu0
      %v2679 = vadd.f32 0.0, %v2678
      %v2680 = vpop.f32.mrb[0].mxu0
      %v2681 = vpop.f32.mrb[0].mxu0
      %v2682 = vadd.f32 0.0, %v2681
      %v2683 = vpop.f32.mrb[0].mxu0
      %2684 = vmatprep.mubr.bf16.mxu0 0
      %2685 = vmatmul.mubr.bf16.gmra.mrb[0].mxu0 %v2509
      %v2686 = vpop.f32.mrb[0].mxu0
      %v2687 = vadd.f32 0.0, %v2686
      %v2688 = vpop.f32.mrb[0].mxu0
      %v2689 = vpop.f32.mrb[0].mxu0
      %v2690 = vadd.f32 0.0, %v2689
      %v2691 = vpop.f32.mrb[0].mxu0
      %2692 = vmatprep.mubr.bf16.mxu0 0
      %2693 = vmatmul.mubr.bf16.gmra.mrb[0].mxu0 %v2510
      %v2694 = vpop.f32.mrb[0].mxu0
      %v2695 = vadd.f32 0.0, %v2694
      %v2696 = vpop.f32.mrb[0].mxu0
      %v2697 = vpop.f32.mrb[0].mxu0
      %v2698 = vadd.f32 0.0, %v2697
      %v2699 = vpop.f32.mrb[0].mxu0
      %2700 = vmatprep.mubr.bf16.mxu0 0
      %2701 = vmatmul.mubr.bf16.gmra.mrb[0].mxu0 %v2511
      %v2702 = vpop.f32.mrb[0].mxu0
      %v2703 = vadd.f32 0.0, %v2702
      %v2704 = vpop.f32.mrb[0].mxu0
      %v2705 = vpop.f32.mrb[0].mxu0
      %v2706 = vadd.f32 0.0, %v2705
      %v2707 = vpop.f32.mrb[0].mxu0
      %2708 = vmatprep.mubr.bf16.mxu0 0
      %2709 = vmatmul.mubr.bf16.gmra.mrb[0].mxu0 %v2512
      %v2710 = vpop.f32.mrb[0].mxu0
      %v2711 = vadd.f32 0.0, %v2710
      %v2712 = vpop.f32.mrb[0].mxu0
      %v2713 = vpop.f32.mrb[0].mxu0
      %v2714 = vadd.f32 0.0, %v2713
      %v2715 = vpop.f32.mrb[0].mxu0
      %2716 = vmatprep.mubr.bf16.mxu0 0
      %2717 = vmatmul.mubr.bf16.gmra.mrb[0].mxu0 %v2513
      %v2718 = vpop.f32.mrb[0].mxu0
      %v2719 = vadd.f32 0.0, %v2718
      %v2720 = vpop.f32.mrb[0].mxu0
      %v2721 = vpop.f32.mrb[0].mxu0
      %v2722 = vadd.f32 0.0, %v2721
      %v2723 = vpop.f32.mrb[0].mxu0
      %2724 = vmatprep.mubr.bf16.mxu0 0
      %2725 = vmatmul.mubr.bf16.gmra.mrb[0].mxu0 %v2514
      %v2726 = vpop.f32.mrb[0].mxu0
      %v2727 = vadd.f32 0.0, %v2726
      %v2728 = vpop.f32.mrb[0].mxu0
      %v2729 = vpop.f32.mrb[0].mxu0
      %v2730 = vadd.f32 0.0, %v2729
      %v2731 = vpop.f32.mrb[0].mxu0
      %2732 = vmatprep.mubr.bf16.mxu0 0
      %2733 = vmatmul.mubr.bf16.gmra.mrb[0].mxu0 %v2515
      %v2734 = vpop.f32.mrb[0].mxu0
      %v2735 = vadd.f32 0.0, %v2734
      %v2736 = vpop.f32.mrb[0].mxu0
      %v2737 = vpop.f32.mrb[0].mxu0
      %v2738 = vadd.f32 0.0, %v2737
      %v2739 = vpop.f32.mrb[0].mxu0
      %2740 = vdwg.mxu0
      %v2741 = vadd.f32 %v2356, %v2615
      %v2742 = vadd.f32 %v2357, %v2618
      %v2743 = vadd.f32 %v2358, %v2623
      %v2744 = vadd.f32 %v2359, %v2626
      %v2745 = vadd.f32 %v2360, %v2631
      %v2746 = vadd.f32 %v2361, %v2634
      %v2747 = vadd.f32 %v2362, %v2639
      %v2748 = vadd.f32 %v2363, %v2642
      %v2749 = vadd.f32 %v2364, %v2647
      %v2750 = vadd.f32 %v2365, %v2650
      %v2751 = vadd.f32 %v2366, %v2655
      %v2752 = vadd.f32 %v2367, %v2658
      %v2753 = vadd.f32 %v2368, %v2663
      %v2754 = vadd.f32 %v2369, %v2666
      %v2755 = vadd.f32 %v2370, %v2671
      %v2756 = vadd.f32 %v2371, %v2674
      %v2757 = vadd.f32 %v2372, %v2679
      %v2758 = vadd.f32 %v2373, %v2682
      %v2759 = vadd.f32 %v2374, %v2687
      %v2760 = vadd.f32 %v2375, %v2690
      %v2761 = vadd.f32 %v2376, %v2695
      %v2762 = vadd.f32 %v2377, %v2698
      %v2763 = vadd.f32 %v2378, %v2703
      %v2764 = vadd.f32 %v2379, %v2706
      %v2765 = vadd.f32 %v2380, %v2711
      %v2766 = vadd.f32 %v2381, %v2714
      %v2767 = vadd.f32 %v2382, %v2719
      %v2768 = vadd.f32 %v2383, %v2722
      %v2769 = vadd.f32 %v2384, %v2727
      %v2770 = vadd.f32 %v2385, %v2730
      %v2771 = vadd.f32 %v2386, %v2735
      %v2772 = vadd.f32 %v2387, %v2738
      %v2773 = vld [vmem:[%s225] sm:$0xf]
      %v2774 = vld [vmem:[%s225 + $0x4] sm:$0xf]
      %v2775 = vld [vmem:[%s225 + $0x8] sm:$0x1]
      %v2776 = vld [vmem:[%s225 + $0xc] sm:$0xf]
      %v2777 = vld [vmem:[%s225 + $0x10] sm:$0xf]
      %v2778 = vld [vmem:[%s225 + $0x14] sm:$0x1]
      %v2779 = vld [vmem:[%s225 + $0x18] sm:$0xf]
      %v2780 = vld [vmem:[%s225 + $0x1c] sm:$0xf]
      %v2781 = vld [vmem:[%s225 + $0x20] sm:$0x1]
      %v2782 = vld [vmem:[%s225 + $0x24] sm:$0xf]
      %v2783 = vld [vmem:[%s225 + $0x28] sm:$0xf]
      %v2784 = vld [vmem:[%s225 + $0x2c] sm:$0x1]
      %v2785 = vld [vmem:[%s225 + $0x30] sm:$0xf]
      %v2786 = vld [vmem:[%s225 + $0x34] sm:$0xf]
      %v2787 = vld [vmem:[%s225 + $0x38] sm:$0x1]
      %v2788 = vld [vmem:[%s225 + $0x3c] sm:$0xf]
      %v2789 = vld [vmem:[%s225 + $0x40] sm:$0xf]
      %v2790 = vld [vmem:[%s225 + $0x44] sm:$0x1]
      %v2791 = vld [vmem:[%s225 + $0x48] sm:$0xf]
      %v2792 = vld [vmem:[%s225 + $0x4c] sm:$0xf]
      %v2793 = vld [vmem:[%s225 + $0x50] sm:$0x1]
      %v2794 = vld [vmem:[%s225 + $0x54] sm:$0xf]
      %v2795 = vld [vmem:[%s225 + $0x58] sm:$0xf]
      %v2796 = vld [vmem:[%s225 + $0x5c] sm:$0x1]
      %v2797 = vld [vmem:[%s225 + $0x60] sm:$0xf]
      %v2798 = vld [vmem:[%s225 + $0x64] sm:$0xf]
      %v2799 = vld [vmem:[%s225 + $0x68] sm:$0x1]
      %v2800 = vld [vmem:[%s225 + $0x6c] sm:$0xf]
      %v2801 = vld [vmem:[%s225 + $0x70] sm:$0xf]
      %v2802 = vld [vmem:[%s225 + $0x74] sm:$0x1]
      %v2803 = vld [vmem:[%s225 + $0x78] sm:$0xf]
      %v2804 = vld [vmem:[%s225 + $0x7c] sm:$0xf]
      %v2805 = vld [vmem:[%s225 + $0x80] sm:$0x1]
      %v2806 = vld [vmem:[%s225 + $0x84] sm:$0xf]
      %v2807 = vld [vmem:[%s225 + $0x88] sm:$0xf]
      %v2808 = vld [vmem:[%s225 + $0x8c] sm:$0x1]
      %v2809 = vld [vmem:[%s225 + $0x90] sm:$0xf]
      %v2810 = vld [vmem:[%s225 + $0x94] sm:$0xf]
      %v2811 = vld [vmem:[%s225 + $0x98] sm:$0x1]
      %v2812 = vld [vmem:[%s225 + $0x9c] sm:$0xf]
      %v2813 = vld [vmem:[%s225 + $0xa0] sm:$0xf]
      %v2814 = vld [vmem:[%s225 + $0xa4] sm:$0x1]
      %v2815 = vld [vmem:[%s225 + $0xa8] sm:$0xf]
      %v2816 = vld [vmem:[%s225 + $0xac] sm:$0xf]
      %v2817 = vld [vmem:[%s225 + $0xb0] sm:$0x1]
      %v2818 = vld [vmem:[%s225 + $0xb4] sm:$0xf]
      %v2819 = vld [vmem:[%s225 + $0xb8] sm:$0xf]
      %v2820 = vld [vmem:[%s225 + $0xbc] sm:$0x1]
      %v2822 = vshrl.u32 %v2773, 16
      %v2824 = vrot.slane %v2822, 4
      %v2825 = vshll.u32 %v2773, 16
      %v2827 = vrot.slane %v2825, 5
      %v2828 = vor.u32 %v2824, %v2827
      %v2829 = vrot.slane %v2828, 4
      %v2831 = vshll.u32 %v2774, 16
      %v2833 = vrot.slane %v2831, 5
      %v2834 = vsel %vm925, %v2829, %v2833
      %v2835 = vshrl.u32 %v2774, 16
      %v2837 = vrot.slane %v2835, 4
      %v2838 = vor.u32 %v2837, %v2833
      %v2839 = vrot.slane %v2838, 4
      %v2841 = vshll.u32 %v2775, 16
      %v2843 = vrot.slane %v2841, 5
      %v2844 = vsel %vm925, %v2839, %v2843
      %v2846 = vshrl.u32 %v2776, 16
      %v2848 = vrot.slane %v2846, 4
      %v2849 = vshll.u32 %v2776, 16
      %v2851 = vrot.slane %v2849, 5
      %v2852 = vor.u32 %v2848, %v2851
      %v2853 = vrot.slane %v2852, 4
      %v2855 = vshll.u32 %v2777, 16
      %v2857 = vrot.slane %v2855, 5
      %v2858 = vsel %vm925, %v2853, %v2857
      %v2859 = vshrl.u32 %v2777, 16
      %v2861 = vrot.slane %v2859, 4
      %v2862 = vor.u32 %v2861, %v2857
      %v2863 = vrot.slane %v2862, 4
      %v2865 = vshll.u32 %v2778, 16
      %v2867 = vrot.slane %v2865, 5
      %v2868 = vsel %vm925, %v2863, %v2867
      %v2870 = vshrl.u32 %v2779, 16
      %v2872 = vrot.slane %v2870, 4
      %v2873 = vshll.u32 %v2779, 16
      %v2875 = vrot.slane %v2873, 5
      %v2876 = vor.u32 %v2872, %v2875
      %v2877 = vrot.slane %v2876, 4
      %v2879 = vshll.u32 %v2780, 16
      %v2881 = vrot.slane %v2879, 5
      %v2882 = vsel %vm925, %v2877, %v2881
      %v2883 = vshrl.u32 %v2780, 16
      %v2885 = vrot.slane %v2883, 4
      %v2886 = vor.u32 %v2885, %v2881
      %v2887 = vrot.slane %v2886, 4
      %v2889 = vshll.u32 %v2781, 16
      %v2891 = vrot.slane %v2889, 5
      %v2892 = vsel %vm925, %v2887, %v2891
      %v2894 = vshrl.u32 %v2782, 16
      %v2896 = vrot.slane %v2894, 4
      %v2897 = vshll.u32 %v2782, 16
      %v2899 = vrot.slane %v2897, 5
      %v2900 = vor.u32 %v2896, %v2899
      %v2901 = vrot.slane %v2900, 4
      %v2903 = vshll.u32 %v2783, 16
      %v2905 = vrot.slane %v2903, 5
      %v2906 = vsel %vm925, %v2901, %v2905
      %v2907 = vshrl.u32 %v2783, 16
      %v2909 = vrot.slane %v2907, 4
      %v2910 = vor.u32 %v2909, %v2905
      %v2911 = vrot.slane %v2910, 4
      %v2913 = vshll.u32 %v2784, 16
      %v2915 = vrot.slane %v2913, 5
      %v2916 = vsel %vm925, %v2911, %v2915
      %v2918 = vshrl.u32 %v2785, 16
      %v2920 = vrot.slane %v2918, 4
      %v2921 = vshll.u32 %v2785, 16
      %v2923 = vrot.slane %v2921, 5
      %v2924 = vor.u32 %v2920, %v2923
      %v2925 = vrot.slane %v2924, 4
      %v2927 = vshll.u32 %v2786, 16
      %v2929 = vrot.slane %v2927, 5
      %v2930 = vsel %vm925, %v2925, %v2929
      %v2931 = vshrl.u32 %v2786, 16
      %v2933 = vrot.slane %v2931, 4
      %v2934 = vor.u32 %v2933, %v2929
      %v2935 = vrot.slane %v2934, 4
      %v2937 = vshll.u32 %v2787, 16
      %v2939 = vrot.slane %v2937, 5
      %v2940 = vsel %vm925, %v2935, %v2939
      %v2942 = vshrl.u32 %v2788, 16
      %v2944 = vrot.slane %v2942, 4
      %v2945 = vshll.u32 %v2788, 16
      %v2947 = vrot.slane %v2945, 5
      %v2948 = vor.u32 %v2944, %v2947
      %v2949 = vrot.slane %v2948, 4
      %v2951 = vshll.u32 %v2789, 16
      %v2953 = vrot.slane %v2951, 5
      %v2954 = vsel %vm925, %v2949, %v2953
      %v2955 = vshrl.u32 %v2789, 16
      %v2957 = vrot.slane %v2955, 4
      %v2958 = vor.u32 %v2957, %v2953
      %v2959 = vrot.slane %v2958, 4
      %v2961 = vshll.u32 %v2790, 16
      %v2963 = vrot.slane %v2961, 5
      %v2964 = vsel %vm925, %v2959, %v2963
      %v2966 = vshrl.u32 %v2791, 16
      %v2968 = vrot.slane %v2966, 4
      %v2969 = vshll.u32 %v2791, 16
      %v2971 = vrot.slane %v2969, 5
      %v2972 = vor.u32 %v2968, %v2971
      %v2973 = vrot.slane %v2972, 4
      %v2975 = vshll.u32 %v2792, 16
      %v2977 = vrot.slane %v2975, 5
      %v2978 = vsel %vm925, %v2973, %v2977
      %v2979 = vshrl.u32 %v2792, 16
      %v2981 = vrot.slane %v2979, 4
      %v2982 = vor.u32 %v2981, %v2977
      %v2983 = vrot.slane %v2982, 4
      %v2985 = vshll.u32 %v2793, 16
      %v2987 = vrot.slane %v2985, 5
      %v2988 = vsel %vm925, %v2983, %v2987
      %v2990 = vshrl.u32 %v2794, 16
      %v2992 = vrot.slane %v2990, 4
      %v2993 = vshll.u32 %v2794, 16
      %v2995 = vrot.slane %v2993, 5
      %v2996 = vor.u32 %v2992, %v2995
      %v2997 = vrot.slane %v2996, 4
      %v2999 = vshll.u32 %v2795, 16
      %v3001 = vrot.slane %v2999, 5
      %v3002 = vsel %vm925, %v2997, %v3001
      %v3003 = vshrl.u32 %v2795, 16
      %v3005 = vrot.slane %v3003, 4
      %v3006 = vor.u32 %v3005, %v3001
      %v3007 = vrot.slane %v3006, 4
      %v3009 = vshll.u32 %v2796, 16
      %v3011 = vrot.slane %v3009, 5
      %v3012 = vsel %vm925, %v3007, %v3011
      %v3014 = vshrl.u32 %v2797, 16
      %v3016 = vrot.slane %v3014, 4
      %v3017 = vshll.u32 %v2797, 16
      %v3019 = vrot.slane %v3017, 5
      %v3020 = vor.u32 %v3016, %v3019
      %v3021 = vrot.slane %v3020, 4
      %v3023 = vshll.u32 %v2798, 16
      %v3025 = vrot.slane %v3023, 5
      %v3026 = vsel %vm925, %v3021, %v3025
      %v3027 = vshrl.u32 %v2798, 16
      %v3029 = vrot.slane %v3027, 4
      %v3030 = vor.u32 %v3029, %v3025
      %v3031 = vrot.slane %v3030, 4
      %v3033 = vshll.u32 %v2799, 16
      %v3035 = vrot.slane %v3033, 5
      %v3036 = vsel %vm925, %v3031, %v3035
      %v3038 = vshrl.u32 %v2800, 16
      %v3040 = vrot.slane %v3038, 4
      %v3041 = vshll.u32 %v2800, 16
      %v3043 = vrot.slane %v3041, 5
      %v3044 = vor.u32 %v3040, %v3043
      %v3045 = vrot.slane %v3044, 4
      %v3047 = vshll.u32 %v2801, 16
      %v3049 = vrot.slane %v3047, 5
      %v3050 = vsel %vm925, %v3045, %v3049
      %v3051 = vshrl.u32 %v2801, 16
      %v3053 = vrot.slane %v3051, 4
      %v3054 = vor.u32 %v3053, %v3049
      %v3055 = vrot.slane %v3054, 4
      %v3057 = vshll.u32 %v2802, 16
      %v3059 = vrot.slane %v3057, 5
      %v3060 = vsel %vm925, %v3055, %v3059
      %v3062 = vshrl.u32 %v2803, 16
      %v3064 = vrot.slane %v3062, 4
      %v3065 = vshll.u32 %v2803, 16
      %v3067 = vrot.slane %v3065, 5
      %v3068 = vor.u32 %v3064, %v3067
      %v3069 = vrot.slane %v3068, 4
      %v3071 = vshll.u32 %v2804, 16
      %v3073 = vrot.slane %v3071, 5
      %v3074 = vsel %vm925, %v3069, %v3073
      %v3075 = vshrl.u32 %v2804, 16
      %v3077 = vrot.slane %v3075, 4
      %v3078 = vor.u32 %v3077, %v3073
      %v3079 = vrot.slane %v3078, 4
      %v3081 = vshll.u32 %v2805, 16
      %v3083 = vrot.slane %v3081, 5
      %v3084 = vsel %vm925, %v3079, %v3083
      %v3086 = vshrl.u32 %v2806, 16
      %v3088 = vrot.slane %v3086, 4
      %v3089 = vshll.u32 %v2806, 16
      %v3091 = vrot.slane %v3089, 5
      %v3092 = vor.u32 %v3088, %v3091
      %v3093 = vrot.slane %v3092, 4
      %v3095 = vshll.u32 %v2807, 16
      %v3097 = vrot.slane %v3095, 5
      %v3098 = vsel %vm925, %v3093, %v3097
      %v3099 = vshrl.u32 %v2807, 16
      %v3101 = vrot.slane %v3099, 4
      %v3102 = vor.u32 %v3101, %v3097
      %v3103 = vrot.slane %v3102, 4
      %v3105 = vshll.u32 %v2808, 16
      %v3107 = vrot.slane %v3105, 5
      %v3108 = vsel %vm925, %v3103, %v3107
      %v3110 = vshrl.u32 %v2809, 16
      %v3112 = vrot.slane %v3110, 4
      %v3113 = vshll.u32 %v2809, 16
      %v3115 = vrot.slane %v3113, 5
      %v3116 = vor.u32 %v3112, %v3115
      %v3117 = vrot.slane %v3116, 4
      %v3119 = vshll.u32 %v2810, 16
      %v3121 = vrot.slane %v3119, 5
      %v3122 = vsel %vm925, %v3117, %v3121
      %v3123 = vshrl.u32 %v2810, 16
      %v3125 = vrot.slane %v3123, 4
      %v3126 = vor.u32 %v3125, %v3121
      %v3127 = vrot.slane %v3126, 4
      %v3129 = vshll.u32 %v2811, 16
      %v3131 = vrot.slane %v3129, 5
      %v3132 = vsel %vm925, %v3127, %v3131
      %v3134 = vshrl.u32 %v2812, 16
      %v3136 = vrot.slane %v3134, 4
      %v3137 = vshll.u32 %v2812, 16
      %v3139 = vrot.slane %v3137, 5
      %v3140 = vor.u32 %v3136, %v3139
      %v3141 = vrot.slane %v3140, 4
      %v3143 = vshll.u32 %v2813, 16
      %v3145 = vrot.slane %v3143, 5
      %v3146 = vsel %vm925, %v3141, %v3145
      %v3147 = vshrl.u32 %v2813, 16
      %v3149 = vrot.slane %v3147, 4
      %v3150 = vor.u32 %v3149, %v3145
      %v3151 = vrot.slane %v3150, 4
      %v3153 = vshll.u32 %v2814, 16
      %v3155 = vrot.slane %v3153, 5
      %v3156 = vsel %vm925, %v3151, %v3155
      %v3158 = vshrl.u32 %v2815, 16
      %v3160 = vrot.slane %v3158, 4
      %v3161 = vshll.u32 %v2815, 16
      %v3163 = vrot.slane %v3161, 5
      %v3164 = vor.u32 %v3160, %v3163
      %v3165 = vrot.slane %v3164, 4
      %v3167 = vshll.u32 %v2816, 16
      %v3169 = vrot.slane %v3167, 5
      %v3170 = vsel %vm925, %v3165, %v3169
      %v3171 = vshrl.u32 %v2816, 16
      %v3173 = vrot.slane %v3171, 4
      %v3174 = vor.u32 %v3173, %v3169
      %v3175 = vrot.slane %v3174, 4
      %v3177 = vshll.u32 %v2817, 16
      %v3179 = vrot.slane %v3177, 5
      %v3180 = vsel %vm925, %v3175, %v3179
      %v3182 = vshrl.u32 %v2818, 16
      %v3184 = vrot.slane %v3182, 4
      %v3185 = vshll.u32 %v2818, 16
      %v3187 = vrot.slane %v3185, 5
      %v3188 = vor.u32 %v3184, %v3187
      %v3189 = vrot.slane %v3188, 4
      %v3191 = vshll.u32 %v2819, 16
      %v3193 = vrot.slane %v3191, 5
      %v3194 = vsel %vm925, %v3189, %v3193
      %v3195 = vshrl.u32 %v2819, 16
      %v3197 = vrot.slane %v3195, 4
      %v3198 = vor.u32 %v3197, %v3193
      %v3199 = vrot.slane %v3198, 4
      %v3201 = vshll.u32 %v2820, 16
      %v3203 = vrot.slane %v3201, 5
      %v3204 = vsel %vm925, %v3199, %v3203
      %v3205 = vld [vmem:[%s1 + $0x100] sm:$0xf]
      %v3206 = vld [vmem:[%s1 + $0x104] sm:$0xf]
      %v3207 = vld [vmem:[%s1 + $0x108] sm:$0xf]
      %v3208 = vld [vmem:[%s1 + $0x10c] sm:$0xf]
      %v3209 = vld [vmem:[%s1 + $0x110] sm:$0xf]
      %v3210 = vld [vmem:[%s1 + $0x114] sm:$0xf]
      %v3211 = vld [vmem:[%s1 + $0x118] sm:$0xf]
      %v3212 = vld [vmem:[%s1 + $0x11c] sm:$0xf]
      %v3213 = vld [vmem:[%s1 + $0x120] sm:$0xf]
      %v3214 = vld [vmem:[%s1 + $0x124] sm:$0xf]
      %v3215 = vld [vmem:[%s1 + $0x128] sm:$0xf]
      %v3216 = vld [vmem:[%s1 + $0x12c] sm:$0xf]
      %v3217 = vld [vmem:[%s1 + $0x130] sm:$0xf]
      %v3218 = vld [vmem:[%s1 + $0x134] sm:$0xf]
      %v3219 = vld [vmem:[%s1 + $0x138] sm:$0xf]
      %v3220 = vld [vmem:[%s1 + $0x13c] sm:$0xf]
      %v3221 = vunpack.c.l.b16 %v2834
      %v3222 = vunpack.c.l.b16 %v2844
      %v3223 = vunpack.c.l.b16 %v2858
      %v3224 = vunpack.c.l.b16 %v2868
      %v3225 = vunpack.c.l.b16 %v2882
      %v3226 = vunpack.c.l.b16 %v2892
      %v3227 = vunpack.c.l.b16 %v2906
      %v3228 = vunpack.c.l.b16 %v2916
      %v3229 = vunpack.c.l.b16 %v2930
      %v3230 = vunpack.c.l.b16 %v2940
      %v3231 = vunpack.c.l.b16 %v2954
      %v3232 = vunpack.c.l.b16 %v2964
      %v3233 = vunpack.c.l.b16 %v2978
      %v3234 = vunpack.c.l.b16 %v2988
      %v3235 = vunpack.c.l.b16 %v3002
      %v3236 = vunpack.c.l.b16 %v3012
      %v3237 = vunpack.c.l.b16 %v3026
      %v3238 = vunpack.c.l.b16 %v3036
      %v3239 = vunpack.c.l.b16 %v3050
      %v3240 = vunpack.c.l.b16 %v3060
      %v3241 = vunpack.c.l.b16 %v3074
      %v3242 = vunpack.c.l.b16 %v3084
      %v3243 = vunpack.c.l.b16 %v3098
      %v3244 = vunpack.c.l.b16 %v3108
      %v3245 = vunpack.c.l.b16 %v3122
      %v3246 = vunpack.c.l.b16 %v3132
      %v3247 = vunpack.c.l.b16 %v3146
      %v3248 = vunpack.c.l.b16 %v3156
      %v3249 = vunpack.c.l.b16 %v3170
      %v3250 = vunpack.c.l.b16 %v3180
      %v3251 = vunpack.c.l.b16 %v3194
      %v3252 = vunpack.c.l.b16 %v3204
      %v3253 = vpack.c.b16 %v3222, %v3221
      %v3254 = vpack.c.b16 %v3224, %v3223
      %v3255 = vpack.c.b16 %v3226, %v3225
      %v3256 = vpack.c.b16 %v3228, %v3227
      %v3257 = vpack.c.b16 %v3230, %v3229
      %v3258 = vpack.c.b16 %v3232, %v3231
      %v3259 = vpack.c.b16 %v3234, %v3233
      %v3260 = vpack.c.b16 %v3236, %v3235
      %v3261 = vpack.c.b16 %v3238, %v3237
      %v3262 = vpack.c.b16 %v3240, %v3239
      %v3263 = vpack.c.b16 %v3242, %v3241
      %v3264 = vpack.c.b16 %v3244, %v3243
      %v3265 = vpack.c.b16 %v3246, %v3245
      %v3266 = vpack.c.b16 %v3248, %v3247
      %v3267 = vpack.c.b16 %v3250, %v3249
      %v3268 = vpack.c.b16 %v3252, %v3251
      %v3301 = vunpack.c.l.b16 %v3205
      %v3302 = vunpack.c.l.b16 %v3206
      %v3303 = vunpack.c.l.b16 %v3207
      %v3304 = vunpack.c.l.b16 %v3208
      %v3305 = vunpack.c.l.b16 %v3209
      %v3306 = vunpack.c.l.b16 %v3210
      %v3307 = vunpack.c.l.b16 %v3211
      %v3308 = vunpack.c.l.b16 %v3212
      %v3309 = vunpack.c.l.b16 %v3213
      %v3310 = vunpack.c.l.b16 %v3214
      %v3311 = vunpack.c.l.b16 %v3215
      %v3312 = vunpack.c.l.b16 %v3216
      %v3313 = vunpack.c.l.b16 %v3217
      %v3314 = vunpack.c.l.b16 %v3218
      %v3315 = vunpack.c.l.b16 %v3219
      %v3316 = vunpack.c.l.b16 %v3220
      %v3317 = vpack.c.b16 %v3302, %v3301
      %v3318 = vpack.c.b16 %v3304, %v3303
      %v3319 = vpack.c.b16 %v3306, %v3305
      %v3320 = vpack.c.b16 %v3308, %v3307
      %v3321 = vpack.c.b16 %v3310, %v3309
      %v3322 = vpack.c.b16 %v3312, %v3311
      %v3323 = vpack.c.b16 %v3314, %v3313
      %v3324 = vpack.c.b16 %v3316, %v3315
      %3333 = vmatprep.subr.bf16.mxu0 0
      %3334 = vmatpush1.bf16.msra.mxu0 %v3317
      %3335 = vmatprep.subr.bf16.mxu0 0
      %3336 = vmatpush1.bf16.msra.mxu0 %v3318
      %3337 = vmatprep.subr.bf16.mxu0 0
      %3338 = vmatpush1.bf16.msra.mxu0 %v3319
      %3339 = vmatprep.subr.bf16.mxu0 0
      %3340 = vmatpush1.bf16.msra.mxu0 %v3320
      %3341 = vmatprep.subr.bf16.mxu0 0
      %3342 = vmatpush1.bf16.msra.mxu0 %v3321
      %3343 = vmatprep.subr.bf16.mxu0 0
      %3344 = vmatpush1.bf16.msra.mxu0 %v3322
      %3345 = vmatprep.subr.bf16.mxu0 0
      %3346 = vmatpush1.bf16.msra.mxu0 %v3323
      %3347 = vmatprep.subr.bf16.mxu0 0
      %3348 = vmatpush1.bf16.msra.mxu0 %v3324
      %3349 = vmatprep.subr.bf16.mxu0 0
      %3350 = vmatpush1.bf16.msra.mxu0 0
      %3351 = vmatprep.subr.bf16.mxu0 0
      %3352 = vmatpush1.bf16.msra.mxu0 0
      %3353 = vmatprep.subr.bf16.mxu0 0
      %3354 = vmatpush1.bf16.msra.mxu0 0
      %3355 = vmatprep.subr.bf16.mxu0 0
      %3356 = vmatpush1.bf16.msra.mxu0 0
      %3357 = vmatprep.subr.bf16.mxu0 0
      %3358 = vmatpush1.bf16.msra.mxu0 0
      %3359 = vmatprep.subr.bf16.mxu0 0
      %3360 = vmatpush1.bf16.msra.mxu0 0
      %3361 = vmatprep.subr.bf16.mxu0 0
      %3362 = vmatpush1.bf16.msra.mxu0 0
      %3363 = vmatprep.subr.bf16.mxu0 0
      %3364 = vmatpush1.bf16.msra.mxu0 0
      %3365 = vmatprep.mubr.bf16.mxu0 0
      %3366 = vmatmul.mubr.bf16.gmra.mrb[0].mxu0 %v3253
      %v3367 = vpop.f32.mrb[0].mxu0
      %v3368 = vadd.f32 0.0, %v3367
      %v3369 = vpop.f32.mrb[0].mxu0
      %v3370 = vpop.f32.mrb[0].mxu0
      %v3371 = vadd.f32 0.0, %v3370
      %v3372 = vpop.f32.mrb[0].mxu0
      %3373 = vmatprep.mubr.bf16.mxu0 0
      %3374 = vmatmul.mubr.bf16.gmra.mrb[0].mxu0 %v3254
      %v3375 = vpop.f32.mrb[0].mxu0
      %v3376 = vadd.f32 0.0, %v3375
      %v3377 = vpop.f32.mrb[0].mxu0
      %v3378 = vpop.f32.mrb[0].mxu0
      %v3379 = vadd.f32 0.0, %v3378
      %v3380 = vpop.f32.mrb[0].mxu0
      %3381 = vmatprep.mubr.bf16.mxu0 0
      %3382 = vmatmul.mubr.bf16.gmra.mrb[0].mxu0 %v3255
      %v3383 = vpop.f32.mrb[0].mxu0
      %v3384 = vadd.f32 0.0, %v3383
      %v3385 = vpop.f32.mrb[0].mxu0
      %v3386 = vpop.f32.mrb[0].mxu0
      %v3387 = vadd.f32 0.0, %v3386
      %v3388 = vpop.f32.mrb[0].mxu0
      %3389 = vmatprep.mubr.bf16.mxu0 0
      %3390 = vmatmul.mubr.bf16.gmra.mrb[0].mxu0 %v3256
      %v3391 = vpop.f32.mrb[0].mxu0
      %v3392 = vadd.f32 0.0, %v3391
      %v3393 = vpop.f32.mrb[0].mxu0
      %v3394 = vpop.f32.mrb[0].mxu0
      %v3395 = vadd.f32 0.0, %v3394
      %v3396 = vpop.f32.mrb[0].mxu0
      %3397 = vmatprep.mubr.bf16.mxu0 0
      %3398 = vmatmul.mubr.bf16.gmra.mrb[0].mxu0 %v3257
      %v3399 = vpop.f32.mrb[0].mxu0
      %v3400 = vadd.f32 0.0, %v3399
      %v3401 = vpop.f32.mrb[0].mxu0
      %v3402 = vpop.f32.mrb[0].mxu0
      %v3403 = vadd.f32 0.0, %v3402
      %v3404 = vpop.f32.mrb[0].mxu0
      %3405 = vmatprep.mubr.bf16.mxu0 0
      %3406 = vmatmul.mubr.bf16.gmra.mrb[0].mxu0 %v3258
      %v3407 = vpop.f32.mrb[0].mxu0
      %v3408 = vadd.f32 0.0, %v3407
      %v3409 = vpop.f32.mrb[0].mxu0
      %v3410 = vpop.f32.mrb[0].mxu0
      %v3411 = vadd.f32 0.0, %v3410
      %v3412 = vpop.f32.mrb[0].mxu0
      %3413 = vmatprep.mubr.bf16.mxu0 0
      %3414 = vmatmul.mubr.bf16.gmra.mrb[0].mxu0 %v3259
      %v3415 = vpop.f32.mrb[0].mxu0
      %v3416 = vadd.f32 0.0, %v3415
      %v3417 = vpop.f32.mrb[0].mxu0
      %v3418 = vpop.f32.mrb[0].mxu0
      %v3419 = vadd.f32 0.0, %v3418
      %v3420 = vpop.f32.mrb[0].mxu0
      %3421 = vmatprep.mubr.bf16.mxu0 0
      %3422 = vmatmul.mubr.bf16.gmra.mrb[0].mxu0 %v3260
      %v3423 = vpop.f32.mrb[0].mxu0
      %v3424 = vadd.f32 0.0, %v3423
      %v3425 = vpop.f32.mrb[0].mxu0
      %v3426 = vpop.f32.mrb[0].mxu0
      %v3427 = vadd.f32 0.0, %v3426
      %v3428 = vpop.f32.mrb[0].mxu0
      %3429 = vmatprep.mubr.bf16.mxu0 0
      %3430 = vmatmul.mubr.bf16.gmra.mrb[0].mxu0 %v3261
      %v3431 = vpop.f32.mrb[0].mxu0
      %v3432 = vadd.f32 0.0, %v3431
      %v3433 = vpop.f32.mrb[0].mxu0
      %v3434 = vpop.f32.mrb[0].mxu0
      %v3435 = vadd.f32 0.0, %v3434
      %v3436 = vpop.f32.mrb[0].mxu0
      %3437 = vmatprep.mubr.bf16.mxu0 0
      %3438 = vmatmul.mubr.bf16.gmra.mrb[0].mxu0 %v3262
      %v3439 = vpop.f32.mrb[0].mxu0
      %v3440 = vadd.f32 0.0, %v3439
      %v3441 = vpop.f32.mrb[0].mxu0
      %v3442 = vpop.f32.mrb[0].mxu0
      %v3443 = vadd.f32 0.0, %v3442
      %v3444 = vpop.f32.mrb[0].mxu0
      %3445 = vmatprep.mubr.bf16.mxu0 0
      %3446 = vmatmul.mubr.bf16.gmra.mrb[0].mxu0 %v3263
      %v3447 = vpop.f32.mrb[0].mxu0
      %v3448 = vadd.f32 0.0, %v3447
      %v3449 = vpop.f32.mrb[0].mxu0
      %v3450 = vpop.f32.mrb[0].mxu0
      %v3451 = vadd.f32 0.0, %v3450
      %v3452 = vpop.f32.mrb[0].mxu0
      %3453 = vmatprep.mubr.bf16.mxu0 0
      %3454 = vmatmul.mubr.bf16.gmra.mrb[0].mxu0 %v3264
      %v3455 = vpop.f32.mrb[0].mxu0
      %v3456 = vadd.f32 0.0, %v3455
      %v3457 = vpop.f32.mrb[0].mxu0
      %v3458 = vpop.f32.mrb[0].mxu0
      %v3459 = vadd.f32 0.0, %v3458
      %v3460 = vpop.f32.mrb[0].mxu0
      %3461 = vmatprep.mubr.bf16.mxu0 0
      %3462 = vmatmul.mubr.bf16.gmra.mrb[0].mxu0 %v3265
      %v3463 = vpop.f32.mrb[0].mxu0
      %v3464 = vadd.f32 0.0, %v3463
      %v3465 = vpop.f32.mrb[0].mxu0
      %v3466 = vpop.f32.mrb[0].mxu0
      %v3467 = vadd.f32 0.0, %v3466
      %v3468 = vpop.f32.mrb[0].mxu0
      %3469 = vmatprep.mubr.bf16.mxu0 0
      %3470 = vmatmul.mubr.bf16.gmra.mrb[0].mxu0 %v3266
      %v3471 = vpop.f32.mrb[0].mxu0
      %v3472 = vadd.f32 0.0, %v3471
      %v3473 = vpop.f32.mrb[0].mxu0
      %v3474 = vpop.f32.mrb[0].mxu0
      %v3475 = vadd.f32 0.0, %v3474
      %v3476 = vpop.f32.mrb[0].mxu0
      %3477 = vmatprep.mubr.bf16.mxu0 0
      %3478 = vmatmul.mubr.bf16.gmra.mrb[0].mxu0 %v3267
      %v3479 = vpop.f32.mrb[0].mxu0
      %v3480 = vadd.f32 0.0, %v3479
      %v3481 = vpop.f32.mrb[0].mxu0
      %v3482 = vpop.f32.mrb[0].mxu0
      %v3483 = vadd.f32 0.0, %v3482
      %v3484 = vpop.f32.mrb[0].mxu0
      %3485 = vmatprep.mubr.bf16.mxu0 0
      %3486 = vmatmul.mubr.bf16.gmra.mrb[0].mxu0 %v3268
      %v3487 = vpop.f32.mrb[0].mxu0
      %v3488 = vadd.f32 0.0, %v3487
      %v3489 = vpop.f32.mrb[0].mxu0
      %v3490 = vpop.f32.mrb[0].mxu0
      %v3491 = vadd.f32 0.0, %v3490
      %v3492 = vpop.f32.mrb[0].mxu0
      %3493 = vdwg.mxu0
      %v3494 = vadd.f32 %v2741, %v3368
      %v3495 = vadd.f32 %v2742, %v3371
      %v3496 = vadd.f32 %v2743, %v3376
      %v3497 = vadd.f32 %v2744, %v3379
      %v3498 = vadd.f32 %v2745, %v3384
      %v3499 = vadd.f32 %v2746, %v3387
      %v3500 = vadd.f32 %v2747, %v3392
      %v3501 = vadd.f32 %v2748, %v3395
      %v3502 = vadd.f32 %v2749, %v3400
      %v3503 = vadd.f32 %v2750, %v3403
      %v3504 = vadd.f32 %v2751, %v3408
      %v3505 = vadd.f32 %v2752, %v3411
      %v3506 = vadd.f32 %v2753, %v3416
      %v3507 = vadd.f32 %v2754, %v3419
      %v3508 = vadd.f32 %v2755, %v3424
      %v3509 = vadd.f32 %v2756, %v3427
      %v3510 = vadd.f32 %v2757, %v3432
      %v3511 = vadd.f32 %v2758, %v3435
      %v3512 = vadd.f32 %v2759, %v3440
      %v3513 = vadd.f32 %v2760, %v3443
      %v3514 = vadd.f32 %v2761, %v3448
      %v3515 = vadd.f32 %v2762, %v3451
      %v3516 = vadd.f32 %v2763, %v3456
      %v3517 = vadd.f32 %v2764, %v3459
      %v3518 = vadd.f32 %v2765, %v3464
      %v3519 = vadd.f32 %v2766, %v3467
      %v3520 = vadd.f32 %v2767, %v3472
      %v3521 = vadd.f32 %v2768, %v3475
      %v3522 = vadd.f32 %v2769, %v3480
      %v3523 = vadd.f32 %v2770, %v3483
      %v3524 = vadd.f32 %v2771, %v3488
      %v3525 = vadd.f32 %v2772, %v3491
      %v3526 = vld [vmem:[%s225] sm:$0xe]
      %v3527 = vld [vmem:[%s225 + $0xc] sm:$0xe]
      %v3528 = vld [vmem:[%s225 + $0x18] sm:$0xe]
      %v3529 = vld [vmem:[%s225 + $0x24] sm:$0xe]
      %v3530 = vld [vmem:[%s225 + $0x30] sm:$0xe]
      %v3531 = vld [vmem:[%s225 + $0x3c] sm:$0xe]
      %v3532 = vld [vmem:[%s225 + $0x48] sm:$0xe]
      %v3533 = vld [vmem:[%s225 + $0x54] sm:$0xe]
      %v3534 = vld [vmem:[%s225 + $0x60] sm:$0xe]
      %v3535 = vld [vmem:[%s225 + $0x6c] sm:$0xe]
      %v3536 = vld [vmem:[%s225 + $0x78] sm:$0xe]
      %v3537 = vld [vmem:[%s225 + $0x84] sm:$0xe]
      %v3538 = vld [vmem:[%s225 + $0x90] sm:$0xe]
      %v3539 = vld [vmem:[%s225 + $0x9c] sm:$0xe]
      %v3540 = vld [vmem:[%s225 + $0xa8] sm:$0xe]
      %v3541 = vld [vmem:[%s225 + $0xb4] sm:$0xe]
      %v3590 = vrot.slane %v3526, 5
      %v3591 = vrot.slane %v3590, 4
      %v3592 = vrot.slane %v2774, 5
      %v3593 = vsel %vm1954, %v3591, %v3592
      %v3594 = vrot.slane %v3592, 4
      %v3595 = vrot.slane %v2775, 5
      %v3596 = vsel %vm1954, %v3594, %v3595
      %v3597 = vrot.slane %v3527, 5
      %v3598 = vrot.slane %v3597, 4
      %v3599 = vrot.slane %v2777, 5
      %v3600 = vsel %vm1954, %v3598, %v3599
      %v3601 = vrot.slane %v3599, 4
      %v3602 = vrot.slane %v2778, 5
      %v3603 = vsel %vm1954, %v3601, %v3602
      %v3604 = vrot.slane %v3528, 5
      %v3605 = vrot.slane %v3604, 4
      %v3606 = vrot.slane %v2780, 5
      %v3607 = vsel %vm1954, %v3605, %v3606
      %v3608 = vrot.slane %v3606, 4
      %v3609 = vrot.slane %v2781, 5
      %v3610 = vsel %vm1954, %v3608, %v3609
      %v3611 = vrot.slane %v3529, 5
      %v3612 = vrot.slane %v3611, 4
      %v3613 = vrot.slane %v2783, 5
      %v3614 = vsel %vm1954, %v3612, %v3613
      %v3615 = vrot.slane %v3613, 4
      %v3616 = vrot.slane %v2784, 5
      %v3617 = vsel %vm1954, %v3615, %v3616
      %v3618 = vrot.slane %v3530, 5
      %v3619 = vrot.slane %v3618, 4
      %v3620 = vrot.slane %v2786, 5
      %v3621 = vsel %vm1954, %v3619, %v3620
      %v3622 = vrot.slane %v3620, 4
      %v3623 = vrot.slane %v2787, 5
      %v3624 = vsel %vm1954, %v3622, %v3623
      %v3625 = vrot.slane %v3531, 5
      %v3626 = vrot.slane %v3625, 4
      %v3627 = vrot.slane %v2789, 5
      %v3628 = vsel %vm1954, %v3626, %v3627
      %v3629 = vrot.slane %v3627, 4
      %v3630 = vrot.slane %v2790, 5
      %v3631 = vsel %vm1954, %v3629, %v3630
      %v3632 = vrot.slane %v3532, 5
      %v3633 = vrot.slane %v3632, 4
      %v3634 = vrot.slane %v2792, 5
      %v3635 = vsel %vm1954, %v3633, %v3634
      %v3636 = vrot.slane %v3634, 4
      %v3637 = vrot.slane %v2793, 5
      %v3638 = vsel %vm1954, %v3636, %v3637
      %v3639 = vrot.slane %v3533, 5
      %v3640 = vrot.slane %v3639, 4
      %v3641 = vrot.slane %v2795, 5
      %v3642 = vsel %vm1954, %v3640, %v3641
      %v3643 = vrot.slane %v3641, 4
      %v3644 = vrot.slane %v2796, 5
      %v3645 = vsel %vm1954, %v3643, %v3644
      %v3646 = vrot.slane %v3534, 5
      %v3647 = vrot.slane %v3646, 4
      %v3648 = vrot.slane %v2798, 5
      %v3649 = vsel %vm1954, %v3647, %v3648
      %v3650 = vrot.slane %v3648, 4
      %v3651 = vrot.slane %v2799, 5
      %v3652 = vsel %vm1954, %v3650, %v3651
      %v3653 = vrot.slane %v3535, 5
      %v3654 = vrot.slane %v3653, 4
      %v3655 = vrot.slane %v2801, 5
      %v3656 = vsel %vm1954, %v3654, %v3655
      %v3657 = vrot.slane %v3655, 4
      %v3658 = vrot.slane %v2802, 5
      %v3659 = vsel %vm1954, %v3657, %v3658
      %v3660 = vrot.slane %v3536, 5
      %v3661 = vrot.slane %v3660, 4
      %v3662 = vrot.slane %v2804, 5
      %v3663 = vsel %vm1954, %v3661, %v3662
      %v3664 = vrot.slane %v3662, 4
      %v3665 = vrot.slane %v2805, 5
      %v3666 = vsel %vm1954, %v3664, %v3665
      %v3667 = vrot.slane %v3537, 5
      %v3668 = vrot.slane %v3667, 4
      %v3669 = vrot.slane %v2807, 5
      %v3670 = vsel %vm1954, %v3668, %v3669
      %v3671 = vrot.slane %v3669, 4
      %v3672 = vrot.slane %v2808, 5
      %v3673 = vsel %vm1954, %v3671, %v3672
      %v3674 = vrot.slane %v3538, 5
      %v3675 = vrot.slane %v3674, 4
      %v3676 = vrot.slane %v2810, 5
      %v3677 = vsel %vm1954, %v3675, %v3676
      %v3678 = vrot.slane %v3676, 4
      %v3679 = vrot.slane %v2811, 5
      %v3680 = vsel %vm1954, %v3678, %v3679
      %v3681 = vrot.slane %v3539, 5
      %v3682 = vrot.slane %v3681, 4
      %v3683 = vrot.slane %v2813, 5
      %v3684 = vsel %vm1954, %v3682, %v3683
      %v3685 = vrot.slane %v3683, 4
      %v3686 = vrot.slane %v2814, 5
      %v3687 = vsel %vm1954, %v3685, %v3686
      %v3688 = vrot.slane %v3540, 5
      %v3689 = vrot.slane %v3688, 4
      %v3690 = vrot.slane %v2816, 5
      %v3691 = vsel %vm1954, %v3689, %v3690
      %v3692 = vrot.slane %v3690, 4
      %v3693 = vrot.slane %v2817, 5
      %v3694 = vsel %vm1954, %v3692, %v3693
      %v3695 = vrot.slane %v3541, 5
      %v3696 = vrot.slane %v3695, 4
      %v3697 = vrot.slane %v2819, 5
      %v3698 = vsel %vm1954, %v3696, %v3697
      %v3699 = vrot.slane %v3697, 4
      %v3700 = vrot.slane %v2820, 5
      %v3701 = vsel %vm1954, %v3699, %v3700
      %v3702 = vld [vmem:[%s1 + $0x140] sm:$0xf]
      %v3703 = vld [vmem:[%s1 + $0x144] sm:$0xf]
      %v3704 = vld [vmem:[%s1 + $0x148] sm:$0xf]
      %v3705 = vld [vmem:[%s1 + $0x14c] sm:$0xf]
      %v3706 = vld [vmem:[%s1 + $0x150] sm:$0xf]
      %v3707 = vld [vmem:[%s1 + $0x154] sm:$0xf]
      %v3708 = vld [vmem:[%s1 + $0x158] sm:$0xf]
      %v3709 = vld [vmem:[%s1 + $0x15c] sm:$0xf]
      %v3710 = vld [vmem:[%s1 + $0x160] sm:$0xf]
      %v3711 = vld [vmem:[%s1 + $0x164] sm:$0xf]
      %v3712 = vld [vmem:[%s1 + $0x168] sm:$0xf]
      %v3713 = vld [vmem:[%s1 + $0x16c] sm:$0xf]
      %v3714 = vld [vmem:[%s1 + $0x170] sm:$0xf]
      %v3715 = vld [vmem:[%s1 + $0x174] sm:$0xf]
      %v3716 = vld [vmem:[%s1 + $0x178] sm:$0xf]
      %v3717 = vld [vmem:[%s1 + $0x17c] sm:$0xf]
      %v3718 = vunpack.c.l.b16 %v3593
      %v3719 = vunpack.c.l.b16 %v3596
      %v3720 = vunpack.c.l.b16 %v3600
      %v3721 = vunpack.c.l.b16 %v3603
      %v3722 = vunpack.c.l.b16 %v3607
      %v3723 = vunpack.c.l.b16 %v3610
      %v3724 = vunpack.c.l.b16 %v3614
      %v3725 = vunpack.c.l.b16 %v3617
      %v3726 = vunpack.c.l.b16 %v3621
      %v3727 = vunpack.c.l.b16 %v3624
      %v3728 = vunpack.c.l.b16 %v3628
      %v3729 = vunpack.c.l.b16 %v3631
      %v3730 = vunpack.c.l.b16 %v3635
      %v3731 = vunpack.c.l.b16 %v3638
      %v3732 = vunpack.c.l.b16 %v3642
      %v3733 = vunpack.c.l.b16 %v3645
      %v3734 = vunpack.c.l.b16 %v3649
      %v3735 = vunpack.c.l.b16 %v3652
      %v3736 = vunpack.c.l.b16 %v3656
      %v3737 = vunpack.c.l.b16 %v3659
      %v3738 = vunpack.c.l.b16 %v3663
      %v3739 = vunpack.c.l.b16 %v3666
      %v3740 = vunpack.c.l.b16 %v3670
      %v3741 = vunpack.c.l.b16 %v3673
      %v3742 = vunpack.c.l.b16 %v3677
      %v3743 = vunpack.c.l.b16 %v3680
      %v3744 = vunpack.c.l.b16 %v3684
      %v3745 = vunpack.c.l.b16 %v3687
      %v3746 = vunpack.c.l.b16 %v3691
      %v3747 = vunpack.c.l.b16 %v3694
      %v3748 = vunpack.c.l.b16 %v3698
      %v3749 = vunpack.c.l.b16 %v3701
      %v3750 = vpack.c.b16 %v3719, %v3718
      %v3751 = vpack.c.b16 %v3721, %v3720
      %v3752 = vpack.c.b16 %v3723, %v3722
      %v3753 = vpack.c.b16 %v3725, %v3724
      %v3754 = vpack.c.b16 %v3727, %v3726
      %v3755 = vpack.c.b16 %v3729, %v3728
      %v3756 = vpack.c.b16 %v3731, %v3730
      %v3757 = vpack.c.b16 %v3733, %v3732
      %v3758 = vpack.c.b16 %v3735, %v3734
      %v3759 = vpack.c.b16 %v3737, %v3736
      %v3760 = vpack.c.b16 %v3739, %v3738
      %v3761 = vpack.c.b16 %v3741, %v3740
      %v3762 = vpack.c.b16 %v3743, %v3742
      %v3763 = vpack.c.b16 %v3745, %v3744
      %v3764 = vpack.c.b16 %v3747, %v3746
      %v3765 = vpack.c.b16 %v3749, %v3748
      %v3798 = vunpack.c.l.b16 %v3702
      %v3799 = vunpack.c.l.b16 %v3703
      %v3800 = vunpack.c.l.b16 %v3704
      %v3801 = vunpack.c.l.b16 %v3705
      %v3802 = vunpack.c.l.b16 %v3706
      %v3803 = vunpack.c.l.b16 %v3707
      %v3804 = vunpack.c.l.b16 %v3708
      %v3805 = vunpack.c.l.b16 %v3709
      %v3806 = vunpack.c.l.b16 %v3710
      %v3807 = vunpack.c.l.b16 %v3711
      %v3808 = vunpack.c.l.b16 %v3712
      %v3809 = vunpack.c.l.b16 %v3713
      %v3810 = vunpack.c.l.b16 %v3714
      %v3811 = vunpack.c.l.b16 %v3715
      %v3812 = vunpack.c.l.b16 %v3716
      %v3813 = vunpack.c.l.b16 %v3717
      %v3814 = vpack.c.b16 %v3799, %v3798
      %v3815 = vpack.c.b16 %v3801, %v3800
      %v3816 = vpack.c.b16 %v3803, %v3802
      %v3817 = vpack.c.b16 %v3805, %v3804
      %v3818 = vpack.c.b16 %v3807, %v3806
      %v3819 = vpack.c.b16 %v3809, %v3808
      %v3820 = vpack.c.b16 %v3811, %v3810
      %v3821 = vpack.c.b16 %v3813, %v3812
      %3830 = vmatprep.subr.bf16.mxu0 0
      %3831 = vmatpush1.bf16.msra.mxu0 %v3814
      %3832 = vmatprep.subr.bf16.mxu0 0
      %3833 = vmatpush1.bf16.msra.mxu0 %v3815
      %3834 = vmatprep.subr.bf16.mxu0 0
      %3835 = vmatpush1.bf16.msra.mxu0 %v3816
      %3836 = vmatprep.subr.bf16.mxu0 0
      %3837 = vmatpush1.bf16.msra.mxu0 %v3817
      %3838 = vmatprep.subr.bf16.mxu0 0
      %3839 = vmatpush1.bf16.msra.mxu0 %v3818
      %3840 = vmatprep.subr.bf16.mxu0 0
      %3841 = vmatpush1.bf16.msra.mxu0 %v3819
      %3842 = vmatprep.subr.bf16.mxu0 0
      %3843 = vmatpush1.bf16.msra.mxu0 %v3820
      %3844 = vmatprep.subr.bf16.mxu0 0
      %3845 = vmatpush1.bf16.msra.mxu0 %v3821
      %3846 = vmatprep.subr.bf16.mxu0 0
      %3847 = vmatpush1.bf16.msra.mxu0 0
      %3848 = vmatprep.subr.bf16.mxu0 0
      %3849 = vmatpush1.bf16.msra.mxu0 0
      %3850 = vmatprep.subr.bf16.mxu0 0
      %3851 = vmatpush1.bf16.msra.mxu0 0
      %3852 = vmatprep.subr.bf16.mxu0 0
      %3853 = vmatpush1.bf16.msra.mxu0 0
      %3854 = vmatprep.subr.bf16.mxu0 0
      %3855 = vmatpush1.bf16.msra.mxu0 0
      %3856 = vmatprep.subr.bf16.mxu0 0
      %3857 = vmatpush1.bf16.msra.mxu0 0
      %3858 = vmatprep.subr.bf16.mxu0 0
      %3859 = vmatpush1.bf16.msra.mxu0 0
      %3860 = vmatprep.subr.bf16.mxu0 0
      %3861 = vmatpush1.bf16.msra.mxu0 0
      %3862 = vmatprep.mubr.bf16.mxu0 0
      %3863 = vmatmul.mubr.bf16.gmra.mrb[0].mxu0 %v3750
      %v3864 = vpop.f32.mrb[0].mxu0
      %v3865 = vadd.f32 0.0, %v3864
      %v3866 = vpop.f32.mrb[0].mxu0
      %v3867 = vpop.f32.mrb[0].mxu0
      %v3868 = vadd.f32 0.0, %v3867
      %v3869 = vpop.f32.mrb[0].mxu0
      %3870 = vmatprep.mubr.bf16.mxu0 0
      %3871 = vmatmul.mubr.bf16.gmra.mrb[0].mxu0 %v3751
      %v3872 = vpop.f32.mrb[0].mxu0
      %v3873 = vadd.f32 0.0, %v3872
      %v3874 = vpop.f32.mrb[0].mxu0
      %v3875 = vpop.f32.mrb[0].mxu0
      %v3876 = vadd.f32 0.0, %v3875
      %v3877 = vpop.f32.mrb[0].mxu0
      %3878 = vmatprep.mubr.bf16.mxu0 0
      %3879 = vmatmul.mubr.bf16.gmra.mrb[0].mxu0 %v3752
      %v3880 = vpop.f32.mrb[0].mxu0
      %v3881 = vadd.f32 0.0, %v3880
      %v3882 = vpop.f32.mrb[0].mxu0
      %v3883 = vpop.f32.mrb[0].mxu0
      %v3884 = vadd.f32 0.0, %v3883
      %v3885 = vpop.f32.mrb[0].mxu0
      %3886 = vmatprep.mubr.bf16.mxu0 0
      %3887 = vmatmul.mubr.bf16.gmra.mrb[0].mxu0 %v3753
      %v3888 = vpop.f32.mrb[0].mxu0
      %v3889 = vadd.f32 0.0, %v3888
      %v3890 = vpop.f32.mrb[0].mxu0
      %v3891 = vpop.f32.mrb[0].mxu0
      %v3892 = vadd.f32 0.0, %v3891
      %v3893 = vpop.f32.mrb[0].mxu0
      %3894 = vmatprep.mubr.bf16.mxu0 0
      %3895 = vmatmul.mubr.bf16.gmra.mrb[0].mxu0 %v3754
      %v3896 = vpop.f32.mrb[0].mxu0
      %v3897 = vadd.f32 0.0, %v3896
      %v3898 = vpop.f32.mrb[0].mxu0
      %v3899 = vpop.f32.mrb[0].mxu0
      %v3900 = vadd.f32 0.0, %v3899
      %v3901 = vpop.f32.mrb[0].mxu0
      %3902 = vmatprep.mubr.bf16.mxu0 0
      %3903 = vmatmul.mubr.bf16.gmra.mrb[0].mxu0 %v3755
      %v3904 = vpop.f32.mrb[0].mxu0
      %v3905 = vadd.f32 0.0, %v3904
      %v3906 = vpop.f32.mrb[0].mxu0
      %v3907 = vpop.f32.mrb[0].mxu0
      %v3908 = vadd.f32 0.0, %v3907
      %v3909 = vpop.f32.mrb[0].mxu0
      %3910 = vmatprep.mubr.bf16.mxu0 0
      %3911 = vmatmul.mubr.bf16.gmra.mrb[0].mxu0 %v3756
      %v3912 = vpop.f32.mrb[0].mxu0
      %v3913 = vadd.f32 0.0, %v3912
      %v3914 = vpop.f32.mrb[0].mxu0
      %v3915 = vpop.f32.mrb[0].mxu0
      %v3916 = vadd.f32 0.0, %v3915
      %v3917 = vpop.f32.mrb[0].mxu0
      %3918 = vmatprep.mubr.bf16.mxu0 0
      %3919 = vmatmul.mubr.bf16.gmra.mrb[0].mxu0 %v3757
      %v3920 = vpop.f32.mrb[0].mxu0
      %v3921 = vadd.f32 0.0, %v3920
      %v3922 = vpop.f32.mrb[0].mxu0
      %v3923 = vpop.f32.mrb[0].mxu0
      %v3924 = vadd.f32 0.0, %v3923
      %v3925 = vpop.f32.mrb[0].mxu0
      %3926 = vmatprep.mubr.bf16.mxu0 0
      %3927 = vmatmul.mubr.bf16.gmra.mrb[0].mxu0 %v3758
      %v3928 = vpop.f32.mrb[0].mxu0
      %v3929 = vadd.f32 0.0, %v3928
      %v3930 = vpop.f32.mrb[0].mxu0
      %v3931 = vpop.f32.mrb[0].mxu0
      %v3932 = vadd.f32 0.0, %v3931
      %v3933 = vpop.f32.mrb[0].mxu0
      %3934 = vmatprep.mubr.bf16.mxu0 0
      %3935 = vmatmul.mubr.bf16.gmra.mrb[0].mxu0 %v3759
      %v3936 = vpop.f32.mrb[0].mxu0
      %v3937 = vadd.f32 0.0, %v3936
      %v3938 = vpop.f32.mrb[0].mxu0
      %v3939 = vpop.f32.mrb[0].mxu0
      %v3940 = vadd.f32 0.0, %v3939
      %v3941 = vpop.f32.mrb[0].mxu0
      %3942 = vmatprep.mubr.bf16.mxu0 0
      %3943 = vmatmul.mubr.bf16.gmra.mrb[0].mxu0 %v3760
      %v3944 = vpop.f32.mrb[0].mxu0
      %v3945 = vadd.f32 0.0, %v3944
      %v3946 = vpop.f32.mrb[0].mxu0
      %v3947 = vpop.f32.mrb[0].mxu0
      %v3948 = vadd.f32 0.0, %v3947
      %v3949 = vpop.f32.mrb[0].mxu0
      %3950 = vmatprep.mubr.bf16.mxu0 0
      %3951 = vmatmul.mubr.bf16.gmra.mrb[0].mxu0 %v3761
      %v3952 = vpop.f32.mrb[0].mxu0
      %v3953 = vadd.f32 0.0, %v3952
      %v3954 = vpop.f32.mrb[0].mxu0
      %v3955 = vpop.f32.mrb[0].mxu0
      %v3956 = vadd.f32 0.0, %v3955
      %v3957 = vpop.f32.mrb[0].mxu0
      %3958 = vmatprep.mubr.bf16.mxu0 0
      %3959 = vmatmul.mubr.bf16.gmra.mrb[0].mxu0 %v3762
      %v3960 = vpop.f32.mrb[0].mxu0
      %v3961 = vadd.f32 0.0, %v3960
      %v3962 = vpop.f32.mrb[0].mxu0
      %v3963 = vpop.f32.mrb[0].mxu0
      %v3964 = vadd.f32 0.0, %v3963
      %v3965 = vpop.f32.mrb[0].mxu0
      %3966 = vmatprep.mubr.bf16.mxu0 0
      %3967 = vmatmul.mubr.bf16.gmra.mrb[0].mxu0 %v3763
      %v3968 = vpop.f32.mrb[0].mxu0
      %v3969 = vadd.f32 0.0, %v3968
      %v3970 = vpop.f32.mrb[0].mxu0
      %v3971 = vpop.f32.mrb[0].mxu0
      %v3972 = vadd.f32 0.0, %v3971
      %v3973 = vpop.f32.mrb[0].mxu0
      %3974 = vmatprep.mubr.bf16.mxu0 0
      %3975 = vmatmul.mubr.bf16.gmra.mrb[0].mxu0 %v3764
      %v3976 = vpop.f32.mrb[0].mxu0
      %v3977 = vadd.f32 0.0, %v3976
      %v3978 = vpop.f32.mrb[0].mxu0
      %v3979 = vpop.f32.mrb[0].mxu0
      %v3980 = vadd.f32 0.0, %v3979
      %v3981 = vpop.f32.mrb[0].mxu0
      %3982 = vmatprep.mubr.bf16.mxu0 0
      %3983 = vmatmul.mubr.bf16.gmra.mrb[0].mxu0 %v3765
      %v3984 = vpop.f32.mrb[0].mxu0
      %v3985 = vadd.f32 0.0, %v3984
      %v3986 = vpop.f32.mrb[0].mxu0
      %v3987 = vpop.f32.mrb[0].mxu0
      %v3988 = vadd.f32 0.0, %v3987
      %v3989 = vpop.f32.mrb[0].mxu0
      %3990 = vdwg.mxu0
      %v3991 = vadd.f32 %v3494, %v3865
      %v3992 = vadd.f32 %v3495, %v3868
      %v3993 = vadd.f32 %v3496, %v3873
      %v3994 = vadd.f32 %v3497, %v3876
      %v3995 = vadd.f32 %v3498, %v3881
      %v3996 = vadd.f32 %v3499, %v3884
      %v3997 = vadd.f32 %v3500, %v3889
      %v3998 = vadd.f32 %v3501, %v3892
      %v3999 = vadd.f32 %v3502, %v3897
      %v4000 = vadd.f32 %v3503, %v3900
      %v4001 = vadd.f32 %v3504, %v3905
      %v4002 = vadd.f32 %v3505, %v3908
      %v4003 = vadd.f32 %v3506, %v3913
      %v4004 = vadd.f32 %v3507, %v3916
      %v4005 = vadd.f32 %v3508, %v3921
      %v4006 = vadd.f32 %v3509, %v3924
      %v4007 = vadd.f32 %v3510, %v3929
      %v4008 = vadd.f32 %v3511, %v3932
      %v4009 = vadd.f32 %v3512, %v3937
      %v4010 = vadd.f32 %v3513, %v3940
      %v4011 = vadd.f32 %v3514, %v3945
      %v4012 = vadd.f32 %v3515, %v3948
      %v4013 = vadd.f32 %v3516, %v3953
      %v4014 = vadd.f32 %v3517, %v3956
      %v4015 = vadd.f32 %v3518, %v3961
      %v4016 = vadd.f32 %v3519, %v3964
      %v4017 = vadd.f32 %v3520, %v3969
      %v4018 = vadd.f32 %v3521, %v3972
      %v4019 = vadd.f32 %v3522, %v3977
      %v4020 = vadd.f32 %v3523, %v3980
      %v4021 = vadd.f32 %v3524, %v3985
      %v4022 = vadd.f32 %v3525, %v3988
      %s4023 = scalar_lea.vmem [#allocation2], 24
      %v4024 = vld [vmem:[%s4023] sm:$0xf]
      %v4025 = vld [vmem:[%s4023 + $0x4] sm:$0xf]
      %v4026 = vld [vmem:[%s4023 + $0xc] sm:$0xf]
      %v4027 = vld [vmem:[%s4023 + $0x10] sm:$0xf]
      %v4028 = vld [vmem:[%s4023 + $0x18] sm:$0xf]
      %v4029 = vld [vmem:[%s4023 + $0x1c] sm:$0xf]
      %v4030 = vld [vmem:[%s4023 + $0x24] sm:$0xf]
      %v4031 = vld [vmem:[%s4023 + $0x28] sm:$0xf]
      %v4032 = vld [vmem:[%s4023 + $0x30] sm:$0xf]
      %v4033 = vld [vmem:[%s4023 + $0x34] sm:$0xf]
      %v4034 = vld [vmem:[%s4023 + $0x3c] sm:$0xf]
      %v4035 = vld [vmem:[%s4023 + $0x40] sm:$0xf]
      %v4036 = vld [vmem:[%s4023 + $0x48] sm:$0xf]
      %v4037 = vld [vmem:[%s4023 + $0x4c] sm:$0xf]
      %v4038 = vld [vmem:[%s4023 + $0x54] sm:$0xf]
      %v4039 = vld [vmem:[%s4023 + $0x58] sm:$0xf]
      %v4040 = vld [vmem:[%s4023 + $0x60] sm:$0xf]
      %v4041 = vld [vmem:[%s4023 + $0x64] sm:$0xf]
      %v4042 = vld [vmem:[%s4023 + $0x6c] sm:$0xf]
      %v4043 = vld [vmem:[%s4023 + $0x70] sm:$0xf]
      %v4044 = vld [vmem:[%s4023 + $0x78] sm:$0xf]
      %v4045 = vld [vmem:[%s4023 + $0x7c] sm:$0xf]
      %v4046 = vld [vmem:[%s4023 + $0x84] sm:$0xf]
      %v4047 = vld [vmem:[%s4023 + $0x88] sm:$0xf]
      %v4048 = vld [vmem:[%s4023 + $0x90] sm:$0xf]
      %v4049 = vld [vmem:[%s4023 + $0x94] sm:$0xf]
      %v4050 = vld [vmem:[%s4023 + $0x9c] sm:$0xf]
      %v4051 = vld [vmem:[%s4023 + $0xa0] sm:$0xf]
      %v4052 = vld [vmem:[%s4023 + $0xa8] sm:$0xf]
      %v4053 = vld [vmem:[%s4023 + $0xac] sm:$0xf]
      %v4054 = vld [vmem:[%s4023 + $0xb4] sm:$0xf]
      %v4055 = vld [vmem:[%s4023 + $0xb8] sm:$0xf]
      %v4056 = vld [vmem:[%s1 + $0x180] sm:$0xf]
      %v4057 = vld [vmem:[%s1 + $0x184] sm:$0xf]
      %v4058 = vld [vmem:[%s1 + $0x188] sm:$0xf]
      %v4059 = vld [vmem:[%s1 + $0x18c] sm:$0xf]
      %v4060 = vld [vmem:[%s1 + $0x190] sm:$0xf]
      %v4061 = vld [vmem:[%s1 + $0x194] sm:$0xf]
      %v4062 = vld [vmem:[%s1 + $0x198] sm:$0xf]
      %v4063 = vld [vmem:[%s1 + $0x19c] sm:$0xf]
      %v4064 = vld [vmem:[%s1 + $0x1a0] sm:$0xf]
      %v4065 = vld [vmem:[%s1 + $0x1a4] sm:$0xf]
      %v4066 = vld [vmem:[%s1 + $0x1a8] sm:$0xf]
      %v4067 = vld [vmem:[%s1 + $0x1ac] sm:$0xf]
      %v4068 = vld [vmem:[%s1 + $0x1b0] sm:$0xf]
      %v4069 = vld [vmem:[%s1 + $0x1b4] sm:$0xf]
      %v4070 = vld [vmem:[%s1 + $0x1b8] sm:$0xf]
      %v4071 = vld [vmem:[%s1 + $0x1bc] sm:$0xf]
      %v4104 = vunpack.c.l.b16 %v4024
      %v4105 = vunpack.c.l.b16 %v4025
      %v4106 = vunpack.c.l.b16 %v4026
      %v4107 = vunpack.c.l.b16 %v4027
      %v4108 = vunpack.c.l.b16 %v4028
      %v4109 = vunpack.c.l.b16 %v4029
      %v4110 = vunpack.c.l.b16 %v4030
      %v4111 = vunpack.c.l.b16 %v4031
      %v4112 = vunpack.c.l.b16 %v4032
      %v4113 = vunpack.c.l.b16 %v4033
      %v4114 = vunpack.c.l.b16 %v4034
      %v4115 = vunpack.c.l.b16 %v4035
      %v4116 = vunpack.c.l.b16 %v4036
      %v4117 = vunpack.c.l.b16 %v4037
      %v4118 = vunpack.c.l.b16 %v4038
      %v4119 = vunpack.c.l.b16 %v4039
      %v4120 = vunpack.c.l.b16 %v4040
      %v4121 = vunpack.c.l.b16 %v4041
      %v4122 = vunpack.c.l.b16 %v4042
      %v4123 = vunpack.c.l.b16 %v4043
      %v4124 = vunpack.c.l.b16 %v4044
      %v4125 = vunpack.c.l.b16 %v4045
      %v4126 = vunpack.c.l.b16 %v4046
      %v4127 = vunpack.c.l.b16 %v4047
      %v4128 = vunpack.c.l.b16 %v4048
      %v4129 = vunpack.c.l.b16 %v4049
      %v4130 = vunpack.c.l.b16 %v4050
      %v4131 = vunpack.c.l.b16 %v4051
      %v4132 = vunpack.c.l.b16 %v4052
      %v4133 = vunpack.c.l.b16 %v4053
      %v4134 = vunpack.c.l.b16 %v4054
      %v4135 = vunpack.c.l.b16 %v4055
      %v4136 = vpack.c.b16 %v4105, %v4104
      %v4137 = vpack.c.b16 %v4107, %v4106
      %v4138 = vpack.c.b16 %v4109, %v4108
      %v4139 = vpack.c.b16 %v4111, %v4110
      %v4140 = vpack.c.b16 %v4113, %v4112
      %v4141 = vpack.c.b16 %v4115, %v4114
      %v4142 = vpack.c.b16 %v4117, %v4116
      %v4143 = vpack.c.b16 %v4119, %v4118
      %v4144 = vpack.c.b16 %v4121, %v4120
      %v4145 = vpack.c.b16 %v4123, %v4122
      %v4146 = vpack.c.b16 %v4125, %v4124
      %v4147 = vpack.c.b16 %v4127, %v4126
      %v4148 = vpack.c.b16 %v4129, %v4128
      %v4149 = vpack.c.b16 %v4131, %v4130
      %v4150 = vpack.c.b16 %v4133, %v4132
      %v4151 = vpack.c.b16 %v4135, %v4134
      %v4184 = vunpack.c.l.b16 %v4056
      %v4185 = vunpack.c.l.b16 %v4057
      %v4186 = vunpack.c.l.b16 %v4058
      %v4187 = vunpack.c.l.b16 %v4059
      %v4188 = vunpack.c.l.b16 %v4060
      %v4189 = vunpack.c.l.b16 %v4061
      %v4190 = vunpack.c.l.b16 %v4062
      %v4191 = vunpack.c.l.b16 %v4063
      %v4192 = vunpack.c.l.b16 %v4064
      %v4193 = vunpack.c.l.b16 %v4065
      %v4194 = vunpack.c.l.b16 %v4066
      %v4195 = vunpack.c.l.b16 %v4067
      %v4196 = vunpack.c.l.b16 %v4068
      %v4197 = vunpack.c.l.b16 %v4069
      %v4198 = vunpack.c.l.b16 %v4070
      %v4199 = vunpack.c.l.b16 %v4071
      %v4200 = vpack.c.b16 %v4185, %v4184
      %v4201 = vpack.c.b16 %v4187, %v4186
      %v4202 = vpack.c.b16 %v4189, %v4188
      %v4203 = vpack.c.b16 %v4191, %v4190
      %v4204 = vpack.c.b16 %v4193, %v4192
      %v4205 = vpack.c.b16 %v4195, %v4194
      %v4206 = vpack.c.b16 %v4197, %v4196
      %v4207 = vpack.c.b16 %v4199, %v4198
      %4216 = vmatprep.subr.bf16.mxu0 0
      %4217 = vmatpush1.bf16.msra.mxu0 %v4200
      %4218 = vmatprep.subr.bf16.mxu0 0
      %4219 = vmatpush1.bf16.msra.mxu0 %v4201
      %4220 = vmatprep.subr.bf16.mxu0 0
      %4221 = vmatpush1.bf16.msra.mxu0 %v4202
      %4222 = vmatprep.subr.bf16.mxu0 0
      %4223 = vmatpush1.bf16.msra.mxu0 %v4203
      %4224 = vmatprep.subr.bf16.mxu0 0
      %4225 = vmatpush1.bf16.msra.mxu0 %v4204
      %4226 = vmatprep.subr.bf16.mxu0 0
      %4227 = vmatpush1.bf16.msra.mxu0 %v4205
      %4228 = vmatprep.subr.bf16.mxu0 0
      %4229 = vmatpush1.bf16.msra.mxu0 %v4206
      %4230 = vmatprep.subr.bf16.mxu0 0
      %4231 = vmatpush1.bf16.msra.mxu0 %v4207
      %4232 = vmatprep.subr.bf16.mxu0 0
      %4233 = vmatpush1.bf16.msra.mxu0 0
      %4234 = vmatprep.subr.bf16.mxu0 0
      %4235 = vmatpush1.bf16.msra.mxu0 0
      %4236 = vmatprep.subr.bf16.mxu0 0
      %4237 = vmatpush1.bf16.msra.mxu0 0
      %4238 = vmatprep.subr.bf16.mxu0 0
      %4239 = vmatpush1.bf16.msra.mxu0 0
      %4240 = vmatprep.subr.bf16.mxu0 0
      %4241 = vmatpush1.bf16.msra.mxu0 0
      %4242 = vmatprep.subr.bf16.mxu0 0
      %4243 = vmatpush1.bf16.msra.mxu0 0
      %4244 = vmatprep.subr.bf16.mxu0 0
      %4245 = vmatpush1.bf16.msra.mxu0 0
      %4246 = vmatprep.subr.bf16.mxu0 0
      %4247 = vmatpush1.bf16.msra.mxu0 0
      %4248 = vmatprep.mubr.bf16.mxu0 0
      %4249 = vmatmul.mubr.bf16.gmra.mrb[0].mxu0 %v4136
      %v4250 = vpop.f32.mrb[0].mxu0
      %v4251 = vadd.f32 0.0, %v4250
      %v4252 = vpop.f32.mrb[0].mxu0
      %v4253 = vpop.f32.mrb[0].mxu0
      %v4254 = vadd.f32 0.0, %v4253
      %v4255 = vpop.f32.mrb[0].mxu0
      %4256 = vmatprep.mubr.bf16.mxu0 0
      %4257 = vmatmul.mubr.bf16.gmra.mrb[0].mxu0 %v4137
      %v4258 = vpop.f32.mrb[0].mxu0
      %v4259 = vadd.f32 0.0, %v4258
      %v4260 = vpop.f32.mrb[0].mxu0
      %v4261 = vpop.f32.mrb[0].mxu0
      %v4262 = vadd.f32 0.0, %v4261
      %v4263 = vpop.f32.mrb[0].mxu0
      %4264 = vmatprep.mubr.bf16.mxu0 0
      %4265 = vmatmul.mubr.bf16.gmra.mrb[0].mxu0 %v4138
      %v4266 = vpop.f32.mrb[0].mxu0
      %v4267 = vadd.f32 0.0, %v4266
      %v4268 = vpop.f32.mrb[0].mxu0
      %v4269 = vpop.f32.mrb[0].mxu0
      %v4270 = vadd.f32 0.0, %v4269
      %v4271 = vpop.f32.mrb[0].mxu0
      %4272 = vmatprep.mubr.bf16.mxu0 0
      %4273 = vmatmul.mubr.bf16.gmra.mrb[0].mxu0 %v4139
      %v4274 = vpop.f32.mrb[0].mxu0
      %v4275 = vadd.f32 0.0, %v4274
      %v4276 = vpop.f32.mrb[0].mxu0
      %v4277 = vpop.f32.mrb[0].mxu0
      %v4278 = vadd.f32 0.0, %v4277
      %v4279 = vpop.f32.mrb[0].mxu0
      %4280 = vmatprep.mubr.bf16.mxu0 0
      %4281 = vmatmul.mubr.bf16.gmra.mrb[0].mxu0 %v4140
      %v4282 = vpop.f32.mrb[0].mxu0
      %v4283 = vadd.f32 0.0, %v4282
      %v4284 = vpop.f32.mrb[0].mxu0
      %v4285 = vpop.f32.mrb[0].mxu0
      %v4286 = vadd.f32 0.0, %v4285
      %v4287 = vpop.f32.mrb[0].mxu0
      %4288 = vmatprep.mubr.bf16.mxu0 0
      %4289 = vmatmul.mubr.bf16.gmra.mrb[0].mxu0 %v4141
      %v4290 = vpop.f32.mrb[0].mxu0
      %v4291 = vadd.f32 0.0, %v4290
      %v4292 = vpop.f32.mrb[0].mxu0
      %v4293 = vpop.f32.mrb[0].mxu0
      %v4294 = vadd.f32 0.0, %v4293
      %v4295 = vpop.f32.mrb[0].mxu0
      %4296 = vmatprep.mubr.bf16.mxu0 0
      %4297 = vmatmul.mubr.bf16.gmra.mrb[0].mxu0 %v4142
      %v4298 = vpop.f32.mrb[0].mxu0
      %v4299 = vadd.f32 0.0, %v4298
      %v4300 = vpop.f32.mrb[0].mxu0
      %v4301 = vpop.f32.mrb[0].mxu0
      %v4302 = vadd.f32 0.0, %v4301
      %v4303 = vpop.f32.mrb[0].mxu0
      %4304 = vmatprep.mubr.bf16.mxu0 0
      %4305 = vmatmul.mubr.bf16.gmra.mrb[0].mxu0 %v4143
      %v4306 = vpop.f32.mrb[0].mxu0
      %v4307 = vadd.f32 0.0, %v4306
      %v4308 = vpop.f32.mrb[0].mxu0
      %v4309 = vpop.f32.mrb[0].mxu0
      %v4310 = vadd.f32 0.0, %v4309
      %v4311 = vpop.f32.mrb[0].mxu0
      %4312 = vmatprep.mubr.bf16.mxu0 0
      %4313 = vmatmul.mubr.bf16.gmra.mrb[0].mxu0 %v4144
      %v4314 = vpop.f32.mrb[0].mxu0
      %v4315 = vadd.f32 0.0, %v4314
      %v4316 = vpop.f32.mrb[0].mxu0
      %v4317 = vpop.f32.mrb[0].mxu0
      %v4318 = vadd.f32 0.0, %v4317
      %v4319 = vpop.f32.mrb[0].mxu0
      %4320 = vmatprep.mubr.bf16.mxu0 0
      %4321 = vmatmul.mubr.bf16.gmra.mrb[0].mxu0 %v4145
      %v4322 = vpop.f32.mrb[0].mxu0
      %v4323 = vadd.f32 0.0, %v4322
      %v4324 = vpop.f32.mrb[0].mxu0
      %v4325 = vpop.f32.mrb[0].mxu0
      %v4326 = vadd.f32 0.0, %v4325
      %v4327 = vpop.f32.mrb[0].mxu0
      %4328 = vmatprep.mubr.bf16.mxu0 0
      %4329 = vmatmul.mubr.bf16.gmra.mrb[0].mxu0 %v4146
      %v4330 = vpop.f32.mrb[0].mxu0
      %v4331 = vadd.f32 0.0, %v4330
      %v4332 = vpop.f32.mrb[0].mxu0
      %v4333 = vpop.f32.mrb[0].mxu0
      %v4334 = vadd.f32 0.0, %v4333
      %v4335 = vpop.f32.mrb[0].mxu0
      %4336 = vmatprep.mubr.bf16.mxu0 0
      %4337 = vmatmul.mubr.bf16.gmra.mrb[0].mxu0 %v4147
      %v4338 = vpop.f32.mrb[0].mxu0
      %v4339 = vadd.f32 0.0, %v4338
      %v4340 = vpop.f32.mrb[0].mxu0
      %v4341 = vpop.f32.mrb[0].mxu0
      %v4342 = vadd.f32 0.0, %v4341
      %v4343 = vpop.f32.mrb[0].mxu0
      %4344 = vmatprep.mubr.bf16.mxu0 0
      %4345 = vmatmul.mubr.bf16.gmra.mrb[0].mxu0 %v4148
      %v4346 = vpop.f32.mrb[0].mxu0
      %v4347 = vadd.f32 0.0, %v4346
      %v4348 = vpop.f32.mrb[0].mxu0
      %v4349 = vpop.f32.mrb[0].mxu0
      %v4350 = vadd.f32 0.0, %v4349
      %v4351 = vpop.f32.mrb[0].mxu0
      %4352 = vmatprep.mubr.bf16.mxu0 0
      %4353 = vmatmul.mubr.bf16.gmra.mrb[0].mxu0 %v4149
      %v4354 = vpop.f32.mrb[0].mxu0
      %v4355 = vadd.f32 0.0, %v4354
      %v4356 = vpop.f32.mrb[0].mxu0
      %v4357 = vpop.f32.mrb[0].mxu0
      %v4358 = vadd.f32 0.0, %v4357
      %v4359 = vpop.f32.mrb[0].mxu0
      %4360 = vmatprep.mubr.bf16.mxu0 0
      %4361 = vmatmul.mubr.bf16.gmra.mrb[0].mxu0 %v4150
      %v4362 = vpop.f32.mrb[0].mxu0
      %v4363 = vadd.f32 0.0, %v4362
      %v4364 = vpop.f32.mrb[0].mxu0
      %v4365 = vpop.f32.mrb[0].mxu0
      %v4366 = vadd.f32 0.0, %v4365
      %v4367 = vpop.f32.mrb[0].mxu0
      %4368 = vmatprep.mubr.bf16.mxu0 0
      %4369 = vmatmul.mubr.bf16.gmra.mrb[0].mxu0 %v4151
      %v4370 = vpop.f32.mrb[0].mxu0
      %v4371 = vadd.f32 0.0, %v4370
      %v4372 = vpop.f32.mrb[0].mxu0
      %v4373 = vpop.f32.mrb[0].mxu0
      %v4374 = vadd.f32 0.0, %v4373
      %v4375 = vpop.f32.mrb[0].mxu0
      %4376 = vdwg.mxu0
      %v4377 = vadd.f32 %v3991, %v4251
      %v4378 = vadd.f32 %v3992, %v4254
      %v4379 = vadd.f32 %v3993, %v4259
      %v4380 = vadd.f32 %v3994, %v4262
      %v4381 = vadd.f32 %v3995, %v4267
      %v4382 = vadd.f32 %v3996, %v4270
      %v4383 = vadd.f32 %v3997, %v4275
      %v4384 = vadd.f32 %v3998, %v4278
      %v4385 = vadd.f32 %v3999, %v4283
      %v4386 = vadd.f32 %v4000, %v4286
      %v4387 = vadd.f32 %v4001, %v4291
      %v4388 = vadd.f32 %v4002, %v4294
      %v4389 = vadd.f32 %v4003, %v4299
      %v4390 = vadd.f32 %v4004, %v4302
      %v4391 = vadd.f32 %v4005, %v4307
      %v4392 = vadd.f32 %v4006, %v4310
      %v4393 = vadd.f32 %v4007, %v4315
      %v4394 = vadd.f32 %v4008, %v4318
      %v4395 = vadd.f32 %v4009, %v4323
      %v4396 = vadd.f32 %v4010, %v4326
      %v4397 = vadd.f32 %v4011, %v4331
      %v4398 = vadd.f32 %v4012, %v4334
      %v4399 = vadd.f32 %v4013, %v4339
      %v4400 = vadd.f32 %v4014, %v4342
      %v4401 = vadd.f32 %v4015, %v4347
      %v4402 = vadd.f32 %v4016, %v4350
      %v4403 = vadd.f32 %v4017, %v4355
      %v4404 = vadd.f32 %v4018, %v4358
      %v4405 = vadd.f32 %v4019, %v4363
      %v4406 = vadd.f32 %v4020, %v4366
      %v4407 = vadd.f32 %v4021, %v4371
      %v4408 = vadd.f32 %v4022, %v4374
      %v4409 = vld [vmem:[%s4023] sm:$0xf]
      %v4410 = vld [vmem:[%s4023 + $0x4] sm:$0xf]
      %v4411 = vld [vmem:[%s4023 + $0x8] sm:$0x1]
      %v4412 = vld [vmem:[%s4023 + $0xc] sm:$0xf]
      %v4413 = vld [vmem:[%s4023 + $0x10] sm:$0xf]
      %v4414 = vld [vmem:[%s4023 + $0x14] sm:$0x1]
      %v4415 = vld [vmem:[%s4023 + $0x18] sm:$0xf]
      %v4416 = vld [vmem:[%s4023 + $0x1c] sm:$0xf]
      %v4417 = vld [vmem:[%s4023 + $0x20] sm:$0x1]
      %v4418 = vld [vmem:[%s4023 + $0x24] sm:$0xf]
      %v4419 = vld [vmem:[%s4023 + $0x28] sm:$0xf]
      %v4420 = vld [vmem:[%s4023 + $0x2c] sm:$0x1]
      %v4421 = vld [vmem:[%s4023 + $0x30] sm:$0xf]
      %v4422 = vld [vmem:[%s4023 + $0x34] sm:$0xf]
      %v4423 = vld [vmem:[%s4023 + $0x38] sm:$0x1]
      %v4424 = vld [vmem:[%s4023 + $0x3c] sm:$0xf]
      %v4425 = vld [vmem:[%s4023 + $0x40] sm:$0xf]
      %v4426 = vld [vmem:[%s4023 + $0x44] sm:$0x1]
      %v4427 = vld [vmem:[%s4023 + $0x48] sm:$0xf]
      %v4428 = vld [vmem:[%s4023 + $0x4c] sm:$0xf]
      %v4429 = vld [vmem:[%s4023 + $0x50] sm:$0x1]
      %v4430 = vld [vmem:[%s4023 + $0x54] sm:$0xf]
      %v4431 = vld [vmem:[%s4023 + $0x58] sm:$0xf]
      %v4432 = vld [vmem:[%s4023 + $0x5c] sm:$0x1]
      %v4433 = vld [vmem:[%s4023 + $0x60] sm:$0xf]
      %v4434 = vld [vmem:[%s4023 + $0x64] sm:$0xf]
      %v4435 = vld [vmem:[%s4023 + $0x68] sm:$0x1]
      %v4436 = vld [vmem:[%s4023 + $0x6c] sm:$0xf]
      %v4437 = vld [vmem:[%s4023 + $0x70] sm:$0xf]
      %v4438 = vld [vmem:[%s4023 + $0x74] sm:$0x1]
      %v4439 = vld [vmem:[%s4023 + $0x78] sm:$0xf]
      %v4440 = vld [vmem:[%s4023 + $0x7c] sm:$0xf]
      %v4441 = vld [vmem:[%s4023 + $0x80] sm:$0x1]
      %v4442 = vld [vmem:[%s4023 + $0x84] sm:$0xf]
      %v4443 = vld [vmem:[%s4023 + $0x88] sm:$0xf]
      %v4444 = vld [vmem:[%s4023 + $0x8c] sm:$0x1]
      %v4445 = vld [vmem:[%s4023 + $0x90] sm:$0xf]
      %v4446 = vld [vmem:[%s4023 + $0x94] sm:$0xf]
      %v4447 = vld [vmem:[%s4023 + $0x98] sm:$0x1]
      %v4448 = vld [vmem:[%s4023 + $0x9c] sm:$0xf]
      %v4449 = vld [vmem:[%s4023 + $0xa0] sm:$0xf]
      %v4450 = vld [vmem:[%s4023 + $0xa4] sm:$0x1]
      %v4451 = vld [vmem:[%s4023 + $0xa8] sm:$0xf]
      %v4452 = vld [vmem:[%s4023 + $0xac] sm:$0xf]
      %v4453 = vld [vmem:[%s4023 + $0xb0] sm:$0x1]
      %v4454 = vld [vmem:[%s4023 + $0xb4] sm:$0xf]
      %v4455 = vld [vmem:[%s4023 + $0xb8] sm:$0xf]
      %v4456 = vld [vmem:[%s4023 + $0xbc] sm:$0x1]
      %v4458 = vshrl.u32 %v4409, 16
      %v4460 = vrot.slane %v4458, 4
      %v4461 = vshll.u32 %v4409, 16
      %v4463 = vrot.slane %v4461, 5
      %v4464 = vor.u32 %v4460, %v4463
      %v4465 = vrot.slane %v4464, 4
      %v4467 = vshll.u32 %v4410, 16
      %v4469 = vrot.slane %v4467, 5
      %v4470 = vsel %vm925, %v4465, %v4469
      %v4471 = vshrl.u32 %v4410, 16
      %v4473 = vrot.slane %v4471, 4
      %v4474 = vor.u32 %v4473, %v4469
      %v4475 = vrot.slane %v4474, 4
      %v4477 = vshll.u32 %v4411, 16
      %v4479 = vrot.slane %v4477, 5
      %v4480 = vsel %vm925, %v4475, %v4479
      %v4482 = vshrl.u32 %v4412, 16
      %v4484 = vrot.slane %v4482, 4
      %v4485 = vshll.u32 %v4412, 16
      %v4487 = vrot.slane %v4485, 5
      %v4488 = vor.u32 %v4484, %v4487
      %v4489 = vrot.slane %v4488, 4
      %v4491 = vshll.u32 %v4413, 16
      %v4493 = vrot.slane %v4491, 5
      %v4494 = vsel %vm925, %v4489, %v4493
      %v4495 = vshrl.u32 %v4413, 16
      %v4497 = vrot.slane %v4495, 4
      %v4498 = vor.u32 %v4497, %v4493
      %v4499 = vrot.slane %v4498, 4
      %v4501 = vshll.u32 %v4414, 16
      %v4503 = vrot.slane %v4501, 5
      %v4504 = vsel %vm925, %v4499, %v4503
      %v4506 = vshrl.u32 %v4415, 16
      %v4508 = vrot.slane %v4506, 4
      %v4509 = vshll.u32 %v4415, 16
      %v4511 = vrot.slane %v4509, 5
      %v4512 = vor.u32 %v4508, %v4511
      %v4513 = vrot.slane %v4512, 4
      %v4515 = vshll.u32 %v4416, 16
      %v4517 = vrot.slane %v4515, 5
      %v4518 = vsel %vm925, %v4513, %v4517
      %v4519 = vshrl.u32 %v4416, 16
      %v4521 = vrot.slane %v4519, 4
      %v4522 = vor.u32 %v4521, %v4517
      %v4523 = vrot.slane %v4522, 4
      %v4525 = vshll.u32 %v4417, 16
      %v4527 = vrot.slane %v4525, 5
      %v4528 = vsel %vm925, %v4523, %v4527
      %v4530 = vshrl.u32 %v4418, 16
      %v4532 = vrot.slane %v4530, 4
      %v4533 = vshll.u32 %v4418, 16
      %v4535 = vrot.slane %v4533, 5
      %v4536 = vor.u32 %v4532, %v4535
      %v4537 = vrot.slane %v4536, 4
      %v4539 = vshll.u32 %v4419, 16
      %v4541 = vrot.slane %v4539, 5
      %v4542 = vsel %vm925, %v4537, %v4541
      %v4543 = vshrl.u32 %v4419, 16
      %v4545 = vrot.slane %v4543, 4
      %v4546 = vor.u32 %v4545, %v4541
      %v4547 = vrot.slane %v4546, 4
      %v4549 = vshll.u32 %v4420, 16
      %v4551 = vrot.slane %v4549, 5
      %v4552 = vsel %vm925, %v4547, %v4551
      %v4554 = vshrl.u32 %v4421, 16
      %v4556 = vrot.slane %v4554, 4
      %v4557 = vshll.u32 %v4421, 16
      %v4559 = vrot.slane %v4557, 5
      %v4560 = vor.u32 %v4556, %v4559
      %v4561 = vrot.slane %v4560, 4
      %v4563 = vshll.u32 %v4422, 16
      %v4565 = vrot.slane %v4563, 5
      %v4566 = vsel %vm925, %v4561, %v4565
      %v4567 = vshrl.u32 %v4422, 16
      %v4569 = vrot.slane %v4567, 4
      %v4570 = vor.u32 %v4569, %v4565
      %v4571 = vrot.slane %v4570, 4
      %v4573 = vshll.u32 %v4423, 16
      %v4575 = vrot.slane %v4573, 5
      %v4576 = vsel %vm925, %v4571, %v4575
      %v4578 = vshrl.u32 %v4424, 16
      %v4580 = vrot.slane %v4578, 4
      %v4581 = vshll.u32 %v4424, 16
      %v4583 = vrot.slane %v4581, 5
      %v4584 = vor.u32 %v4580, %v4583
      %v4585 = vrot.slane %v4584, 4
      %v4587 = vshll.u32 %v4425, 16
      %v4589 = vrot.slane %v4587, 5
      %v4590 = vsel %vm925, %v4585, %v4589
      %v4591 = vshrl.u32 %v4425, 16
      %v4593 = vrot.slane %v4591, 4
      %v4594 = vor.u32 %v4593, %v4589
      %v4595 = vrot.slane %v4594, 4
      %v4597 = vshll.u32 %v4426, 16
      %v4599 = vrot.slane %v4597, 5
      %v4600 = vsel %vm925, %v4595, %v4599
      %v4602 = vshrl.u32 %v4427, 16
      %v4604 = vrot.slane %v4602, 4
      %v4605 = vshll.u32 %v4427, 16
      %v4607 = vrot.slane %v4605, 5
      %v4608 = vor.u32 %v4604, %v4607
      %v4609 = vrot.slane %v4608, 4
      %v4611 = vshll.u32 %v4428, 16
      %v4613 = vrot.slane %v4611, 5
      %v4614 = vsel %vm925, %v4609, %v4613
      %v4615 = vshrl.u32 %v4428, 16
      %v4617 = vrot.slane %v4615, 4
      %v4618 = vor.u32 %v4617, %v4613
      %v4619 = vrot.slane %v4618, 4
      %v4621 = vshll.u32 %v4429, 16
      %v4623 = vrot.slane %v4621, 5
      %v4624 = vsel %vm925, %v4619, %v4623
      %v4626 = vshrl.u32 %v4430, 16
      %v4628 = vrot.slane %v4626, 4
      %v4629 = vshll.u32 %v4430, 16
      %v4631 = vrot.slane %v4629, 5
      %v4632 = vor.u32 %v4628, %v4631
      %v4633 = vrot.slane %v4632, 4
      %v4635 = vshll.u32 %v4431, 16
      %v4637 = vrot.slane %v4635, 5
      %v4638 = vsel %vm925, %v4633, %v4637
      %v4639 = vshrl.u32 %v4431, 16
      %v4641 = vrot.slane %v4639, 4
      %v4642 = vor.u32 %v4641, %v4637
      %v4643 = vrot.slane %v4642, 4
      %v4645 = vshll.u32 %v4432, 16
      %v4647 = vrot.slane %v4645, 5
      %v4648 = vsel %vm925, %v4643, %v4647
      %v4650 = vshrl.u32 %v4433, 16
      %v4652 = vrot.slane %v4650, 4
      %v4653 = vshll.u32 %v4433, 16
      %v4655 = vrot.slane %v4653, 5
      %v4656 = vor.u32 %v4652, %v4655
      %v4657 = vrot.slane %v4656, 4
      %v4659 = vshll.u32 %v4434, 16
      %v4661 = vrot.slane %v4659, 5
      %v4662 = vsel %vm925, %v4657, %v4661
      %v4663 = vshrl.u32 %v4434, 16
      %v4665 = vrot.slane %v4663, 4
      %v4666 = vor.u32 %v4665, %v4661
      %v4667 = vrot.slane %v4666, 4
      %v4669 = vshll.u32 %v4435, 16
      %v4671 = vrot.slane %v4669, 5
      %v4672 = vsel %vm925, %v4667, %v4671
      %v4674 = vshrl.u32 %v4436, 16
      %v4676 = vrot.slane %v4674, 4
      %v4677 = vshll.u32 %v4436, 16
      %v4679 = vrot.slane %v4677, 5
      %v4680 = vor.u32 %v4676, %v4679
      %v4681 = vrot.slane %v4680, 4
      %v4683 = vshll.u32 %v4437, 16
      %v4685 = vrot.slane %v4683, 5
      %v4686 = vsel %vm925, %v4681, %v4685
      %v4687 = vshrl.u32 %v4437, 16
      %v4689 = vrot.slane %v4687, 4
      %v4690 = vor.u32 %v4689, %v4685
      %v4691 = vrot.slane %v4690, 4
      %v4693 = vshll.u32 %v4438, 16
      %v4695 = vrot.slane %v4693, 5
      %v4696 = vsel %vm925, %v4691, %v4695
      %v4698 = vshrl.u32 %v4439, 16
      %v4700 = vrot.slane %v4698, 4
      %v4701 = vshll.u32 %v4439, 16
      %v4703 = vrot.slane %v4701, 5
      %v4704 = vor.u32 %v4700, %v4703
      %v4705 = vrot.slane %v4704, 4
      %v4707 = vshll.u32 %v4440, 16
      %v4709 = vrot.slane %v4707, 5
      %v4710 = vsel %vm925, %v4705, %v4709
      %v4711 = vshrl.u32 %v4440, 16
      %v4713 = vrot.slane %v4711, 4
      %v4714 = vor.u32 %v4713, %v4709
      %v4715 = vrot.slane %v4714, 4
      %v4717 = vshll.u32 %v4441, 16
      %v4719 = vrot.slane %v4717, 5
      %v4720 = vsel %vm925, %v4715, %v4719
      %v4722 = vshrl.u32 %v4442, 16
      %v4724 = vrot.slane %v4722, 4
      %v4725 = vshll.u32 %v4442, 16
      %v4727 = vrot.slane %v4725, 5
      %v4728 = vor.u32 %v4724, %v4727
      %v4729 = vrot.slane %v4728, 4
      %v4731 = vshll.u32 %v4443, 16
      %v4733 = vrot.slane %v4731, 5
      %v4734 = vsel %vm925, %v4729, %v4733
      %v4735 = vshrl.u32 %v4443, 16
      %v4737 = vrot.slane %v4735, 4
      %v4738 = vor.u32 %v4737, %v4733
      %v4739 = vrot.slane %v4738, 4
      %v4741 = vshll.u32 %v4444, 16
      %v4743 = vrot.slane %v4741, 5
      %v4744 = vsel %vm925, %v4739, %v4743
      %v4746 = vshrl.u32 %v4445, 16
      %v4748 = vrot.slane %v4746, 4
      %v4749 = vshll.u32 %v4445, 16
      %v4751 = vrot.slane %v4749, 5
      %v4752 = vor.u32 %v4748, %v4751
      %v4753 = vrot.slane %v4752, 4
      %v4755 = vshll.u32 %v4446, 16
      %v4757 = vrot.slane %v4755, 5
      %v4758 = vsel %vm925, %v4753, %v4757
      %v4759 = vshrl.u32 %v4446, 16
      %v4761 = vrot.slane %v4759, 4
      %v4762 = vor.u32 %v4761, %v4757
      %v4763 = vrot.slane %v4762, 4
      %v4765 = vshll.u32 %v4447, 16
      %v4767 = vrot.slane %v4765, 5
      %v4768 = vsel %vm925, %v4763, %v4767
      %v4770 = vshrl.u32 %v4448, 16
      %v4772 = vrot.slane %v4770, 4
      %v4773 = vshll.u32 %v4448, 16
      %v4775 = vrot.slane %v4773, 5
      %v4776 = vor.u32 %v4772, %v4775
      %v4777 = vrot.slane %v4776, 4
      %v4779 = vshll.u32 %v4449, 16
      %v4781 = vrot.slane %v4779, 5
      %v4782 = vsel %vm925, %v4777, %v4781
      %v4783 = vshrl.u32 %v4449, 16
      %v4785 = vrot.slane %v4783, 4
      %v4786 = vor.u32 %v4785, %v4781
      %v4787 = vrot.slane %v4786, 4
      %v4789 = vshll.u32 %v4450, 16
      %v4791 = vrot.slane %v4789, 5
      %v4792 = vsel %vm925, %v4787, %v4791
      %v4794 = vshrl.u32 %v4451, 16
      %v4796 = vrot.slane %v4794, 4
      %v4797 = vshll.u32 %v4451, 16
      %v4799 = vrot.slane %v4797, 5
      %v4800 = vor.u32 %v4796, %v4799
      %v4801 = vrot.slane %v4800, 4
      %v4803 = vshll.u32 %v4452, 16
      %v4805 = vrot.slane %v4803, 5
      %v4806 = vsel %vm925, %v4801, %v4805
      %v4807 = vshrl.u32 %v4452, 16
      %v4809 = vrot.slane %v4807, 4
      %v4810 = vor.u32 %v4809, %v4805
      %v4811 = vrot.slane %v4810, 4
      %v4813 = vshll.u32 %v4453, 16
      %v4815 = vrot.slane %v4813, 5
      %v4816 = vsel %vm925, %v4811, %v4815
      %v4818 = vshrl.u32 %v4454, 16
      %v4820 = vrot.slane %v4818, 4
      %v4821 = vshll.u32 %v4454, 16
      %v4823 = vrot.slane %v4821, 5
      %v4824 = vor.u32 %v4820, %v4823
      %v4825 = vrot.slane %v4824, 4
      %v4827 = vshll.u32 %v4455, 16
      %v4829 = vrot.slane %v4827, 5
      %v4830 = vsel %vm925, %v4825, %v4829
      %v4831 = vshrl.u32 %v4455, 16
      %v4833 = vrot.slane %v4831, 4
      %v4834 = vor.u32 %v4833, %v4829
      %v4835 = vrot.slane %v4834, 4
      %v4837 = vshll.u32 %v4456, 16
      %v4839 = vrot.slane %v4837, 5
      %v4840 = vsel %vm925, %v4835, %v4839
      %v4841 = vld [vmem:[%s1 + $0x1c0] sm:$0xf]
      %v4842 = vld [vmem:[%s1 + $0x1c4] sm:$0xf]
      %v4843 = vld [vmem:[%s1 + $0x1c8] sm:$0xf]
      %v4844 = vld [vmem:[%s1 + $0x1cc] sm:$0xf]
      %v4845 = vld [vmem:[%s1 + $0x1d0] sm:$0xf]
      %v4846 = vld [vmem:[%s1 + $0x1d4] sm:$0xf]
      %v4847 = vld [vmem:[%s1 + $0x1d8] sm:$0xf]
      %v4848 = vld [vmem:[%s1 + $0x1dc] sm:$0xf]
      %v4849 = vld [vmem:[%s1 + $0x1e0] sm:$0xf]
      %v4850 = vld [vmem:[%s1 + $0x1e4] sm:$0xf]
      %v4851 = vld [vmem:[%s1 + $0x1e8] sm:$0xf]
      %v4852 = vld [vmem:[%s1 + $0x1ec] sm:$0xf]
      %v4853 = vld [vmem:[%s1 + $0x1f0] sm:$0xf]
      %v4854 = vld [vmem:[%s1 + $0x1f4] sm:$0xf]
      %v4855 = vld [vmem:[%s1 + $0x1f8] sm:$0xf]
      %v4856 = vld [vmem:[%s1 + $0x1fc] sm:$0xf]
      %v4857 = vunpack.c.l.b16 %v4470
      %v4858 = vunpack.c.l.b16 %v4480
      %v4859 = vunpack.c.l.b16 %v4494
      %v4860 = vunpack.c.l.b16 %v4504
      %v4861 = vunpack.c.l.b16 %v4518
      %v4862 = vunpack.c.l.b16 %v4528
      %v4863 = vunpack.c.l.b16 %v4542
      %v4864 = vunpack.c.l.b16 %v4552
      %v4865 = vunpack.c.l.b16 %v4566
      %v4866 = vunpack.c.l.b16 %v4576
      %v4867 = vunpack.c.l.b16 %v4590
      %v4868 = vunpack.c.l.b16 %v4600
      %v4869 = vunpack.c.l.b16 %v4614
      %v4870 = vunpack.c.l.b16 %v4624
      %v4871 = vunpack.c.l.b16 %v4638
      %v4872 = vunpack.c.l.b16 %v4648
      %v4873 = vunpack.c.l.b16 %v4662
      %v4874 = vunpack.c.l.b16 %v4672
      %v4875 = vunpack.c.l.b16 %v4686
      %v4876 = vunpack.c.l.b16 %v4696
      %v4877 = vunpack.c.l.b16 %v4710
      %v4878 = vunpack.c.l.b16 %v4720
      %v4879 = vunpack.c.l.b16 %v4734
      %v4880 = vunpack.c.l.b16 %v4744
      %v4881 = vunpack.c.l.b16 %v4758
      %v4882 = vunpack.c.l.b16 %v4768
      %v4883 = vunpack.c.l.b16 %v4782
      %v4884 = vunpack.c.l.b16 %v4792
      %v4885 = vunpack.c.l.b16 %v4806
      %v4886 = vunpack.c.l.b16 %v4816
      %v4887 = vunpack.c.l.b16 %v4830
      %v4888 = vunpack.c.l.b16 %v4840
      %v4889 = vpack.c.b16 %v4858, %v4857
      %v4890 = vpack.c.b16 %v4860, %v4859
      %v4891 = vpack.c.b16 %v4862, %v4861
      %v4892 = vpack.c.b16 %v4864, %v4863
      %v4893 = vpack.c.b16 %v4866, %v4865
      %v4894 = vpack.c.b16 %v4868, %v4867
      %v4895 = vpack.c.b16 %v4870, %v4869
      %v4896 = vpack.c.b16 %v4872, %v4871
      %v4897 = vpack.c.b16 %v4874, %v4873
      %v4898 = vpack.c.b16 %v4876, %v4875
      %v4899 = vpack.c.b16 %v4878, %v4877
      %v4900 = vpack.c.b16 %v4880, %v4879
      %v4901 = vpack.c.b16 %v4882, %v4881
      %v4902 = vpack.c.b16 %v4884, %v4883
      %v4903 = vpack.c.b16 %v4886, %v4885
      %v4904 = vpack.c.b16 %v4888, %v4887
      %v4937 = vunpack.c.l.b16 %v4841
      %v4938 = vunpack.c.l.b16 %v4842
      %v4939 = vunpack.c.l.b16 %v4843
      %v4940 = vunpack.c.l.b16 %v4844
      %v4941 = vunpack.c.l.b16 %v4845
      %v4942 = vunpack.c.l.b16 %v4846
      %v4943 = vunpack.c.l.b16 %v4847
      %v4944 = vunpack.c.l.b16 %v4848
      %v4945 = vunpack.c.l.b16 %v4849
      %v4946 = vunpack.c.l.b16 %v4850
      %v4947 = vunpack.c.l.b16 %v4851
      %v4948 = vunpack.c.l.b16 %v4852
      %v4949 = vunpack.c.l.b16 %v4853
      %v4950 = vunpack.c.l.b16 %v4854
      %v4951 = vunpack.c.l.b16 %v4855
      %v4952 = vunpack.c.l.b16 %v4856
      %v4953 = vpack.c.b16 %v4938, %v4937
      %v4954 = vpack.c.b16 %v4940, %v4939
      %v4955 = vpack.c.b16 %v4942, %v4941
      %v4956 = vpack.c.b16 %v4944, %v4943
      %v4957 = vpack.c.b16 %v4946, %v4945
      %v4958 = vpack.c.b16 %v4948, %v4947
      %v4959 = vpack.c.b16 %v4950, %v4949
      %v4960 = vpack.c.b16 %v4952, %v4951
      %4969 = vmatprep.subr.bf16.mxu0 0
      %4970 = vmatpush1.bf16.msra.mxu0 %v4953
      %4971 = vmatprep.subr.bf16.mxu0 0
      %4972 = vmatpush1.bf16.msra.mxu0 %v4954
      %4973 = vmatprep.subr.bf16.mxu0 0
      %4974 = vmatpush1.bf16.msra.mxu0 %v4955
      %4975 = vmatprep.subr.bf16.mxu0 0
      %4976 = vmatpush1.bf16.msra.mxu0 %v4956
      %4977 = vmatprep.subr.bf16.mxu0 0
      %4978 = vmatpush1.bf16.msra.mxu0 %v4957
      %4979 = vmatprep.subr.bf16.mxu0 0
      %4980 = vmatpush1.bf16.msra.mxu0 %v4958
      %4981 = vmatprep.subr.bf16.mxu0 0
      %4982 = vmatpush1.bf16.msra.mxu0 %v4959
      %4983 = vmatprep.subr.bf16.mxu0 0
      %4984 = vmatpush1.bf16.msra.mxu0 %v4960
      %4985 = vmatprep.subr.bf16.mxu0 0
      %4986 = vmatpush1.bf16.msra.mxu0 0
      %4987 = vmatprep.subr.bf16.mxu0 0
      %4988 = vmatpush1.bf16.msra.mxu0 0
      %4989 = vmatprep.subr.bf16.mxu0 0
      %4990 = vmatpush1.bf16.msra.mxu0 0
      %4991 = vmatprep.subr.bf16.mxu0 0
      %4992 = vmatpush1.bf16.msra.mxu0 0
      %4993 = vmatprep.subr.bf16.mxu0 0
      %4994 = vmatpush1.bf16.msra.mxu0 0
      %4995 = vmatprep.subr.bf16.mxu0 0
      %4996 = vmatpush1.bf16.msra.mxu0 0
      %4997 = vmatprep.subr.bf16.mxu0 0
      %4998 = vmatpush1.bf16.msra.mxu0 0
      %4999 = vmatprep.subr.bf16.mxu0 0
      %5000 = vmatpush1.bf16.msra.mxu0 0
      %5001 = vmatprep.mubr.bf16.mxu0 0
      %5002 = vmatmul.mubr.bf16.gmra.mrb[0].mxu0 %v4889
      %v5003 = vpop.f32.mrb[0].mxu0
      %v5004 = vadd.f32 0.0, %v5003
      %v5005 = vpop.f32.mrb[0].mxu0
      %v5006 = vpop.f32.mrb[0].mxu0
      %v5007 = vadd.f32 0.0, %v5006
      %v5008 = vpop.f32.mrb[0].mxu0
      %5009 = vmatprep.mubr.bf16.mxu0 0
      %5010 = vmatmul.mubr.bf16.gmra.mrb[0].mxu0 %v4890
      %v5011 = vpop.f32.mrb[0].mxu0
      %v5012 = vadd.f32 0.0, %v5011
      %v5013 = vpop.f32.mrb[0].mxu0
      %v5014 = vpop.f32.mrb[0].mxu0
      %v5015 = vadd.f32 0.0, %v5014
      %v5016 = vpop.f32.mrb[0].mxu0
      %5017 = vmatprep.mubr.bf16.mxu0 0
      %5018 = vmatmul.mubr.bf16.gmra.mrb[0].mxu0 %v4891
      %v5019 = vpop.f32.mrb[0].mxu0
      %v5020 = vadd.f32 0.0, %v5019
      %v5021 = vpop.f32.mrb[0].mxu0
      %v5022 = vpop.f32.mrb[0].mxu0
      %v5023 = vadd.f32 0.0, %v5022
      %v5024 = vpop.f32.mrb[0].mxu0
      %5025 = vmatprep.mubr.bf16.mxu0 0
      %5026 = vmatmul.mubr.bf16.gmra.mrb[0].mxu0 %v4892
      %v5027 = vpop.f32.mrb[0].mxu0
      %v5028 = vadd.f32 0.0, %v5027
      %v5029 = vpop.f32.mrb[0].mxu0
      %v5030 = vpop.f32.mrb[0].mxu0
      %v5031 = vadd.f32 0.0, %v5030
      %v5032 = vpop.f32.mrb[0].mxu0
      %5033 = vmatprep.mubr.bf16.mxu0 0
      %5034 = vmatmul.mubr.bf16.gmra.mrb[0].mxu0 %v4893
      %v5035 = vpop.f32.mrb[0].mxu0
      %v5036 = vadd.f32 0.0, %v5035
      %v5037 = vpop.f32.mrb[0].mxu0
      %v5038 = vpop.f32.mrb[0].mxu0
      %v5039 = vadd.f32 0.0, %v5038
      %v5040 = vpop.f32.mrb[0].mxu0
      %5041 = vmatprep.mubr.bf16.mxu0 0
      %5042 = vmatmul.mubr.bf16.gmra.mrb[0].mxu0 %v4894
      %v5043 = vpop.f32.mrb[0].mxu0
      %v5044 = vadd.f32 0.0, %v5043
      %v5045 = vpop.f32.mrb[0].mxu0
      %v5046 = vpop.f32.mrb[0].mxu0
      %v5047 = vadd.f32 0.0, %v5046
      %v5048 = vpop.f32.mrb[0].mxu0
      %5049 = vmatprep.mubr.bf16.mxu0 0
      %5050 = vmatmul.mubr.bf16.gmra.mrb[0].mxu0 %v4895
      %v5051 = vpop.f32.mrb[0].mxu0
      %v5052 = vadd.f32 0.0, %v5051
      %v5053 = vpop.f32.mrb[0].mxu0
      %v5054 = vpop.f32.mrb[0].mxu0
      %v5055 = vadd.f32 0.0, %v5054
      %v5056 = vpop.f32.mrb[0].mxu0
      %5057 = vmatprep.mubr.bf16.mxu0 0
      %5058 = vmatmul.mubr.bf16.gmra.mrb[0].mxu0 %v4896
      %v5059 = vpop.f32.mrb[0].mxu0
      %v5060 = vadd.f32 0.0, %v5059
      %v5061 = vpop.f32.mrb[0].mxu0
      %v5062 = vpop.f32.mrb[0].mxu0
      %v5063 = vadd.f32 0.0, %v5062
      %v5064 = vpop.f32.mrb[0].mxu0
      %5065 = vmatprep.mubr.bf16.mxu0 0
      %5066 = vmatmul.mubr.bf16.gmra.mrb[0].mxu0 %v4897
      %v5067 = vpop.f32.mrb[0].mxu0
      %v5068 = vadd.f32 0.0, %v5067
      %v5069 = vpop.f32.mrb[0].mxu0
      %v5070 = vpop.f32.mrb[0].mxu0
      %v5071 = vadd.f32 0.0, %v5070
      %v5072 = vpop.f32.mrb[0].mxu0
      %5073 = vmatprep.mubr.bf16.mxu0 0
      %5074 = vmatmul.mubr.bf16.gmra.mrb[0].mxu0 %v4898
      %v5075 = vpop.f32.mrb[0].mxu0
      %v5076 = vadd.f32 0.0, %v5075
      %v5077 = vpop.f32.mrb[0].mxu0
      %v5078 = vpop.f32.mrb[0].mxu0
      %v5079 = vadd.f32 0.0, %v5078
      %v5080 = vpop.f32.mrb[0].mxu0
      %5081 = vmatprep.mubr.bf16.mxu0 0
      %5082 = vmatmul.mubr.bf16.gmra.mrb[0].mxu0 %v4899
      %v5083 = vpop.f32.mrb[0].mxu0
      %v5084 = vadd.f32 0.0, %v5083
      %v5085 = vpop.f32.mrb[0].mxu0
      %v5086 = vpop.f32.mrb[0].mxu0
      %v5087 = vadd.f32 0.0, %v5086
      %v5088 = vpop.f32.mrb[0].mxu0
      %5089 = vmatprep.mubr.bf16.mxu0 0
      %5090 = vmatmul.mubr.bf16.gmra.mrb[0].mxu0 %v4900
      %v5091 = vpop.f32.mrb[0].mxu0
      %v5092 = vadd.f32 0.0, %v5091
      %v5093 = vpop.f32.mrb[0].mxu0
      %v5094 = vpop.f32.mrb[0].mxu0
      %v5095 = vadd.f32 0.0, %v5094
      %v5096 = vpop.f32.mrb[0].mxu0
      %5097 = vmatprep.mubr.bf16.mxu0 0
      %5098 = vmatmul.mubr.bf16.gmra.mrb[0].mxu0 %v4901
      %v5099 = vpop.f32.mrb[0].mxu0
      %v5100 = vadd.f32 0.0, %v5099
      %v5101 = vpop.f32.mrb[0].mxu0
      %v5102 = vpop.f32.mrb[0].mxu0
      %v5103 = vadd.f32 0.0, %v5102
      %v5104 = vpop.f32.mrb[0].mxu0
      %5105 = vmatprep.mubr.bf16.mxu0 0
      %5106 = vmatmul.mubr.bf16.gmra.mrb[0].mxu0 %v4902
      %v5107 = vpop.f32.mrb[0].mxu0
      %v5108 = vadd.f32 0.0, %v5107
      %v5109 = vpop.f32.mrb[0].mxu0
      %v5110 = vpop.f32.mrb[0].mxu0
      %v5111 = vadd.f32 0.0, %v5110
      %v5112 = vpop.f32.mrb[0].mxu0
      %5113 = vmatprep.mubr.bf16.mxu0 0
      %5114 = vmatmul.mubr.bf16.gmra.mrb[0].mxu0 %v4903
      %v5115 = vpop.f32.mrb[0].mxu0
      %v5116 = vadd.f32 0.0, %v5115
      %v5117 = vpop.f32.mrb[0].mxu0
      %v5118 = vpop.f32.mrb[0].mxu0
      %v5119 = vadd.f32 0.0, %v5118
      %v5120 = vpop.f32.mrb[0].mxu0
      %5121 = vmatprep.mubr.bf16.mxu0 0
      %5122 = vmatmul.mubr.bf16.gmra.mrb[0].mxu0 %v4904
      %v5123 = vpop.f32.mrb[0].mxu0
      %v5124 = vadd.f32 0.0, %v5123
      %v5125 = vpop.f32.mrb[0].mxu0
      %v5126 = vpop.f32.mrb[0].mxu0
      %v5127 = vadd.f32 0.0, %v5126
      %v5128 = vpop.f32.mrb[0].mxu0
      %5129 = vdwg.mxu0
      %v5130 = vadd.f32 %v4377, %v5004
      %v5131 = vadd.f32 %v4378, %v5007
      %v5132 = vadd.f32 %v4379, %v5012
      %v5133 = vadd.f32 %v4380, %v5015
      %v5134 = vadd.f32 %v4381, %v5020
      %v5135 = vadd.f32 %v4382, %v5023
      %v5136 = vadd.f32 %v4383, %v5028
      %v5137 = vadd.f32 %v4384, %v5031
      %v5138 = vadd.f32 %v4385, %v5036
      %v5139 = vadd.f32 %v4386, %v5039
      %v5140 = vadd.f32 %v4387, %v5044
      %v5141 = vadd.f32 %v4388, %v5047
      %v5142 = vadd.f32 %v4389, %v5052
      %v5143 = vadd.f32 %v4390, %v5055
      %v5144 = vadd.f32 %v4391, %v5060
      %v5145 = vadd.f32 %v4392, %v5063
      %v5146 = vadd.f32 %v4393, %v5068
      %v5147 = vadd.f32 %v4394, %v5071
      %v5148 = vadd.f32 %v4395, %v5076
      %v5149 = vadd.f32 %v4396, %v5079
      %v5150 = vadd.f32 %v4397, %v5084
      %v5151 = vadd.f32 %v4398, %v5087
      %v5152 = vadd.f32 %v4399, %v5092
      %v5153 = vadd.f32 %v4400, %v5095
      %v5154 = vadd.f32 %v4401, %v5100
      %v5155 = vadd.f32 %v4402, %v5103
      %v5156 = vadd.f32 %v4403, %v5108
      %v5157 = vadd.f32 %v4404, %v5111
      %v5158 = vadd.f32 %v4405, %v5116
      %v5159 = vadd.f32 %v4406, %v5119
      %v5160 = vadd.f32 %v4407, %v5124
      %v5161 = vadd.f32 %v4408, %v5127
      %v5162 = vld [vmem:[%s4023] sm:$0xe]
      %v5163 = vld [vmem:[%s4023 + $0xc] sm:$0xe]
      %v5164 = vld [vmem:[%s4023 + $0x18] sm:$0xe]
      %v5165 = vld [vmem:[%s4023 + $0x24] sm:$0xe]
      %v5166 = vld [vmem:[%s4023 + $0x30] sm:$0xe]
      %v5167 = vld [vmem:[%s4023 + $0x3c] sm:$0xe]
      %v5168 = vld [vmem:[%s4023 + $0x48] sm:$0xe]
      %v5169 = vld [vmem:[%s4023 + $0x54] sm:$0xe]
      %v5170 = vld [vmem:[%s4023 + $0x60] sm:$0xe]
      %v5171 = vld [vmem:[%s4023 + $0x6c] sm:$0xe]
      %v5172 = vld [vmem:[%s4023 + $0x78] sm:$0xe]
      %v5173 = vld [vmem:[%s4023 + $0x84] sm:$0xe]
      %v5174 = vld [vmem:[%s4023 + $0x90] sm:$0xe]
      %v5175 = vld [vmem:[%s4023 + $0x9c] sm:$0xe]
      %v5176 = vld [vmem:[%s4023 + $0xa8] sm:$0xe]
      %v5177 = vld [vmem:[%s4023 + $0xb4] sm:$0xe]
      %v5226 = vrot.slane %v5162, 5
      %v5227 = vrot.slane %v5226, 4
      %v5228 = vrot.slane %v4410, 5
      %v5229 = vsel %vm1954, %v5227, %v5228
      %v5230 = vrot.slane %v5228, 4
      %v5231 = vrot.slane %v4411, 5
      %v5232 = vsel %vm1954, %v5230, %v5231
      %v5233 = vrot.slane %v5163, 5
      %v5234 = vrot.slane %v5233, 4
      %v5235 = vrot.slane %v4413, 5
      %v5236 = vsel %vm1954, %v5234, %v5235
      %v5237 = vrot.slane %v5235, 4
      %v5238 = vrot.slane %v4414, 5
      %v5239 = vsel %vm1954, %v5237, %v5238
      %v5240 = vrot.slane %v5164, 5
      %v5241 = vrot.slane %v5240, 4
      %v5242 = vrot.slane %v4416, 5
      %v5243 = vsel %vm1954, %v5241, %v5242
      %v5244 = vrot.slane %v5242, 4
      %v5245 = vrot.slane %v4417, 5
      %v5246 = vsel %vm1954, %v5244, %v5245
      %v5247 = vrot.slane %v5165, 5
      %v5248 = vrot.slane %v5247, 4
      %v5249 = vrot.slane %v4419, 5
      %v5250 = vsel %vm1954, %v5248, %v5249
      %v5251 = vrot.slane %v5249, 4
      %v5252 = vrot.slane %v4420, 5
      %v5253 = vsel %vm1954, %v5251, %v5252
      %v5254 = vrot.slane %v5166, 5
      %v5255 = vrot.slane %v5254, 4
      %v5256 = vrot.slane %v4422, 5
      %v5257 = vsel %vm1954, %v5255, %v5256
      %v5258 = vrot.slane %v5256, 4
      %v5259 = vrot.slane %v4423, 5
      %v5260 = vsel %vm1954, %v5258, %v5259
      %v5261 = vrot.slane %v5167, 5
      %v5262 = vrot.slane %v5261, 4
      %v5263 = vrot.slane %v4425, 5
      %v5264 = vsel %vm1954, %v5262, %v5263
      %v5265 = vrot.slane %v5263, 4
      %v5266 = vrot.slane %v4426, 5
      %v5267 = vsel %vm1954, %v5265, %v5266
      %v5268 = vrot.slane %v5168, 5
      %v5269 = vrot.slane %v5268, 4
      %v5270 = vrot.slane %v4428, 5
      %v5271 = vsel %vm1954, %v5269, %v5270
      %v5272 = vrot.slane %v5270, 4
      %v5273 = vrot.slane %v4429, 5
      %v5274 = vsel %vm1954, %v5272, %v5273
      %v5275 = vrot.slane %v5169, 5
      %v5276 = vrot.slane %v5275, 4
      %v5277 = vrot.slane %v4431, 5
      %v5278 = vsel %vm1954, %v5276, %v5277
      %v5279 = vrot.slane %v5277, 4
      %v5280 = vrot.slane %v4432, 5
      %v5281 = vsel %vm1954, %v5279, %v5280
      %v5282 = vrot.slane %v5170, 5
      %v5283 = vrot.slane %v5282, 4
      %v5284 = vrot.slane %v4434, 5
      %v5285 = vsel %vm1954, %v5283, %v5284
      %v5286 = vrot.slane %v5284, 4
      %v5287 = vrot.slane %v4435, 5
      %v5288 = vsel %vm1954, %v5286, %v5287
      %v5289 = vrot.slane %v5171, 5
      %v5290 = vrot.slane %v5289, 4
      %v5291 = vrot.slane %v4437, 5
      %v5292 = vsel %vm1954, %v5290, %v5291
      %v5293 = vrot.slane %v5291, 4
      %v5294 = vrot.slane %v4438, 5
      %v5295 = vsel %vm1954, %v5293, %v5294
      %v5296 = vrot.slane %v5172, 5
      %v5297 = vrot.slane %v5296, 4
      %v5298 = vrot.slane %v4440, 5
      %v5299 = vsel %vm1954, %v5297, %v5298
      %v5300 = vrot.slane %v5298, 4
      %v5301 = vrot.slane %v4441, 5
      %v5302 = vsel %vm1954, %v5300, %v5301
      %v5303 = vrot.slane %v5173, 5
      %v5304 = vrot.slane %v5303, 4
      %v5305 = vrot.slane %v4443, 5
      %v5306 = vsel %vm1954, %v5304, %v5305
      %v5307 = vrot.slane %v5305, 4
      %v5308 = vrot.slane %v4444, 5
      %v5309 = vsel %vm1954, %v5307, %v5308
      %v5310 = vrot.slane %v5174, 5
      %v5311 = vrot.slane %v5310, 4
      %v5312 = vrot.slane %v4446, 5
      %v5313 = vsel %vm1954, %v5311, %v5312
      %v5314 = vrot.slane %v5312, 4
      %v5315 = vrot.slane %v4447, 5
      %v5316 = vsel %vm1954, %v5314, %v5315
      %v5317 = vrot.slane %v5175, 5
      %v5318 = vrot.slane %v5317, 4
      %v5319 = vrot.slane %v4449, 5
      %v5320 = vsel %vm1954, %v5318, %v5319
      %v5321 = vrot.slane %v5319, 4
      %v5322 = vrot.slane %v4450, 5
      %v5323 = vsel %vm1954, %v5321, %v5322
      %v5324 = vrot.slane %v5176, 5
      %v5325 = vrot.slane %v5324, 4
      %v5326 = vrot.slane %v4452, 5
      %v5327 = vsel %vm1954, %v5325, %v5326
      %v5328 = vrot.slane %v5326, 4
      %v5329 = vrot.slane %v4453, 5
      %v5330 = vsel %vm1954, %v5328, %v5329
      %v5331 = vrot.slane %v5177, 5
      %v5332 = vrot.slane %v5331, 4
      %v5333 = vrot.slane %v4455, 5
      %v5334 = vsel %vm1954, %v5332, %v5333
      %v5335 = vrot.slane %v5333, 4
      %v5336 = vrot.slane %v4456, 5
      %v5337 = vsel %vm1954, %v5335, %v5336
      %v5338 = vld [vmem:[%s1 + $0x200] sm:$0xf]
      %v5339 = vld [vmem:[%s1 + $0x204] sm:$0xf]
      %v5340 = vld [vmem:[%s1 + $0x208] sm:$0xf]
      %v5341 = vld [vmem:[%s1 + $0x20c] sm:$0xf]
      %v5342 = vld [vmem:[%s1 + $0x210] sm:$0xf]
      %v5343 = vld [vmem:[%s1 + $0x214] sm:$0xf]
      %v5344 = vld [vmem:[%s1 + $0x218] sm:$0xf]
      %v5345 = vld [vmem:[%s1 + $0x21c] sm:$0xf]
      %v5346 = vld [vmem:[%s1 + $0x220] sm:$0xf]
      %v5347 = vld [vmem:[%s1 + $0x224] sm:$0xf]
      %v5348 = vld [vmem:[%s1 + $0x228] sm:$0xf]
      %v5349 = vld [vmem:[%s1 + $0x22c] sm:$0xf]
      %v5350 = vld [vmem:[%s1 + $0x230] sm:$0xf]
      %v5351 = vld [vmem:[%s1 + $0x234] sm:$0xf]
      %v5352 = vld [vmem:[%s1 + $0x238] sm:$0xf]
      %v5353 = vld [vmem:[%s1 + $0x23c] sm:$0xf]
      %v5354 = vunpack.c.l.b16 %v5229
      %v5355 = vunpack.c.l.b16 %v5232
      %v5356 = vunpack.c.l.b16 %v5236
      %v5357 = vunpack.c.l.b16 %v5239
      %v5358 = vunpack.c.l.b16 %v5243
      %v5359 = vunpack.c.l.b16 %v5246
      %v5360 = vunpack.c.l.b16 %v5250
      %v5361 = vunpack.c.l.b16 %v5253
      %v5362 = vunpack.c.l.b16 %v5257
      %v5363 = vunpack.c.l.b16 %v5260
      %v5364 = vunpack.c.l.b16 %v5264
      %v5365 = vunpack.c.l.b16 %v5267
      %v5366 = vunpack.c.l.b16 %v5271
      %v5367 = vunpack.c.l.b16 %v5274
      %v5368 = vunpack.c.l.b16 %v5278
      %v5369 = vunpack.c.l.b16 %v5281
      %v5370 = vunpack.c.l.b16 %v5285
      %v5371 = vunpack.c.l.b16 %v5288
      %v5372 = vunpack.c.l.b16 %v5292
      %v5373 = vunpack.c.l.b16 %v5295
      %v5374 = vunpack.c.l.b16 %v5299
      %v5375 = vunpack.c.l.b16 %v5302
      %v5376 = vunpack.c.l.b16 %v5306
      %v5377 = vunpack.c.l.b16 %v5309
      %v5378 = vunpack.c.l.b16 %v5313
      %v5379 = vunpack.c.l.b16 %v5316
      %v5380 = vunpack.c.l.b16 %v5320
      %v5381 = vunpack.c.l.b16 %v5323
      %v5382 = vunpack.c.l.b16 %v5327
      %v5383 = vunpack.c.l.b16 %v5330
      %v5384 = vunpack.c.l.b16 %v5334
      %v5385 = vunpack.c.l.b16 %v5337
      %v5386 = vpack.c.b16 %v5355, %v5354
      %v5387 = vpack.c.b16 %v5357, %v5356
      %v5388 = vpack.c.b16 %v5359, %v5358
      %v5389 = vpack.c.b16 %v5361, %v5360
      %v5390 = vpack.c.b16 %v5363, %v5362
      %v5391 = vpack.c.b16 %v5365, %v5364
      %v5392 = vpack.c.b16 %v5367, %v5366
      %v5393 = vpack.c.b16 %v5369, %v5368
      %v5394 = vpack.c.b16 %v5371, %v5370
      %v5395 = vpack.c.b16 %v5373, %v5372
      %v5396 = vpack.c.b16 %v5375, %v5374
      %v5397 = vpack.c.b16 %v5377, %v5376
      %v5398 = vpack.c.b16 %v5379, %v5378
      %v5399 = vpack.c.b16 %v5381, %v5380
      %v5400 = vpack.c.b16 %v5383, %v5382
      %v5401 = vpack.c.b16 %v5385, %v5384
      %v5434 = vunpack.c.l.b16 %v5338
      %v5435 = vunpack.c.l.b16 %v5339
      %v5436 = vunpack.c.l.b16 %v5340
      %v5437 = vunpack.c.l.b16 %v5341
      %v5438 = vunpack.c.l.b16 %v5342
      %v5439 = vunpack.c.l.b16 %v5343
      %v5440 = vunpack.c.l.b16 %v5344
      %v5441 = vunpack.c.l.b16 %v5345
      %v5442 = vunpack.c.l.b16 %v5346
      %v5443 = vunpack.c.l.b16 %v5347
      %v5444 = vunpack.c.l.b16 %v5348
      %v5445 = vunpack.c.l.b16 %v5349
      %v5446 = vunpack.c.l.b16 %v5350
      %v5447 = vunpack.c.l.b16 %v5351
      %v5448 = vunpack.c.l.b16 %v5352
      %v5449 = vunpack.c.l.b16 %v5353
      %v5450 = vpack.c.b16 %v5435, %v5434
      %v5451 = vpack.c.b16 %v5437, %v5436
      %v5452 = vpack.c.b16 %v5439, %v5438
      %v5453 = vpack.c.b16 %v5441, %v5440
      %v5454 = vpack.c.b16 %v5443, %v5442
      %v5455 = vpack.c.b16 %v5445, %v5444
      %v5456 = vpack.c.b16 %v5447, %v5446
      %v5457 = vpack.c.b16 %v5449, %v5448
      %5466 = vmatprep.subr.bf16.mxu0 0
      %5467 = vmatpush1.bf16.msra.mxu0 %v5450
      %5468 = vmatprep.subr.bf16.mxu0 0
      %5469 = vmatpush1.bf16.msra.mxu0 %v5451
      %5470 = vmatprep.subr.bf16.mxu0 0
      %5471 = vmatpush1.bf16.msra.mxu0 %v5452
      %5472 = vmatprep.subr.bf16.mxu0 0
      %5473 = vmatpush1.bf16.msra.mxu0 %v5453
      %5474 = vmatprep.subr.bf16.mxu0 0
      %5475 = vmatpush1.bf16.msra.mxu0 %v5454
      %5476 = vmatprep.subr.bf16.mxu0 0
      %5477 = vmatpush1.bf16.msra.mxu0 %v5455
      %5478 = vmatprep.subr.bf16.mxu0 0
      %5479 = vmatpush1.bf16.msra.mxu0 %v5456
      %5480 = vmatprep.subr.bf16.mxu0 0
      %5481 = vmatpush1.bf16.msra.mxu0 %v5457
      %5482 = vmatprep.subr.bf16.mxu0 0
      %5483 = vmatpush1.bf16.msra.mxu0 0
      %5484 = vmatprep.subr.bf16.mxu0 0
      %5485 = vmatpush1.bf16.msra.mxu0 0
      %5486 = vmatprep.subr.bf16.mxu0 0
      %5487 = vmatpush1.bf16.msra.mxu0 0
      %5488 = vmatprep.subr.bf16.mxu0 0
      %5489 = vmatpush1.bf16.msra.mxu0 0
      %5490 = vmatprep.subr.bf16.mxu0 0
      %5491 = vmatpush1.bf16.msra.mxu0 0
      %5492 = vmatprep.subr.bf16.mxu0 0
      %5493 = vmatpush1.bf16.msra.mxu0 0
      %5494 = vmatprep.subr.bf16.mxu0 0
      %5495 = vmatpush1.bf16.msra.mxu0 0
      %5496 = vmatprep.subr.bf16.mxu0 0
      %5497 = vmatpush1.bf16.msra.mxu0 0
      %5498 = vmatprep.mubr.bf16.mxu0 0
      %5499 = vmatmul.mubr.bf16.gmra.mrb[0].mxu0 %v5386
      %v5500 = vpop.f32.mrb[0].mxu0
      %v5501 = vadd.f32 0.0, %v5500
      %v5502 = vpop.f32.mrb[0].mxu0
      %v5503 = vpop.f32.mrb[0].mxu0
      %v5504 = vadd.f32 0.0, %v5503
      %v5505 = vpop.f32.mrb[0].mxu0
      %5506 = vmatprep.mubr.bf16.mxu0 0
      %5507 = vmatmul.mubr.bf16.gmra.mrb[0].mxu0 %v5387
      %v5508 = vpop.f32.mrb[0].mxu0
      %v5509 = vadd.f32 0.0, %v5508
      %v5510 = vpop.f32.mrb[0].mxu0
      %v5511 = vpop.f32.mrb[0].mxu0
      %v5512 = vadd.f32 0.0, %v5511
      %v5513 = vpop.f32.mrb[0].mxu0
      %5514 = vmatprep.mubr.bf16.mxu0 0
      %5515 = vmatmul.mubr.bf16.gmra.mrb[0].mxu0 %v5388
      %v5516 = vpop.f32.mrb[0].mxu0
      %v5517 = vadd.f32 0.0, %v5516
      %v5518 = vpop.f32.mrb[0].mxu0
      %v5519 = vpop.f32.mrb[0].mxu0
      %v5520 = vadd.f32 0.0, %v5519
      %v5521 = vpop.f32.mrb[0].mxu0
      %5522 = vmatprep.mubr.bf16.mxu0 0
      %5523 = vmatmul.mubr.bf16.gmra.mrb[0].mxu0 %v5389
      %v5524 = vpop.f32.mrb[0].mxu0
      %v5525 = vadd.f32 0.0, %v5524
      %v5526 = vpop.f32.mrb[0].mxu0
      %v5527 = vpop.f32.mrb[0].mxu0
      %v5528 = vadd.f32 0.0, %v5527
      %v5529 = vpop.f32.mrb[0].mxu0
      %5530 = vmatprep.mubr.bf16.mxu0 0
      %5531 = vmatmul.mubr.bf16.gmra.mrb[0].mxu0 %v5390
      %v5532 = vpop.f32.mrb[0].mxu0
      %v5533 = vadd.f32 0.0, %v5532
      %v5534 = vpop.f32.mrb[0].mxu0
      %v5535 = vpop.f32.mrb[0].mxu0
      %v5536 = vadd.f32 0.0, %v5535
      %v5537 = vpop.f32.mrb[0].mxu0
      %5538 = vmatprep.mubr.bf16.mxu0 0
      %5539 = vmatmul.mubr.bf16.gmra.mrb[0].mxu0 %v5391
      %v5540 = vpop.f32.mrb[0].mxu0
      %v5541 = vadd.f32 0.0, %v5540
      %v5542 = vpop.f32.mrb[0].mxu0
      %v5543 = vpop.f32.mrb[0].mxu0
      %v5544 = vadd.f32 0.0, %v5543
      %v5545 = vpop.f32.mrb[0].mxu0
      %5546 = vmatprep.mubr.bf16.mxu0 0
      %5547 = vmatmul.mubr.bf16.gmra.mrb[0].mxu0 %v5392
      %v5548 = vpop.f32.mrb[0].mxu0
      %v5549 = vadd.f32 0.0, %v5548
      %v5550 = vpop.f32.mrb[0].mxu0
      %v5551 = vpop.f32.mrb[0].mxu0
      %v5552 = vadd.f32 0.0, %v5551
      %v5553 = vpop.f32.mrb[0].mxu0
      %5554 = vmatprep.mubr.bf16.mxu0 0
      %5555 = vmatmul.mubr.bf16.gmra.mrb[0].mxu0 %v5393
      %v5556 = vpop.f32.mrb[0].mxu0
      %v5557 = vadd.f32 0.0, %v5556
      %v5558 = vpop.f32.mrb[0].mxu0
      %v5559 = vpop.f32.mrb[0].mxu0
      %v5560 = vadd.f32 0.0, %v5559
      %v5561 = vpop.f32.mrb[0].mxu0
      %5562 = vmatprep.mubr.bf16.mxu0 0
      %5563 = vmatmul.mubr.bf16.gmra.mrb[0].mxu0 %v5394
      %v5564 = vpop.f32.mrb[0].mxu0
      %v5565 = vadd.f32 0.0, %v5564
      %v5566 = vpop.f32.mrb[0].mxu0
      %v5567 = vpop.f32.mrb[0].mxu0
      %v5568 = vadd.f32 0.0, %v5567
      %v5569 = vpop.f32.mrb[0].mxu0
      %5570 = vmatprep.mubr.bf16.mxu0 0
      %5571 = vmatmul.mubr.bf16.gmra.mrb[0].mxu0 %v5395
      %v5572 = vpop.f32.mrb[0].mxu0
      %v5573 = vadd.f32 0.0, %v5572
      %v5574 = vpop.f32.mrb[0].mxu0
      %v5575 = vpop.f32.mrb[0].mxu0
      %v5576 = vadd.f32 0.0, %v5575
      %v5577 = vpop.f32.mrb[0].mxu0
      %5578 = vmatprep.mubr.bf16.mxu0 0
      %5579 = vmatmul.mubr.bf16.gmra.mrb[0].mxu0 %v5396
      %v5580 = vpop.f32.mrb[0].mxu0
      %v5581 = vadd.f32 0.0, %v5580
      %v5582 = vpop.f32.mrb[0].mxu0
      %v5583 = vpop.f32.mrb[0].mxu0
      %v5584 = vadd.f32 0.0, %v5583
      %v5585 = vpop.f32.mrb[0].mxu0
      %5586 = vmatprep.mubr.bf16.mxu0 0
      %5587 = vmatmul.mubr.bf16.gmra.mrb[0].mxu0 %v5397
      %v5588 = vpop.f32.mrb[0].mxu0
      %v5589 = vadd.f32 0.0, %v5588
      %v5590 = vpop.f32.mrb[0].mxu0
      %v5591 = vpop.f32.mrb[0].mxu0
      %v5592 = vadd.f32 0.0, %v5591
      %v5593 = vpop.f32.mrb[0].mxu0
      %5594 = vmatprep.mubr.bf16.mxu0 0
      %5595 = vmatmul.mubr.bf16.gmra.mrb[0].mxu0 %v5398
      %v5596 = vpop.f32.mrb[0].mxu0
      %v5597 = vadd.f32 0.0, %v5596
      %v5598 = vpop.f32.mrb[0].mxu0
      %v5599 = vpop.f32.mrb[0].mxu0
      %v5600 = vadd.f32 0.0, %v5599
      %v5601 = vpop.f32.mrb[0].mxu0
      %5602 = vmatprep.mubr.bf16.mxu0 0
      %5603 = vmatmul.mubr.bf16.gmra.mrb[0].mxu0 %v5399
      %v5604 = vpop.f32.mrb[0].mxu0
      %v5605 = vadd.f32 0.0, %v5604
      %v5606 = vpop.f32.mrb[0].mxu0
      %v5607 = vpop.f32.mrb[0].mxu0
      %v5608 = vadd.f32 0.0, %v5607
      %v5609 = vpop.f32.mrb[0].mxu0
      %5610 = vmatprep.mubr.bf16.mxu0 0
      %5611 = vmatmul.mubr.bf16.gmra.mrb[0].mxu0 %v5400
      %v5612 = vpop.f32.mrb[0].mxu0
      %v5613 = vadd.f32 0.0, %v5612
      %v5614 = vpop.f32.mrb[0].mxu0
      %v5615 = vpop.f32.mrb[0].mxu0
      %v5616 = vadd.f32 0.0, %v5615
      %v5617 = vpop.f32.mrb[0].mxu0
      %5618 = vmatprep.mubr.bf16.mxu0 0
      %5619 = vmatmul.mubr.bf16.gmra.mrb[0].mxu0 %v5401
      %v5620 = vpop.f32.mrb[0].mxu0
      %v5621 = vadd.f32 0.0, %v5620
      %v5622 = vpop.f32.mrb[0].mxu0
      %v5623 = vpop.f32.mrb[0].mxu0
      %v5624 = vadd.f32 0.0, %v5623
      %v5625 = vpop.f32.mrb[0].mxu0
      %5626 = vdwg.mxu0
      %v5627 = vadd.f32 %v5130, %v5501
      %v5628 = vadd.f32 %v5131, %v5504
      %v5629 = vadd.f32 %v5132, %v5509
      %v5630 = vadd.f32 %v5133, %v5512
      %v5631 = vadd.f32 %v5134, %v5517
      %v5632 = vadd.f32 %v5135, %v5520
      %v5633 = vadd.f32 %v5136, %v5525
      %v5634 = vadd.f32 %v5137, %v5528
      %v5635 = vadd.f32 %v5138, %v5533
      %v5636 = vadd.f32 %v5139, %v5536
      %v5637 = vadd.f32 %v5140, %v5541
      %v5638 = vadd.f32 %v5141, %v5544
      %v5639 = vadd.f32 %v5142, %v5549
      %v5640 = vadd.f32 %v5143, %v5552
      %v5641 = vadd.f32 %v5144, %v5557
      %v5642 = vadd.f32 %v5145, %v5560
      %v5643 = vadd.f32 %v5146, %v5565
      %v5644 = vadd.f32 %v5147, %v5568
      %v5645 = vadd.f32 %v5148, %v5573
      %v5646 = vadd.f32 %v5149, %v5576
      %v5647 = vadd.f32 %v5150, %v5581
      %v5648 = vadd.f32 %v5151, %v5584
      %v5649 = vadd.f32 %v5152, %v5589
      %v5650 = vadd.f32 %v5153, %v5592
      %v5651 = vadd.f32 %v5154, %v5597
      %v5652 = vadd.f32 %v5155, %v5600
      %v5653 = vadd.f32 %v5156, %v5605
      %v5654 = vadd.f32 %v5157, %v5608
      %v5655 = vadd.f32 %v5158, %v5613
      %v5656 = vadd.f32 %v5159, %v5616
      %v5657 = vadd.f32 %v5160, %v5621
      %v5658 = vadd.f32 %v5161, %v5624
      %5659 = vst [vmem:[%s179] sm:$0xff] %v5627
      %5660 = vst [vmem:[%s179 + $0x8] sm:$0xff] %v5628
      %5661 = vst [vmem:[%s179 + $0x10] sm:$0xff] %v5629
      %5662 = vst [vmem:[%s179 + $0x18] sm:$0xff] %v5630
      %5663 = vst [vmem:[%s179 + $0x20] sm:$0xff] %v5631
      %5664 = vst [vmem:[%s179 + $0x28] sm:$0xff] %v5632
      %5665 = vst [vmem:[%s179 + $0x30] sm:$0xff] %v5633
      %5666 = vst [vmem:[%s179 + $0x38] sm:$0xff] %v5634
      %5667 = vst [vmem:[%s179 + $0x40] sm:$0xff] %v5635
      %5668 = vst [vmem:[%s179 + $0x48] sm:$0xff] %v5636
      %5669 = vst [vmem:[%s179 + $0x50] sm:$0xff] %v5637
      %5670 = vst [vmem:[%s179 + $0x58] sm:$0xff] %v5638
      %5671 = vst [vmem:[%s179 + $0x60] sm:$0xff] %v5639
      %5672 = vst [vmem:[%s179 + $0x68] sm:$0xff] %v5640
      %5673 = vst [vmem:[%s179 + $0x70] sm:$0xff] %v5641
      %5674 = vst [vmem:[%s179 + $0x78] sm:$0xff] %v5642
      %5675 = vst [vmem:[%s179 + $0x80] sm:$0xff] %v5643
      %5676 = vst [vmem:[%s179 + $0x88] sm:$0xff] %v5644
      %5677 = vst [vmem:[%s179 + $0x90] sm:$0xff] %v5645
      %5678 = vst [vmem:[%s179 + $0x98] sm:$0xff] %v5646
      %5679 = vst [vmem:[%s179 + $0xa0] sm:$0xff] %v5647
      %5680 = vst [vmem:[%s179 + $0xa8] sm:$0xff] %v5648
      %5681 = vst [vmem:[%s179 + $0xb0] sm:$0xff] %v5649
      %5682 = vst [vmem:[%s179 + $0xb8] sm:$0xff] %v5650
      %5683 = vst [vmem:[%s179 + $0xc0] sm:$0xff] %v5651
      %5684 = vst [vmem:[%s179 + $0xc8] sm:$0xff] %v5652
      %5685 = vst [vmem:[%s179 + $0xd0] sm:$0xff] %v5653
      %5686 = vst [vmem:[%s179 + $0xd8] sm:$0xff] %v5654
      %5687 = vst [vmem:[%s179 + $0xe0] sm:$0xff] %v5655
      %5688 = vst [vmem:[%s179 + $0xe8] sm:$0xff] %v5656
      %5689 = vst [vmem:[%s179 + $0xf0] sm:$0xff] %v5657
      %5690 = vst [vmem:[%s179 + $0xf8] sm:$0xff] %v5658
      %v5691 = vadd.f32 %v5627, %v5628
      %v5692 = vadd.f32 %v5691, %v5629
      %v5693 = vadd.f32 %v5692, %v5630
      %v5694 = vadd.f32 %v5693, %v5631
      %v5695 = vadd.f32 %v5694, %v5632
      %v5696 = vadd.f32 %v5695, %v5633
      %v5697 = vadd.f32 %v5696, %v5634
      %v5698 = vadd.f32 %v5697, %v5635
      %v5699 = vadd.f32 %v5698, %v5636
      %v5700 = vadd.f32 %v5699, %v5637
      %v5701 = vadd.f32 %v5700, %v5638
      %v5702 = vadd.f32 %v5701, %v5639
      %v5703 = vadd.f32 %v5702, %v5640
      %v5704 = vadd.f32 %v5703, %v5641
      %v5705 = vadd.f32 %v5704, %v5642
      %v5706 = vadd.f32 %v5705, %v5643
      %v5707 = vadd.f32 %v5706, %v5644
      %v5708 = vadd.f32 %v5707, %v5645
      %v5709 = vadd.f32 %v5708, %v5646
      %v5710 = vadd.f32 %v5709, %v5647
      %v5711 = vadd.f32 %v5710, %v5648
      %v5712 = vadd.f32 %v5711, %v5649
      %v5713 = vadd.f32 %v5712, %v5650
      %v5714 = vadd.f32 %v5713, %v5651
      %v5715 = vadd.f32 %v5714, %v5652
      %v5716 = vadd.f32 %v5715, %v5653
      %v5717 = vadd.f32 %v5716, %v5654
      %v5718 = vadd.f32 %v5717, %v5655
      %v5719 = vadd.f32 %v5718, %v5656
      %v5720 = vadd.f32 %v5719, %v5657
      %v5721 = vadd.f32 %v5720, %v5658
      %v5722 = vrot.slane %v5721, 4
      %v5723 = vadd.f32 %v5721, %v5722
      %v5724 = vrot.slane %v5723, 2
      %v5725 = vadd.f32 %v5723, %v5724
      %v5726 = vrot.slane %v5725, 1
      %v5727 = vadd.f32 %v5725, %v5726
      %v5728 = vmul.f32 %v5627, %v5627
      %v5729 = vmul.f32 %v5628, %v5628
      %v5730 = vmul.f32 %v5629, %v5629
      %v5731 = vmul.f32 %v5630, %v5630
      %v5732 = vmul.f32 %v5631, %v5631
      %v5733 = vmul.f32 %v5632, %v5632
      %v5734 = vmul.f32 %v5633, %v5633
      %v5735 = vmul.f32 %v5634, %v5634
      %v5736 = vmul.f32 %v5635, %v5635
      %v5737 = vmul.f32 %v5636, %v5636
      %v5738 = vmul.f32 %v5637, %v5637
      %v5739 = vmul.f32 %v5638, %v5638
      %v5740 = vmul.f32 %v5639, %v5639
      %v5741 = vmul.f32 %v5640, %v5640
      %v5742 = vmul.f32 %v5641, %v5641
      %v5743 = vmul.f32 %v5642, %v5642
      %v5744 = vmul.f32 %v5643, %v5643
      %v5745 = vmul.f32 %v5644, %v5644
      %v5746 = vmul.f32 %v5645, %v5645
      %v5747 = vmul.f32 %v5646, %v5646
      %v5748 = vmul.f32 %v5647, %v5647
      %v5749 = vmul.f32 %v5648, %v5648
      %v5750 = vmul.f32 %v5649, %v5649
      %v5751 = vmul.f32 %v5650, %v5650
      %v5752 = vmul.f32 %v5651, %v5651
      %v5753 = vmul.f32 %v5652, %v5652
      %v5754 = vmul.f32 %v5653, %v5653
      %v5755 = vmul.f32 %v5654, %v5654
      %v5756 = vmul.f32 %v5655, %v5655
      %v5757 = vmul.f32 %v5656, %v5656
      %v5758 = vmul.f32 %v5657, %v5657
      %v5759 = vmul.f32 %v5658, %v5658
      %v5760 = vadd.f32 %v5728, %v5729
      %v5761 = vadd.f32 %v5760, %v5730
      %v5762 = vadd.f32 %v5761, %v5731
      %v5763 = vadd.f32 %v5762, %v5732
      %v5764 = vadd.f32 %v5763, %v5733
      %v5765 = vadd.f32 %v5764, %v5734
      %v5766 = vadd.f32 %v5765, %v5735
      %v5767 = vadd.f32 %v5766, %v5736
      %v5768 = vadd.f32 %v5767, %v5737
      %v5769 = vadd.f32 %v5768, %v5738
      %v5770 = vadd.f32 %v5769, %v5739
      %v5771 = vadd.f32 %v5770, %v5740
      %v5772 = vadd.f32 %v5771, %v5741
      %v5773 = vadd.f32 %v5772, %v5742
      %v5774 = vadd.f32 %v5773, %v5743
      %v5775 = vadd.f32 %v5774, %v5744
      %v5776 = vadd.f32 %v5775, %v5745
      %v5777 = vadd.f32 %v5776, %v5746
      %v5778 = vadd.f32 %v5777, %v5747
      %v5779 = vadd.f32 %v5778, %v5748
      %v5780 = vadd.f32 %v5779, %v5749
      %v5781 = vadd.f32 %v5780, %v5750
      %v5782 = vadd.f32 %v5781, %v5751
      %v5783 = vadd.f32 %v5782, %v5752
      %v5784 = vadd.f32 %v5783, %v5753
      %v5785 = vadd.f32 %v5784, %v5754
      %v5786 = vadd.f32 %v5785, %v5755
      %v5787 = vadd.f32 %v5786, %v5756
      %v5788 = vadd.f32 %v5787, %v5757
      %v5789 = vadd.f32 %v5788, %v5758
      %v5790 = vadd.f32 %v5789, %v5759
      %v5791 = vrot.slane %v5790, 4
      %v5792 = vadd.f32 %v5790, %v5791
      %v5793 = vrot.slane %v5792, 2
      %v5794 = vadd.f32 %v5792, %v5793
      %v5795 = vrot.slane %v5794, 1
      %v5796 = vadd.f32 %v5794, %v5795
      %vm5797 = vcmask 1040384
      %v5798 = vsel %vm5797, %v5727, %v5796
      %5799 = vst [vmem:[%s184] sm:$0x3] %v5798
      %s5800 = smul.u32 32, %s15
      %p5801 = scmp.lt.s32.totalorder %s5800, 63
      %s5802 = scalar_select %p5801, %s5800, 63
      %s5803 = smul.addr %s5802, 8
      %s5804 = scalar_lea.vmem %s2, %s5803
      %p5805 = scmp.lt.s32.totalorder %s15, 1
      %s5806 = scalar_select %p5805, %s15, 1
      %s5807 = smul.addr %s5806, 2
      %s5808 = scalar_lea.vmem %s3, %s5807
      // Predicated region
      $region29: #{basic_block_forward.3} parent=27 // pred_check
        %p5809 = pneg %p80
      $region30: #{basic_block_forward.3} parent=27 // pred_check_branch
        %5811 = sbr.rel (%p5809) target = $region32
      $region31: #{basic_block_forward.3} parent=27 // pred_region
        %s5812 = smul.u32 32, %s15
      $region32: #{basic_block_forward.3} parent=27 // pred_fallthru
        _
      // Predicated region
      $region33: #{basic_block_forward.3} parent=27 // pred_check
        %p5813 = pneg %p106
      $region34: #{basic_block_forward.3} parent=27 // pred_check_branch
        %5815 = sbr.rel (%p5813) target = $region36
      $region35: #{basic_block_forward.3} parent=27 // pred_region
        _
      $region36: #{basic_block_forward.3} parent=27 // pred_fallthru
        _
    $region28: #{basic_block_forward.3} parent=5 // pred_fallthru
      _
    %p5816 = scmp.le.s32.totalorder 2, %s10
    // Predicated region
    $region37: #{basic_block_forward.3} parent=5 // pred_check
      %p5817 = pneg %p5816
    $region38: #{basic_block_forward.3} parent=5 // pred_check_branch
      %5819 = sbr.rel (%p5817) target = $region40
    $region39: #{basic_block_forward.3} parent=5 // pred_region
      %s5820 = ssub.s32 %s10, 2
      // Predicated region
      $region41: #{basic_block_forward.3} parent=39 // pred_check
        %p5821 = pneg %p86
      $region42: #{basic_block_forward.3} parent=39 // pred_check_branch
        %5823 = sbr.rel (%p5821) target = $region44
      $region43: #{basic_block_forward.3} parent=39 // pred_region
        %s5824 = smul.u32 32, %s16
        %p5825 = scmp.lt.s32.totalorder %s5824, 63
        %s5826 = scalar_select %p5825, %s5824, 63
        %s5827 = smul.addr %s5826, 8
        %s5828 = scalar_lea.vmem %s2, %s5827
      $region44: #{basic_block_forward.3} parent=39 // pred_fallthru
        _
      // Predicated region
      $region45: #{basic_block_forward.3} parent=39 // pred_check
        %p5829 = pneg %p112
      $region46: #{basic_block_forward.3} parent=39 // pred_check_branch
        %5831 = sbr.rel (%p5829) target = $region48
      $region47: #{basic_block_forward.3} parent=39 // pred_region
        %p5832 = scmp.lt.s32.totalorder %s16, 1
        %s5833 = scalar_select %p5832, %s16, 1
        %s5834 = smul.addr %s5833, 2
        %s5835 = scalar_lea.vmem %s3, %s5834
      $region48: #{basic_block_forward.3} parent=39 // pred_fallthru
        _
    $region40: #{basic_block_forward.3} parent=5 // pred_fallthru
      _
  $region6: #{basic_block_forward.3} parent=0 // loop_footer
    %s14 = sadd.s32 1, %s10
  $region7: #{basic_block_forward.3} parent=0 // loop_footer_branch
    %9 = sbr.rel target = $region3
  $region8: #{basic_block_forward.3} parent=0 // loop_exit
    _

// kernel: basic_block_forward.4
$region0: #{basic_block_forward.4}
  #allocation0 [shape = 'u32[]', space=smem, size = 0x4, offset = 0x4, fixed_abs, tag = 'smem constant byte address 0x4 - core index']
  #allocation1 [shape = 'u32[144,128]{1,0:T(1,128)}', space=vmem, size = 0x12000, scoped, tag = 'internal scratch']
  #allocation2 [shape = 'bf16[18,18,128]{2,1,0:T(8,128)(2,1)}', space=vmem, size = 0x1b000, scoped, tag = 'scratch operand']
  %s0 = inlined_call_operand.vmem [shape: f32[512,128], index: 0, kind: input, shape index: {}]
  %s1 = inlined_call_operand.vmem [shape: f32[1,128], index: 1, kind: input, shape index: {}]
  %s2 = inlined_call_operand.vmem [shape: f32[1,128], index: 2, kind: input, shape index: {}]
  %s3 = inlined_call_operand.vmem [shape: bf16[1152,128], index: 3, kind: input, shape index: {}]
  %s4 = inlined_call_operand.vmem [shape: f32[512,128], index: 4, kind: output, shape index: {0}]
  %s5 = inlined_call_operand.vmem [shape: f32[2,2,128], index: 5, kind: output, shape index: {1}]
  %6 = xla_tuple %s4, %s5
  %s7 = sld [smem:[#allocation0]]
  $region57: #{basic_block_forward.4} parent=0
    _
  %s9 = ssub.s32 1, %s7
  %s10 = scalar_select 0, %s9, %s7
  loop: start=0, step=1, limit=4
  $region2: #{basic_block_forward.4} parent=0 // loop_pre_header
    _
  $region3: #{basic_block_forward.4} parent=0 // loop_header
    %s12 = sphi 0, %s16
    %p13 = scmp.ge.s32.totalorder %s12, 4
    %s22 = sphi 0, %s24
    %s25 = sphi 0, %s22
    %s26 = sphi 0, %s25
    %s42 = sphi 0, %s26
    %s46 = sphi 0, %s46
    %s48 = sphi 0, %s46
    %s49 = sphi 0, %s48
    %s63 = sphi 0, %s49
    %s67 = sphi 0, %s67
    %s69 = sphi 0, %s67
    %s70 = sphi 0, %s69
    %s84 = sphi 0, %s70
    %s88 = sphi 0, %s88
    %s90 = sphi 0, %s88
    %s91 = sphi 0, %s90
    %s105 = sphi 0, %s91
    %s111 = sphi 0, %s113
    %s114 = sphi 0, %s111
    %s115 = sphi 0, %s114
    %s131 = sphi 0, %s115
    %s137 = sphi 0, %s139
    %s140 = sphi 0, %s137
    %s141 = sphi 0, %s140
    %s157 = sphi 0, %s141
  $region4: #{basic_block_forward.4} parent=0 // loop_header_branch
    %15 = sbr.rel (%p13) target = $region8
  $region5: #{basic_block_forward.4} parent=0 // loop_body
    %s17 = ssub.s32 %s12, 1
    %s18 = ssub.s32 %s12, 2
    %s19 = sadd.s32 %s12, 1
    %s20 = ssub.s32 %s12, %s19
    %p21 = scmp.eq.s32.totalorder %s20, 0
    %s23 = sadd.s32 %s22, 1
    %s24 = scalar_select %p21, %s22, %s23
    %p27 = pneg %p21
    %p28 = scmp.eq.s32.totalorder %s12, 1
    %p29 = por %p27, %p28
    %p30 = scmp.ne.s32.totalorder %s22, %s25
    %p31 = scmp.eq.s32.totalorder %s12, 0
    %p32 = por %p30, %p31
    %p33 = scmp.ne.s32.totalorder %s22, %s25
    %p34 = scmp.eq.s32.totalorder %s17, 1
    %p35 = por %p33, %p34
    %p36 = scmp.ne.s32.totalorder %s25, %s26
    %p37 = scmp.eq.s32.totalorder %s17, 0
    %p38 = por %p36, %p37
    %p39 = scmp.ne.s32.totalorder %s25, %s26
    %p40 = scmp.eq.s32.totalorder %s18, 1
    %p41 = por %p39, %p40
    %p43 = scmp.ne.s32.totalorder %s26, %s42
    %p44 = scmp.eq.s32.totalorder %s18, 0
    %p45 = por %p43, %p44
    %s47 = sadd.s32 %s46, 1
    %p50 = scmp.eq.s32.totalorder %s12, 1
    %p51 = scmp.ne.s32.totalorder %s46, %s48
    %p52 = scmp.eq.s32.totalorder %s12, 0
    %p53 = por %p51, %p52
    %p54 = scmp.ne.s32.totalorder %s46, %s48
    %p55 = scmp.eq.s32.totalorder %s17, 1
    %p56 = por %p54, %p55
    %p57 = scmp.ne.s32.totalorder %s48, %s49
    %p58 = scmp.eq.s32.totalorder %s17, 0
    %p59 = por %p57, %p58
    %p60 = scmp.ne.s32.totalorder %s48, %s49
    %p61 = scmp.eq.s32.totalorder %s18, 1
    %p62 = por %p60, %p61
    %p64 = scmp.ne.s32.totalorder %s49, %s63
    %p65 = scmp.eq.s32.totalorder %s18, 0
    %p66 = por %p64, %p65
    %s68 = sadd.s32 %s67, 1
    %p71 = scmp.eq.s32.totalorder %s12, 1
    %p72 = scmp.ne.s32.totalorder %s67, %s69
    %p73 = scmp.eq.s32.totalorder %s12, 0
    %p74 = por %p72, %p73
    %p75 = scmp.ne.s32.totalorder %s67, %s69
    %p76 = scmp.eq.s32.totalorder %s17, 1
    %p77 = por %p75, %p76
    %p78 = scmp.ne.s32.totalorder %s69, %s70
    %p79 = scmp.eq.s32.totalorder %s17, 0
    %p80 = por %p78, %p79
    %p81 = scmp.ne.s32.totalorder %s69, %s70
    %p82 = scmp.eq.s32.totalorder %s18, 1
    %p83 = por %p81, %p82
    %p85 = scmp.ne.s32.totalorder %s70, %s84
    %p86 = scmp.eq.s32.totalorder %s18, 0
    %p87 = por %p85, %p86
    %s89 = sadd.s32 %s88, 1
    %p92 = scmp.eq.s32.totalorder %s12, 1
    %p93 = scmp.ne.s32.totalorder %s88, %s90
    %p94 = scmp.eq.s32.totalorder %s12, 0
    %p95 = por %p93, %p94
    %p96 = scmp.ne.s32.totalorder %s88, %s90
    %p97 = scmp.eq.s32.totalorder %s17, 1
    %p98 = por %p96, %p97
    %p99 = scmp.ne.s32.totalorder %s90, %s91
    %p100 = scmp.eq.s32.totalorder %s17, 0
    %p101 = por %p99, %p100
    %p102 = scmp.ne.s32.totalorder %s90, %s91
    %p103 = scmp.eq.s32.totalorder %s18, 1
    %p104 = por %p102, %p103
    %p106 = scmp.ne.s32.totalorder %s91, %s105
    %p107 = scmp.eq.s32.totalorder %s18, 0
    %p108 = por %p106, %p107
    %s109 = ssub.s32 %s12, %s19
    %p110 = scmp.eq.s32.totalorder %s109, 0
    %s112 = sadd.s32 %s111, 1
    %s113 = scalar_select %p110, %s111, %s112
    %p116 = pneg %p110
    %p117 = scmp.eq.s32.totalorder %s12, 1
    %p118 = por %p116, %p117
    %p119 = scmp.ne.s32.totalorder %s111, %s114
    %p120 = scmp.eq.s32.totalorder %s12, 0
    %p121 = por %p119, %p120
    %p122 = scmp.ne.s32.totalorder %s111, %s114
    %p123 = scmp.eq.s32.totalorder %s17, 1
    %p124 = por %p122, %p123
    %p125 = scmp.ne.s32.totalorder %s114, %s115
    %p126 = scmp.eq.s32.totalorder %s17, 0
    %p127 = por %p125, %p126
    %p128 = scmp.ne.s32.totalorder %s114, %s115
    %p129 = scmp.eq.s32.totalorder %s18, 1
    %p130 = por %p128, %p129
    %p132 = scmp.ne.s32.totalorder %s115, %s131
    %p133 = scmp.eq.s32.totalorder %s18, 0
    %p134 = por %p132, %p133
    %s135 = ssub.s32 %s12, %s19
    %p136 = scmp.eq.s32.totalorder %s135, 0
    %s138 = sadd.s32 %s137, 1
    %s139 = scalar_select %p136, %s137, %s138
    %p142 = pneg %p136
    %p143 = scmp.eq.s32.totalorder %s12, 1
    %p144 = por %p142, %p143
    %p145 = scmp.ne.s32.totalorder %s137, %s140
    %p146 = scmp.eq.s32.totalorder %s12, 0
    %p147 = por %p145, %p146
    %p148 = scmp.ne.s32.totalorder %s137, %s140
    %p149 = scmp.eq.s32.totalorder %s17, 1
    %p150 = por %p148, %p149
    %p151 = scmp.ne.s32.totalorder %s140, %s141
    %p152 = scmp.eq.s32.totalorder %s17, 0
    %p153 = por %p151, %p152
    %p154 = scmp.ne.s32.totalorder %s140, %s141
    %p155 = scmp.eq.s32.totalorder %s18, 1
    %p156 = por %p154, %p155
    %p158 = scmp.ne.s32.totalorder %s141, %s157
    %p159 = scmp.eq.s32.totalorder %s18, 0
    %p160 = por %p158, %p159
    %p161 = scmp.le.s32.totalorder 1, %s12
    %p162 = scmp.lt.s32.totalorder %s12, 3
    %p163 = pnand %p161, %p162
    %p164 = pneg %p163
    // Predicated region
    $region9: #{basic_block_forward.4} parent=5 // pred_check
      _
    $region10: #{basic_block_forward.4} parent=5 // pred_check_branch
      %166 = sbr.rel (%p163) target = $region12
    $region11: #{basic_block_forward.4} parent=5 // pred_region
      %s167 = ssub.s32 %s12, 1
      // Predicated region
      $region13: #{basic_block_forward.4} parent=11 // pred_check
        %p168 = pneg %p59
      $region14: #{basic_block_forward.4} parent=11 // pred_check_branch
        %170 = sbr.rel (%p168) target = $region16
      $region15: #{basic_block_forward.4} parent=11 // pred_region
        _
      $region16: #{basic_block_forward.4} parent=11 // pred_fallthru
        _
      // Predicated region
      $region17: #{basic_block_forward.4} parent=11 // pred_check
        %p171 = pneg %p80
      $region18: #{basic_block_forward.4} parent=11 // pred_check_branch
        %173 = sbr.rel (%p171) target = $region20
      $region19: #{basic_block_forward.4} parent=11 // pred_region
        _
      $region20: #{basic_block_forward.4} parent=11 // pred_fallthru
        _
      // Predicated region
      $region21: #{basic_block_forward.4} parent=11 // pred_check
        %p174 = pneg %p101
      $region22: #{basic_block_forward.4} parent=11 // pred_check_branch
        %176 = sbr.rel (%p174) target = $region24
      $region23: #{basic_block_forward.4} parent=11 // pred_region
        _
      $region24: #{basic_block_forward.4} parent=11 // pred_fallthru
        _
    $region12: #{basic_block_forward.4} parent=5 // pred_fallthru
      _
    %p177 = scmp.lt.s32.totalorder %s12, 2
    // Predicated region
    $region25: #{basic_block_forward.4} parent=5 // pred_check
      %p178 = pneg %p177
    $region26: #{basic_block_forward.4} parent=5 // pred_check_branch
      %180 = sbr.rel (%p178) target = $region28
    $region27: #{basic_block_forward.4} parent=5 // pred_region
      // Predicated region
      $region29: #{basic_block_forward.4} parent=27 // pred_check
        %p181 = pneg %p32
      $region30: #{basic_block_forward.4} parent=27 // pred_check_branch
        %183 = sbr.rel (%p181) target = $region32
      $region31: #{basic_block_forward.4} parent=27 // pred_region
        %s184 = smul.u32 32, %s12
        %p185 = scmp.lt.s32.totalorder %s184, 63
        %s186 = scalar_select %p185, %s184, 63
        %s187 = smul.addr %s186, 8
        %s188 = scalar_lea.vmem %s0, %s187
        %s189 = smul.u32 32, %s12
      $region32: #{basic_block_forward.4} parent=27 // pred_fallthru
        _
    $region28: #{basic_block_forward.4} parent=5 // pred_fallthru
      _
    %p190 = scmp.le.s32.totalorder 1, %s12
    %p191 = scmp.lt.s32.totalorder %s12, 3
    %p192 = pnand %p190, %p191
    %p193 = pneg %p192
    // Predicated region
    $region33: #{basic_block_forward.4} parent=5 // pred_check
      _
    $region34: #{basic_block_forward.4} parent=5 // pred_check_branch
      %195 = sbr.rel (%p192) target = $region36
    $region35: #{basic_block_forward.4} parent=5 // pred_region
      %s196 = ssub.s32 %s12, 1
      %s197 = smul.u32 32, %s17
      %p198 = scmp.lt.s32.totalorder %s197, 63
      %s199 = scalar_select %p198, %s197, 63
      %s200 = smul.addr %s199, 8
      %s201 = scalar_lea.vmem %s0, %s200
      %p202 = pneg %p38
      %p203 = pneg %p35
      %p204 = pneg %p59
      %p205 = pneg %p56
      %p206 = pneg %p80
      %p207 = pneg %p77
      %p208 = pneg %p101
      %p209 = pneg %p98
      %p210 = pneg %p127
      %p211 = pneg %p124
      %s212 = smul.u32 32, %s17
      %p213 = scmp.lt.s32.totalorder %s212, 63
      %s214 = scalar_select %p213, %s212, 63
      %s215 = smul.addr %s214, 8
      %s216 = scalar_lea.vmem %s4, %s215
      %p217 = pneg %p153
      %p218 = pneg %p150
      %p219 = scmp.lt.s32.totalorder %s17, 1
      %s220 = scalar_select %p219, %s17, 1
      %s221 = smul.addr %s220, 2
      %s222 = scalar_lea.vmem %s5, %s221
      %s223 = smul.u32 32, %s17
      %p224 = scmp.lt.s32.totalorder %s223, 63
      %s225 = scalar_select %p224, %s223, 63
      %s226 = smul.addr %s225, 8
      %s227 = scalar_lea.vmem %s0, %s226
      %s228 = smul.u32 32, %s17
      %s229 = smul.u32 32, %s17
      %p230 = scmp.lt.s32.totalorder %s229, 63
      %s231 = scalar_select %p230, %s229, 63
      %s232 = smul.addr %s231, 8
      %s233 = scalar_lea.vmem %s4, %s232
      %s234 = smul.u32 32, %s17
      %p235 = scmp.lt.s32.totalorder %s17, 1
      %s236 = scalar_select %p235, %s17, 1
      %s237 = smul.addr %s236, 2
      %s238 = scalar_lea.vmem %s5, %s237
      %v240 = vld [vmem:[%s227] sm:$0xff]
      %v241 = vld [vmem:[%s227 + $0x8] sm:$0xff]
      %v242 = vld [vmem:[%s227 + $0x10] sm:$0xff]
      %v243 = vld [vmem:[%s227 + $0x18] sm:$0xff]
      %v244 = vld [vmem:[%s227 + $0x20] sm:$0xff]
      %v245 = vld [vmem:[%s227 + $0x28] sm:$0xff]
      %v246 = vld [vmem:[%s227 + $0x30] sm:$0xff]
      %v247 = vld [vmem:[%s227 + $0x38] sm:$0xff]
      %v248 = vld [vmem:[%s227 + $0x40] sm:$0xff]
      %v249 = vld [vmem:[%s227 + $0x48] sm:$0xff]
      %v250 = vld [vmem:[%s227 + $0x50] sm:$0xff]
      %v251 = vld [vmem:[%s227 + $0x58] sm:$0xff]
      %v252 = vld [vmem:[%s227 + $0x60] sm:$0xff]
      %v253 = vld [vmem:[%s227 + $0x68] sm:$0xff]
      %v254 = vld [vmem:[%s227 + $0x70] sm:$0xff]
      %v255 = vld [vmem:[%s227 + $0x78] sm:$0xff]
      %v256 = vld [vmem:[%s227 + $0x80] sm:$0xff]
      %v257 = vld [vmem:[%s227 + $0x88] sm:$0xff]
      %v258 = vld [vmem:[%s227 + $0x90] sm:$0xff]
      %v259 = vld [vmem:[%s227 + $0x98] sm:$0xff]
      %v260 = vld [vmem:[%s227 + $0xa0] sm:$0xff]
      %v261 = vld [vmem:[%s227 + $0xa8] sm:$0xff]
      %v262 = vld [vmem:[%s227 + $0xb0] sm:$0xff]
      %v263 = vld [vmem:[%s227 + $0xb8] sm:$0xff]
      %v264 = vld [vmem:[%s227 + $0xc0] sm:$0xff]
      %v265 = vld [vmem:[%s227 + $0xc8] sm:$0xff]
      %v266 = vld [vmem:[%s227 + $0xd0] sm:$0xff]
      %v267 = vld [vmem:[%s227 + $0xd8] sm:$0xff]
      %v268 = vld [vmem:[%s227 + $0xe0] sm:$0xff]
      %v269 = vld [vmem:[%s227 + $0xe8] sm:$0xff]
      %v270 = vld [vmem:[%s227 + $0xf0] sm:$0xff]
      %v271 = vld [vmem:[%s227 + $0xf8] sm:$0xff]
      %v272 = vld [vmem:[%s1] sm:$0x1]
      %v274 = vlaneseq
      %v275 = vshrl.u32 %v274, 7
      %v276 = vsub.s32 0, %v275
      %v277 = vrot.slane %v272, %v276
      %v279 = vmul.f32 %v240, %v277
      %v280 = vmul.f32 %v241, %v277
      %v281 = vmul.f32 %v242, %v277
      %v282 = vmul.f32 %v243, %v277
      %v283 = vmul.f32 %v244, %v277
      %v284 = vmul.f32 %v245, %v277
      %v285 = vmul.f32 %v246, %v277
      %v286 = vmul.f32 %v247, %v277
      %v287 = vmul.f32 %v248, %v277
      %v288 = vmul.f32 %v249, %v277
      %v289 = vmul.f32 %v250, %v277
      %v290 = vmul.f32 %v251, %v277
      %v291 = vmul.f32 %v252, %v277
      %v292 = vmul.f32 %v253, %v277
      %v293 = vmul.f32 %v254, %v277
      %v294 = vmul.f32 %v255, %v277
      %v295 = vmul.f32 %v256, %v277
      %v296 = vmul.f32 %v257, %v277
      %v297 = vmul.f32 %v258, %v277
      %v298 = vmul.f32 %v259, %v277
      %v299 = vmul.f32 %v260, %v277
      %v300 = vmul.f32 %v261, %v277
      %v301 = vmul.f32 %v262, %v277
      %v302 = vmul.f32 %v263, %v277
      %v303 = vmul.f32 %v264, %v277
      %v304 = vmul.f32 %v265, %v277
      %v305 = vmul.f32 %v266, %v277
      %v306 = vmul.f32 %v267, %v277
      %v307 = vmul.f32 %v268, %v277
      %v308 = vmul.f32 %v269, %v277
      %v309 = vmul.f32 %v270, %v277
      %v310 = vmul.f32 %v271, %v277
      %v311 = vld [vmem:[%s2] sm:$0x1]
      %v313 = vlaneseq
      %v314 = vshrl.u32 %v313, 7
      %v315 = vsub.s32 0, %v314
      %v316 = vrot.slane %v311, %v315
      %v318 = vadd.f32 %v279, %v316
      %v319 = vadd.f32 %v280, %v316
      %v320 = vadd.f32 %v281, %v316
      %v321 = vadd.f32 %v282, %v316
      %v322 = vadd.f32 %v283, %v316
      %v323 = vadd.f32 %v284, %v316
      %v324 = vadd.f32 %v285, %v316
      %v325 = vadd.f32 %v286, %v316
      %v326 = vadd.f32 %v287, %v316
      %v327 = vadd.f32 %v288, %v316
      %v328 = vadd.f32 %v289, %v316
      %v329 = vadd.f32 %v290, %v316
      %v330 = vadd.f32 %v291, %v316
      %v331 = vadd.f32 %v292, %v316
      %v332 = vadd.f32 %v293, %v316
      %v333 = vadd.f32 %v294, %v316
      %v334 = vadd.f32 %v295, %v316
      %v335 = vadd.f32 %v296, %v316
      %v336 = vadd.f32 %v297, %v316
      %v337 = vadd.f32 %v298, %v316
      %v338 = vadd.f32 %v299, %v316
      %v339 = vadd.f32 %v300, %v316
      %v340 = vadd.f32 %v301, %v316
      %v341 = vadd.f32 %v302, %v316
      %v342 = vadd.f32 %v303, %v316
      %v343 = vadd.f32 %v304, %v316
      %v344 = vadd.f32 %v305, %v316
      %v345 = vadd.f32 %v306, %v316
      %v346 = vadd.f32 %v307, %v316
      %v347 = vadd.f32 %v308, %v316
      %v348 = vadd.f32 %v309, %v316
      %v349 = vadd.f32 %v310, %v316
      %v350 = vmax.f32 %v318, 0.0
      %v351 = vmax.f32 %v319, 0.0
      %v352 = vmax.f32 %v320, 0.0
      %v353 = vmax.f32 %v321, 0.0
      %v354 = vmax.f32 %v322, 0.0
      %v355 = vmax.f32 %v323, 0.0
      %v356 = vmax.f32 %v324, 0.0
      %v357 = vmax.f32 %v325, 0.0
      %v358 = vmax.f32 %v326, 0.0
      %v359 = vmax.f32 %v327, 0.0
      %v360 = vmax.f32 %v328, 0.0
      %v361 = vmax.f32 %v329, 0.0
      %v362 = vmax.f32 %v330, 0.0
      %v363 = vmax.f32 %v331, 0.0
      %v364 = vmax.f32 %v332, 0.0
      %v365 = vmax.f32 %v333, 0.0
      %v366 = vmax.f32 %v334, 0.0
      %v367 = vmax.f32 %v335, 0.0
      %v368 = vmax.f32 %v336, 0.0
      %v369 = vmax.f32 %v337, 0.0
      %v370 = vmax.f32 %v338, 0.0
      %v371 = vmax.f32 %v339, 0.0
      %v372 = vmax.f32 %v340, 0.0
      %v373 = vmax.f32 %v341, 0.0
      %v374 = vmax.f32 %v342, 0.0
      %v375 = vmax.f32 %v343, 0.0
      %v376 = vmax.f32 %v344, 0.0
      %v377 = vmax.f32 %v345, 0.0
      %v378 = vmax.f32 %v346, 0.0
      %v379 = vmax.f32 %v347, 0.0
      %v380 = vmax.f32 %v348, 0.0
      %v381 = vmax.f32 %v349, 0.0
      %382 = vst [vmem:[#allocation2] sm:$0xf] 0
      %383 = vst [vmem:[#allocation2 + $0x4] sm:$0xf] 0
      %384 = vst [vmem:[#allocation2 + $0x8] sm:$0x1] 0
      %s385 = scalar_lea.vmem [#allocation2], 204
      %386 = vst [vmem:[%s385] sm:$0xf] 0
      %387 = vst [vmem:[%s385 + $0x4] sm:$0xf] 0
      %388 = vst [vmem:[%s385 + $0x8] sm:$0x1] 0
      %s389 = scalar_lea.vmem [#allocation2], 12
      %vm390 = vcmask 1040384
      %vm391 = vsmask.f32 256
      %vm392 = vmand %vm390, %vm391
      %v393 = vld [vmem:[%s389] sm:$0x1]
      %v394 = vsel %vm392, 0, %v393
      %395 = vst [vmem:[%s389] sm:$0x1] %v394
      %v396 = vld [vmem:[%s389 + $0xc] sm:$0x1]
      %v397 = vsel %vm392, 0, %v396
      %398 = vst [vmem:[%s389 + $0xc] sm:$0x1] %v397
      %v399 = vld [vmem:[%s389 + $0x18] sm:$0x1]
      %v400 = vsel %vm392, 0, %v399
      %401 = vst [vmem:[%s389 + $0x18] sm:$0x1] %v400
      %v402 = vld [vmem:[%s389 + $0x24] sm:$0x1]
      %v403 = vsel %vm392, 0, %v402
      %404 = vst [vmem:[%s389 + $0x24] sm:$0x1] %v403
      %v405 = vld [vmem:[%s389 + $0x30] sm:$0x1]
      %v406 = vsel %vm392, 0, %v405
      %407 = vst [vmem:[%s389 + $0x30] sm:$0x1] %v406
      %v408 = vld [vmem:[%s389 + $0x3c] sm:$0x1]
      %v409 = vsel %vm392, 0, %v408
      %410 = vst [vmem:[%s389 + $0x3c] sm:$0x1] %v409
      %v411 = vld [vmem:[%s389 + $0x48] sm:$0x1]
      %v412 = vsel %vm392, 0, %v411
      %413 = vst [vmem:[%s389 + $0x48] sm:$0x1] %v412
      %v414 = vld [vmem:[%s389 + $0x54] sm:$0x1]
      %v415 = vsel %vm392, 0, %v414
      %416 = vst [vmem:[%s389 + $0x54] sm:$0x1] %v415
      %v417 = vld [vmem:[%s389 + $0x60] sm:$0x1]
      %v418 = vsel %vm392, 0, %v417
      %419 = vst [vmem:[%s389 + $0x60] sm:$0x1] %v418
      %v420 = vld [vmem:[%s389 + $0x6c] sm:$0x1]
      %v421 = vsel %vm392, 0, %v420
      %422 = vst [vmem:[%s389 + $0x6c] sm:$0x1] %v421
      %v423 = vld [vmem:[%s389 + $0x78] sm:$0x1]
      %v424 = vsel %vm392, 0, %v423
      %425 = vst [vmem:[%s389 + $0x78] sm:$0x1] %v424
      %v426 = vld [vmem:[%s389 + $0x84] sm:$0x1]
      %v427 = vsel %vm392, 0, %v426
      %428 = vst [vmem:[%s389 + $0x84] sm:$0x1] %v427
      %v429 = vld [vmem:[%s389 + $0x90] sm:$0x1]
      %v430 = vsel %vm392, 0, %v429
      %431 = vst [vmem:[%s389 + $0x90] sm:$0x1] %v430
      %v432 = vld [vmem:[%s389 + $0x9c] sm:$0x1]
      %v433 = vsel %vm392, 0, %v432
      %434 = vst [vmem:[%s389 + $0x9c] sm:$0x1] %v433
      %v435 = vld [vmem:[%s389 + $0xa8] sm:$0x1]
      %v436 = vsel %vm392, 0, %v435
      %437 = vst [vmem:[%s389 + $0xa8] sm:$0x1] %v436
      %v438 = vld [vmem:[%s389 + $0xb4] sm:$0x1]
      %v439 = vsel %vm392, 0, %v438
      %440 = vst [vmem:[%s389 + $0xb4] sm:$0x1] %v439
      %vm441 = vsmask.f32 7938
      %vm442 = vmand %vm390, %vm441
      %v443 = vld [vmem:[%s389 + $0x8] sm:$0x1]
      %v444 = vsel %vm442, 0, %v443
      %445 = vst [vmem:[%s389 + $0x8] sm:$0x1] %v444
      %v446 = vld [vmem:[%s389 + $0x14] sm:$0x1]
      %v447 = vsel %vm442, 0, %v446
      %448 = vst [vmem:[%s389 + $0x14] sm:$0x1] %v447
      %v449 = vld [vmem:[%s389 + $0x20] sm:$0x1]
      %v450 = vsel %vm442, 0, %v449
      %451 = vst [vmem:[%s389 + $0x20] sm:$0x1] %v450
      %v452 = vld [vmem:[%s389 + $0x2c] sm:$0x1]
      %v453 = vsel %vm442, 0, %v452
      %454 = vst [vmem:[%s389 + $0x2c] sm:$0x1] %v453
      %v455 = vld [vmem:[%s389 + $0x38] sm:$0x1]
      %v456 = vsel %vm442, 0, %v455
      %457 = vst [vmem:[%s389 + $0x38] sm:$0x1] %v456
      %v458 = vld [vmem:[%s389 + $0x44] sm:$0x1]
      %v459 = vsel %vm442, 0, %v458
      %460 = vst [vmem:[%s389 + $0x44] sm:$0x1] %v459
      %v461 = vld [vmem:[%s389 + $0x50] sm:$0x1]
      %v462 = vsel %vm442, 0, %v461
      %463 = vst [vmem:[%s389 + $0x50] sm:$0x1] %v462
      %v464 = vld [vmem:[%s389 + $0x5c] sm:$0x1]
      %v465 = vsel %vm442, 0, %v464
      %466 = vst [vmem:[%s389 + $0x5c] sm:$0x1] %v465
      %v467 = vld [vmem:[%s389 + $0x68] sm:$0x1]
      %v468 = vsel %vm442, 0, %v467
      %469 = vst [vmem:[%s389 + $0x68] sm:$0x1] %v468
      %v470 = vld [vmem:[%s389 + $0x74] sm:$0x1]
      %v471 = vsel %vm442, 0, %v470
      %472 = vst [vmem:[%s389 + $0x74] sm:$0x1] %v471
      %v473 = vld [vmem:[%s389 + $0x80] sm:$0x1]
      %v474 = vsel %vm442, 0, %v473
      %475 = vst [vmem:[%s389 + $0x80] sm:$0x1] %v474
      %v476 = vld [vmem:[%s389 + $0x8c] sm:$0x1]
      %v477 = vsel %vm442, 0, %v476
      %478 = vst [vmem:[%s389 + $0x8c] sm:$0x1] %v477
      %v479 = vld [vmem:[%s389 + $0x98] sm:$0x1]
      %v480 = vsel %vm442, 0, %v479
      %481 = vst [vmem:[%s389 + $0x98] sm:$0x1] %v480
      %v482 = vld [vmem:[%s389 + $0xa4] sm:$0x1]
      %v483 = vsel %vm442, 0, %v482
      %484 = vst [vmem:[%s389 + $0xa4] sm:$0x1] %v483
      %v485 = vld [vmem:[%s389 + $0xb0] sm:$0x1]
      %v486 = vsel %vm442, 0, %v485
      %487 = vst [vmem:[%s389 + $0xb0] sm:$0x1] %v486
      %v488 = vld [vmem:[%s389 + $0xbc] sm:$0x1]
      %v489 = vsel %vm442, 0, %v488
      %490 = vst [vmem:[%s389 + $0xbc] sm:$0x1] %v489
      %v491 = vpack.c.bf16 %v351, %v350
      %v492 = vpack.c.bf16 %v353, %v352
      %v493 = vpack.c.bf16 %v355, %v354
      %v494 = vpack.c.bf16 %v357, %v356
      %v495 = vpack.c.bf16 %v359, %v358
      %v496 = vpack.c.bf16 %v361, %v360
      %v497 = vpack.c.bf16 %v363, %v362
      %v498 = vpack.c.bf16 %v365, %v364
      %v499 = vpack.c.bf16 %v367, %v366
      %v500 = vpack.c.bf16 %v369, %v368
      %v501 = vpack.c.bf16 %v371, %v370
      %v502 = vpack.c.bf16 %v373, %v372
      %v503 = vpack.c.bf16 %v375, %v374
      %v504 = vpack.c.bf16 %v377, %v376
      %v505 = vpack.c.bf16 %v379, %v378
      %v506 = vpack.c.bf16 %v381, %v380
      %v523 = vunpack.c.l.b16 %v491
      %v524 = vunpack.c.h.b16 %v491
      %v525 = vunpack.c.l.b16 %v492
      %v526 = vunpack.c.h.b16 %v492
      %v527 = vunpack.c.l.b16 %v493
      %v528 = vunpack.c.h.b16 %v493
      %v529 = vunpack.c.l.b16 %v494
      %v530 = vunpack.c.h.b16 %v494
      %v531 = vunpack.c.l.b16 %v495
      %v532 = vunpack.c.h.b16 %v495
      %v533 = vunpack.c.l.b16 %v496
      %v534 = vunpack.c.h.b16 %v496
      %v535 = vunpack.c.l.b16 %v497
      %v536 = vunpack.c.h.b16 %v497
      %v537 = vunpack.c.l.b16 %v498
      %v538 = vunpack.c.h.b16 %v498
      %v539 = vunpack.c.l.b16 %v499
      %v540 = vunpack.c.h.b16 %v499
      %v541 = vunpack.c.l.b16 %v500
      %v542 = vunpack.c.h.b16 %v500
      %v543 = vunpack.c.l.b16 %v501
      %v544 = vunpack.c.h.b16 %v501
      %v545 = vunpack.c.l.b16 %v502
      %v546 = vunpack.c.h.b16 %v502
      %v547 = vunpack.c.l.b16 %v503
      %v548 = vunpack.c.h.b16 %v503
      %v549 = vunpack.c.l.b16 %v504
      %v550 = vunpack.c.h.b16 %v504
      %v551 = vunpack.c.l.b16 %v505
      %v552 = vunpack.c.h.b16 %v505
      %v553 = vunpack.c.l.b16 %v506
      %v554 = vunpack.c.h.b16 %v506
      %v555 = vpack.c.b16 %v523, %v523
      %v556 = vpack.c.b16 %v524, %v524
      %v557 = vpack.c.b16 %v525, %v525
      %v558 = vpack.c.b16 %v526, %v526
      %v559 = vpack.c.b16 %v527, %v527
      %v560 = vpack.c.b16 %v528, %v528
      %v561 = vpack.c.b16 %v529, %v529
      %v562 = vpack.c.b16 %v530, %v530
      %v563 = vpack.c.b16 %v531, %v531
      %v564 = vpack.c.b16 %v532, %v532
      %v565 = vpack.c.b16 %v533, %v533
      %v566 = vpack.c.b16 %v534, %v534
      %v567 = vpack.c.b16 %v535, %v535
      %v568 = vpack.c.b16 %v536, %v536
      %v569 = vpack.c.b16 %v537, %v537
      %v570 = vpack.c.b16 %v538, %v538
      %v571 = vpack.c.b16 %v539, %v539
      %v572 = vpack.c.b16 %v540, %v540
      %v573 = vpack.c.b16 %v541, %v541
      %v574 = vpack.c.b16 %v542, %v542
      %v575 = vpack.c.b16 %v543, %v543
      %v576 = vpack.c.b16 %v544, %v544
      %v577 = vpack.c.b16 %v545, %v545
      %v578 = vpack.c.b16 %v546, %v546
      %v579 = vpack.c.b16 %v547, %v547
      %v580 = vpack.c.b16 %v548, %v548
      %v581 = vpack.c.b16 %v549, %v549
      %v582 = vpack.c.b16 %v550, %v550
      %v583 = vpack.c.b16 %v551, %v551
      %v584 = vpack.c.b16 %v552, %v552
      %v585 = vpack.c.b16 %v553, %v553
      %v586 = vpack.c.b16 %v554, %v554
      %vm587 = vsmask.f32 4368
      %vm588 = vmor %vm391, %vm587
      %v590 = vshrl.u32 %v555, 16
      %v592 = vrot.slane %v590, 7
      %v593 = vshll.u32 %v555, 16
      %v595 = vor.u32 %v592, %v593
      %v596 = vrot.slane %v592, 4
      %v598 = vshrl.u32 %v556, 16
      %v600 = vrot.slane %v598, 7
      %v601 = vshll.u32 %v556, 16
      %v603 = vor.u32 %v600, %v601
      %v604 = vsel %vm588, %v596, %v603
      %v605 = vrot.slane %v600, 4
      %v607 = vshrl.u32 %v557, 16
      %v609 = vrot.slane %v607, 7
      %v610 = vshll.u32 %v557, 16
      %v612 = vor.u32 %v609, %v610
      %v613 = vrot.slane %v609, 4
      %v615 = vshrl.u32 %v558, 16
      %v617 = vrot.slane %v615, 7
      %v618 = vshll.u32 %v558, 16
      %v620 = vor.u32 %v617, %v618
      %v621 = vsel %vm588, %v613, %v620
      %v622 = vrot.slane %v617, 4
      %v624 = vshrl.u32 %v559, 16
      %v626 = vrot.slane %v624, 7
      %v627 = vshll.u32 %v559, 16
      %v629 = vor.u32 %v626, %v627
      %v630 = vrot.slane %v626, 4
      %v632 = vshrl.u32 %v560, 16
      %v634 = vrot.slane %v632, 7
      %v635 = vshll.u32 %v560, 16
      %v637 = vor.u32 %v634, %v635
      %v638 = vsel %vm588, %v630, %v637
      %v639 = vrot.slane %v634, 4
      %v641 = vshrl.u32 %v561, 16
      %v643 = vrot.slane %v641, 7
      %v644 = vshll.u32 %v561, 16
      %v646 = vor.u32 %v643, %v644
      %v647 = vrot.slane %v643, 4
      %v649 = vshrl.u32 %v562, 16
      %v651 = vrot.slane %v649, 7
      %v652 = vshll.u32 %v562, 16
      %v654 = vor.u32 %v651, %v652
      %v655 = vsel %vm588, %v647, %v654
      %v656 = vrot.slane %v651, 4
      %v658 = vshrl.u32 %v563, 16
      %v660 = vrot.slane %v658, 7
      %v661 = vshll.u32 %v563, 16
      %v663 = vor.u32 %v660, %v661
      %v664 = vrot.slane %v660, 4
      %v666 = vshrl.u32 %v564, 16
      %v668 = vrot.slane %v666, 7
      %v669 = vshll.u32 %v564, 16
      %v671 = vor.u32 %v668, %v669
      %v672 = vsel %vm588, %v664, %v671
      %v673 = vrot.slane %v668, 4
      %v675 = vshrl.u32 %v565, 16
      %v677 = vrot.slane %v675, 7
      %v678 = vshll.u32 %v565, 16
      %v680 = vor.u32 %v677, %v678
      %v681 = vrot.slane %v677, 4
      %v683 = vshrl.u32 %v566, 16
      %v685 = vrot.slane %v683, 7
      %v686 = vshll.u32 %v566, 16
      %v688 = vor.u32 %v685, %v686
      %v689 = vsel %vm588, %v681, %v688
      %v690 = vrot.slane %v685, 4
      %v692 = vshrl.u32 %v567, 16
      %v694 = vrot.slane %v692, 7
      %v695 = vshll.u32 %v567, 16
      %v697 = vor.u32 %v694, %v695
      %v698 = vrot.slane %v694, 4
      %v700 = vshrl.u32 %v568, 16
      %v702 = vrot.slane %v700, 7
      %v703 = vshll.u32 %v568, 16
      %v705 = vor.u32 %v702, %v703
      %v706 = vsel %vm588, %v698, %v705
      %v707 = vrot.slane %v702, 4
      %v709 = vshrl.u32 %v569, 16
      %v711 = vrot.slane %v709, 7
      %v712 = vshll.u32 %v569, 16
      %v714 = vor.u32 %v711, %v712
      %v715 = vrot.slane %v711, 4
      %v717 = vshrl.u32 %v570, 16
      %v719 = vrot.slane %v717, 7
      %v720 = vshll.u32 %v570, 16
      %v722 = vor.u32 %v719, %v720
      %v723 = vsel %vm588, %v715, %v722
      %v724 = vrot.slane %v719, 4
      %v726 = vshrl.u32 %v571, 16
      %v728 = vrot.slane %v726, 7
      %v729 = vshll.u32 %v571, 16
      %v731 = vor.u32 %v728, %v729
      %v732 = vrot.slane %v728, 4
      %v734 = vshrl.u32 %v572, 16
      %v736 = vrot.slane %v734, 7
      %v737 = vshll.u32 %v572, 16
      %v739 = vor.u32 %v736, %v737
      %v740 = vsel %vm588, %v732, %v739
      %v741 = vrot.slane %v736, 4
      %v743 = vshrl.u32 %v573, 16
      %v745 = vrot.slane %v743, 7
      %v746 = vshll.u32 %v573, 16
      %v748 = vor.u32 %v745, %v746
      %v749 = vrot.slane %v745, 4
      %v751 = vshrl.u32 %v574, 16
      %v753 = vrot.slane %v751, 7
      %v754 = vshll.u32 %v574, 16
      %v756 = vor.u32 %v753, %v754
      %v757 = vsel %vm588, %v749, %v756
      %v758 = vrot.slane %v753, 4
      %v760 = vshrl.u32 %v575, 16
      %v762 = vrot.slane %v760, 7
      %v763 = vshll.u32 %v575, 16
      %v765 = vor.u32 %v762, %v763
      %v766 = vrot.slane %v762, 4
      %v768 = vshrl.u32 %v576, 16
      %v770 = vrot.slane %v768, 7
      %v771 = vshll.u32 %v576, 16
      %v773 = vor.u32 %v770, %v771
      %v774 = vsel %vm588, %v766, %v773
      %v775 = vrot.slane %v770, 4
      %v777 = vshrl.u32 %v577, 16
      %v779 = vrot.slane %v777, 7
      %v780 = vshll.u32 %v577, 16
      %v782 = vor.u32 %v779, %v780
      %v783 = vrot.slane %v779, 4
      %v785 = vshrl.u32 %v578, 16
      %v787 = vrot.slane %v785, 7
      %v788 = vshll.u32 %v578, 16
      %v790 = vor.u32 %v787, %v788
      %v791 = vsel %vm588, %v783, %v790
      %v792 = vrot.slane %v787, 4
      %v794 = vshrl.u32 %v579, 16
      %v796 = vrot.slane %v794, 7
      %v797 = vshll.u32 %v579, 16
      %v799 = vor.u32 %v796, %v797
      %v800 = vrot.slane %v796, 4
      %v802 = vshrl.u32 %v580, 16
      %v804 = vrot.slane %v802, 7
      %v805 = vshll.u32 %v580, 16
      %v807 = vor.u32 %v804, %v805
      %v808 = vsel %vm588, %v800, %v807
      %v809 = vrot.slane %v804, 4
      %v811 = vshrl.u32 %v581, 16
      %v813 = vrot.slane %v811, 7
      %v814 = vshll.u32 %v581, 16
      %v816 = vor.u32 %v813, %v814
      %v817 = vrot.slane %v813, 4
      %v819 = vshrl.u32 %v582, 16
      %v821 = vrot.slane %v819, 7
      %v822 = vshll.u32 %v582, 16
      %v824 = vor.u32 %v821, %v822
      %v825 = vsel %vm588, %v817, %v824
      %v826 = vrot.slane %v821, 4
      %v828 = vshrl.u32 %v583, 16
      %v830 = vrot.slane %v828, 7
      %v831 = vshll.u32 %v583, 16
      %v833 = vor.u32 %v830, %v831
      %v834 = vrot.slane %v830, 4
      %v836 = vshrl.u32 %v584, 16
      %v838 = vrot.slane %v836, 7
      %v839 = vshll.u32 %v584, 16
      %v841 = vor.u32 %v838, %v839
      %v842 = vsel %vm588, %v834, %v841
      %v843 = vrot.slane %v838, 4
      %v845 = vshrl.u32 %v585, 16
      %v847 = vrot.slane %v845, 7
      %v848 = vshll.u32 %v585, 16
      %v850 = vor.u32 %v847, %v848
      %v851 = vrot.slane %v847, 4
      %v853 = vshrl.u32 %v586, 16
      %v855 = vrot.slane %v853, 7
      %v856 = vshll.u32 %v586, 16
      %v858 = vor.u32 %v855, %v856
      %v859 = vsel %vm588, %v851, %v858
      %v860 = vrot.slane %v855, 4
      %vm909 = vcmask 1043456
      %vm910 = vmand %vm909, %vm441
      %v911 = vld [vmem:[%s389] sm:$0xf]
      %v912 = vsel %vm910, %v595, %v911
      %913 = vst [vmem:[%s389] sm:$0xf] %v912
      %914 = vst [vmem:[%s389 + $0x4] sm:$0xf] %v604
      %v915 = vld [vmem:[%s389 + $0x8] sm:$0x1]
      %v916 = vsel %vm392, %v605, %v915
      %917 = vst [vmem:[%s389 + $0x8] sm:$0x1] %v916
      %v918 = vld [vmem:[%s389 + $0xc] sm:$0xf]
      %v919 = vsel %vm910, %v612, %v918
      %920 = vst [vmem:[%s389 + $0xc] sm:$0xf] %v919
      %921 = vst [vmem:[%s389 + $0x10] sm:$0xf] %v621
      %v922 = vld [vmem:[%s389 + $0x14] sm:$0x1]
      %v923 = vsel %vm392, %v622, %v922
      %924 = vst [vmem:[%s389 + $0x14] sm:$0x1] %v923
      %v925 = vld [vmem:[%s389 + $0x18] sm:$0xf]
      %v926 = vsel %vm910, %v629, %v925
      %927 = vst [vmem:[%s389 + $0x18] sm:$0xf] %v926
      %928 = vst [vmem:[%s389 + $0x1c] sm:$0xf] %v638
      %v929 = vld [vmem:[%s389 + $0x20] sm:$0x1]
      %v930 = vsel %vm392, %v639, %v929
      %931 = vst [vmem:[%s389 + $0x20] sm:$0x1] %v930
      %v932 = vld [vmem:[%s389 + $0x24] sm:$0xf]
      %v933 = vsel %vm910, %v646, %v932
      %934 = vst [vmem:[%s389 + $0x24] sm:$0xf] %v933
      %935 = vst [vmem:[%s389 + $0x28] sm:$0xf] %v655
      %v936 = vld [vmem:[%s389 + $0x2c] sm:$0x1]
      %v937 = vsel %vm392, %v656, %v936
      %938 = vst [vmem:[%s389 + $0x2c] sm:$0x1] %v937
      %v939 = vld [vmem:[%s389 + $0x30] sm:$0xf]
      %v940 = vsel %vm910, %v663, %v939
      %941 = vst [vmem:[%s389 + $0x30] sm:$0xf] %v940
      %942 = vst [vmem:[%s389 + $0x34] sm:$0xf] %v672
      %v943 = vld [vmem:[%s389 + $0x38] sm:$0x1]
      %v944 = vsel %vm392, %v673, %v943
      %945 = vst [vmem:[%s389 + $0x38] sm:$0x1] %v944
      %v946 = vld [vmem:[%s389 + $0x3c] sm:$0xf]
      %v947 = vsel %vm910, %v680, %v946
      %948 = vst [vmem:[%s389 + $0x3c] sm:$0xf] %v947
      %949 = vst [vmem:[%s389 + $0x40] sm:$0xf] %v689
      %v950 = vld [vmem:[%s389 + $0x44] sm:$0x1]
      %v951 = vsel %vm392, %v690, %v950
      %952 = vst [vmem:[%s389 + $0x44] sm:$0x1] %v951
      %v953 = vld [vmem:[%s389 + $0x48] sm:$0xf]
      %v954 = vsel %vm910, %v697, %v953
      %955 = vst [vmem:[%s389 + $0x48] sm:$0xf] %v954
      %956 = vst [vmem:[%s389 + $0x4c] sm:$0xf] %v706
      %v957 = vld [vmem:[%s389 + $0x50] sm:$0x1]
      %v958 = vsel %vm392, %v707, %v957
      %959 = vst [vmem:[%s389 + $0x50] sm:$0x1] %v958
      %v960 = vld [vmem:[%s389 + $0x54] sm:$0xf]
      %v961 = vsel %vm910, %v714, %v960
      %962 = vst [vmem:[%s389 + $0x54] sm:$0xf] %v961
      %963 = vst [vmem:[%s389 + $0x58] sm:$0xf] %v723
      %v964 = vld [vmem:[%s389 + $0x5c] sm:$0x1]
      %v965 = vsel %vm392, %v724, %v964
      %966 = vst [vmem:[%s389 + $0x5c] sm:$0x1] %v965
      %v967 = vld [vmem:[%s389 + $0x60] sm:$0xf]
      %v968 = vsel %vm910, %v731, %v967
      %969 = vst [vmem:[%s389 + $0x60] sm:$0xf] %v968
      %970 = vst [vmem:[%s389 + $0x64] sm:$0xf] %v740
      %v971 = vld [vmem:[%s389 + $0x68] sm:$0x1]
      %v972 = vsel %vm392, %v741, %v971
      %973 = vst [vmem:[%s389 + $0x68] sm:$0x1] %v972
      %v974 = vld [vmem:[%s389 + $0x6c] sm:$0xf]
      %v975 = vsel %vm910, %v748, %v974
      %976 = vst [vmem:[%s389 + $0x6c] sm:$0xf] %v975
      %977 = vst [vmem:[%s389 + $0x70] sm:$0xf] %v757
      %v978 = vld [vmem:[%s389 + $0x74] sm:$0x1]
      %v979 = vsel %vm392, %v758, %v978
      %980 = vst [vmem:[%s389 + $0x74] sm:$0x1] %v979
      %v981 = vld [vmem:[%s389 + $0x78] sm:$0xf]
      %v982 = vsel %vm910, %v765, %v981
      %983 = vst [vmem:[%s389 + $0x78] sm:$0xf] %v982
      %984 = vst [vmem:[%s389 + $0x7c] sm:$0xf] %v774
      %v985 = vld [vmem:[%s389 + $0x80] sm:$0x1]
      %v986 = vsel %vm392, %v775, %v985
      %987 = vst [vmem:[%s389 + $0x80] sm:$0x1] %v986
      %v988 = vld [vmem:[%s389 + $0x84] sm:$0xf]
      %v989 = vsel %vm910, %v782, %v988
      %990 = vst [vmem:[%s389 + $0x84] sm:$0xf] %v989
      %991 = vst [vmem:[%s389 + $0x88] sm:$0xf] %v791
      %v992 = vld [vmem:[%s389 + $0x8c] sm:$0x1]
      %v993 = vsel %vm392, %v792, %v992
      %994 = vst [vmem:[%s389 + $0x8c] sm:$0x1] %v993
      %v995 = vld [vmem:[%s389 + $0x90] sm:$0xf]
      %v996 = vsel %vm910, %v799, %v995
      %997 = vst [vmem:[%s389 + $0x90] sm:$0xf] %v996
      %998 = vst [vmem:[%s389 + $0x94] sm:$0xf] %v808
      %v999 = vld [vmem:[%s389 + $0x98] sm:$0x1]
      %v1000 = vsel %vm392, %v809, %v999
      %1001 = vst [vmem:[%s389 + $0x98] sm:$0x1] %v1000
      %v1002 = vld [vmem:[%s389 + $0x9c] sm:$0xf]
      %v1003 = vsel %vm910, %v816, %v1002
      %1004 = vst [vmem:[%s389 + $0x9c] sm:$0xf] %v1003
      %1005 = vst [vmem:[%s389 + $0xa0] sm:$0xf] %v825
      %v1006 = vld [vmem:[%s389 + $0xa4] sm:$0x1]
      %v1007 = vsel %vm392, %v826, %v1006
      %1008 = vst [vmem:[%s389 + $0xa4] sm:$0x1] %v1007
      %v1009 = vld [vmem:[%s389 + $0xa8] sm:$0xf]
      %v1010 = vsel %vm910, %v833, %v1009
      %1011 = vst [vmem:[%s389 + $0xa8] sm:$0xf] %v1010
      %1012 = vst [vmem:[%s389 + $0xac] sm:$0xf] %v842
      %v1013 = vld [vmem:[%s389 + $0xb0] sm:$0x1]
      %v1014 = vsel %vm392, %v843, %v1013
      %1015 = vst [vmem:[%s389 + $0xb0] sm:$0x1] %v1014
      %v1016 = vld [vmem:[%s389 + $0xb4] sm:$0xf]
      %v1017 = vsel %vm910, %v850, %v1016
      %1018 = vst [vmem:[%s389 + $0xb4] sm:$0xf] %v1017
      %1019 = vst [vmem:[%s389 + $0xb8] sm:$0xf] %v859
      %v1020 = vld [vmem:[%s389 + $0xbc] sm:$0x1]
      %v1021 = vsel %vm392, %v860, %v1020
      %1022 = vst [vmem:[%s389 + $0xbc] sm:$0x1] %v1021
      %v1023 = vld [vmem:[#allocation2] sm:$0xf]
      %v1024 = vld [vmem:[#allocation2 + $0x4] sm:$0xf]
      %v1025 = vld [vmem:[#allocation2 + $0xc] sm:$0xf]
      %v1026 = vld [vmem:[#allocation2 + $0x10] sm:$0xf]
      %v1027 = vld [vmem:[#allocation2 + $0x18] sm:$0xf]
      %v1028 = vld [vmem:[#allocation2 + $0x1c] sm:$0xf]
      %v1029 = vld [vmem:[#allocation2 + $0x24] sm:$0xf]
      %v1030 = vld [vmem:[#allocation2 + $0x28] sm:$0xf]
      %v1031 = vld [vmem:[#allocation2 + $0x30] sm:$0xf]
      %v1032 = vld [vmem:[#allocation2 + $0x34] sm:$0xf]
      %v1033 = vld [vmem:[#allocation2 + $0x3c] sm:$0xf]
      %v1034 = vld [vmem:[#allocation2 + $0x40] sm:$0xf]
      %v1035 = vld [vmem:[#allocation2 + $0x48] sm:$0xf]
      %v1036 = vld [vmem:[#allocation2 + $0x4c] sm:$0xf]
      %v1037 = vld [vmem:[#allocation2 + $0x54] sm:$0xf]
      %v1038 = vld [vmem:[#allocation2 + $0x58] sm:$0xf]
      %v1039 = vld [vmem:[#allocation2 + $0x60] sm:$0xf]
      %v1040 = vld [vmem:[#allocation2 + $0x64] sm:$0xf]
      %v1041 = vld [vmem:[#allocation2 + $0x6c] sm:$0xf]
      %v1042 = vld [vmem:[#allocation2 + $0x70] sm:$0xf]
      %v1043 = vld [vmem:[#allocation2 + $0x78] sm:$0xf]
      %v1044 = vld [vmem:[#allocation2 + $0x7c] sm:$0xf]
      %v1045 = vld [vmem:[#allocation2 + $0x84] sm:$0xf]
      %v1046 = vld [vmem:[#allocation2 + $0x88] sm:$0xf]
      %v1047 = vld [vmem:[#allocation2 + $0x90] sm:$0xf]
      %v1048 = vld [vmem:[#allocation2 + $0x94] sm:$0xf]
      %v1049 = vld [vmem:[#allocation2 + $0x9c] sm:$0xf]
      %v1050 = vld [vmem:[#allocation2 + $0xa0] sm:$0xf]
      %v1051 = vld [vmem:[#allocation2 + $0xa8] sm:$0xf]
      %v1052 = vld [vmem:[#allocation2 + $0xac] sm:$0xf]
      %v1053 = vld [vmem:[#allocation2 + $0xb4] sm:$0xf]
      %v1054 = vld [vmem:[#allocation2 + $0xb8] sm:$0xf]
      %v1055 = vld [vmem:[%s3] sm:$0xf]
      %v1056 = vld [vmem:[%s3 + $0x4] sm:$0xf]
      %v1057 = vld [vmem:[%s3 + $0x8] sm:$0xf]
      %v1058 = vld [vmem:[%s3 + $0xc] sm:$0xf]
      %v1059 = vld [vmem:[%s3 + $0x10] sm:$0xf]
      %v1060 = vld [vmem:[%s3 + $0x14] sm:$0xf]
      %v1061 = vld [vmem:[%s3 + $0x18] sm:$0xf]
      %v1062 = vld [vmem:[%s3 + $0x1c] sm:$0xf]
      %v1063 = vld [vmem:[%s3 + $0x20] sm:$0xf]
      %v1064 = vld [vmem:[%s3 + $0x24] sm:$0xf]
      %v1065 = vld [vmem:[%s3 + $0x28] sm:$0xf]
      %v1066 = vld [vmem:[%s3 + $0x2c] sm:$0xf]
      %v1067 = vld [vmem:[%s3 + $0x30] sm:$0xf]
      %v1068 = vld [vmem:[%s3 + $0x34] sm:$0xf]
      %v1069 = vld [vmem:[%s3 + $0x38] sm:$0xf]
      %v1070 = vld [vmem:[%s3 + $0x3c] sm:$0xf]
      %v1071 = vld [vmem:[#allocation2 + $0x8] sm:$0x1]
      %v1072 = vld [vmem:[#allocation2 + $0x14] sm:$0x1]
      %v1073 = vld [vmem:[#allocation2 + $0x20] sm:$0x1]
      %v1074 = vld [vmem:[#allocation2 + $0x2c] sm:$0x1]
      %v1075 = vld [vmem:[#allocation2 + $0x38] sm:$0x1]
      %v1076 = vld [vmem:[#allocation2 + $0x44] sm:$0x1]
      %v1077 = vld [vmem:[#allocation2 + $0x50] sm:$0x1]
      %v1078 = vld [vmem:[#allocation2 + $0x5c] sm:$0x1]
      %v1079 = vld [vmem:[#allocation2 + $0x68] sm:$0x1]
      %v1080 = vld [vmem:[#allocation2 + $0x74] sm:$0x1]
      %v1081 = vld [vmem:[#allocation2 + $0x80] sm:$0x1]
      %v1082 = vld [vmem:[#allocation2 + $0x8c] sm:$0x1]
      %v1083 = vld [vmem:[#allocation2 + $0x98] sm:$0x1]
      %v1084 = vld [vmem:[#allocation2 + $0xa4] sm:$0x1]
      %v1085 = vld [vmem:[#allocation2 + $0xb0] sm:$0x1]
      %v1086 = vld [vmem:[#allocation2 + $0xbc] sm:$0x1]
      %vm1087 = vsmask.f32 3328
      %vm1088 = vsmask.f32 7440
      %vm1089 = vmor %vm1087, %vm1088
      %v1091 = vshrl.u32 %v1023, 16
      %v1093 = vrot.slane %v1091, 4
      %v1094 = vshll.u32 %v1023, 16
      %v1096 = vrot.slane %v1094, 5
      %v1097 = vor.u32 %v1093, %v1096
      %v1098 = vrot.slane %v1097, 4
      %v1100 = vshll.u32 %v1024, 16
      %v1102 = vrot.slane %v1100, 5
      %v1103 = vsel %vm1089, %v1098, %v1102
      %v1104 = vshrl.u32 %v1024, 16
      %v1106 = vrot.slane %v1104, 4
      %v1107 = vor.u32 %v1106, %v1102
      %v1108 = vrot.slane %v1107, 4
      %v1110 = vshll.u32 %v1071, 16
      %v1112 = vrot.slane %v1110, 5
      %v1113 = vsel %vm1089, %v1108, %v1112
      %v1115 = vshrl.u32 %v1025, 16
      %v1117 = vrot.slane %v1115, 4
      %v1118 = vshll.u32 %v1025, 16
      %v1120 = vrot.slane %v1118, 5
      %v1121 = vor.u32 %v1117, %v1120
      %v1122 = vrot.slane %v1121, 4
      %v1124 = vshll.u32 %v1026, 16
      %v1126 = vrot.slane %v1124, 5
      %v1127 = vsel %vm1089, %v1122, %v1126
      %v1128 = vshrl.u32 %v1026, 16
      %v1130 = vrot.slane %v1128, 4
      %v1131 = vor.u32 %v1130, %v1126
      %v1132 = vrot.slane %v1131, 4
      %v1134 = vshll.u32 %v1072, 16
      %v1136 = vrot.slane %v1134, 5
      %v1137 = vsel %vm1089, %v1132, %v1136
      %v1139 = vshrl.u32 %v1027, 16
      %v1141 = vrot.slane %v1139, 4
      %v1142 = vshll.u32 %v1027, 16
      %v1144 = vrot.slane %v1142, 5
      %v1145 = vor.u32 %v1141, %v1144
      %v1146 = vrot.slane %v1145, 4
      %v1148 = vshll.u32 %v1028, 16
      %v1150 = vrot.slane %v1148, 5
      %v1151 = vsel %vm1089, %v1146, %v1150
      %v1152 = vshrl.u32 %v1028, 16
      %v1154 = vrot.slane %v1152, 4
      %v1155 = vor.u32 %v1154, %v1150
      %v1156 = vrot.slane %v1155, 4
      %v1158 = vshll.u32 %v1073, 16
      %v1160 = vrot.slane %v1158, 5
      %v1161 = vsel %vm1089, %v1156, %v1160
      %v1163 = vshrl.u32 %v1029, 16
      %v1165 = vrot.slane %v1163, 4
      %v1166 = vshll.u32 %v1029, 16
      %v1168 = vrot.slane %v1166, 5
      %v1169 = vor.u32 %v1165, %v1168
      %v1170 = vrot.slane %v1169, 4
      %v1172 = vshll.u32 %v1030, 16
      %v1174 = vrot.slane %v1172, 5
      %v1175 = vsel %vm1089, %v1170, %v1174
      %v1176 = vshrl.u32 %v1030, 16
      %v1178 = vrot.slane %v1176, 4
      %v1179 = vor.u32 %v1178, %v1174
      %v1180 = vrot.slane %v1179, 4
      %v1182 = vshll.u32 %v1074, 16
      %v1184 = vrot.slane %v1182, 5
      %v1185 = vsel %vm1089, %v1180, %v1184
      %v1187 = vshrl.u32 %v1031, 16
      %v1189 = vrot.slane %v1187, 4
      %v1190 = vshll.u32 %v1031, 16
      %v1192 = vrot.slane %v1190, 5
      %v1193 = vor.u32 %v1189, %v1192
      %v1194 = vrot.slane %v1193, 4
      %v1196 = vshll.u32 %v1032, 16
      %v1198 = vrot.slane %v1196, 5
      %v1199 = vsel %vm1089, %v1194, %v1198
      %v1200 = vshrl.u32 %v1032, 16
      %v1202 = vrot.slane %v1200, 4
      %v1203 = vor.u32 %v1202, %v1198
      %v1204 = vrot.slane %v1203, 4
      %v1206 = vshll.u32 %v1075, 16
      %v1208 = vrot.slane %v1206, 5
      %v1209 = vsel %vm1089, %v1204, %v1208
      %v1211 = vshrl.u32 %v1033, 16
      %v1213 = vrot.slane %v1211, 4
      %v1214 = vshll.u32 %v1033, 16
      %v1216 = vrot.slane %v1214, 5
      %v1217 = vor.u32 %v1213, %v1216
      %v1218 = vrot.slane %v1217, 4
      %v1220 = vshll.u32 %v1034, 16
      %v1222 = vrot.slane %v1220, 5
      %v1223 = vsel %vm1089, %v1218, %v1222
      %v1224 = vshrl.u32 %v1034, 16
      %v1226 = vrot.slane %v1224, 4
      %v1227 = vor.u32 %v1226, %v1222
      %v1228 = vrot.slane %v1227, 4
      %v1230 = vshll.u32 %v1076, 16
      %v1232 = vrot.slane %v1230, 5
      %v1233 = vsel %vm1089, %v1228, %v1232
      %v1235 = vshrl.u32 %v1035, 16
      %v1237 = vrot.slane %v1235, 4
      %v1238 = vshll.u32 %v1035, 16
      %v1240 = vrot.slane %v1238, 5
      %v1241 = vor.u32 %v1237, %v1240
      %v1242 = vrot.slane %v1241, 4
      %v1244 = vshll.u32 %v1036, 16
      %v1246 = vrot.slane %v1244, 5
      %v1247 = vsel %vm1089, %v1242, %v1246
      %v1248 = vshrl.u32 %v1036, 16
      %v1250 = vrot.slane %v1248, 4
      %v1251 = vor.u32 %v1250, %v1246
      %v1252 = vrot.slane %v1251, 4
      %v1254 = vshll.u32 %v1077, 16
      %v1256 = vrot.slane %v1254, 5
      %v1257 = vsel %vm1089, %v1252, %v1256
      %v1259 = vshrl.u32 %v1037, 16
      %v1261 = vrot.slane %v1259, 4
      %v1262 = vshll.u32 %v1037, 16
      %v1264 = vrot.slane %v1262, 5
      %v1265 = vor.u32 %v1261, %v1264
      %v1266 = vrot.slane %v1265, 4
      %v1268 = vshll.u32 %v1038, 16
      %v1270 = vrot.slane %v1268, 5
      %v1271 = vsel %vm1089, %v1266, %v1270
      %v1272 = vshrl.u32 %v1038, 16
      %v1274 = vrot.slane %v1272, 4
      %v1275 = vor.u32 %v1274, %v1270
      %v1276 = vrot.slane %v1275, 4
      %v1278 = vshll.u32 %v1078, 16
      %v1280 = vrot.slane %v1278, 5
      %v1281 = vsel %vm1089, %v1276, %v1280
      %v1283 = vshrl.u32 %v1039, 16
      %v1285 = vrot.slane %v1283, 4
      %v1286 = vshll.u32 %v1039, 16
      %v1288 = vrot.slane %v1286, 5
      %v1289 = vor.u32 %v1285, %v1288
      %v1290 = vrot.slane %v1289, 4
      %v1292 = vshll.u32 %v1040, 16
      %v1294 = vrot.slane %v1292, 5
      %v1295 = vsel %vm1089, %v1290, %v1294
      %v1296 = vshrl.u32 %v1040, 16
      %v1298 = vrot.slane %v1296, 4
      %v1299 = vor.u32 %v1298, %v1294
      %v1300 = vrot.slane %v1299, 4
      %v1302 = vshll.u32 %v1079, 16
      %v1304 = vrot.slane %v1302, 5
      %v1305 = vsel %vm1089, %v1300, %v1304
      %v1307 = vshrl.u32 %v1041, 16
      %v1309 = vrot.slane %v1307, 4
      %v1310 = vshll.u32 %v1041, 16
      %v1312 = vrot.slane %v1310, 5
      %v1313 = vor.u32 %v1309, %v1312
      %v1314 = vrot.slane %v1313, 4
      %v1316 = vshll.u32 %v1042, 16
      %v1318 = vrot.slane %v1316, 5
      %v1319 = vsel %vm1089, %v1314, %v1318
      %v1320 = vshrl.u32 %v1042, 16
      %v1322 = vrot.slane %v1320, 4
      %v1323 = vor.u32 %v1322, %v1318
      %v1324 = vrot.slane %v1323, 4
      %v1326 = vshll.u32 %v1080, 16
      %v1328 = vrot.slane %v1326, 5
      %v1329 = vsel %vm1089, %v1324, %v1328
      %v1331 = vshrl.u32 %v1043, 16
      %v1333 = vrot.slane %v1331, 4
      %v1334 = vshll.u32 %v1043, 16
      %v1336 = vrot.slane %v1334, 5
      %v1337 = vor.u32 %v1333, %v1336
      %v1338 = vrot.slane %v1337, 4
      %v1340 = vshll.u32 %v1044, 16
      %v1342 = vrot.slane %v1340, 5
      %v1343 = vsel %vm1089, %v1338, %v1342
      %v1344 = vshrl.u32 %v1044, 16
      %v1346 = vrot.slane %v1344, 4
      %v1347 = vor.u32 %v1346, %v1342
      %v1348 = vrot.slane %v1347, 4
      %v1350 = vshll.u32 %v1081, 16
      %v1352 = vrot.slane %v1350, 5
      %v1353 = vsel %vm1089, %v1348, %v1352
      %v1355 = vshrl.u32 %v1045, 16
      %v1357 = vrot.slane %v1355, 4
      %v1358 = vshll.u32 %v1045, 16
      %v1360 = vrot.slane %v1358, 5
      %v1361 = vor.u32 %v1357, %v1360
      %v1362 = vrot.slane %v1361, 4
      %v1364 = vshll.u32 %v1046, 16
      %v1366 = vrot.slane %v1364, 5
      %v1367 = vsel %vm1089, %v1362, %v1366
      %v1368 = vshrl.u32 %v1046, 16
      %v1370 = vrot.slane %v1368, 4
      %v1371 = vor.u32 %v1370, %v1366
      %v1372 = vrot.slane %v1371, 4
      %v1374 = vshll.u32 %v1082, 16
      %v1376 = vrot.slane %v1374, 5
      %v1377 = vsel %vm1089, %v1372, %v1376
      %v1379 = vshrl.u32 %v1047, 16
      %v1381 = vrot.slane %v1379, 4
      %v1382 = vshll.u32 %v1047, 16
      %v1384 = vrot.slane %v1382, 5
      %v1385 = vor.u32 %v1381, %v1384
      %v1386 = vrot.slane %v1385, 4
      %v1388 = vshll.u32 %v1048, 16
      %v1390 = vrot.slane %v1388, 5
      %v1391 = vsel %vm1089, %v1386, %v1390
      %v1392 = vshrl.u32 %v1048, 16
      %v1394 = vrot.slane %v1392, 4
      %v1395 = vor.u32 %v1394, %v1390
      %v1396 = vrot.slane %v1395, 4
      %v1398 = vshll.u32 %v1083, 16
      %v1400 = vrot.slane %v1398, 5
      %v1401 = vsel %vm1089, %v1396, %v1400
      %v1403 = vshrl.u32 %v1049, 16
      %v1405 = vrot.slane %v1403, 4
      %v1406 = vshll.u32 %v1049, 16
      %v1408 = vrot.slane %v1406, 5
      %v1409 = vor.u32 %v1405, %v1408
      %v1410 = vrot.slane %v1409, 4
      %v1412 = vshll.u32 %v1050, 16
      %v1414 = vrot.slane %v1412, 5
      %v1415 = vsel %vm1089, %v1410, %v1414
      %v1416 = vshrl.u32 %v1050, 16
      %v1418 = vrot.slane %v1416, 4
      %v1419 = vor.u32 %v1418, %v1414
      %v1420 = vrot.slane %v1419, 4
      %v1422 = vshll.u32 %v1084, 16
      %v1424 = vrot.slane %v1422, 5
      %v1425 = vsel %vm1089, %v1420, %v1424
      %v1427 = vshrl.u32 %v1051, 16
      %v1429 = vrot.slane %v1427, 4
      %v1430 = vshll.u32 %v1051, 16
      %v1432 = vrot.slane %v1430, 5
      %v1433 = vor.u32 %v1429, %v1432
      %v1434 = vrot.slane %v1433, 4
      %v1436 = vshll.u32 %v1052, 16
      %v1438 = vrot.slane %v1436, 5
      %v1439 = vsel %vm1089, %v1434, %v1438
      %v1440 = vshrl.u32 %v1052, 16
      %v1442 = vrot.slane %v1440, 4
      %v1443 = vor.u32 %v1442, %v1438
      %v1444 = vrot.slane %v1443, 4
      %v1446 = vshll.u32 %v1085, 16
      %v1448 = vrot.slane %v1446, 5
      %v1449 = vsel %vm1089, %v1444, %v1448
      %v1451 = vshrl.u32 %v1053, 16
      %v1453 = vrot.slane %v1451, 4
      %v1454 = vshll.u32 %v1053, 16
      %v1456 = vrot.slane %v1454, 5
      %v1457 = vor.u32 %v1453, %v1456
      %v1458 = vrot.slane %v1457, 4
      %v1460 = vshll.u32 %v1054, 16
      %v1462 = vrot.slane %v1460, 5
      %v1463 = vsel %vm1089, %v1458, %v1462
      %v1464 = vshrl.u32 %v1054, 16
      %v1466 = vrot.slane %v1464, 4
      %v1467 = vor.u32 %v1466, %v1462
      %v1468 = vrot.slane %v1467, 4
      %v1470 = vshll.u32 %v1086, 16
      %v1472 = vrot.slane %v1470, 5
      %v1473 = vsel %vm1089, %v1468, %v1472
      %v1474 = vld [vmem:[%s3 + $0x40] sm:$0xf]
      %v1475 = vld [vmem:[%s3 + $0x44] sm:$0xf]
      %v1476 = vld [vmem:[%s3 + $0x48] sm:$0xf]
      %v1477 = vld [vmem:[%s3 + $0x4c] sm:$0xf]
      %v1478 = vld [vmem:[%s3 + $0x50] sm:$0xf]
      %v1479 = vld [vmem:[%s3 + $0x54] sm:$0xf]
      %v1480 = vld [vmem:[%s3 + $0x58] sm:$0xf]
      %v1481 = vld [vmem:[%s3 + $0x5c] sm:$0xf]
      %v1482 = vld [vmem:[%s3 + $0x60] sm:$0xf]
      %v1483 = vld [vmem:[%s3 + $0x64] sm:$0xf]
      %v1484 = vld [vmem:[%s3 + $0x68] sm:$0xf]
      %v1485 = vld [vmem:[%s3 + $0x6c] sm:$0xf]
      %v1486 = vld [vmem:[%s3 + $0x70] sm:$0xf]
      %v1487 = vld [vmem:[%s3 + $0x74] sm:$0xf]
      %v1488 = vld [vmem:[%s3 + $0x78] sm:$0xf]
      %v1489 = vld [vmem:[%s3 + $0x7c] sm:$0xf]
      %v1490 = vunpack.c.l.b16 %v1103
      %v1491 = vunpack.c.l.b16 %v1113
      %v1492 = vunpack.c.l.b16 %v1127
      %v1493 = vunpack.c.l.b16 %v1137
      %v1494 = vunpack.c.l.b16 %v1151
      %v1495 = vunpack.c.l.b16 %v1161
      %v1496 = vunpack.c.l.b16 %v1175
      %v1497 = vunpack.c.l.b16 %v1185
      %v1498 = vunpack.c.l.b16 %v1199
      %v1499 = vunpack.c.l.b16 %v1209
      %v1500 = vunpack.c.l.b16 %v1223
      %v1501 = vunpack.c.l.b16 %v1233
      %v1502 = vunpack.c.l.b16 %v1247
      %v1503 = vunpack.c.l.b16 %v1257
      %v1504 = vunpack.c.l.b16 %v1271
      %v1505 = vunpack.c.l.b16 %v1281
      %v1506 = vunpack.c.l.b16 %v1295
      %v1507 = vunpack.c.l.b16 %v1305
      %v1508 = vunpack.c.l.b16 %v1319
      %v1509 = vunpack.c.l.b16 %v1329
      %v1510 = vunpack.c.l.b16 %v1343
      %v1511 = vunpack.c.l.b16 %v1353
      %v1512 = vunpack.c.l.b16 %v1367
      %v1513 = vunpack.c.l.b16 %v1377
      %v1514 = vunpack.c.l.b16 %v1391
      %v1515 = vunpack.c.l.b16 %v1401
      %v1516 = vunpack.c.l.b16 %v1415
      %v1517 = vunpack.c.l.b16 %v1425
      %v1518 = vunpack.c.l.b16 %v1439
      %v1519 = vunpack.c.l.b16 %v1449
      %v1520 = vunpack.c.l.b16 %v1463
      %v1521 = vunpack.c.l.b16 %v1473
      %v1522 = vpack.c.b16 %v1491, %v1490
      %v1523 = vpack.c.b16 %v1493, %v1492
      %v1524 = vpack.c.b16 %v1495, %v1494
      %v1525 = vpack.c.b16 %v1497, %v1496
      %v1526 = vpack.c.b16 %v1499, %v1498
      %v1527 = vpack.c.b16 %v1501, %v1500
      %v1528 = vpack.c.b16 %v1503, %v1502
      %v1529 = vpack.c.b16 %v1505, %v1504
      %v1530 = vpack.c.b16 %v1507, %v1506
      %v1531 = vpack.c.b16 %v1509, %v1508
      %v1532 = vpack.c.b16 %v1511, %v1510
      %v1533 = vpack.c.b16 %v1513, %v1512
      %v1534 = vpack.c.b16 %v1515, %v1514
      %v1535 = vpack.c.b16 %v1517, %v1516
      %v1536 = vpack.c.b16 %v1519, %v1518
      %v1537 = vpack.c.b16 %v1521, %v1520
      %v1570 = vunpack.c.l.b16 %v1474
      %v1571 = vunpack.c.l.b16 %v1475
      %v1572 = vunpack.c.l.b16 %v1476
      %v1573 = vunpack.c.l.b16 %v1477
      %v1574 = vunpack.c.l.b16 %v1478
      %v1575 = vunpack.c.l.b16 %v1479
      %v1576 = vunpack.c.l.b16 %v1480
      %v1577 = vunpack.c.l.b16 %v1481
      %v1578 = vunpack.c.l.b16 %v1482
      %v1579 = vunpack.c.l.b16 %v1483
      %v1580 = vunpack.c.l.b16 %v1484
      %v1581 = vunpack.c.l.b16 %v1485
      %v1582 = vunpack.c.l.b16 %v1486
      %v1583 = vunpack.c.l.b16 %v1487
      %v1584 = vunpack.c.l.b16 %v1488
      %v1585 = vunpack.c.l.b16 %v1489
      %v1586 = vpack.c.b16 %v1571, %v1570
      %v1587 = vpack.c.b16 %v1573, %v1572
      %v1588 = vpack.c.b16 %v1575, %v1574
      %v1589 = vpack.c.b16 %v1577, %v1576
      %v1590 = vpack.c.b16 %v1579, %v1578
      %v1591 = vpack.c.b16 %v1581, %v1580
      %v1592 = vpack.c.b16 %v1583, %v1582
      %v1593 = vpack.c.b16 %v1585, %v1584
      %1602 = vmatprep.subr.bf16.mxu0 0
      %1603 = vmatpush1.bf16.msra.mxu0 %v1586
      %1604 = vmatprep.subr.bf16.mxu0 0
      %1605 = vmatpush1.bf16.msra.mxu0 %v1587
      %1606 = vmatprep.subr.bf16.mxu0 0
      %1607 = vmatpush1.bf16.msra.mxu0 %v1588
      %1608 = vmatprep.subr.bf16.mxu0 0
      %1609 = vmatpush1.bf16.msra.mxu0 %v1589
      %1610 = vmatprep.subr.bf16.mxu0 0
      %1611 = vmatpush1.bf16.msra.mxu0 %v1590
      %1612 = vmatprep.subr.bf16.mxu0 0
      %1613 = vmatpush1.bf16.msra.mxu0 %v1591
      %1614 = vmatprep.subr.bf16.mxu0 0
      %1615 = vmatpush1.bf16.msra.mxu0 %v1592
      %1616 = vmatprep.subr.bf16.mxu0 0
      %1617 = vmatpush1.bf16.msra.mxu0 %v1593
      %1618 = vmatprep.subr.bf16.mxu0 0
      %1619 = vmatpush1.bf16.msra.mxu0 0
      %1620 = vmatprep.subr.bf16.mxu0 0
      %1621 = vmatpush1.bf16.msra.mxu0 0
      %1622 = vmatprep.subr.bf16.mxu0 0
      %1623 = vmatpush1.bf16.msra.mxu0 0
      %1624 = vmatprep.subr.bf16.mxu0 0
      %1625 = vmatpush1.bf16.msra.mxu0 0
      %1626 = vmatprep.subr.bf16.mxu0 0
      %1627 = vmatpush1.bf16.msra.mxu0 0
      %1628 = vmatprep.subr.bf16.mxu0 0
      %1629 = vmatpush1.bf16.msra.mxu0 0
      %1630 = vmatprep.subr.bf16.mxu0 0
      %1631 = vmatpush1.bf16.msra.mxu0 0
      %1632 = vmatprep.subr.bf16.mxu0 0
      %1633 = vmatpush1.bf16.msra.mxu0 0
      %1634 = vmatprep.mubr.bf16.mxu0 0
      %1635 = vmatmul.mubr.bf16.gmra.mrb[0].mxu0 %v1522
      %v1636 = vpop.f32.mrb[0].mxu0
      %v1637 = vadd.f32 0.0, %v1636
      %v1638 = vpop.f32.mrb[0].mxu0
      %v1639 = vpop.f32.mrb[0].mxu0
      %v1640 = vadd.f32 0.0, %v1639
      %v1641 = vpop.f32.mrb[0].mxu0
      %1642 = vmatprep.mubr.bf16.mxu0 0
      %1643 = vmatmul.mubr.bf16.gmra.mrb[0].mxu0 %v1523
      %v1644 = vpop.f32.mrb[0].mxu0
      %v1645 = vadd.f32 0.0, %v1644
      %v1646 = vpop.f32.mrb[0].mxu0
      %v1647 = vpop.f32.mrb[0].mxu0
      %v1648 = vadd.f32 0.0, %v1647
      %v1649 = vpop.f32.mrb[0].mxu0
      %1650 = vmatprep.mubr.bf16.mxu0 0
      %1651 = vmatmul.mubr.bf16.gmra.mrb[0].mxu0 %v1524
      %v1652 = vpop.f32.mrb[0].mxu0
      %v1653 = vadd.f32 0.0, %v1652
      %v1654 = vpop.f32.mrb[0].mxu0
      %v1655 = vpop.f32.mrb[0].mxu0
      %v1656 = vadd.f32 0.0, %v1655
      %v1657 = vpop.f32.mrb[0].mxu0
      %1658 = vmatprep.mubr.bf16.mxu0 0
      %1659 = vmatmul.mubr.bf16.gmra.mrb[0].mxu0 %v1525
      %v1660 = vpop.f32.mrb[0].mxu0
      %v1661 = vadd.f32 0.0, %v1660
      %v1662 = vpop.f32.mrb[0].mxu0
      %v1663 = vpop.f32.mrb[0].mxu0
      %v1664 = vadd.f32 0.0, %v1663
      %v1665 = vpop.f32.mrb[0].mxu0
      %1666 = vmatprep.mubr.bf16.mxu0 0
      %1667 = vmatmul.mubr.bf16.gmra.mrb[0].mxu0 %v1526
      %v1668 = vpop.f32.mrb[0].mxu0
      %v1669 = vadd.f32 0.0, %v1668
      %v1670 = vpop.f32.mrb[0].mxu0
      %v1671 = vpop.f32.mrb[0].mxu0
      %v1672 = vadd.f32 0.0, %v1671
      %v1673 = vpop.f32.mrb[0].mxu0
      %1674 = vmatprep.mubr.bf16.mxu0 0
      %1675 = vmatmul.mubr.bf16.gmra.mrb[0].mxu0 %v1527
      %v1676 = vpop.f32.mrb[0].mxu0
      %v1677 = vadd.f32 0.0, %v1676
      %v1678 = vpop.f32.mrb[0].mxu0
      %v1679 = vpop.f32.mrb[0].mxu0
      %v1680 = vadd.f32 0.0, %v1679
      %v1681 = vpop.f32.mrb[0].mxu0
      %1682 = vmatprep.mubr.bf16.mxu0 0
      %1683 = vmatmul.mubr.bf16.gmra.mrb[0].mxu0 %v1528
      %v1684 = vpop.f32.mrb[0].mxu0
      %v1685 = vadd.f32 0.0, %v1684
      %v1686 = vpop.f32.mrb[0].mxu0
      %v1687 = vpop.f32.mrb[0].mxu0
      %v1688 = vadd.f32 0.0, %v1687
      %v1689 = vpop.f32.mrb[0].mxu0
      %1690 = vmatprep.mubr.bf16.mxu0 0
      %1691 = vmatmul.mubr.bf16.gmra.mrb[0].mxu0 %v1529
      %v1692 = vpop.f32.mrb[0].mxu0
      %v1693 = vadd.f32 0.0, %v1692
      %v1694 = vpop.f32.mrb[0].mxu0
      %v1695 = vpop.f32.mrb[0].mxu0
      %v1696 = vadd.f32 0.0, %v1695
      %v1697 = vpop.f32.mrb[0].mxu0
      %1698 = vmatprep.mubr.bf16.mxu0 0
      %1699 = vmatmul.mubr.bf16.gmra.mrb[0].mxu0 %v1530
      %v1700 = vpop.f32.mrb[0].mxu0
      %v1701 = vadd.f32 0.0, %v1700
      %v1702 = vpop.f32.mrb[0].mxu0
      %v1703 = vpop.f32.mrb[0].mxu0
      %v1704 = vadd.f32 0.0, %v1703
      %v1705 = vpop.f32.mrb[0].mxu0
      %1706 = vmatprep.mubr.bf16.mxu0 0
      %1707 = vmatmul.mubr.bf16.gmra.mrb[0].mxu0 %v1531
      %v1708 = vpop.f32.mrb[0].mxu0
      %v1709 = vadd.f32 0.0, %v1708
      %v1710 = vpop.f32.mrb[0].mxu0
      %v1711 = vpop.f32.mrb[0].mxu0
      %v1712 = vadd.f32 0.0, %v1711
      %v1713 = vpop.f32.mrb[0].mxu0
      %1714 = vmatprep.mubr.bf16.mxu0 0
      %1715 = vmatmul.mubr.bf16.gmra.mrb[0].mxu0 %v1532
      %v1716 = vpop.f32.mrb[0].mxu0
      %v1717 = vadd.f32 0.0, %v1716
      %v1718 = vpop.f32.mrb[0].mxu0
      %v1719 = vpop.f32.mrb[0].mxu0
      %v1720 = vadd.f32 0.0, %v1719
      %v1721 = vpop.f32.mrb[0].mxu0
      %1722 = vmatprep.mubr.bf16.mxu0 0
      %1723 = vmatmul.mubr.bf16.gmra.mrb[0].mxu0 %v1533
      %v1724 = vpop.f32.mrb[0].mxu0
      %v1725 = vadd.f32 0.0, %v1724
      %v1726 = vpop.f32.mrb[0].mxu0
      %v1727 = vpop.f32.mrb[0].mxu0
      %v1728 = vadd.f32 0.0, %v1727
      %v1729 = vpop.f32.mrb[0].mxu0
      %1730 = vmatprep.mubr.bf16.mxu0 0
      %1731 = vmatmul.mubr.bf16.gmra.mrb[0].mxu0 %v1534
      %v1732 = vpop.f32.mrb[0].mxu0
      %v1733 = vadd.f32 0.0, %v1732
      %v1734 = vpop.f32.mrb[0].mxu0
      %v1735 = vpop.f32.mrb[0].mxu0
      %v1736 = vadd.f32 0.0, %v1735
      %v1737 = vpop.f32.mrb[0].mxu0
      %1738 = vmatprep.mubr.bf16.mxu0 0
      %1739 = vmatmul.mubr.bf16.gmra.mrb[0].mxu0 %v1535
      %v1740 = vpop.f32.mrb[0].mxu0
      %v1741 = vadd.f32 0.0, %v1740
      %v1742 = vpop.f32.mrb[0].mxu0
      %v1743 = vpop.f32.mrb[0].mxu0
      %v1744 = vadd.f32 0.0, %v1743
      %v1745 = vpop.f32.mrb[0].mxu0
      %1746 = vmatprep.mubr.bf16.mxu0 0
      %1747 = vmatmul.mubr.bf16.gmra.mrb[0].mxu0 %v1536
      %v1748 = vpop.f32.mrb[0].mxu0
      %v1749 = vadd.f32 0.0, %v1748
      %v1750 = vpop.f32.mrb[0].mxu0
      %v1751 = vpop.f32.mrb[0].mxu0
      %v1752 = vadd.f32 0.0, %v1751
      %v1753 = vpop.f32.mrb[0].mxu0
      %1754 = vmatprep.mubr.bf16.mxu0 0
      %1755 = vmatmul.mubr.bf16.gmra.mrb[0].mxu0 %v1537
      %v1756 = vpop.f32.mrb[0].mxu0
      %v1757 = vadd.f32 0.0, %v1756
      %v1758 = vpop.f32.mrb[0].mxu0
      %v1759 = vpop.f32.mrb[0].mxu0
      %v1760 = vadd.f32 0.0, %v1759
      %v1761 = vpop.f32.mrb[0].mxu0
      %1762 = vdwg.mxu0
      %v1795 = vunpack.c.l.b16 %v1023
      %v1796 = vunpack.c.l.b16 %v1024
      %v1797 = vunpack.c.l.b16 %v1025
      %v1798 = vunpack.c.l.b16 %v1026
      %v1799 = vunpack.c.l.b16 %v1027
      %v1800 = vunpack.c.l.b16 %v1028
      %v1801 = vunpack.c.l.b16 %v1029
      %v1802 = vunpack.c.l.b16 %v1030
      %v1803 = vunpack.c.l.b16 %v1031
      %v1804 = vunpack.c.l.b16 %v1032
      %v1805 = vunpack.c.l.b16 %v1033
      %v1806 = vunpack.c.l.b16 %v1034
      %v1807 = vunpack.c.l.b16 %v1035
      %v1808 = vunpack.c.l.b16 %v1036
      %v1809 = vunpack.c.l.b16 %v1037
      %v1810 = vunpack.c.l.b16 %v1038
      %v1811 = vunpack.c.l.b16 %v1039
      %v1812 = vunpack.c.l.b16 %v1040
      %v1813 = vunpack.c.l.b16 %v1041
      %v1814 = vunpack.c.l.b16 %v1042
      %v1815 = vunpack.c.l.b16 %v1043
      %v1816 = vunpack.c.l.b16 %v1044
      %v1817 = vunpack.c.l.b16 %v1045
      %v1818 = vunpack.c.l.b16 %v1046
      %v1819 = vunpack.c.l.b16 %v1047
      %v1820 = vunpack.c.l.b16 %v1048
      %v1821 = vunpack.c.l.b16 %v1049
      %v1822 = vunpack.c.l.b16 %v1050
      %v1823 = vunpack.c.l.b16 %v1051
      %v1824 = vunpack.c.l.b16 %v1052
      %v1825 = vunpack.c.l.b16 %v1053
      %v1826 = vunpack.c.l.b16 %v1054
      %v1827 = vpack.c.b16 %v1796, %v1795
      %v1828 = vpack.c.b16 %v1798, %v1797
      %v1829 = vpack.c.b16 %v1800, %v1799
      %v1830 = vpack.c.b16 %v1802, %v1801
      %v1831 = vpack.c.b16 %v1804, %v1803
      %v1832 = vpack.c.b16 %v1806, %v1805
      %v1833 = vpack.c.b16 %v1808, %v1807
      %v1834 = vpack.c.b16 %v1810, %v1809
      %v1835 = vpack.c.b16 %v1812, %v1811
      %v1836 = vpack.c.b16 %v1814, %v1813
      %v1837 = vpack.c.b16 %v1816, %v1815
      %v1838 = vpack.c.b16 %v1818, %v1817
      %v1839 = vpack.c.b16 %v1820, %v1819
      %v1840 = vpack.c.b16 %v1822, %v1821
      %v1841 = vpack.c.b16 %v1824, %v1823
      %v1842 = vpack.c.b16 %v1826, %v1825
      %v1875 = vunpack.c.l.b16 %v1055
      %v1876 = vunpack.c.l.b16 %v1056
      %v1877 = vunpack.c.l.b16 %v1057
      %v1878 = vunpack.c.l.b16 %v1058
      %v1879 = vunpack.c.l.b16 %v1059
      %v1880 = vunpack.c.l.b16 %v1060
      %v1881 = vunpack.c.l.b16 %v1061
      %v1882 = vunpack.c.l.b16 %v1062
      %v1883 = vunpack.c.l.b16 %v1063
      %v1884 = vunpack.c.l.b16 %v1064
      %v1885 = vunpack.c.l.b16 %v1065
      %v1886 = vunpack.c.l.b16 %v1066
      %v1887 = vunpack.c.l.b16 %v1067
      %v1888 = vunpack.c.l.b16 %v1068
      %v1889 = vunpack.c.l.b16 %v1069
      %v1890 = vunpack.c.l.b16 %v1070
      %v1891 = vpack.c.b16 %v1876, %v1875
      %v1892 = vpack.c.b16 %v1878, %v1877
      %v1893 = vpack.c.b16 %v1880, %v1879
      %v1894 = vpack.c.b16 %v1882, %v1881
      %v1895 = vpack.c.b16 %v1884, %v1883
      %v1896 = vpack.c.b16 %v1886, %v1885
      %v1897 = vpack.c.b16 %v1888, %v1887
      %v1898 = vpack.c.b16 %v1890, %v1889
      %1907 = vmatprep.subr.bf16.mxu0 0
      %1908 = vmatpush1.bf16.msra.mxu0 %v1891
      %1909 = vmatprep.subr.bf16.mxu0 0
      %1910 = vmatpush1.bf16.msra.mxu0 %v1892
      %1911 = vmatprep.subr.bf16.mxu0 0
      %1912 = vmatpush1.bf16.msra.mxu0 %v1893
      %1913 = vmatprep.subr.bf16.mxu0 0
      %1914 = vmatpush1.bf16.msra.mxu0 %v1894
      %1915 = vmatprep.subr.bf16.mxu0 0
      %1916 = vmatpush1.bf16.msra.mxu0 %v1895
      %1917 = vmatprep.subr.bf16.mxu0 0
      %1918 = vmatpush1.bf16.msra.mxu0 %v1896
      %1919 = vmatprep.subr.bf16.mxu0 0
      %1920 = vmatpush1.bf16.msra.mxu0 %v1897
      %1921 = vmatprep.subr.bf16.mxu0 0
      %1922 = vmatpush1.bf16.msra.mxu0 %v1898
      %1923 = vmatprep.subr.bf16.mxu0 0
      %1924 = vmatpush1.bf16.msra.mxu0 0
      %1925 = vmatprep.subr.bf16.mxu0 0
      %1926 = vmatpush1.bf16.msra.mxu0 0
      %1927 = vmatprep.subr.bf16.mxu0 0
      %1928 = vmatpush1.bf16.msra.mxu0 0
      %1929 = vmatprep.subr.bf16.mxu0 0
      %1930 = vmatpush1.bf16.msra.mxu0 0
      %1931 = vmatprep.subr.bf16.mxu0 0
      %1932 = vmatpush1.bf16.msra.mxu0 0
      %1933 = vmatprep.subr.bf16.mxu0 0
      %1934 = vmatpush1.bf16.msra.mxu0 0
      %1935 = vmatprep.subr.bf16.mxu0 0
      %1936 = vmatpush1.bf16.msra.mxu0 0
      %1937 = vmatprep.subr.bf16.mxu0 0
      %1938 = vmatpush1.bf16.msra.mxu0 0
      %1939 = vmatprep.mubr.bf16.mxu0 0
      %1940 = vmatmul.mubr.bf16.gmra.mrb[0].mxu0 %v1827
      %v1941 = vpop.f32.mrb[0].mxu0
      %v1942 = vadd.f32 %v1637, %v1941
      %v1943 = vpop.f32.mrb[0].mxu0
      %v1944 = vpop.f32.mrb[0].mxu0
      %v1945 = vadd.f32 %v1640, %v1944
      %v1946 = vpop.f32.mrb[0].mxu0
      %1947 = vmatprep.mubr.bf16.mxu0 0
      %1948 = vmatmul.mubr.bf16.gmra.mrb[0].mxu0 %v1828
      %v1949 = vpop.f32.mrb[0].mxu0
      %v1950 = vadd.f32 %v1645, %v1949
      %v1951 = vpop.f32.mrb[0].mxu0
      %v1952 = vpop.f32.mrb[0].mxu0
      %v1953 = vadd.f32 %v1648, %v1952
      %v1954 = vpop.f32.mrb[0].mxu0
      %1955 = vmatprep.mubr.bf16.mxu0 0
      %1956 = vmatmul.mubr.bf16.gmra.mrb[0].mxu0 %v1829
      %v1957 = vpop.f32.mrb[0].mxu0
      %v1958 = vadd.f32 %v1653, %v1957
      %v1959 = vpop.f32.mrb[0].mxu0
      %v1960 = vpop.f32.mrb[0].mxu0
      %v1961 = vadd.f32 %v1656, %v1960
      %v1962 = vpop.f32.mrb[0].mxu0
      %1963 = vmatprep.mubr.bf16.mxu0 0
      %1964 = vmatmul.mubr.bf16.gmra.mrb[0].mxu0 %v1830
      %v1965 = vpop.f32.mrb[0].mxu0
      %v1966 = vadd.f32 %v1661, %v1965
      %v1967 = vpop.f32.mrb[0].mxu0
      %v1968 = vpop.f32.mrb[0].mxu0
      %v1969 = vadd.f32 %v1664, %v1968
      %v1970 = vpop.f32.mrb[0].mxu0
      %1971 = vmatprep.mubr.bf16.mxu0 0
      %1972 = vmatmul.mubr.bf16.gmra.mrb[0].mxu0 %v1831
      %v1973 = vpop.f32.mrb[0].mxu0
      %v1974 = vadd.f32 %v1669, %v1973
      %v1975 = vpop.f32.mrb[0].mxu0
      %v1976 = vpop.f32.mrb[0].mxu0
      %v1977 = vadd.f32 %v1672, %v1976
      %v1978 = vpop.f32.mrb[0].mxu0
      %1979 = vmatprep.mubr.bf16.mxu0 0
      %1980 = vmatmul.mubr.bf16.gmra.mrb[0].mxu0 %v1832
      %v1981 = vpop.f32.mrb[0].mxu0
      %v1982 = vadd.f32 %v1677, %v1981
      %v1983 = vpop.f32.mrb[0].mxu0
      %v1984 = vpop.f32.mrb[0].mxu0
      %v1985 = vadd.f32 %v1680, %v1984
      %v1986 = vpop.f32.mrb[0].mxu0
      %1987 = vmatprep.mubr.bf16.mxu0 0
      %1988 = vmatmul.mubr.bf16.gmra.mrb[0].mxu0 %v1833
      %v1989 = vpop.f32.mrb[0].mxu0
      %v1990 = vadd.f32 %v1685, %v1989
      %v1991 = vpop.f32.mrb[0].mxu0
      %v1992 = vpop.f32.mrb[0].mxu0
      %v1993 = vadd.f32 %v1688, %v1992
      %v1994 = vpop.f32.mrb[0].mxu0
      %1995 = vmatprep.mubr.bf16.mxu0 0
      %1996 = vmatmul.mubr.bf16.gmra.mrb[0].mxu0 %v1834
      %v1997 = vpop.f32.mrb[0].mxu0
      %v1998 = vadd.f32 %v1693, %v1997
      %v1999 = vpop.f32.mrb[0].mxu0
      %v2000 = vpop.f32.mrb[0].mxu0
      %v2001 = vadd.f32 %v1696, %v2000
      %v2002 = vpop.f32.mrb[0].mxu0
      %2003 = vmatprep.mubr.bf16.mxu0 0
      %2004 = vmatmul.mubr.bf16.gmra.mrb[0].mxu0 %v1835
      %v2005 = vpop.f32.mrb[0].mxu0
      %v2006 = vadd.f32 %v1701, %v2005
      %v2007 = vpop.f32.mrb[0].mxu0
      %v2008 = vpop.f32.mrb[0].mxu0
      %v2009 = vadd.f32 %v1704, %v2008
      %v2010 = vpop.f32.mrb[0].mxu0
      %2011 = vmatprep.mubr.bf16.mxu0 0
      %2012 = vmatmul.mubr.bf16.gmra.mrb[0].mxu0 %v1836
      %v2013 = vpop.f32.mrb[0].mxu0
      %v2014 = vadd.f32 %v1709, %v2013
      %v2015 = vpop.f32.mrb[0].mxu0
      %v2016 = vpop.f32.mrb[0].mxu0
      %v2017 = vadd.f32 %v1712, %v2016
      %v2018 = vpop.f32.mrb[0].mxu0
      %2019 = vmatprep.mubr.bf16.mxu0 0
      %2020 = vmatmul.mubr.bf16.gmra.mrb[0].mxu0 %v1837
      %v2021 = vpop.f32.mrb[0].mxu0
      %v2022 = vadd.f32 %v1717, %v2021
      %v2023 = vpop.f32.mrb[0].mxu0
      %v2024 = vpop.f32.mrb[0].mxu0
      %v2025 = vadd.f32 %v1720, %v2024
      %v2026 = vpop.f32.mrb[0].mxu0
      %2027 = vmatprep.mubr.bf16.mxu0 0
      %2028 = vmatmul.mubr.bf16.gmra.mrb[0].mxu0 %v1838
      %v2029 = vpop.f32.mrb[0].mxu0
      %v2030 = vadd.f32 %v1725, %v2029
      %v2031 = vpop.f32.mrb[0].mxu0
      %v2032 = vpop.f32.mrb[0].mxu0
      %v2033 = vadd.f32 %v1728, %v2032
      %v2034 = vpop.f32.mrb[0].mxu0
      %2035 = vmatprep.mubr.bf16.mxu0 0
      %2036 = vmatmul.mubr.bf16.gmra.mrb[0].mxu0 %v1839
      %v2037 = vpop.f32.mrb[0].mxu0
      %v2038 = vadd.f32 %v1733, %v2037
      %v2039 = vpop.f32.mrb[0].mxu0
      %v2040 = vpop.f32.mrb[0].mxu0
      %v2041 = vadd.f32 %v1736, %v2040
      %v2042 = vpop.f32.mrb[0].mxu0
      %2043 = vmatprep.mubr.bf16.mxu0 0
      %2044 = vmatmul.mubr.bf16.gmra.mrb[0].mxu0 %v1840
      %v2045 = vpop.f32.mrb[0].mxu0
      %v2046 = vadd.f32 %v1741, %v2045
      %v2047 = vpop.f32.mrb[0].mxu0
      %v2048 = vpop.f32.mrb[0].mxu0
      %v2049 = vadd.f32 %v1744, %v2048
      %v2050 = vpop.f32.mrb[0].mxu0
      %2051 = vmatprep.mubr.bf16.mxu0 0
      %2052 = vmatmul.mubr.bf16.gmra.mrb[0].mxu0 %v1841
      %v2053 = vpop.f32.mrb[0].mxu0
      %v2054 = vadd.f32 %v1749, %v2053
      %v2055 = vpop.f32.mrb[0].mxu0
      %v2056 = vpop.f32.mrb[0].mxu0
      %v2057 = vadd.f32 %v1752, %v2056
      %v2058 = vpop.f32.mrb[0].mxu0
      %2059 = vmatprep.mubr.bf16.mxu0 0
      %2060 = vmatmul.mubr.bf16.gmra.mrb[0].mxu0 %v1842
      %v2061 = vpop.f32.mrb[0].mxu0
      %v2062 = vadd.f32 %v1757, %v2061
      %v2063 = vpop.f32.mrb[0].mxu0
      %v2064 = vpop.f32.mrb[0].mxu0
      %v2065 = vadd.f32 %v1760, %v2064
      %v2066 = vpop.f32.mrb[0].mxu0
      %2067 = vdwg.mxu0
      %v2068 = vld [vmem:[#allocation2] sm:$0xe]
      %v2069 = vld [vmem:[#allocation2 + $0xc] sm:$0xe]
      %v2070 = vld [vmem:[#allocation2 + $0x18] sm:$0xe]
      %v2071 = vld [vmem:[#allocation2 + $0x24] sm:$0xe]
      %v2072 = vld [vmem:[#allocation2 + $0x30] sm:$0xe]
      %v2073 = vld [vmem:[#allocation2 + $0x3c] sm:$0xe]
      %v2074 = vld [vmem:[#allocation2 + $0x48] sm:$0xe]
      %v2075 = vld [vmem:[#allocation2 + $0x54] sm:$0xe]
      %v2076 = vld [vmem:[#allocation2 + $0x60] sm:$0xe]
      %v2077 = vld [vmem:[#allocation2 + $0x6c] sm:$0xe]
      %v2078 = vld [vmem:[#allocation2 + $0x78] sm:$0xe]
      %v2079 = vld [vmem:[#allocation2 + $0x84] sm:$0xe]
      %v2080 = vld [vmem:[#allocation2 + $0x90] sm:$0xe]
      %v2081 = vld [vmem:[#allocation2 + $0x9c] sm:$0xe]
      %v2082 = vld [vmem:[#allocation2 + $0xa8] sm:$0xe]
      %v2083 = vld [vmem:[#allocation2 + $0xb4] sm:$0xe]
      %vm2116 = vcmask 1042432
      %vm2117 = vcmask 1046532
      %vm2118 = vmor %vm2116, %vm2117
      %v2119 = vrot.slane %v2068, 5
      %v2120 = vrot.slane %v2119, 4
      %v2121 = vrot.slane %v1024, 5
      %v2122 = vsel %vm2118, %v2120, %v2121
      %v2123 = vrot.slane %v2121, 4
      %v2124 = vrot.slane %v1071, 5
      %v2125 = vsel %vm2118, %v2123, %v2124
      %v2126 = vrot.slane %v2069, 5
      %v2127 = vrot.slane %v2126, 4
      %v2128 = vrot.slane %v1026, 5
      %v2129 = vsel %vm2118, %v2127, %v2128
      %v2130 = vrot.slane %v2128, 4
      %v2131 = vrot.slane %v1072, 5
      %v2132 = vsel %vm2118, %v2130, %v2131
      %v2133 = vrot.slane %v2070, 5
      %v2134 = vrot.slane %v2133, 4
      %v2135 = vrot.slane %v1028, 5
      %v2136 = vsel %vm2118, %v2134, %v2135
      %v2137 = vrot.slane %v2135, 4
      %v2138 = vrot.slane %v1073, 5
      %v2139 = vsel %vm2118, %v2137, %v2138
      %v2140 = vrot.slane %v2071, 5
      %v2141 = vrot.slane %v2140, 4
      %v2142 = vrot.slane %v1030, 5
      %v2143 = vsel %vm2118, %v2141, %v2142
      %v2144 = vrot.slane %v2142, 4
      %v2145 = vrot.slane %v1074, 5
      %v2146 = vsel %vm2118, %v2144, %v2145
      %v2147 = vrot.slane %v2072, 5
      %v2148 = vrot.slane %v2147, 4
      %v2149 = vrot.slane %v1032, 5
      %v2150 = vsel %vm2118, %v2148, %v2149
      %v2151 = vrot.slane %v2149, 4
      %v2152 = vrot.slane %v1075, 5
      %v2153 = vsel %vm2118, %v2151, %v2152
      %v2154 = vrot.slane %v2073, 5
      %v2155 = vrot.slane %v2154, 4
      %v2156 = vrot.slane %v1034, 5
      %v2157 = vsel %vm2118, %v2155, %v2156
      %v2158 = vrot.slane %v2156, 4
      %v2159 = vrot.slane %v1076, 5
      %v2160 = vsel %vm2118, %v2158, %v2159
      %v2161 = vrot.slane %v2074, 5
      %v2162 = vrot.slane %v2161, 4
      %v2163 = vrot.slane %v1036, 5
      %v2164 = vsel %vm2118, %v2162, %v2163
      %v2165 = vrot.slane %v2163, 4
      %v2166 = vrot.slane %v1077, 5
      %v2167 = vsel %vm2118, %v2165, %v2166
      %v2168 = vrot.slane %v2075, 5
      %v2169 = vrot.slane %v2168, 4
      %v2170 = vrot.slane %v1038, 5
      %v2171 = vsel %vm2118, %v2169, %v2170
      %v2172 = vrot.slane %v2170, 4
      %v2173 = vrot.slane %v1078, 5
      %v2174 = vsel %vm2118, %v2172, %v2173
      %v2175 = vrot.slane %v2076, 5
      %v2176 = vrot.slane %v2175, 4
      %v2177 = vrot.slane %v1040, 5
      %v2178 = vsel %vm2118, %v2176, %v2177
      %v2179 = vrot.slane %v2177, 4
      %v2180 = vrot.slane %v1079, 5
      %v2181 = vsel %vm2118, %v2179, %v2180
      %v2182 = vrot.slane %v2077, 5
      %v2183 = vrot.slane %v2182, 4
      %v2184 = vrot.slane %v1042, 5
      %v2185 = vsel %vm2118, %v2183, %v2184
      %v2186 = vrot.slane %v2184, 4
      %v2187 = vrot.slane %v1080, 5
      %v2188 = vsel %vm2118, %v2186, %v2187
      %v2189 = vrot.slane %v2078, 5
      %v2190 = vrot.slane %v2189, 4
      %v2191 = vrot.slane %v1044, 5
      %v2192 = vsel %vm2118, %v2190, %v2191
      %v2193 = vrot.slane %v2191, 4
      %v2194 = vrot.slane %v1081, 5
      %v2195 = vsel %vm2118, %v2193, %v2194
      %v2196 = vrot.slane %v2079, 5
      %v2197 = vrot.slane %v2196, 4
      %v2198 = vrot.slane %v1046, 5
      %v2199 = vsel %vm2118, %v2197, %v2198
      %v2200 = vrot.slane %v2198, 4
      %v2201 = vrot.slane %v1082, 5
      %v2202 = vsel %vm2118, %v2200, %v2201
      %v2203 = vrot.slane %v2080, 5
      %v2204 = vrot.slane %v2203, 4
      %v2205 = vrot.slane %v1048, 5
      %v2206 = vsel %vm2118, %v2204, %v2205
      %v2207 = vrot.slane %v2205, 4
      %v2208 = vrot.slane %v1083, 5
      %v2209 = vsel %vm2118, %v2207, %v2208
      %v2210 = vrot.slane %v2081, 5
      %v2211 = vrot.slane %v2210, 4
      %v2212 = vrot.slane %v1050, 5
      %v2213 = vsel %vm2118, %v2211, %v2212
      %v2214 = vrot.slane %v2212, 4
      %v2215 = vrot.slane %v1084, 5
      %v2216 = vsel %vm2118, %v2214, %v2215
      %v2217 = vrot.slane %v2082, 5
      %v2218 = vrot.slane %v2217, 4
      %v2219 = vrot.slane %v1052, 5
      %v2220 = vsel %vm2118, %v2218, %v2219
      %v2221 = vrot.slane %v2219, 4
      %v2222 = vrot.slane %v1085, 5
      %v2223 = vsel %vm2118, %v2221, %v2222
      %v2224 = vrot.slane %v2083, 5
      %v2225 = vrot.slane %v2224, 4
      %v2226 = vrot.slane %v1054, 5
      %v2227 = vsel %vm2118, %v2225, %v2226
      %v2228 = vrot.slane %v2226, 4
      %v2229 = vrot.slane %v1086, 5
      %v2230 = vsel %vm2118, %v2228, %v2229
      %v2231 = vld [vmem:[%s3 + $0x80] sm:$0xf]
      %v2232 = vld [vmem:[%s3 + $0x84] sm:$0xf]
      %v2233 = vld [vmem:[%s3 + $0x88] sm:$0xf]
      %v2234 = vld [vmem:[%s3 + $0x8c] sm:$0xf]
      %v2235 = vld [vmem:[%s3 + $0x90] sm:$0xf]
      %v2236 = vld [vmem:[%s3 + $0x94] sm:$0xf]
      %v2237 = vld [vmem:[%s3 + $0x98] sm:$0xf]
      %v2238 = vld [vmem:[%s3 + $0x9c] sm:$0xf]
      %v2239 = vld [vmem:[%s3 + $0xa0] sm:$0xf]
      %v2240 = vld [vmem:[%s3 + $0xa4] sm:$0xf]
      %v2241 = vld [vmem:[%s3 + $0xa8] sm:$0xf]
      %v2242 = vld [vmem:[%s3 + $0xac] sm:$0xf]
      %v2243 = vld [vmem:[%s3 + $0xb0] sm:$0xf]
      %v2244 = vld [vmem:[%s3 + $0xb4] sm:$0xf]
      %v2245 = vld [vmem:[%s3 + $0xb8] sm:$0xf]
      %v2246 = vld [vmem:[%s3 + $0xbc] sm:$0xf]
      %v2247 = vunpack.c.l.b16 %v2122
      %v2248 = vunpack.c.l.b16 %v2125
      %v2249 = vunpack.c.l.b16 %v2129
      %v2250 = vunpack.c.l.b16 %v2132
      %v2251 = vunpack.c.l.b16 %v2136
      %v2252 = vunpack.c.l.b16 %v2139
      %v2253 = vunpack.c.l.b16 %v2143
      %v2254 = vunpack.c.l.b16 %v2146
      %v2255 = vunpack.c.l.b16 %v2150
      %v2256 = vunpack.c.l.b16 %v2153
      %v2257 = vunpack.c.l.b16 %v2157
      %v2258 = vunpack.c.l.b16 %v2160
      %v2259 = vunpack.c.l.b16 %v2164
      %v2260 = vunpack.c.l.b16 %v2167
      %v2261 = vunpack.c.l.b16 %v2171
      %v2262 = vunpack.c.l.b16 %v2174
      %v2263 = vunpack.c.l.b16 %v2178
      %v2264 = vunpack.c.l.b16 %v2181
      %v2265 = vunpack.c.l.b16 %v2185
      %v2266 = vunpack.c.l.b16 %v2188
      %v2267 = vunpack.c.l.b16 %v2192
      %v2268 = vunpack.c.l.b16 %v2195
      %v2269 = vunpack.c.l.b16 %v2199
      %v2270 = vunpack.c.l.b16 %v2202
      %v2271 = vunpack.c.l.b16 %v2206
      %v2272 = vunpack.c.l.b16 %v2209
      %v2273 = vunpack.c.l.b16 %v2213
      %v2274 = vunpack.c.l.b16 %v2216
      %v2275 = vunpack.c.l.b16 %v2220
      %v2276 = vunpack.c.l.b16 %v2223
      %v2277 = vunpack.c.l.b16 %v2227
      %v2278 = vunpack.c.l.b16 %v2230
      %v2279 = vpack.c.b16 %v2248, %v2247
      %v2280 = vpack.c.b16 %v2250, %v2249
      %v2281 = vpack.c.b16 %v2252, %v2251
      %v2282 = vpack.c.b16 %v2254, %v2253
      %v2283 = vpack.c.b16 %v2256, %v2255
      %v2284 = vpack.c.b16 %v2258, %v2257
      %v2285 = vpack.c.b16 %v2260, %v2259
      %v2286 = vpack.c.b16 %v2262, %v2261
      %v2287 = vpack.c.b16 %v2264, %v2263
      %v2288 = vpack.c.b16 %v2266, %v2265
      %v2289 = vpack.c.b16 %v2268, %v2267
      %v2290 = vpack.c.b16 %v2270, %v2269
      %v2291 = vpack.c.b16 %v2272, %v2271
      %v2292 = vpack.c.b16 %v2274, %v2273
      %v2293 = vpack.c.b16 %v2276, %v2275
      %v2294 = vpack.c.b16 %v2278, %v2277
      %v2327 = vunpack.c.l.b16 %v2231
      %v2328 = vunpack.c.l.b16 %v2232
      %v2329 = vunpack.c.l.b16 %v2233
      %v2330 = vunpack.c.l.b16 %v2234
      %v2331 = vunpack.c.l.b16 %v2235
      %v2332 = vunpack.c.l.b16 %v2236
      %v2333 = vunpack.c.l.b16 %v2237
      %v2334 = vunpack.c.l.b16 %v2238
      %v2335 = vunpack.c.l.b16 %v2239
      %v2336 = vunpack.c.l.b16 %v2240
      %v2337 = vunpack.c.l.b16 %v2241
      %v2338 = vunpack.c.l.b16 %v2242
      %v2339 = vunpack.c.l.b16 %v2243
      %v2340 = vunpack.c.l.b16 %v2244
      %v2341 = vunpack.c.l.b16 %v2245
      %v2342 = vunpack.c.l.b16 %v2246
      %v2343 = vpack.c.b16 %v2328, %v2327
      %v2344 = vpack.c.b16 %v2330, %v2329
      %v2345 = vpack.c.b16 %v2332, %v2331
      %v2346 = vpack.c.b16 %v2334, %v2333
      %v2347 = vpack.c.b16 %v2336, %v2335
      %v2348 = vpack.c.b16 %v2338, %v2337
      %v2349 = vpack.c.b16 %v2340, %v2339
      %v2350 = vpack.c.b16 %v2342, %v2341
      %2359 = vmatprep.subr.bf16.mxu0 0
      %2360 = vmatpush1.bf16.msra.mxu0 %v2343
      %2361 = vmatprep.subr.bf16.mxu0 0
      %2362 = vmatpush1.bf16.msra.mxu0 %v2344
      %2363 = vmatprep.subr.bf16.mxu0 0
      %2364 = vmatpush1.bf16.msra.mxu0 %v2345
      %2365 = vmatprep.subr.bf16.mxu0 0
      %2366 = vmatpush1.bf16.msra.mxu0 %v2346
      %2367 = vmatprep.subr.bf16.mxu0 0
      %2368 = vmatpush1.bf16.msra.mxu0 %v2347
      %2369 = vmatprep.subr.bf16.mxu0 0
      %2370 = vmatpush1.bf16.msra.mxu0 %v2348
      %2371 = vmatprep.subr.bf16.mxu0 0
      %2372 = vmatpush1.bf16.msra.mxu0 %v2349
      %2373 = vmatprep.subr.bf16.mxu0 0
      %2374 = vmatpush1.bf16.msra.mxu0 %v2350
      %2375 = vmatprep.subr.bf16.mxu0 0
      %2376 = vmatpush1.bf16.msra.mxu0 0
      %2377 = vmatprep.subr.bf16.mxu0 0
      %2378 = vmatpush1.bf16.msra.mxu0 0
      %2379 = vmatprep.subr.bf16.mxu0 0
      %2380 = vmatpush1.bf16.msra.mxu0 0
      %2381 = vmatprep.subr.bf16.mxu0 0
      %2382 = vmatpush1.bf16.msra.mxu0 0
      %2383 = vmatprep.subr.bf16.mxu0 0
      %2384 = vmatpush1.bf16.msra.mxu0 0
      %2385 = vmatprep.subr.bf16.mxu0 0
      %2386 = vmatpush1.bf16.msra.mxu0 0
      %2387 = vmatprep.subr.bf16.mxu0 0
      %2388 = vmatpush1.bf16.msra.mxu0 0
      %2389 = vmatprep.subr.bf16.mxu0 0
      %2390 = vmatpush1.bf16.msra.mxu0 0
      %2391 = vmatprep.mubr.bf16.mxu0 0
      %2392 = vmatmul.mubr.bf16.gmra.mrb[0].mxu0 %v2279
      %v2393 = vpop.f32.mrb[0].mxu0
      %v2394 = vadd.f32 0.0, %v2393
      %v2395 = vpop.f32.mrb[0].mxu0
      %v2396 = vpop.f32.mrb[0].mxu0
      %v2397 = vadd.f32 0.0, %v2396
      %v2398 = vpop.f32.mrb[0].mxu0
      %2399 = vmatprep.mubr.bf16.mxu0 0
      %2400 = vmatmul.mubr.bf16.gmra.mrb[0].mxu0 %v2280
      %v2401 = vpop.f32.mrb[0].mxu0
      %v2402 = vadd.f32 0.0, %v2401
      %v2403 = vpop.f32.mrb[0].mxu0
      %v2404 = vpop.f32.mrb[0].mxu0
      %v2405 = vadd.f32 0.0, %v2404
      %v2406 = vpop.f32.mrb[0].mxu0
      %2407 = vmatprep.mubr.bf16.mxu0 0
      %2408 = vmatmul.mubr.bf16.gmra.mrb[0].mxu0 %v2281
      %v2409 = vpop.f32.mrb[0].mxu0
      %v2410 = vadd.f32 0.0, %v2409
      %v2411 = vpop.f32.mrb[0].mxu0
      %v2412 = vpop.f32.mrb[0].mxu0
      %v2413 = vadd.f32 0.0, %v2412
      %v2414 = vpop.f32.mrb[0].mxu0
      %2415 = vmatprep.mubr.bf16.mxu0 0
      %2416 = vmatmul.mubr.bf16.gmra.mrb[0].mxu0 %v2282
      %v2417 = vpop.f32.mrb[0].mxu0
      %v2418 = vadd.f32 0.0, %v2417
      %v2419 = vpop.f32.mrb[0].mxu0
      %v2420 = vpop.f32.mrb[0].mxu0
      %v2421 = vadd.f32 0.0, %v2420
      %v2422 = vpop.f32.mrb[0].mxu0
      %2423 = vmatprep.mubr.bf16.mxu0 0
      %2424 = vmatmul.mubr.bf16.gmra.mrb[0].mxu0 %v2283
      %v2425 = vpop.f32.mrb[0].mxu0
      %v2426 = vadd.f32 0.0, %v2425
      %v2427 = vpop.f32.mrb[0].mxu0
      %v2428 = vpop.f32.mrb[0].mxu0
      %v2429 = vadd.f32 0.0, %v2428
      %v2430 = vpop.f32.mrb[0].mxu0
      %2431 = vmatprep.mubr.bf16.mxu0 0
      %2432 = vmatmul.mubr.bf16.gmra.mrb[0].mxu0 %v2284
      %v2433 = vpop.f32.mrb[0].mxu0
      %v2434 = vadd.f32 0.0, %v2433
      %v2435 = vpop.f32.mrb[0].mxu0
      %v2436 = vpop.f32.mrb[0].mxu0
      %v2437 = vadd.f32 0.0, %v2436
      %v2438 = vpop.f32.mrb[0].mxu0
      %2439 = vmatprep.mubr.bf16.mxu0 0
      %2440 = vmatmul.mubr.bf16.gmra.mrb[0].mxu0 %v2285
      %v2441 = vpop.f32.mrb[0].mxu0
      %v2442 = vadd.f32 0.0, %v2441
      %v2443 = vpop.f32.mrb[0].mxu0
      %v2444 = vpop.f32.mrb[0].mxu0
      %v2445 = vadd.f32 0.0, %v2444
      %v2446 = vpop.f32.mrb[0].mxu0
      %2447 = vmatprep.mubr.bf16.mxu0 0
      %2448 = vmatmul.mubr.bf16.gmra.mrb[0].mxu0 %v2286
      %v2449 = vpop.f32.mrb[0].mxu0
      %v2450 = vadd.f32 0.0, %v2449
      %v2451 = vpop.f32.mrb[0].mxu0
      %v2452 = vpop.f32.mrb[0].mxu0
      %v2453 = vadd.f32 0.0, %v2452
      %v2454 = vpop.f32.mrb[0].mxu0
      %2455 = vmatprep.mubr.bf16.mxu0 0
      %2456 = vmatmul.mubr.bf16.gmra.mrb[0].mxu0 %v2287
      %v2457 = vpop.f32.mrb[0].mxu0
      %v2458 = vadd.f32 0.0, %v2457
      %v2459 = vpop.f32.mrb[0].mxu0
      %v2460 = vpop.f32.mrb[0].mxu0
      %v2461 = vadd.f32 0.0, %v2460
      %v2462 = vpop.f32.mrb[0].mxu0
      %2463 = vmatprep.mubr.bf16.mxu0 0
      %2464 = vmatmul.mubr.bf16.gmra.mrb[0].mxu0 %v2288
      %v2465 = vpop.f32.mrb[0].mxu0
      %v2466 = vadd.f32 0.0, %v2465
      %v2467 = vpop.f32.mrb[0].mxu0
      %v2468 = vpop.f32.mrb[0].mxu0
      %v2469 = vadd.f32 0.0, %v2468
      %v2470 = vpop.f32.mrb[0].mxu0
      %2471 = vmatprep.mubr.bf16.mxu0 0
      %2472 = vmatmul.mubr.bf16.gmra.mrb[0].mxu0 %v2289
      %v2473 = vpop.f32.mrb[0].mxu0
      %v2474 = vadd.f32 0.0, %v2473
      %v2475 = vpop.f32.mrb[0].mxu0
      %v2476 = vpop.f32.mrb[0].mxu0
      %v2477 = vadd.f32 0.0, %v2476
      %v2478 = vpop.f32.mrb[0].mxu0
      %2479 = vmatprep.mubr.bf16.mxu0 0
      %2480 = vmatmul.mubr.bf16.gmra.mrb[0].mxu0 %v2290
      %v2481 = vpop.f32.mrb[0].mxu0
      %v2482 = vadd.f32 0.0, %v2481
      %v2483 = vpop.f32.mrb[0].mxu0
      %v2484 = vpop.f32.mrb[0].mxu0
      %v2485 = vadd.f32 0.0, %v2484
      %v2486 = vpop.f32.mrb[0].mxu0
      %2487 = vmatprep.mubr.bf16.mxu0 0
      %2488 = vmatmul.mubr.bf16.gmra.mrb[0].mxu0 %v2291
      %v2489 = vpop.f32.mrb[0].mxu0
      %v2490 = vadd.f32 0.0, %v2489
      %v2491 = vpop.f32.mrb[0].mxu0
      %v2492 = vpop.f32.mrb[0].mxu0
      %v2493 = vadd.f32 0.0, %v2492
      %v2494 = vpop.f32.mrb[0].mxu0
      %2495 = vmatprep.mubr.bf16.mxu0 0
      %2496 = vmatmul.mubr.bf16.gmra.mrb[0].mxu0 %v2292
      %v2497 = vpop.f32.mrb[0].mxu0
      %v2498 = vadd.f32 0.0, %v2497
      %v2499 = vpop.f32.mrb[0].mxu0
      %v2500 = vpop.f32.mrb[0].mxu0
      %v2501 = vadd.f32 0.0, %v2500
      %v2502 = vpop.f32.mrb[0].mxu0
      %2503 = vmatprep.mubr.bf16.mxu0 0
      %2504 = vmatmul.mubr.bf16.gmra.mrb[0].mxu0 %v2293
      %v2505 = vpop.f32.mrb[0].mxu0
      %v2506 = vadd.f32 0.0, %v2505
      %v2507 = vpop.f32.mrb[0].mxu0
      %v2508 = vpop.f32.mrb[0].mxu0
      %v2509 = vadd.f32 0.0, %v2508
      %v2510 = vpop.f32.mrb[0].mxu0
      %2511 = vmatprep.mubr.bf16.mxu0 0
      %2512 = vmatmul.mubr.bf16.gmra.mrb[0].mxu0 %v2294
      %v2513 = vpop.f32.mrb[0].mxu0
      %v2514 = vadd.f32 0.0, %v2513
      %v2515 = vpop.f32.mrb[0].mxu0
      %v2516 = vpop.f32.mrb[0].mxu0
      %v2517 = vadd.f32 0.0, %v2516
      %v2518 = vpop.f32.mrb[0].mxu0
      %2519 = vdwg.mxu0
      %v2520 = vadd.f32 %v1942, %v2394
      %v2521 = vadd.f32 %v1945, %v2397
      %v2522 = vadd.f32 %v1950, %v2402
      %v2523 = vadd.f32 %v1953, %v2405
      %v2524 = vadd.f32 %v1958, %v2410
      %v2525 = vadd.f32 %v1961, %v2413
      %v2526 = vadd.f32 %v1966, %v2418
      %v2527 = vadd.f32 %v1969, %v2421
      %v2528 = vadd.f32 %v1974, %v2426
      %v2529 = vadd.f32 %v1977, %v2429
      %v2530 = vadd.f32 %v1982, %v2434
      %v2531 = vadd.f32 %v1985, %v2437
      %v2532 = vadd.f32 %v1990, %v2442
      %v2533 = vadd.f32 %v1993, %v2445
      %v2534 = vadd.f32 %v1998, %v2450
      %v2535 = vadd.f32 %v2001, %v2453
      %v2536 = vadd.f32 %v2006, %v2458
      %v2537 = vadd.f32 %v2009, %v2461
      %v2538 = vadd.f32 %v2014, %v2466
      %v2539 = vadd.f32 %v2017, %v2469
      %v2540 = vadd.f32 %v2022, %v2474
      %v2541 = vadd.f32 %v2025, %v2477
      %v2542 = vadd.f32 %v2030, %v2482
      %v2543 = vadd.f32 %v2033, %v2485
      %v2544 = vadd.f32 %v2038, %v2490
      %v2545 = vadd.f32 %v2041, %v2493
      %v2546 = vadd.f32 %v2046, %v2498
      %v2547 = vadd.f32 %v2049, %v2501
      %v2548 = vadd.f32 %v2054, %v2506
      %v2549 = vadd.f32 %v2057, %v2509
      %v2550 = vadd.f32 %v2062, %v2514
      %v2551 = vadd.f32 %v2065, %v2517
      %v2552 = vld [vmem:[%s389] sm:$0xf]
      %v2553 = vld [vmem:[%s389 + $0x4] sm:$0xf]
      %v2554 = vld [vmem:[%s389 + $0xc] sm:$0xf]
      %v2555 = vld [vmem:[%s389 + $0x10] sm:$0xf]
      %v2556 = vld [vmem:[%s389 + $0x18] sm:$0xf]
      %v2557 = vld [vmem:[%s389 + $0x1c] sm:$0xf]
      %v2558 = vld [vmem:[%s389 + $0x24] sm:$0xf]
      %v2559 = vld [vmem:[%s389 + $0x28] sm:$0xf]
      %v2560 = vld [vmem:[%s389 + $0x30] sm:$0xf]
      %v2561 = vld [vmem:[%s389 + $0x34] sm:$0xf]
      %v2562 = vld [vmem:[%s389 + $0x3c] sm:$0xf]
      %v2563 = vld [vmem:[%s389 + $0x40] sm:$0xf]
      %v2564 = vld [vmem:[%s389 + $0x48] sm:$0xf]
      %v2565 = vld [vmem:[%s389 + $0x4c] sm:$0xf]
      %v2566 = vld [vmem:[%s389 + $0x54] sm:$0xf]
      %v2567 = vld [vmem:[%s389 + $0x58] sm:$0xf]
      %v2568 = vld [vmem:[%s389 + $0x60] sm:$0xf]
      %v2569 = vld [vmem:[%s389 + $0x64] sm:$0xf]
      %v2570 = vld [vmem:[%s389 + $0x6c] sm:$0xf]
      %v2571 = vld [vmem:[%s389 + $0x70] sm:$0xf]
      %v2572 = vld [vmem:[%s389 + $0x78] sm:$0xf]
      %v2573 = vld [vmem:[%s389 + $0x7c] sm:$0xf]
      %v2574 = vld [vmem:[%s389 + $0x84] sm:$0xf]
      %v2575 = vld [vmem:[%s389 + $0x88] sm:$0xf]
      %v2576 = vld [vmem:[%s389 + $0x90] sm:$0xf]
      %v2577 = vld [vmem:[%s389 + $0x94] sm:$0xf]
      %v2578 = vld [vmem:[%s389 + $0x9c] sm:$0xf]
      %v2579 = vld [vmem:[%s389 + $0xa0] sm:$0xf]
      %v2580 = vld [vmem:[%s389 + $0xa8] sm:$0xf]
      %v2581 = vld [vmem:[%s389 + $0xac] sm:$0xf]
      %v2582 = vld [vmem:[%s389 + $0xb4] sm:$0xf]
      %v2583 = vld [vmem:[%s389 + $0xb8] sm:$0xf]
      %v2584 = vld [vmem:[%s3 + $0xc0] sm:$0xf]
      %v2585 = vld [vmem:[%s3 + $0xc4] sm:$0xf]
      %v2586 = vld [vmem:[%s3 + $0xc8] sm:$0xf]
      %v2587 = vld [vmem:[%s3 + $0xcc] sm:$0xf]
      %v2588 = vld [vmem:[%s3 + $0xd0] sm:$0xf]
      %v2589 = vld [vmem:[%s3 + $0xd4] sm:$0xf]
      %v2590 = vld [vmem:[%s3 + $0xd8] sm:$0xf]
      %v2591 = vld [vmem:[%s3 + $0xdc] sm:$0xf]
      %v2592 = vld [vmem:[%s3 + $0xe0] sm:$0xf]
      %v2593 = vld [vmem:[%s3 + $0xe4] sm:$0xf]
      %v2594 = vld [vmem:[%s3 + $0xe8] sm:$0xf]
      %v2595 = vld [vmem:[%s3 + $0xec] sm:$0xf]
      %v2596 = vld [vmem:[%s3 + $0xf0] sm:$0xf]
      %v2597 = vld [vmem:[%s3 + $0xf4] sm:$0xf]
      %v2598 = vld [vmem:[%s3 + $0xf8] sm:$0xf]
      %v2599 = vld [vmem:[%s3 + $0xfc] sm:$0xf]
      %v2632 = vunpack.c.l.b16 %v2552
      %v2633 = vunpack.c.l.b16 %v2553
      %v2634 = vunpack.c.l.b16 %v2554
      %v2635 = vunpack.c.l.b16 %v2555
      %v2636 = vunpack.c.l.b16 %v2556
      %v2637 = vunpack.c.l.b16 %v2557
      %v2638 = vunpack.c.l.b16 %v2558
      %v2639 = vunpack.c.l.b16 %v2559
      %v2640 = vunpack.c.l.b16 %v2560
      %v2641 = vunpack.c.l.b16 %v2561
      %v2642 = vunpack.c.l.b16 %v2562
      %v2643 = vunpack.c.l.b16 %v2563
      %v2644 = vunpack.c.l.b16 %v2564
      %v2645 = vunpack.c.l.b16 %v2565
      %v2646 = vunpack.c.l.b16 %v2566
      %v2647 = vunpack.c.l.b16 %v2567
      %v2648 = vunpack.c.l.b16 %v2568
      %v2649 = vunpack.c.l.b16 %v2569
      %v2650 = vunpack.c.l.b16 %v2570
      %v2651 = vunpack.c.l.b16 %v2571
      %v2652 = vunpack.c.l.b16 %v2572
      %v2653 = vunpack.c.l.b16 %v2573
      %v2654 = vunpack.c.l.b16 %v2574
      %v2655 = vunpack.c.l.b16 %v2575
      %v2656 = vunpack.c.l.b16 %v2576
      %v2657 = vunpack.c.l.b16 %v2577
      %v2658 = vunpack.c.l.b16 %v2578
      %v2659 = vunpack.c.l.b16 %v2579
      %v2660 = vunpack.c.l.b16 %v2580
      %v2661 = vunpack.c.l.b16 %v2581
      %v2662 = vunpack.c.l.b16 %v2582
      %v2663 = vunpack.c.l.b16 %v2583
      %v2664 = vpack.c.b16 %v2633, %v2632
      %v2665 = vpack.c.b16 %v2635, %v2634
      %v2666 = vpack.c.b16 %v2637, %v2636
      %v2667 = vpack.c.b16 %v2639, %v2638
      %v2668 = vpack.c.b16 %v2641, %v2640
      %v2669 = vpack.c.b16 %v2643, %v2642
      %v2670 = vpack.c.b16 %v2645, %v2644
      %v2671 = vpack.c.b16 %v2647, %v2646
      %v2672 = vpack.c.b16 %v2649, %v2648
      %v2673 = vpack.c.b16 %v2651, %v2650
      %v2674 = vpack.c.b16 %v2653, %v2652
      %v2675 = vpack.c.b16 %v2655, %v2654
      %v2676 = vpack.c.b16 %v2657, %v2656
      %v2677 = vpack.c.b16 %v2659, %v2658
      %v2678 = vpack.c.b16 %v2661, %v2660
      %v2679 = vpack.c.b16 %v2663, %v2662
      %v2712 = vunpack.c.l.b16 %v2584
      %v2713 = vunpack.c.l.b16 %v2585
      %v2714 = vunpack.c.l.b16 %v2586
      %v2715 = vunpack.c.l.b16 %v2587
      %v2716 = vunpack.c.l.b16 %v2588
      %v2717 = vunpack.c.l.b16 %v2589
      %v2718 = vunpack.c.l.b16 %v2590
      %v2719 = vunpack.c.l.b16 %v2591
      %v2720 = vunpack.c.l.b16 %v2592
      %v2721 = vunpack.c.l.b16 %v2593
      %v2722 = vunpack.c.l.b16 %v2594
      %v2723 = vunpack.c.l.b16 %v2595
      %v2724 = vunpack.c.l.b16 %v2596
      %v2725 = vunpack.c.l.b16 %v2597
      %v2726 = vunpack.c.l.b16 %v2598
      %v2727 = vunpack.c.l.b16 %v2599
      %v2728 = vpack.c.b16 %v2713, %v2712
      %v2729 = vpack.c.b16 %v2715, %v2714
      %v2730 = vpack.c.b16 %v2717, %v2716
      %v2731 = vpack.c.b16 %v2719, %v2718
      %v2732 = vpack.c.b16 %v2721, %v2720
      %v2733 = vpack.c.b16 %v2723, %v2722
      %v2734 = vpack.c.b16 %v2725, %v2724
      %v2735 = vpack.c.b16 %v2727, %v2726
      %2744 = vmatprep.subr.bf16.mxu0 0
      %2745 = vmatpush1.bf16.msra.mxu0 %v2728
      %2746 = vmatprep.subr.bf16.mxu0 0
      %2747 = vmatpush1.bf16.msra.mxu0 %v2729
      %2748 = vmatprep.subr.bf16.mxu0 0
      %2749 = vmatpush1.bf16.msra.mxu0 %v2730
      %2750 = vmatprep.subr.bf16.mxu0 0
      %2751 = vmatpush1.bf16.msra.mxu0 %v2731
      %2752 = vmatprep.subr.bf16.mxu0 0
      %2753 = vmatpush1.bf16.msra.mxu0 %v2732
      %2754 = vmatprep.subr.bf16.mxu0 0
      %2755 = vmatpush1.bf16.msra.mxu0 %v2733
      %2756 = vmatprep.subr.bf16.mxu0 0
      %2757 = vmatpush1.bf16.msra.mxu0 %v2734
      %2758 = vmatprep.subr.bf16.mxu0 0
      %2759 = vmatpush1.bf16.msra.mxu0 %v2735
      %2760 = vmatprep.subr.bf16.mxu0 0
      %2761 = vmatpush1.bf16.msra.mxu0 0
      %2762 = vmatprep.subr.bf16.mxu0 0
      %2763 = vmatpush1.bf16.msra.mxu0 0
      %2764 = vmatprep.subr.bf16.mxu0 0
      %2765 = vmatpush1.bf16.msra.mxu0 0
      %2766 = vmatprep.subr.bf16.mxu0 0
      %2767 = vmatpush1.bf16.msra.mxu0 0
      %2768 = vmatprep.subr.bf16.mxu0 0
      %2769 = vmatpush1.bf16.msra.mxu0 0
      %2770 = vmatprep.subr.bf16.mxu0 0
      %2771 = vmatpush1.bf16.msra.mxu0 0
      %2772 = vmatprep.subr.bf16.mxu0 0
      %2773 = vmatpush1.bf16.msra.mxu0 0
      %2774 = vmatprep.subr.bf16.mxu0 0
      %2775 = vmatpush1.bf16.msra.mxu0 0
      %2776 = vmatprep.mubr.bf16.mxu0 0
      %2777 = vmatmul.mubr.bf16.gmra.mrb[0].mxu0 %v2664
      %v2778 = vpop.f32.mrb[0].mxu0
      %v2779 = vadd.f32 0.0, %v2778
      %v2780 = vpop.f32.mrb[0].mxu0
      %v2781 = vpop.f32.mrb[0].mxu0
      %v2782 = vadd.f32 0.0, %v2781
      %v2783 = vpop.f32.mrb[0].mxu0
      %2784 = vmatprep.mubr.bf16.mxu0 0
      %2785 = vmatmul.mubr.bf16.gmra.mrb[0].mxu0 %v2665
      %v2786 = vpop.f32.mrb[0].mxu0
      %v2787 = vadd.f32 0.0, %v2786
      %v2788 = vpop.f32.mrb[0].mxu0
      %v2789 = vpop.f32.mrb[0].mxu0
      %v2790 = vadd.f32 0.0, %v2789
      %v2791 = vpop.f32.mrb[0].mxu0
      %2792 = vmatprep.mubr.bf16.mxu0 0
      %2793 = vmatmul.mubr.bf16.gmra.mrb[0].mxu0 %v2666
      %v2794 = vpop.f32.mrb[0].mxu0
      %v2795 = vadd.f32 0.0, %v2794
      %v2796 = vpop.f32.mrb[0].mxu0
      %v2797 = vpop.f32.mrb[0].mxu0
      %v2798 = vadd.f32 0.0, %v2797
      %v2799 = vpop.f32.mrb[0].mxu0
      %2800 = vmatprep.mubr.bf16.mxu0 0
      %2801 = vmatmul.mubr.bf16.gmra.mrb[0].mxu0 %v2667
      %v2802 = vpop.f32.mrb[0].mxu0
      %v2803 = vadd.f32 0.0, %v2802
      %v2804 = vpop.f32.mrb[0].mxu0
      %v2805 = vpop.f32.mrb[0].mxu0
      %v2806 = vadd.f32 0.0, %v2805
      %v2807 = vpop.f32.mrb[0].mxu0
      %2808 = vmatprep.mubr.bf16.mxu0 0
      %2809 = vmatmul.mubr.bf16.gmra.mrb[0].mxu0 %v2668
      %v2810 = vpop.f32.mrb[0].mxu0
      %v2811 = vadd.f32 0.0, %v2810
      %v2812 = vpop.f32.mrb[0].mxu0
      %v2813 = vpop.f32.mrb[0].mxu0
      %v2814 = vadd.f32 0.0, %v2813
      %v2815 = vpop.f32.mrb[0].mxu0
      %2816 = vmatprep.mubr.bf16.mxu0 0
      %2817 = vmatmul.mubr.bf16.gmra.mrb[0].mxu0 %v2669
      %v2818 = vpop.f32.mrb[0].mxu0
      %v2819 = vadd.f32 0.0, %v2818
      %v2820 = vpop.f32.mrb[0].mxu0
      %v2821 = vpop.f32.mrb[0].mxu0
      %v2822 = vadd.f32 0.0, %v2821
      %v2823 = vpop.f32.mrb[0].mxu0
      %2824 = vmatprep.mubr.bf16.mxu0 0
      %2825 = vmatmul.mubr.bf16.gmra.mrb[0].mxu0 %v2670
      %v2826 = vpop.f32.mrb[0].mxu0
      %v2827 = vadd.f32 0.0, %v2826
      %v2828 = vpop.f32.mrb[0].mxu0
      %v2829 = vpop.f32.mrb[0].mxu0
      %v2830 = vadd.f32 0.0, %v2829
      %v2831 = vpop.f32.mrb[0].mxu0
      %2832 = vmatprep.mubr.bf16.mxu0 0
      %2833 = vmatmul.mubr.bf16.gmra.mrb[0].mxu0 %v2671
      %v2834 = vpop.f32.mrb[0].mxu0
      %v2835 = vadd.f32 0.0, %v2834
      %v2836 = vpop.f32.mrb[0].mxu0
      %v2837 = vpop.f32.mrb[0].mxu0
      %v2838 = vadd.f32 0.0, %v2837
      %v2839 = vpop.f32.mrb[0].mxu0
      %2840 = vmatprep.mubr.bf16.mxu0 0
      %2841 = vmatmul.mubr.bf16.gmra.mrb[0].mxu0 %v2672
      %v2842 = vpop.f32.mrb[0].mxu0
      %v2843 = vadd.f32 0.0, %v2842
      %v2844 = vpop.f32.mrb[0].mxu0
      %v2845 = vpop.f32.mrb[0].mxu0
      %v2846 = vadd.f32 0.0, %v2845
      %v2847 = vpop.f32.mrb[0].mxu0
      %2848 = vmatprep.mubr.bf16.mxu0 0
      %2849 = vmatmul.mubr.bf16.gmra.mrb[0].mxu0 %v2673
      %v2850 = vpop.f32.mrb[0].mxu0
      %v2851 = vadd.f32 0.0, %v2850
      %v2852 = vpop.f32.mrb[0].mxu0
      %v2853 = vpop.f32.mrb[0].mxu0
      %v2854 = vadd.f32 0.0, %v2853
      %v2855 = vpop.f32.mrb[0].mxu0
      %2856 = vmatprep.mubr.bf16.mxu0 0
      %2857 = vmatmul.mubr.bf16.gmra.mrb[0].mxu0 %v2674
      %v2858 = vpop.f32.mrb[0].mxu0
      %v2859 = vadd.f32 0.0, %v2858
      %v2860 = vpop.f32.mrb[0].mxu0
      %v2861 = vpop.f32.mrb[0].mxu0
      %v2862 = vadd.f32 0.0, %v2861
      %v2863 = vpop.f32.mrb[0].mxu0
      %2864 = vmatprep.mubr.bf16.mxu0 0
      %2865 = vmatmul.mubr.bf16.gmra.mrb[0].mxu0 %v2675
      %v2866 = vpop.f32.mrb[0].mxu0
      %v2867 = vadd.f32 0.0, %v2866
      %v2868 = vpop.f32.mrb[0].mxu0
      %v2869 = vpop.f32.mrb[0].mxu0
      %v2870 = vadd.f32 0.0, %v2869
      %v2871 = vpop.f32.mrb[0].mxu0
      %2872 = vmatprep.mubr.bf16.mxu0 0
      %2873 = vmatmul.mubr.bf16.gmra.mrb[0].mxu0 %v2676
      %v2874 = vpop.f32.mrb[0].mxu0
      %v2875 = vadd.f32 0.0, %v2874
      %v2876 = vpop.f32.mrb[0].mxu0
      %v2877 = vpop.f32.mrb[0].mxu0
      %v2878 = vadd.f32 0.0, %v2877
      %v2879 = vpop.f32.mrb[0].mxu0
      %2880 = vmatprep.mubr.bf16.mxu0 0
      %2881 = vmatmul.mubr.bf16.gmra.mrb[0].mxu0 %v2677
      %v2882 = vpop.f32.mrb[0].mxu0
      %v2883 = vadd.f32 0.0, %v2882
      %v2884 = vpop.f32.mrb[0].mxu0
      %v2885 = vpop.f32.mrb[0].mxu0
      %v2886 = vadd.f32 0.0, %v2885
      %v2887 = vpop.f32.mrb[0].mxu0
      %2888 = vmatprep.mubr.bf16.mxu0 0
      %2889 = vmatmul.mubr.bf16.gmra.mrb[0].mxu0 %v2678
      %v2890 = vpop.f32.mrb[0].mxu0
      %v2891 = vadd.f32 0.0, %v2890
      %v2892 = vpop.f32.mrb[0].mxu0
      %v2893 = vpop.f32.mrb[0].mxu0
      %v2894 = vadd.f32 0.0, %v2893
      %v2895 = vpop.f32.mrb[0].mxu0
      %2896 = vmatprep.mubr.bf16.mxu0 0
      %2897 = vmatmul.mubr.bf16.gmra.mrb[0].mxu0 %v2679
      %v2898 = vpop.f32.mrb[0].mxu0
      %v2899 = vadd.f32 0.0, %v2898
      %v2900 = vpop.f32.mrb[0].mxu0
      %v2901 = vpop.f32.mrb[0].mxu0
      %v2902 = vadd.f32 0.0, %v2901
      %v2903 = vpop.f32.mrb[0].mxu0
      %2904 = vdwg.mxu0
      %v2905 = vadd.f32 %v2520, %v2779
      %v2906 = vadd.f32 %v2521, %v2782
      %v2907 = vadd.f32 %v2522, %v2787
      %v2908 = vadd.f32 %v2523, %v2790
      %v2909 = vadd.f32 %v2524, %v2795
      %v2910 = vadd.f32 %v2525, %v2798
      %v2911 = vadd.f32 %v2526, %v2803
      %v2912 = vadd.f32 %v2527, %v2806
      %v2913 = vadd.f32 %v2528, %v2811
      %v2914 = vadd.f32 %v2529, %v2814
      %v2915 = vadd.f32 %v2530, %v2819
      %v2916 = vadd.f32 %v2531, %v2822
      %v2917 = vadd.f32 %v2532, %v2827
      %v2918 = vadd.f32 %v2533, %v2830
      %v2919 = vadd.f32 %v2534, %v2835
      %v2920 = vadd.f32 %v2535, %v2838
      %v2921 = vadd.f32 %v2536, %v2843
      %v2922 = vadd.f32 %v2537, %v2846
      %v2923 = vadd.f32 %v2538, %v2851
      %v2924 = vadd.f32 %v2539, %v2854
      %v2925 = vadd.f32 %v2540, %v2859
      %v2926 = vadd.f32 %v2541, %v2862
      %v2927 = vadd.f32 %v2542, %v2867
      %v2928 = vadd.f32 %v2543, %v2870
      %v2929 = vadd.f32 %v2544, %v2875
      %v2930 = vadd.f32 %v2545, %v2878
      %v2931 = vadd.f32 %v2546, %v2883
      %v2932 = vadd.f32 %v2547, %v2886
      %v2933 = vadd.f32 %v2548, %v2891
      %v2934 = vadd.f32 %v2549, %v2894
      %v2935 = vadd.f32 %v2550, %v2899
      %v2936 = vadd.f32 %v2551, %v2902
      %v2937 = vld [vmem:[%s389] sm:$0xf]
      %v2938 = vld [vmem:[%s389 + $0x4] sm:$0xf]
      %v2939 = vld [vmem:[%s389 + $0x8] sm:$0x1]
      %v2940 = vld [vmem:[%s389 + $0xc] sm:$0xf]
      %v2941 = vld [vmem:[%s389 + $0x10] sm:$0xf]
      %v2942 = vld [vmem:[%s389 + $0x14] sm:$0x1]
      %v2943 = vld [vmem:[%s389 + $0x18] sm:$0xf]
      %v2944 = vld [vmem:[%s389 + $0x1c] sm:$0xf]
      %v2945 = vld [vmem:[%s389 + $0x20] sm:$0x1]
      %v2946 = vld [vmem:[%s389 + $0x24] sm:$0xf]
      %v2947 = vld [vmem:[%s389 + $0x28] sm:$0xf]
      %v2948 = vld [vmem:[%s389 + $0x2c] sm:$0x1]
      %v2949 = vld [vmem:[%s389 + $0x30] sm:$0xf]
      %v2950 = vld [vmem:[%s389 + $0x34] sm:$0xf]
      %v2951 = vld [vmem:[%s389 + $0x38] sm:$0x1]
      %v2952 = vld [vmem:[%s389 + $0x3c] sm:$0xf]
      %v2953 = vld [vmem:[%s389 + $0x40] sm:$0xf]
      %v2954 = vld [vmem:[%s389 + $0x44] sm:$0x1]
      %v2955 = vld [vmem:[%s389 + $0x48] sm:$0xf]
      %v2956 = vld [vmem:[%s389 + $0x4c] sm:$0xf]
      %v2957 = vld [vmem:[%s389 + $0x50] sm:$0x1]
      %v2958 = vld [vmem:[%s389 + $0x54] sm:$0xf]
      %v2959 = vld [vmem:[%s389 + $0x58] sm:$0xf]
      %v2960 = vld [vmem:[%s389 + $0x5c] sm:$0x1]
      %v2961 = vld [vmem:[%s389 + $0x60] sm:$0xf]
      %v2962 = vld [vmem:[%s389 + $0x64] sm:$0xf]
      %v2963 = vld [vmem:[%s389 + $0x68] sm:$0x1]
      %v2964 = vld [vmem:[%s389 + $0x6c] sm:$0xf]
      %v2965 = vld [vmem:[%s389 + $0x70] sm:$0xf]
      %v2966 = vld [vmem:[%s389 + $0x74] sm:$0x1]
      %v2967 = vld [vmem:[%s389 + $0x78] sm:$0xf]
      %v2968 = vld [vmem:[%s389 + $0x7c] sm:$0xf]
      %v2969 = vld [vmem:[%s389 + $0x80] sm:$0x1]
      %v2970 = vld [vmem:[%s389 + $0x84] sm:$0xf]
      %v2971 = vld [vmem:[%s389 + $0x88] sm:$0xf]
      %v2972 = vld [vmem:[%s389 + $0x8c] sm:$0x1]
      %v2973 = vld [vmem:[%s389 + $0x90] sm:$0xf]
      %v2974 = vld [vmem:[%s389 + $0x94] sm:$0xf]
      %v2975 = vld [vmem:[%s389 + $0x98] sm:$0x1]
      %v2976 = vld [vmem:[%s389 + $0x9c] sm:$0xf]
      %v2977 = vld [vmem:[%s389 + $0xa0] sm:$0xf]
      %v2978 = vld [vmem:[%s389 + $0xa4] sm:$0x1]
      %v2979 = vld [vmem:[%s389 + $0xa8] sm:$0xf]
      %v2980 = vld [vmem:[%s389 + $0xac] sm:$0xf]
      %v2981 = vld [vmem:[%s389 + $0xb0] sm:$0x1]
      %v2982 = vld [vmem:[%s389 + $0xb4] sm:$0xf]
      %v2983 = vld [vmem:[%s389 + $0xb8] sm:$0xf]
      %v2984 = vld [vmem:[%s389 + $0xbc] sm:$0x1]
      %v2986 = vshrl.u32 %v2937, 16
      %v2988 = vrot.slane %v2986, 4
      %v2989 = vshll.u32 %v2937, 16
      %v2991 = vrot.slane %v2989, 5
      %v2992 = vor.u32 %v2988, %v2991
      %v2993 = vrot.slane %v2992, 4
      %v2995 = vshll.u32 %v2938, 16
      %v2997 = vrot.slane %v2995, 5
      %v2998 = vsel %vm1089, %v2993, %v2997
      %v2999 = vshrl.u32 %v2938, 16
      %v3001 = vrot.slane %v2999, 4
      %v3002 = vor.u32 %v3001, %v2997
      %v3003 = vrot.slane %v3002, 4
      %v3005 = vshll.u32 %v2939, 16
      %v3007 = vrot.slane %v3005, 5
      %v3008 = vsel %vm1089, %v3003, %v3007
      %v3010 = vshrl.u32 %v2940, 16
      %v3012 = vrot.slane %v3010, 4
      %v3013 = vshll.u32 %v2940, 16
      %v3015 = vrot.slane %v3013, 5
      %v3016 = vor.u32 %v3012, %v3015
      %v3017 = vrot.slane %v3016, 4
      %v3019 = vshll.u32 %v2941, 16
      %v3021 = vrot.slane %v3019, 5
      %v3022 = vsel %vm1089, %v3017, %v3021
      %v3023 = vshrl.u32 %v2941, 16
      %v3025 = vrot.slane %v3023, 4
      %v3026 = vor.u32 %v3025, %v3021
      %v3027 = vrot.slane %v3026, 4
      %v3029 = vshll.u32 %v2942, 16
      %v3031 = vrot.slane %v3029, 5
      %v3032 = vsel %vm1089, %v3027, %v3031
      %v3034 = vshrl.u32 %v2943, 16
      %v3036 = vrot.slane %v3034, 4
      %v3037 = vshll.u32 %v2943, 16
      %v3039 = vrot.slane %v3037, 5
      %v3040 = vor.u32 %v3036, %v3039
      %v3041 = vrot.slane %v3040, 4
      %v3043 = vshll.u32 %v2944, 16
      %v3045 = vrot.slane %v3043, 5
      %v3046 = vsel %vm1089, %v3041, %v3045
      %v3047 = vshrl.u32 %v2944, 16
      %v3049 = vrot.slane %v3047, 4
      %v3050 = vor.u32 %v3049, %v3045
      %v3051 = vrot.slane %v3050, 4
      %v3053 = vshll.u32 %v2945, 16
      %v3055 = vrot.slane %v3053, 5
      %v3056 = vsel %vm1089, %v3051, %v3055
      %v3058 = vshrl.u32 %v2946, 16
      %v3060 = vrot.slane %v3058, 4
      %v3061 = vshll.u32 %v2946, 16
      %v3063 = vrot.slane %v3061, 5
      %v3064 = vor.u32 %v3060, %v3063
      %v3065 = vrot.slane %v3064, 4
      %v3067 = vshll.u32 %v2947, 16
      %v3069 = vrot.slane %v3067, 5
      %v3070 = vsel %vm1089, %v3065, %v3069
      %v3071 = vshrl.u32 %v2947, 16
      %v3073 = vrot.slane %v3071, 4
      %v3074 = vor.u32 %v3073, %v3069
      %v3075 = vrot.slane %v3074, 4
      %v3077 = vshll.u32 %v2948, 16
      %v3079 = vrot.slane %v3077, 5
      %v3080 = vsel %vm1089, %v3075, %v3079
      %v3082 = vshrl.u32 %v2949, 16
      %v3084 = vrot.slane %v3082, 4
      %v3085 = vshll.u32 %v2949, 16
      %v3087 = vrot.slane %v3085, 5
      %v3088 = vor.u32 %v3084, %v3087
      %v3089 = vrot.slane %v3088, 4
      %v3091 = vshll.u32 %v2950, 16
      %v3093 = vrot.slane %v3091, 5
      %v3094 = vsel %vm1089, %v3089, %v3093
      %v3095 = vshrl.u32 %v2950, 16
      %v3097 = vrot.slane %v3095, 4
      %v3098 = vor.u32 %v3097, %v3093
      %v3099 = vrot.slane %v3098, 4
      %v3101 = vshll.u32 %v2951, 16
      %v3103 = vrot.slane %v3101, 5
      %v3104 = vsel %vm1089, %v3099, %v3103
      %v3106 = vshrl.u32 %v2952, 16
      %v3108 = vrot.slane %v3106, 4
      %v3109 = vshll.u32 %v2952, 16
      %v3111 = vrot.slane %v3109, 5
      %v3112 = vor.u32 %v3108, %v3111
      %v3113 = vrot.slane %v3112, 4
      %v3115 = vshll.u32 %v2953, 16
      %v3117 = vrot.slane %v3115, 5
      %v3118 = vsel %vm1089, %v3113, %v3117
      %v3119 = vshrl.u32 %v2953, 16
      %v3121 = vrot.slane %v3119, 4
      %v3122 = vor.u32 %v3121, %v3117
      %v3123 = vrot.slane %v3122, 4
      %v3125 = vshll.u32 %v2954, 16
      %v3127 = vrot.slane %v3125, 5
      %v3128 = vsel %vm1089, %v3123, %v3127
      %v3130 = vshrl.u32 %v2955, 16
      %v3132 = vrot.slane %v3130, 4
      %v3133 = vshll.u32 %v2955, 16
      %v3135 = vrot.slane %v3133, 5
      %v3136 = vor.u32 %v3132, %v3135
      %v3137 = vrot.slane %v3136, 4
      %v3139 = vshll.u32 %v2956, 16
      %v3141 = vrot.slane %v3139, 5
      %v3142 = vsel %vm1089, %v3137, %v3141
      %v3143 = vshrl.u32 %v2956, 16
      %v3145 = vrot.slane %v3143, 4
      %v3146 = vor.u32 %v3145, %v3141
      %v3147 = vrot.slane %v3146, 4
      %v3149 = vshll.u32 %v2957, 16
      %v3151 = vrot.slane %v3149, 5
      %v3152 = vsel %vm1089, %v3147, %v3151
      %v3154 = vshrl.u32 %v2958, 16
      %v3156 = vrot.slane %v3154, 4
      %v3157 = vshll.u32 %v2958, 16
      %v3159 = vrot.slane %v3157, 5
      %v3160 = vor.u32 %v3156, %v3159
      %v3161 = vrot.slane %v3160, 4
      %v3163 = vshll.u32 %v2959, 16
      %v3165 = vrot.slane %v3163, 5
      %v3166 = vsel %vm1089, %v3161, %v3165
      %v3167 = vshrl.u32 %v2959, 16
      %v3169 = vrot.slane %v3167, 4
      %v3170 = vor.u32 %v3169, %v3165
      %v3171 = vrot.slane %v3170, 4
      %v3173 = vshll.u32 %v2960, 16
      %v3175 = vrot.slane %v3173, 5
      %v3176 = vsel %vm1089, %v3171, %v3175
      %v3178 = vshrl.u32 %v2961, 16
      %v3180 = vrot.slane %v3178, 4
      %v3181 = vshll.u32 %v2961, 16
      %v3183 = vrot.slane %v3181, 5
      %v3184 = vor.u32 %v3180, %v3183
      %v3185 = vrot.slane %v3184, 4
      %v3187 = vshll.u32 %v2962, 16
      %v3189 = vrot.slane %v3187, 5
      %v3190 = vsel %vm1089, %v3185, %v3189
      %v3191 = vshrl.u32 %v2962, 16
      %v3193 = vrot.slane %v3191, 4
      %v3194 = vor.u32 %v3193, %v3189
      %v3195 = vrot.slane %v3194, 4
      %v3197 = vshll.u32 %v2963, 16
      %v3199 = vrot.slane %v3197, 5
      %v3200 = vsel %vm1089, %v3195, %v3199
      %v3202 = vshrl.u32 %v2964, 16
      %v3204 = vrot.slane %v3202, 4
      %v3205 = vshll.u32 %v2964, 16
      %v3207 = vrot.slane %v3205, 5
      %v3208 = vor.u32 %v3204, %v3207
      %v3209 = vrot.slane %v3208, 4
      %v3211 = vshll.u32 %v2965, 16
      %v3213 = vrot.slane %v3211, 5
      %v3214 = vsel %vm1089, %v3209, %v3213
      %v3215 = vshrl.u32 %v2965, 16
      %v3217 = vrot.slane %v3215, 4
      %v3218 = vor.u32 %v3217, %v3213
      %v3219 = vrot.slane %v3218, 4
      %v3221 = vshll.u32 %v2966, 16
      %v3223 = vrot.slane %v3221, 5
      %v3224 = vsel %vm1089, %v3219, %v3223
      %v3226 = vshrl.u32 %v2967, 16
      %v3228 = vrot.slane %v3226, 4
      %v3229 = vshll.u32 %v2967, 16
      %v3231 = vrot.slane %v3229, 5
      %v3232 = vor.u32 %v3228, %v3231
      %v3233 = vrot.slane %v3232, 4
      %v3235 = vshll.u32 %v2968, 16
      %v3237 = vrot.slane %v3235, 5
      %v3238 = vsel %vm1089, %v3233, %v3237
      %v3239 = vshrl.u32 %v2968, 16
      %v3241 = vrot.slane %v3239, 4
      %v3242 = vor.u32 %v3241, %v3237
      %v3243 = vrot.slane %v3242, 4
      %v3245 = vshll.u32 %v2969, 16
      %v3247 = vrot.slane %v3245, 5
      %v3248 = vsel %vm1089, %v3243, %v3247
      %v3250 = vshrl.u32 %v2970, 16
      %v3252 = vrot.slane %v3250, 4
      %v3253 = vshll.u32 %v2970, 16
      %v3255 = vrot.slane %v3253, 5
      %v3256 = vor.u32 %v3252, %v3255
      %v3257 = vrot.slane %v3256, 4
      %v3259 = vshll.u32 %v2971, 16
      %v3261 = vrot.slane %v3259, 5
      %v3262 = vsel %vm1089, %v3257, %v3261
      %v3263 = vshrl.u32 %v2971, 16
      %v3265 = vrot.slane %v3263, 4
      %v3266 = vor.u32 %v3265, %v3261
      %v3267 = vrot.slane %v3266, 4
      %v3269 = vshll.u32 %v2972, 16
      %v3271 = vrot.slane %v3269, 5
      %v3272 = vsel %vm1089, %v3267, %v3271
      %v3274 = vshrl.u32 %v2973, 16
      %v3276 = vrot.slane %v3274, 4
      %v3277 = vshll.u32 %v2973, 16
      %v3279 = vrot.slane %v3277, 5
      %v3280 = vor.u32 %v3276, %v3279
      %v3281 = vrot.slane %v3280, 4
      %v3283 = vshll.u32 %v2974, 16
      %v3285 = vrot.slane %v3283, 5
      %v3286 = vsel %vm1089, %v3281, %v3285
      %v3287 = vshrl.u32 %v2974, 16
      %v3289 = vrot.slane %v3287, 4
      %v3290 = vor.u32 %v3289, %v3285
      %v3291 = vrot.slane %v3290, 4
      %v3293 = vshll.u32 %v2975, 16
      %v3295 = vrot.slane %v3293, 5
      %v3296 = vsel %vm1089, %v3291, %v3295
      %v3298 = vshrl.u32 %v2976, 16
      %v3300 = vrot.slane %v3298, 4
      %v3301 = vshll.u32 %v2976, 16
      %v3303 = vrot.slane %v3301, 5
      %v3304 = vor.u32 %v3300, %v3303
      %v3305 = vrot.slane %v3304, 4
      %v3307 = vshll.u32 %v2977, 16
      %v3309 = vrot.slane %v3307, 5
      %v3310 = vsel %vm1089, %v3305, %v3309
      %v3311 = vshrl.u32 %v2977, 16
      %v3313 = vrot.slane %v3311, 4
      %v3314 = vor.u32 %v3313, %v3309
      %v3315 = vrot.slane %v3314, 4
      %v3317 = vshll.u32 %v2978, 16
      %v3319 = vrot.slane %v3317, 5
      %v3320 = vsel %vm1089, %v3315, %v3319
      %v3322 = vshrl.u32 %v2979, 16
      %v3324 = vrot.slane %v3322, 4
      %v3325 = vshll.u32 %v2979, 16
      %v3327 = vrot.slane %v3325, 5
      %v3328 = vor.u32 %v3324, %v3327
      %v3329 = vrot.slane %v3328, 4
      %v3331 = vshll.u32 %v2980, 16
      %v3333 = vrot.slane %v3331, 5
      %v3334 = vsel %vm1089, %v3329, %v3333
      %v3335 = vshrl.u32 %v2980, 16
      %v3337 = vrot.slane %v3335, 4
      %v3338 = vor.u32 %v3337, %v3333
      %v3339 = vrot.slane %v3338, 4
      %v3341 = vshll.u32 %v2981, 16
      %v3343 = vrot.slane %v3341, 5
      %v3344 = vsel %vm1089, %v3339, %v3343
      %v3346 = vshrl.u32 %v2982, 16
      %v3348 = vrot.slane %v3346, 4
      %v3349 = vshll.u32 %v2982, 16
      %v3351 = vrot.slane %v3349, 5
      %v3352 = vor.u32 %v3348, %v3351
      %v3353 = vrot.slane %v3352, 4
      %v3355 = vshll.u32 %v2983, 16
      %v3357 = vrot.slane %v3355, 5
      %v3358 = vsel %vm1089, %v3353, %v3357
      %v3359 = vshrl.u32 %v2983, 16
      %v3361 = vrot.slane %v3359, 4
      %v3362 = vor.u32 %v3361, %v3357
      %v3363 = vrot.slane %v3362, 4
      %v3365 = vshll.u32 %v2984, 16
      %v3367 = vrot.slane %v3365, 5
      %v3368 = vsel %vm1089, %v3363, %v3367
      %v3369 = vld [vmem:[%s3 + $0x100] sm:$0xf]
      %v3370 = vld [vmem:[%s3 + $0x104] sm:$0xf]
      %v3371 = vld [vmem:[%s3 + $0x108] sm:$0xf]
      %v3372 = vld [vmem:[%s3 + $0x10c] sm:$0xf]
      %v3373 = vld [vmem:[%s3 + $0x110] sm:$0xf]
      %v3374 = vld [vmem:[%s3 + $0x114] sm:$0xf]
      %v3375 = vld [vmem:[%s3 + $0x118] sm:$0xf]
      %v3376 = vld [vmem:[%s3 + $0x11c] sm:$0xf]
      %v3377 = vld [vmem:[%s3 + $0x120] sm:$0xf]
      %v3378 = vld [vmem:[%s3 + $0x124] sm:$0xf]
      %v3379 = vld [vmem:[%s3 + $0x128] sm:$0xf]
      %v3380 = vld [vmem:[%s3 + $0x12c] sm:$0xf]
      %v3381 = vld [vmem:[%s3 + $0x130] sm:$0xf]
      %v3382 = vld [vmem:[%s3 + $0x134] sm:$0xf]
      %v3383 = vld [vmem:[%s3 + $0x138] sm:$0xf]
      %v3384 = vld [vmem:[%s3 + $0x13c] sm:$0xf]
      %v3385 = vunpack.c.l.b16 %v2998
      %v3386 = vunpack.c.l.b16 %v3008
      %v3387 = vunpack.c.l.b16 %v3022
      %v3388 = vunpack.c.l.b16 %v3032
      %v3389 = vunpack.c.l.b16 %v3046
      %v3390 = vunpack.c.l.b16 %v3056
      %v3391 = vunpack.c.l.b16 %v3070
      %v3392 = vunpack.c.l.b16 %v3080
      %v3393 = vunpack.c.l.b16 %v3094
      %v3394 = vunpack.c.l.b16 %v3104
      %v3395 = vunpack.c.l.b16 %v3118
      %v3396 = vunpack.c.l.b16 %v3128
      %v3397 = vunpack.c.l.b16 %v3142
      %v3398 = vunpack.c.l.b16 %v3152
      %v3399 = vunpack.c.l.b16 %v3166
      %v3400 = vunpack.c.l.b16 %v3176
      %v3401 = vunpack.c.l.b16 %v3190
      %v3402 = vunpack.c.l.b16 %v3200
      %v3403 = vunpack.c.l.b16 %v3214
      %v3404 = vunpack.c.l.b16 %v3224
      %v3405 = vunpack.c.l.b16 %v3238
      %v3406 = vunpack.c.l.b16 %v3248
      %v3407 = vunpack.c.l.b16 %v3262
      %v3408 = vunpack.c.l.b16 %v3272
      %v3409 = vunpack.c.l.b16 %v3286
      %v3410 = vunpack.c.l.b16 %v3296
      %v3411 = vunpack.c.l.b16 %v3310
      %v3412 = vunpack.c.l.b16 %v3320
      %v3413 = vunpack.c.l.b16 %v3334
      %v3414 = vunpack.c.l.b16 %v3344
      %v3415 = vunpack.c.l.b16 %v3358
      %v3416 = vunpack.c.l.b16 %v3368
      %v3417 = vpack.c.b16 %v3386, %v3385
      %v3418 = vpack.c.b16 %v3388, %v3387
      %v3419 = vpack.c.b16 %v3390, %v3389
      %v3420 = vpack.c.b16 %v3392, %v3391
      %v3421 = vpack.c.b16 %v3394, %v3393
      %v3422 = vpack.c.b16 %v3396, %v3395
      %v3423 = vpack.c.b16 %v3398, %v3397
      %v3424 = vpack.c.b16 %v3400, %v3399
      %v3425 = vpack.c.b16 %v3402, %v3401
      %v3426 = vpack.c.b16 %v3404, %v3403
      %v3427 = vpack.c.b16 %v3406, %v3405
      %v3428 = vpack.c.b16 %v3408, %v3407
      %v3429 = vpack.c.b16 %v3410, %v3409
      %v3430 = vpack.c.b16 %v3412, %v3411
      %v3431 = vpack.c.b16 %v3414, %v3413
      %v3432 = vpack.c.b16 %v3416, %v3415
      %v3465 = vunpack.c.l.b16 %v3369
      %v3466 = vunpack.c.l.b16 %v3370
      %v3467 = vunpack.c.l.b16 %v3371
      %v3468 = vunpack.c.l.b16 %v3372
      %v3469 = vunpack.c.l.b16 %v3373
      %v3470 = vunpack.c.l.b16 %v3374
      %v3471 = vunpack.c.l.b16 %v3375
      %v3472 = vunpack.c.l.b16 %v3376
      %v3473 = vunpack.c.l.b16 %v3377
      %v3474 = vunpack.c.l.b16 %v3378
      %v3475 = vunpack.c.l.b16 %v3379
      %v3476 = vunpack.c.l.b16 %v3380
      %v3477 = vunpack.c.l.b16 %v3381
      %v3478 = vunpack.c.l.b16 %v3382
      %v3479 = vunpack.c.l.b16 %v3383
      %v3480 = vunpack.c.l.b16 %v3384
      %v3481 = vpack.c.b16 %v3466, %v3465
      %v3482 = vpack.c.b16 %v3468, %v3467
      %v3483 = vpack.c.b16 %v3470, %v3469
      %v3484 = vpack.c.b16 %v3472, %v3471
      %v3485 = vpack.c.b16 %v3474, %v3473
      %v3486 = vpack.c.b16 %v3476, %v3475
      %v3487 = vpack.c.b16 %v3478, %v3477
      %v3488 = vpack.c.b16 %v3480, %v3479
      %3497 = vmatprep.subr.bf16.mxu0 0
      %3498 = vmatpush1.bf16.msra.mxu0 %v3481
      %3499 = vmatprep.subr.bf16.mxu0 0
      %3500 = vmatpush1.bf16.msra.mxu0 %v3482
      %3501 = vmatprep.subr.bf16.mxu0 0
      %3502 = vmatpush1.bf16.msra.mxu0 %v3483
      %3503 = vmatprep.subr.bf16.mxu0 0
      %3504 = vmatpush1.bf16.msra.mxu0 %v3484
      %3505 = vmatprep.subr.bf16.mxu0 0
      %3506 = vmatpush1.bf16.msra.mxu0 %v3485
      %3507 = vmatprep.subr.bf16.mxu0 0
      %3508 = vmatpush1.bf16.msra.mxu0 %v3486
      %3509 = vmatprep.subr.bf16.mxu0 0
      %3510 = vmatpush1.bf16.msra.mxu0 %v3487
      %3511 = vmatprep.subr.bf16.mxu0 0
      %3512 = vmatpush1.bf16.msra.mxu0 %v3488
      %3513 = vmatprep.subr.bf16.mxu0 0
      %3514 = vmatpush1.bf16.msra.mxu0 0
      %3515 = vmatprep.subr.bf16.mxu0 0
      %3516 = vmatpush1.bf16.msra.mxu0 0
      %3517 = vmatprep.subr.bf16.mxu0 0
      %3518 = vmatpush1.bf16.msra.mxu0 0
      %3519 = vmatprep.subr.bf16.mxu0 0
      %3520 = vmatpush1.bf16.msra.mxu0 0
      %3521 = vmatprep.subr.bf16.mxu0 0
      %3522 = vmatpush1.bf16.msra.mxu0 0
      %3523 = vmatprep.subr.bf16.mxu0 0
      %3524 = vmatpush1.bf16.msra.mxu0 0
      %3525 = vmatprep.subr.bf16.mxu0 0
      %3526 = vmatpush1.bf16.msra.mxu0 0
      %3527 = vmatprep.subr.bf16.mxu0 0
      %3528 = vmatpush1.bf16.msra.mxu0 0
      %3529 = vmatprep.mubr.bf16.mxu0 0
      %3530 = vmatmul.mubr.bf16.gmra.mrb[0].mxu0 %v3417
      %v3531 = vpop.f32.mrb[0].mxu0
      %v3532 = vadd.f32 0.0, %v3531
      %v3533 = vpop.f32.mrb[0].mxu0
      %v3534 = vpop.f32.mrb[0].mxu0
      %v3535 = vadd.f32 0.0, %v3534
      %v3536 = vpop.f32.mrb[0].mxu0
      %3537 = vmatprep.mubr.bf16.mxu0 0
      %3538 = vmatmul.mubr.bf16.gmra.mrb[0].mxu0 %v3418
      %v3539 = vpop.f32.mrb[0].mxu0
      %v3540 = vadd.f32 0.0, %v3539
      %v3541 = vpop.f32.mrb[0].mxu0
      %v3542 = vpop.f32.mrb[0].mxu0
      %v3543 = vadd.f32 0.0, %v3542
      %v3544 = vpop.f32.mrb[0].mxu0
      %3545 = vmatprep.mubr.bf16.mxu0 0
      %3546 = vmatmul.mubr.bf16.gmra.mrb[0].mxu0 %v3419
      %v3547 = vpop.f32.mrb[0].mxu0
      %v3548 = vadd.f32 0.0, %v3547
      %v3549 = vpop.f32.mrb[0].mxu0
      %v3550 = vpop.f32.mrb[0].mxu0
      %v3551 = vadd.f32 0.0, %v3550
      %v3552 = vpop.f32.mrb[0].mxu0
      %3553 = vmatprep.mubr.bf16.mxu0 0
      %3554 = vmatmul.mubr.bf16.gmra.mrb[0].mxu0 %v3420
      %v3555 = vpop.f32.mrb[0].mxu0
      %v3556 = vadd.f32 0.0, %v3555
      %v3557 = vpop.f32.mrb[0].mxu0
      %v3558 = vpop.f32.mrb[0].mxu0
      %v3559 = vadd.f32 0.0, %v3558
      %v3560 = vpop.f32.mrb[0].mxu0
      %3561 = vmatprep.mubr.bf16.mxu0 0
      %3562 = vmatmul.mubr.bf16.gmra.mrb[0].mxu0 %v3421
      %v3563 = vpop.f32.mrb[0].mxu0
      %v3564 = vadd.f32 0.0, %v3563
      %v3565 = vpop.f32.mrb[0].mxu0
      %v3566 = vpop.f32.mrb[0].mxu0
      %v3567 = vadd.f32 0.0, %v3566
      %v3568 = vpop.f32.mrb[0].mxu0
      %3569 = vmatprep.mubr.bf16.mxu0 0
      %3570 = vmatmul.mubr.bf16.gmra.mrb[0].mxu0 %v3422
      %v3571 = vpop.f32.mrb[0].mxu0
      %v3572 = vadd.f32 0.0, %v3571
      %v3573 = vpop.f32.mrb[0].mxu0
      %v3574 = vpop.f32.mrb[0].mxu0
      %v3575 = vadd.f32 0.0, %v3574
      %v3576 = vpop.f32.mrb[0].mxu0
      %3577 = vmatprep.mubr.bf16.mxu0 0
      %3578 = vmatmul.mubr.bf16.gmra.mrb[0].mxu0 %v3423
      %v3579 = vpop.f32.mrb[0].mxu0
      %v3580 = vadd.f32 0.0, %v3579
      %v3581 = vpop.f32.mrb[0].mxu0
      %v3582 = vpop.f32.mrb[0].mxu0
      %v3583 = vadd.f32 0.0, %v3582
      %v3584 = vpop.f32.mrb[0].mxu0
      %3585 = vmatprep.mubr.bf16.mxu0 0
      %3586 = vmatmul.mubr.bf16.gmra.mrb[0].mxu0 %v3424
      %v3587 = vpop.f32.mrb[0].mxu0
      %v3588 = vadd.f32 0.0, %v3587
      %v3589 = vpop.f32.mrb[0].mxu0
      %v3590 = vpop.f32.mrb[0].mxu0
      %v3591 = vadd.f32 0.0, %v3590
      %v3592 = vpop.f32.mrb[0].mxu0
      %3593 = vmatprep.mubr.bf16.mxu0 0
      %3594 = vmatmul.mubr.bf16.gmra.mrb[0].mxu0 %v3425
      %v3595 = vpop.f32.mrb[0].mxu0
      %v3596 = vadd.f32 0.0, %v3595
      %v3597 = vpop.f32.mrb[0].mxu0
      %v3598 = vpop.f32.mrb[0].mxu0
      %v3599 = vadd.f32 0.0, %v3598
      %v3600 = vpop.f32.mrb[0].mxu0
      %3601 = vmatprep.mubr.bf16.mxu0 0
      %3602 = vmatmul.mubr.bf16.gmra.mrb[0].mxu0 %v3426
      %v3603 = vpop.f32.mrb[0].mxu0
      %v3604 = vadd.f32 0.0, %v3603
      %v3605 = vpop.f32.mrb[0].mxu0
      %v3606 = vpop.f32.mrb[0].mxu0
      %v3607 = vadd.f32 0.0, %v3606
      %v3608 = vpop.f32.mrb[0].mxu0
      %3609 = vmatprep.mubr.bf16.mxu0 0
      %3610 = vmatmul.mubr.bf16.gmra.mrb[0].mxu0 %v3427
      %v3611 = vpop.f32.mrb[0].mxu0
      %v3612 = vadd.f32 0.0, %v3611
      %v3613 = vpop.f32.mrb[0].mxu0
      %v3614 = vpop.f32.mrb[0].mxu0
      %v3615 = vadd.f32 0.0, %v3614
      %v3616 = vpop.f32.mrb[0].mxu0
      %3617 = vmatprep.mubr.bf16.mxu0 0
      %3618 = vmatmul.mubr.bf16.gmra.mrb[0].mxu0 %v3428
      %v3619 = vpop.f32.mrb[0].mxu0
      %v3620 = vadd.f32 0.0, %v3619
      %v3621 = vpop.f32.mrb[0].mxu0
      %v3622 = vpop.f32.mrb[0].mxu0
      %v3623 = vadd.f32 0.0, %v3622
      %v3624 = vpop.f32.mrb[0].mxu0
      %3625 = vmatprep.mubr.bf16.mxu0 0
      %3626 = vmatmul.mubr.bf16.gmra.mrb[0].mxu0 %v3429
      %v3627 = vpop.f32.mrb[0].mxu0
      %v3628 = vadd.f32 0.0, %v3627
      %v3629 = vpop.f32.mrb[0].mxu0
      %v3630 = vpop.f32.mrb[0].mxu0
      %v3631 = vadd.f32 0.0, %v3630
      %v3632 = vpop.f32.mrb[0].mxu0
      %3633 = vmatprep.mubr.bf16.mxu0 0
      %3634 = vmatmul.mubr.bf16.gmra.mrb[0].mxu0 %v3430
      %v3635 = vpop.f32.mrb[0].mxu0
      %v3636 = vadd.f32 0.0, %v3635
      %v3637 = vpop.f32.mrb[0].mxu0
      %v3638 = vpop.f32.mrb[0].mxu0
      %v3639 = vadd.f32 0.0, %v3638
      %v3640 = vpop.f32.mrb[0].mxu0
      %3641 = vmatprep.mubr.bf16.mxu0 0
      %3642 = vmatmul.mubr.bf16.gmra.mrb[0].mxu0 %v3431
      %v3643 = vpop.f32.mrb[0].mxu0
      %v3644 = vadd.f32 0.0, %v3643
      %v3645 = vpop.f32.mrb[0].mxu0
      %v3646 = vpop.f32.mrb[0].mxu0
      %v3647 = vadd.f32 0.0, %v3646
      %v3648 = vpop.f32.mrb[0].mxu0
      %3649 = vmatprep.mubr.bf16.mxu0 0
      %3650 = vmatmul.mubr.bf16.gmra.mrb[0].mxu0 %v3432
      %v3651 = vpop.f32.mrb[0].mxu0
      %v3652 = vadd.f32 0.0, %v3651
      %v3653 = vpop.f32.mrb[0].mxu0
      %v3654 = vpop.f32.mrb[0].mxu0
      %v3655 = vadd.f32 0.0, %v3654
      %v3656 = vpop.f32.mrb[0].mxu0
      %3657 = vdwg.mxu0
      %v3658 = vadd.f32 %v2905, %v3532
      %v3659 = vadd.f32 %v2906, %v3535
      %v3660 = vadd.f32 %v2907, %v3540
      %v3661 = vadd.f32 %v2908, %v3543
      %v3662 = vadd.f32 %v2909, %v3548
      %v3663 = vadd.f32 %v2910, %v3551
      %v3664 = vadd.f32 %v2911, %v3556
      %v3665 = vadd.f32 %v2912, %v3559
      %v3666 = vadd.f32 %v2913, %v3564
      %v3667 = vadd.f32 %v2914, %v3567
      %v3668 = vadd.f32 %v2915, %v3572
      %v3669 = vadd.f32 %v2916, %v3575
      %v3670 = vadd.f32 %v2917, %v3580
      %v3671 = vadd.f32 %v2918, %v3583
      %v3672 = vadd.f32 %v2919, %v3588
      %v3673 = vadd.f32 %v2920, %v3591
      %v3674 = vadd.f32 %v2921, %v3596
      %v3675 = vadd.f32 %v2922, %v3599
      %v3676 = vadd.f32 %v2923, %v3604
      %v3677 = vadd.f32 %v2924, %v3607
      %v3678 = vadd.f32 %v2925, %v3612
      %v3679 = vadd.f32 %v2926, %v3615
      %v3680 = vadd.f32 %v2927, %v3620
      %v3681 = vadd.f32 %v2928, %v3623
      %v3682 = vadd.f32 %v2929, %v3628
      %v3683 = vadd.f32 %v2930, %v3631
      %v3684 = vadd.f32 %v2931, %v3636
      %v3685 = vadd.f32 %v2932, %v3639
      %v3686 = vadd.f32 %v2933, %v3644
      %v3687 = vadd.f32 %v2934, %v3647
      %v3688 = vadd.f32 %v2935, %v3652
      %v3689 = vadd.f32 %v2936, %v3655
      %v3690 = vld [vmem:[%s389] sm:$0xe]
      %v3691 = vld [vmem:[%s389 + $0xc] sm:$0xe]
      %v3692 = vld [vmem:[%s389 + $0x18] sm:$0xe]
      %v3693 = vld [vmem:[%s389 + $0x24] sm:$0xe]
      %v3694 = vld [vmem:[%s389 + $0x30] sm:$0xe]
      %v3695 = vld [vmem:[%s389 + $0x3c] sm:$0xe]
      %v3696 = vld [vmem:[%s389 + $0x48] sm:$0xe]
      %v3697 = vld [vmem:[%s389 + $0x54] sm:$0xe]
      %v3698 = vld [vmem:[%s389 + $0x60] sm:$0xe]
      %v3699 = vld [vmem:[%s389 + $0x6c] sm:$0xe]
      %v3700 = vld [vmem:[%s389 + $0x78] sm:$0xe]
      %v3701 = vld [vmem:[%s389 + $0x84] sm:$0xe]
      %v3702 = vld [vmem:[%s389 + $0x90] sm:$0xe]
      %v3703 = vld [vmem:[%s389 + $0x9c] sm:$0xe]
      %v3704 = vld [vmem:[%s389 + $0xa8] sm:$0xe]
      %v3705 = vld [vmem:[%s389 + $0xb4] sm:$0xe]
      %v3754 = vrot.slane %v3690, 5
      %v3755 = vrot.slane %v3754, 4
      %v3756 = vrot.slane %v2938, 5
      %v3757 = vsel %vm2118, %v3755, %v3756
      %v3758 = vrot.slane %v3756, 4
      %v3759 = vrot.slane %v2939, 5
      %v3760 = vsel %vm2118, %v3758, %v3759
      %v3761 = vrot.slane %v3691, 5
      %v3762 = vrot.slane %v3761, 4
      %v3763 = vrot.slane %v2941, 5
      %v3764 = vsel %vm2118, %v3762, %v3763
      %v3765 = vrot.slane %v3763, 4
      %v3766 = vrot.slane %v2942, 5
      %v3767 = vsel %vm2118, %v3765, %v3766
      %v3768 = vrot.slane %v3692, 5
      %v3769 = vrot.slane %v3768, 4
      %v3770 = vrot.slane %v2944, 5
      %v3771 = vsel %vm2118, %v3769, %v3770
      %v3772 = vrot.slane %v3770, 4
      %v3773 = vrot.slane %v2945, 5
      %v3774 = vsel %vm2118, %v3772, %v3773
      %v3775 = vrot.slane %v3693, 5
      %v3776 = vrot.slane %v3775, 4
      %v3777 = vrot.slane %v2947, 5
      %v3778 = vsel %vm2118, %v3776, %v3777
      %v3779 = vrot.slane %v3777, 4
      %v3780 = vrot.slane %v2948, 5
      %v3781 = vsel %vm2118, %v3779, %v3780
      %v3782 = vrot.slane %v3694, 5
      %v3783 = vrot.slane %v3782, 4
      %v3784 = vrot.slane %v2950, 5
      %v3785 = vsel %vm2118, %v3783, %v3784
      %v3786 = vrot.slane %v3784, 4
      %v3787 = vrot.slane %v2951, 5
      %v3788 = vsel %vm2118, %v3786, %v3787
      %v3789 = vrot.slane %v3695, 5
      %v3790 = vrot.slane %v3789, 4
      %v3791 = vrot.slane %v2953, 5
      %v3792 = vsel %vm2118, %v3790, %v3791
      %v3793 = vrot.slane %v3791, 4
      %v3794 = vrot.slane %v2954, 5
      %v3795 = vsel %vm2118, %v3793, %v3794
      %v3796 = vrot.slane %v3696, 5
      %v3797 = vrot.slane %v3796, 4
      %v3798 = vrot.slane %v2956, 5
      %v3799 = vsel %vm2118, %v3797, %v3798
      %v3800 = vrot.slane %v3798, 4
      %v3801 = vrot.slane %v2957, 5
      %v3802 = vsel %vm2118, %v3800, %v3801
      %v3803 = vrot.slane %v3697, 5
      %v3804 = vrot.slane %v3803, 4
      %v3805 = vrot.slane %v2959, 5
      %v3806 = vsel %vm2118, %v3804, %v3805
      %v3807 = vrot.slane %v3805, 4
      %v3808 = vrot.slane %v2960, 5
      %v3809 = vsel %vm2118, %v3807, %v3808
      %v3810 = vrot.slane %v3698, 5
      %v3811 = vrot.slane %v3810, 4
      %v3812 = vrot.slane %v2962, 5
      %v3813 = vsel %vm2118, %v3811, %v3812
      %v3814 = vrot.slane %v3812, 4
      %v3815 = vrot.slane %v2963, 5
      %v3816 = vsel %vm2118, %v3814, %v3815
      %v3817 = vrot.slane %v3699, 5
      %v3818 = vrot.slane %v3817, 4
      %v3819 = vrot.slane %v2965, 5
      %v3820 = vsel %vm2118, %v3818, %v3819
      %v3821 = vrot.slane %v3819, 4
      %v3822 = vrot.slane %v2966, 5
      %v3823 = vsel %vm2118, %v3821, %v3822
      %v3824 = vrot.slane %v3700, 5
      %v3825 = vrot.slane %v3824, 4
      %v3826 = vrot.slane %v2968, 5
      %v3827 = vsel %vm2118, %v3825, %v3826
      %v3828 = vrot.slane %v3826, 4
      %v3829 = vrot.slane %v2969, 5
      %v3830 = vsel %vm2118, %v3828, %v3829
      %v3831 = vrot.slane %v3701, 5
      %v3832 = vrot.slane %v3831, 4
      %v3833 = vrot.slane %v2971, 5
      %v3834 = vsel %vm2118, %v3832, %v3833
      %v3835 = vrot.slane %v3833, 4
      %v3836 = vrot.slane %v2972, 5
      %v3837 = vsel %vm2118, %v3835, %v3836
      %v3838 = vrot.slane %v3702, 5
      %v3839 = vrot.slane %v3838, 4
      %v3840 = vrot.slane %v2974, 5
      %v3841 = vsel %vm2118, %v3839, %v3840
      %v3842 = vrot.slane %v3840, 4
      %v3843 = vrot.slane %v2975, 5
      %v3844 = vsel %vm2118, %v3842, %v3843
      %v3845 = vrot.slane %v3703, 5
      %v3846 = vrot.slane %v3845, 4
      %v3847 = vrot.slane %v2977, 5
      %v3848 = vsel %vm2118, %v3846, %v3847
      %v3849 = vrot.slane %v3847, 4
      %v3850 = vrot.slane %v2978, 5
      %v3851 = vsel %vm2118, %v3849, %v3850
      %v3852 = vrot.slane %v3704, 5
      %v3853 = vrot.slane %v3852, 4
      %v3854 = vrot.slane %v2980, 5
      %v3855 = vsel %vm2118, %v3853, %v3854
      %v3856 = vrot.slane %v3854, 4
      %v3857 = vrot.slane %v2981, 5
      %v3858 = vsel %vm2118, %v3856, %v3857
      %v3859 = vrot.slane %v3705, 5
      %v3860 = vrot.slane %v3859, 4
      %v3861 = vrot.slane %v2983, 5
      %v3862 = vsel %vm2118, %v3860, %v3861
      %v3863 = vrot.slane %v3861, 4
      %v3864 = vrot.slane %v2984, 5
      %v3865 = vsel %vm2118, %v3863, %v3864
      %v3866 = vld [vmem:[%s3 + $0x140] sm:$0xf]
      %v3867 = vld [vmem:[%s3 + $0x144] sm:$0xf]
      %v3868 = vld [vmem:[%s3 + $0x148] sm:$0xf]
      %v3869 = vld [vmem:[%s3 + $0x14c] sm:$0xf]
      %v3870 = vld [vmem:[%s3 + $0x150] sm:$0xf]
      %v3871 = vld [vmem:[%s3 + $0x154] sm:$0xf]
      %v3872 = vld [vmem:[%s3 + $0x158] sm:$0xf]
      %v3873 = vld [vmem:[%s3 + $0x15c] sm:$0xf]
      %v3874 = vld [vmem:[%s3 + $0x160] sm:$0xf]
      %v3875 = vld [vmem:[%s3 + $0x164] sm:$0xf]
      %v3876 = vld [vmem:[%s3 + $0x168] sm:$0xf]
      %v3877 = vld [vmem:[%s3 + $0x16c] sm:$0xf]
      %v3878 = vld [vmem:[%s3 + $0x170] sm:$0xf]
      %v3879 = vld [vmem:[%s3 + $0x174] sm:$0xf]
      %v3880 = vld [vmem:[%s3 + $0x178] sm:$0xf]
      %v3881 = vld [vmem:[%s3 + $0x17c] sm:$0xf]
      %v3882 = vunpack.c.l.b16 %v3757
      %v3883 = vunpack.c.l.b16 %v3760
      %v3884 = vunpack.c.l.b16 %v3764
      %v3885 = vunpack.c.l.b16 %v3767
      %v3886 = vunpack.c.l.b16 %v3771
      %v3887 = vunpack.c.l.b16 %v3774
      %v3888 = vunpack.c.l.b16 %v3778
      %v3889 = vunpack.c.l.b16 %v3781
      %v3890 = vunpack.c.l.b16 %v3785
      %v3891 = vunpack.c.l.b16 %v3788
      %v3892 = vunpack.c.l.b16 %v3792
      %v3893 = vunpack.c.l.b16 %v3795
      %v3894 = vunpack.c.l.b16 %v3799
      %v3895 = vunpack.c.l.b16 %v3802
      %v3896 = vunpack.c.l.b16 %v3806
      %v3897 = vunpack.c.l.b16 %v3809
      %v3898 = vunpack.c.l.b16 %v3813
      %v3899 = vunpack.c.l.b16 %v3816
      %v3900 = vunpack.c.l.b16 %v3820
      %v3901 = vunpack.c.l.b16 %v3823
      %v3902 = vunpack.c.l.b16 %v3827
      %v3903 = vunpack.c.l.b16 %v3830
      %v3904 = vunpack.c.l.b16 %v3834
      %v3905 = vunpack.c.l.b16 %v3837
      %v3906 = vunpack.c.l.b16 %v3841
      %v3907 = vunpack.c.l.b16 %v3844
      %v3908 = vunpack.c.l.b16 %v3848
      %v3909 = vunpack.c.l.b16 %v3851
      %v3910 = vunpack.c.l.b16 %v3855
      %v3911 = vunpack.c.l.b16 %v3858
      %v3912 = vunpack.c.l.b16 %v3862
      %v3913 = vunpack.c.l.b16 %v3865
      %v3914 = vpack.c.b16 %v3883, %v3882
      %v3915 = vpack.c.b16 %v3885, %v3884
      %v3916 = vpack.c.b16 %v3887, %v3886
      %v3917 = vpack.c.b16 %v3889, %v3888
      %v3918 = vpack.c.b16 %v3891, %v3890
      %v3919 = vpack.c.b16 %v3893, %v3892
      %v3920 = vpack.c.b16 %v3895, %v3894
      %v3921 = vpack.c.b16 %v3897, %v3896
      %v3922 = vpack.c.b16 %v3899, %v3898
      %v3923 = vpack.c.b16 %v3901, %v3900
      %v3924 = vpack.c.b16 %v3903, %v3902
      %v3925 = vpack.c.b16 %v3905, %v3904
      %v3926 = vpack.c.b16 %v3907, %v3906
      %v3927 = vpack.c.b16 %v3909, %v3908
      %v3928 = vpack.c.b16 %v3911, %v3910
      %v3929 = vpack.c.b16 %v3913, %v3912
      %v3962 = vunpack.c.l.b16 %v3866
      %v3963 = vunpack.c.l.b16 %v3867
      %v3964 = vunpack.c.l.b16 %v3868
      %v3965 = vunpack.c.l.b16 %v3869
      %v3966 = vunpack.c.l.b16 %v3870
      %v3967 = vunpack.c.l.b16 %v3871
      %v3968 = vunpack.c.l.b16 %v3872
      %v3969 = vunpack.c.l.b16 %v3873
      %v3970 = vunpack.c.l.b16 %v3874
      %v3971 = vunpack.c.l.b16 %v3875
      %v3972 = vunpack.c.l.b16 %v3876
      %v3973 = vunpack.c.l.b16 %v3877
      %v3974 = vunpack.c.l.b16 %v3878
      %v3975 = vunpack.c.l.b16 %v3879
      %v3976 = vunpack.c.l.b16 %v3880
      %v3977 = vunpack.c.l.b16 %v3881
      %v3978 = vpack.c.b16 %v3963, %v3962
      %v3979 = vpack.c.b16 %v3965, %v3964
      %v3980 = vpack.c.b16 %v3967, %v3966
      %v3981 = vpack.c.b16 %v3969, %v3968
      %v3982 = vpack.c.b16 %v3971, %v3970
      %v3983 = vpack.c.b16 %v3973, %v3972
      %v3984 = vpack.c.b16 %v3975, %v3974
      %v3985 = vpack.c.b16 %v3977, %v3976
      %3994 = vmatprep.subr.bf16.mxu0 0
      %3995 = vmatpush1.bf16.msra.mxu0 %v3978
      %3996 = vmatprep.subr.bf16.mxu0 0
      %3997 = vmatpush1.bf16.msra.mxu0 %v3979
      %3998 = vmatprep.subr.bf16.mxu0 0
      %3999 = vmatpush1.bf16.msra.mxu0 %v3980
      %4000 = vmatprep.subr.bf16.mxu0 0
      %4001 = vmatpush1.bf16.msra.mxu0 %v3981
      %4002 = vmatprep.subr.bf16.mxu0 0
      %4003 = vmatpush1.bf16.msra.mxu0 %v3982
      %4004 = vmatprep.subr.bf16.mxu0 0
      %4005 = vmatpush1.bf16.msra.mxu0 %v3983
      %4006 = vmatprep.subr.bf16.mxu0 0
      %4007 = vmatpush1.bf16.msra.mxu0 %v3984
      %4008 = vmatprep.subr.bf16.mxu0 0
      %4009 = vmatpush1.bf16.msra.mxu0 %v3985
      %4010 = vmatprep.subr.bf16.mxu0 0
      %4011 = vmatpush1.bf16.msra.mxu0 0
      %4012 = vmatprep.subr.bf16.mxu0 0
      %4013 = vmatpush1.bf16.msra.mxu0 0
      %4014 = vmatprep.subr.bf16.mxu0 0
      %4015 = vmatpush1.bf16.msra.mxu0 0
      %4016 = vmatprep.subr.bf16.mxu0 0
      %4017 = vmatpush1.bf16.msra.mxu0 0
      %4018 = vmatprep.subr.bf16.mxu0 0
      %4019 = vmatpush1.bf16.msra.mxu0 0
      %4020 = vmatprep.subr.bf16.mxu0 0
      %4021 = vmatpush1.bf16.msra.mxu0 0
      %4022 = vmatprep.subr.bf16.mxu0 0
      %4023 = vmatpush1.bf16.msra.mxu0 0
      %4024 = vmatprep.subr.bf16.mxu0 0
      %4025 = vmatpush1.bf16.msra.mxu0 0
      %4026 = vmatprep.mubr.bf16.mxu0 0
      %4027 = vmatmul.mubr.bf16.gmra.mrb[0].mxu0 %v3914
      %v4028 = vpop.f32.mrb[0].mxu0
      %v4029 = vadd.f32 0.0, %v4028
      %v4030 = vpop.f32.mrb[0].mxu0
      %v4031 = vpop.f32.mrb[0].mxu0
      %v4032 = vadd.f32 0.0, %v4031
      %v4033 = vpop.f32.mrb[0].mxu0
      %4034 = vmatprep.mubr.bf16.mxu0 0
      %4035 = vmatmul.mubr.bf16.gmra.mrb[0].mxu0 %v3915
      %v4036 = vpop.f32.mrb[0].mxu0
      %v4037 = vadd.f32 0.0, %v4036
      %v4038 = vpop.f32.mrb[0].mxu0
      %v4039 = vpop.f32.mrb[0].mxu0
      %v4040 = vadd.f32 0.0, %v4039
      %v4041 = vpop.f32.mrb[0].mxu0
      %4042 = vmatprep.mubr.bf16.mxu0 0
      %4043 = vmatmul.mubr.bf16.gmra.mrb[0].mxu0 %v3916
      %v4044 = vpop.f32.mrb[0].mxu0
      %v4045 = vadd.f32 0.0, %v4044
      %v4046 = vpop.f32.mrb[0].mxu0
      %v4047 = vpop.f32.mrb[0].mxu0
      %v4048 = vadd.f32 0.0, %v4047
      %v4049 = vpop.f32.mrb[0].mxu0
      %4050 = vmatprep.mubr.bf16.mxu0 0
      %4051 = vmatmul.mubr.bf16.gmra.mrb[0].mxu0 %v3917
      %v4052 = vpop.f32.mrb[0].mxu0
      %v4053 = vadd.f32 0.0, %v4052
      %v4054 = vpop.f32.mrb[0].mxu0
      %v4055 = vpop.f32.mrb[0].mxu0
      %v4056 = vadd.f32 0.0, %v4055
      %v4057 = vpop.f32.mrb[0].mxu0
      %4058 = vmatprep.mubr.bf16.mxu0 0
      %4059 = vmatmul.mubr.bf16.gmra.mrb[0].mxu0 %v3918
      %v4060 = vpop.f32.mrb[0].mxu0
      %v4061 = vadd.f32 0.0, %v4060
      %v4062 = vpop.f32.mrb[0].mxu0
      %v4063 = vpop.f32.mrb[0].mxu0
      %v4064 = vadd.f32 0.0, %v4063
      %v4065 = vpop.f32.mrb[0].mxu0
      %4066 = vmatprep.mubr.bf16.mxu0 0
      %4067 = vmatmul.mubr.bf16.gmra.mrb[0].mxu0 %v3919
      %v4068 = vpop.f32.mrb[0].mxu0
      %v4069 = vadd.f32 0.0, %v4068
      %v4070 = vpop.f32.mrb[0].mxu0
      %v4071 = vpop.f32.mrb[0].mxu0
      %v4072 = vadd.f32 0.0, %v4071
      %v4073 = vpop.f32.mrb[0].mxu0
      %4074 = vmatprep.mubr.bf16.mxu0 0
      %4075 = vmatmul.mubr.bf16.gmra.mrb[0].mxu0 %v3920
      %v4076 = vpop.f32.mrb[0].mxu0
      %v4077 = vadd.f32 0.0, %v4076
      %v4078 = vpop.f32.mrb[0].mxu0
      %v4079 = vpop.f32.mrb[0].mxu0
      %v4080 = vadd.f32 0.0, %v4079
      %v4081 = vpop.f32.mrb[0].mxu0
      %4082 = vmatprep.mubr.bf16.mxu0 0
      %4083 = vmatmul.mubr.bf16.gmra.mrb[0].mxu0 %v3921
      %v4084 = vpop.f32.mrb[0].mxu0
      %v4085 = vadd.f32 0.0, %v4084
      %v4086 = vpop.f32.mrb[0].mxu0
      %v4087 = vpop.f32.mrb[0].mxu0
      %v4088 = vadd.f32 0.0, %v4087
      %v4089 = vpop.f32.mrb[0].mxu0
      %4090 = vmatprep.mubr.bf16.mxu0 0
      %4091 = vmatmul.mubr.bf16.gmra.mrb[0].mxu0 %v3922
      %v4092 = vpop.f32.mrb[0].mxu0
      %v4093 = vadd.f32 0.0, %v4092
      %v4094 = vpop.f32.mrb[0].mxu0
      %v4095 = vpop.f32.mrb[0].mxu0
      %v4096 = vadd.f32 0.0, %v4095
      %v4097 = vpop.f32.mrb[0].mxu0
      %4098 = vmatprep.mubr.bf16.mxu0 0
      %4099 = vmatmul.mubr.bf16.gmra.mrb[0].mxu0 %v3923
      %v4100 = vpop.f32.mrb[0].mxu0
      %v4101 = vadd.f32 0.0, %v4100
      %v4102 = vpop.f32.mrb[0].mxu0
      %v4103 = vpop.f32.mrb[0].mxu0
      %v4104 = vadd.f32 0.0, %v4103
      %v4105 = vpop.f32.mrb[0].mxu0
      %4106 = vmatprep.mubr.bf16.mxu0 0
      %4107 = vmatmul.mubr.bf16.gmra.mrb[0].mxu0 %v3924
      %v4108 = vpop.f32.mrb[0].mxu0
      %v4109 = vadd.f32 0.0, %v4108
      %v4110 = vpop.f32.mrb[0].mxu0
      %v4111 = vpop.f32.mrb[0].mxu0
      %v4112 = vadd.f32 0.0, %v4111
      %v4113 = vpop.f32.mrb[0].mxu0
      %4114 = vmatprep.mubr.bf16.mxu0 0
      %4115 = vmatmul.mubr.bf16.gmra.mrb[0].mxu0 %v3925
      %v4116 = vpop.f32.mrb[0].mxu0
      %v4117 = vadd.f32 0.0, %v4116
      %v4118 = vpop.f32.mrb[0].mxu0
      %v4119 = vpop.f32.mrb[0].mxu0
      %v4120 = vadd.f32 0.0, %v4119
      %v4121 = vpop.f32.mrb[0].mxu0
      %4122 = vmatprep.mubr.bf16.mxu0 0
      %4123 = vmatmul.mubr.bf16.gmra.mrb[0].mxu0 %v3926
      %v4124 = vpop.f32.mrb[0].mxu0
      %v4125 = vadd.f32 0.0, %v4124
      %v4126 = vpop.f32.mrb[0].mxu0
      %v4127 = vpop.f32.mrb[0].mxu0
      %v4128 = vadd.f32 0.0, %v4127
      %v4129 = vpop.f32.mrb[0].mxu0
      %4130 = vmatprep.mubr.bf16.mxu0 0
      %4131 = vmatmul.mubr.bf16.gmra.mrb[0].mxu0 %v3927
      %v4132 = vpop.f32.mrb[0].mxu0
      %v4133 = vadd.f32 0.0, %v4132
      %v4134 = vpop.f32.mrb[0].mxu0
      %v4135 = vpop.f32.mrb[0].mxu0
      %v4136 = vadd.f32 0.0, %v4135
      %v4137 = vpop.f32.mrb[0].mxu0
      %4138 = vmatprep.mubr.bf16.mxu0 0
      %4139 = vmatmul.mubr.bf16.gmra.mrb[0].mxu0 %v3928
      %v4140 = vpop.f32.mrb[0].mxu0
      %v4141 = vadd.f32 0.0, %v4140
      %v4142 = vpop.f32.mrb[0].mxu0
      %v4143 = vpop.f32.mrb[0].mxu0
      %v4144 = vadd.f32 0.0, %v4143
      %v4145 = vpop.f32.mrb[0].mxu0
      %4146 = vmatprep.mubr.bf16.mxu0 0
      %4147 = vmatmul.mubr.bf16.gmra.mrb[0].mxu0 %v3929
      %v4148 = vpop.f32.mrb[0].mxu0
      %v4149 = vadd.f32 0.0, %v4148
      %v4150 = vpop.f32.mrb[0].mxu0
      %v4151 = vpop.f32.mrb[0].mxu0
      %v4152 = vadd.f32 0.0, %v4151
      %v4153 = vpop.f32.mrb[0].mxu0
      %4154 = vdwg.mxu0
      %v4155 = vadd.f32 %v3658, %v4029
      %v4156 = vadd.f32 %v3659, %v4032
      %v4157 = vadd.f32 %v3660, %v4037
      %v4158 = vadd.f32 %v3661, %v4040
      %v4159 = vadd.f32 %v3662, %v4045
      %v4160 = vadd.f32 %v3663, %v4048
      %v4161 = vadd.f32 %v3664, %v4053
      %v4162 = vadd.f32 %v3665, %v4056
      %v4163 = vadd.f32 %v3666, %v4061
      %v4164 = vadd.f32 %v3667, %v4064
      %v4165 = vadd.f32 %v3668, %v4069
      %v4166 = vadd.f32 %v3669, %v4072
      %v4167 = vadd.f32 %v3670, %v4077
      %v4168 = vadd.f32 %v3671, %v4080
      %v4169 = vadd.f32 %v3672, %v4085
      %v4170 = vadd.f32 %v3673, %v4088
      %v4171 = vadd.f32 %v3674, %v4093
      %v4172 = vadd.f32 %v3675, %v4096
      %v4173 = vadd.f32 %v3676, %v4101
      %v4174 = vadd.f32 %v3677, %v4104
      %v4175 = vadd.f32 %v3678, %v4109
      %v4176 = vadd.f32 %v3679, %v4112
      %v4177 = vadd.f32 %v3680, %v4117
      %v4178 = vadd.f32 %v3681, %v4120
      %v4179 = vadd.f32 %v3682, %v4125
      %v4180 = vadd.f32 %v3683, %v4128
      %v4181 = vadd.f32 %v3684, %v4133
      %v4182 = vadd.f32 %v3685, %v4136
      %v4183 = vadd.f32 %v3686, %v4141
      %v4184 = vadd.f32 %v3687, %v4144
      %v4185 = vadd.f32 %v3688, %v4149
      %v4186 = vadd.f32 %v3689, %v4152
      %s4187 = scalar_lea.vmem [#allocation2], 24
      %v4188 = vld [vmem:[%s4187] sm:$0xf]
      %v4189 = vld [vmem:[%s4187 + $0x4] sm:$0xf]
      %v4190 = vld [vmem:[%s4187 + $0xc] sm:$0xf]
      %v4191 = vld [vmem:[%s4187 + $0x10] sm:$0xf]
      %v4192 = vld [vmem:[%s4187 + $0x18] sm:$0xf]
      %v4193 = vld [vmem:[%s4187 + $0x1c] sm:$0xf]
      %v4194 = vld [vmem:[%s4187 + $0x24] sm:$0xf]
      %v4195 = vld [vmem:[%s4187 + $0x28] sm:$0xf]
      %v4196 = vld [vmem:[%s4187 + $0x30] sm:$0xf]
      %v4197 = vld [vmem:[%s4187 + $0x34] sm:$0xf]
      %v4198 = vld [vmem:[%s4187 + $0x3c] sm:$0xf]
      %v4199 = vld [vmem:[%s4187 + $0x40] sm:$0xf]
      %v4200 = vld [vmem:[%s4187 + $0x48] sm:$0xf]
      %v4201 = vld [vmem:[%s4187 + $0x4c] sm:$0xf]
      %v4202 = vld [vmem:[%s4187 + $0x54] sm:$0xf]
      %v4203 = vld [vmem:[%s4187 + $0x58] sm:$0xf]
      %v4204 = vld [vmem:[%s4187 + $0x60] sm:$0xf]
      %v4205 = vld [vmem:[%s4187 + $0x64] sm:$0xf]
      %v4206 = vld [vmem:[%s4187 + $0x6c] sm:$0xf]
      %v4207 = vld [vmem:[%s4187 + $0x70] sm:$0xf]
      %v4208 = vld [vmem:[%s4187 + $0x78] sm:$0xf]
      %v4209 = vld [vmem:[%s4187 + $0x7c] sm:$0xf]
      %v4210 = vld [vmem:[%s4187 + $0x84] sm:$0xf]
      %v4211 = vld [vmem:[%s4187 + $0x88] sm:$0xf]
      %v4212 = vld [vmem:[%s4187 + $0x90] sm:$0xf]
      %v4213 = vld [vmem:[%s4187 + $0x94] sm:$0xf]
      %v4214 = vld [vmem:[%s4187 + $0x9c] sm:$0xf]
      %v4215 = vld [vmem:[%s4187 + $0xa0] sm:$0xf]
      %v4216 = vld [vmem:[%s4187 + $0xa8] sm:$0xf]
      %v4217 = vld [vmem:[%s4187 + $0xac] sm:$0xf]
      %v4218 = vld [vmem:[%s4187 + $0xb4] sm:$0xf]
      %v4219 = vld [vmem:[%s4187 + $0xb8] sm:$0xf]
      %v4220 = vld [vmem:[%s3 + $0x180] sm:$0xf]
      %v4221 = vld [vmem:[%s3 + $0x184] sm:$0xf]
      %v4222 = vld [vmem:[%s3 + $0x188] sm:$0xf]
      %v4223 = vld [vmem:[%s3 + $0x18c] sm:$0xf]
      %v4224 = vld [vmem:[%s3 + $0x190] sm:$0xf]
      %v4225 = vld [vmem:[%s3 + $0x194] sm:$0xf]
      %v4226 = vld [vmem:[%s3 + $0x198] sm:$0xf]
      %v4227 = vld [vmem:[%s3 + $0x19c] sm:$0xf]
      %v4228 = vld [vmem:[%s3 + $0x1a0] sm:$0xf]
      %v4229 = vld [vmem:[%s3 + $0x1a4] sm:$0xf]
      %v4230 = vld [vmem:[%s3 + $0x1a8] sm:$0xf]
      %v4231 = vld [vmem:[%s3 + $0x1ac] sm:$0xf]
      %v4232 = vld [vmem:[%s3 + $0x1b0] sm:$0xf]
      %v4233 = vld [vmem:[%s3 + $0x1b4] sm:$0xf]
      %v4234 = vld [vmem:[%s3 + $0x1b8] sm:$0xf]
      %v4235 = vld [vmem:[%s3 + $0x1bc] sm:$0xf]
      %v4268 = vunpack.c.l.b16 %v4188
      %v4269 = vunpack.c.l.b16 %v4189
      %v4270 = vunpack.c.l.b16 %v4190
      %v4271 = vunpack.c.l.b16 %v4191
      %v4272 = vunpack.c.l.b16 %v4192
      %v4273 = vunpack.c.l.b16 %v4193
      %v4274 = vunpack.c.l.b16 %v4194
      %v4275 = vunpack.c.l.b16 %v4195
      %v4276 = vunpack.c.l.b16 %v4196
      %v4277 = vunpack.c.l.b16 %v4197
      %v4278 = vunpack.c.l.b16 %v4198
      %v4279 = vunpack.c.l.b16 %v4199
      %v4280 = vunpack.c.l.b16 %v4200
      %v4281 = vunpack.c.l.b16 %v4201
      %v4282 = vunpack.c.l.b16 %v4202
      %v4283 = vunpack.c.l.b16 %v4203
      %v4284 = vunpack.c.l.b16 %v4204
      %v4285 = vunpack.c.l.b16 %v4205
      %v4286 = vunpack.c.l.b16 %v4206
      %v4287 = vunpack.c.l.b16 %v4207
      %v4288 = vunpack.c.l.b16 %v4208
      %v4289 = vunpack.c.l.b16 %v4209
      %v4290 = vunpack.c.l.b16 %v4210
      %v4291 = vunpack.c.l.b16 %v4211
      %v4292 = vunpack.c.l.b16 %v4212
      %v4293 = vunpack.c.l.b16 %v4213
      %v4294 = vunpack.c.l.b16 %v4214
      %v4295 = vunpack.c.l.b16 %v4215
      %v4296 = vunpack.c.l.b16 %v4216
      %v4297 = vunpack.c.l.b16 %v4217
      %v4298 = vunpack.c.l.b16 %v4218
      %v4299 = vunpack.c.l.b16 %v4219
      %v4300 = vpack.c.b16 %v4269, %v4268
      %v4301 = vpack.c.b16 %v4271, %v4270
      %v4302 = vpack.c.b16 %v4273, %v4272
      %v4303 = vpack.c.b16 %v4275, %v4274
      %v4304 = vpack.c.b16 %v4277, %v4276
      %v4305 = vpack.c.b16 %v4279, %v4278
      %v4306 = vpack.c.b16 %v4281, %v4280
      %v4307 = vpack.c.b16 %v4283, %v4282
      %v4308 = vpack.c.b16 %v4285, %v4284
      %v4309 = vpack.c.b16 %v4287, %v4286
      %v4310 = vpack.c.b16 %v4289, %v4288
      %v4311 = vpack.c.b16 %v4291, %v4290
      %v4312 = vpack.c.b16 %v4293, %v4292
      %v4313 = vpack.c.b16 %v4295, %v4294
      %v4314 = vpack.c.b16 %v4297, %v4296
      %v4315 = vpack.c.b16 %v4299, %v4298
      %v4348 = vunpack.c.l.b16 %v4220
      %v4349 = vunpack.c.l.b16 %v4221
      %v4350 = vunpack.c.l.b16 %v4222
      %v4351 = vunpack.c.l.b16 %v4223
      %v4352 = vunpack.c.l.b16 %v4224
      %v4353 = vunpack.c.l.b16 %v4225
      %v4354 = vunpack.c.l.b16 %v4226
      %v4355 = vunpack.c.l.b16 %v4227
      %v4356 = vunpack.c.l.b16 %v4228
      %v4357 = vunpack.c.l.b16 %v4229
      %v4358 = vunpack.c.l.b16 %v4230
      %v4359 = vunpack.c.l.b16 %v4231
      %v4360 = vunpack.c.l.b16 %v4232
      %v4361 = vunpack.c.l.b16 %v4233
      %v4362 = vunpack.c.l.b16 %v4234
      %v4363 = vunpack.c.l.b16 %v4235
      %v4364 = vpack.c.b16 %v4349, %v4348
      %v4365 = vpack.c.b16 %v4351, %v4350
      %v4366 = vpack.c.b16 %v4353, %v4352
      %v4367 = vpack.c.b16 %v4355, %v4354
      %v4368 = vpack.c.b16 %v4357, %v4356
      %v4369 = vpack.c.b16 %v4359, %v4358
      %v4370 = vpack.c.b16 %v4361, %v4360
      %v4371 = vpack.c.b16 %v4363, %v4362
      %4380 = vmatprep.subr.bf16.mxu0 0
      %4381 = vmatpush1.bf16.msra.mxu0 %v4364
      %4382 = vmatprep.subr.bf16.mxu0 0
      %4383 = vmatpush1.bf16.msra.mxu0 %v4365
      %4384 = vmatprep.subr.bf16.mxu0 0
      %4385 = vmatpush1.bf16.msra.mxu0 %v4366
      %4386 = vmatprep.subr.bf16.mxu0 0
      %4387 = vmatpush1.bf16.msra.mxu0 %v4367
      %4388 = vmatprep.subr.bf16.mxu0 0
      %4389 = vmatpush1.bf16.msra.mxu0 %v4368
      %4390 = vmatprep.subr.bf16.mxu0 0
      %4391 = vmatpush1.bf16.msra.mxu0 %v4369
      %4392 = vmatprep.subr.bf16.mxu0 0
      %4393 = vmatpush1.bf16.msra.mxu0 %v4370
      %4394 = vmatprep.subr.bf16.mxu0 0
      %4395 = vmatpush1.bf16.msra.mxu0 %v4371
      %4396 = vmatprep.subr.bf16.mxu0 0
      %4397 = vmatpush1.bf16.msra.mxu0 0
      %4398 = vmatprep.subr.bf16.mxu0 0
      %4399 = vmatpush1.bf16.msra.mxu0 0
      %4400 = vmatprep.subr.bf16.mxu0 0
      %4401 = vmatpush1.bf16.msra.mxu0 0
      %4402 = vmatprep.subr.bf16.mxu0 0
      %4403 = vmatpush1.bf16.msra.mxu0 0
      %4404 = vmatprep.subr.bf16.mxu0 0
      %4405 = vmatpush1.bf16.msra.mxu0 0
      %4406 = vmatprep.subr.bf16.mxu0 0
      %4407 = vmatpush1.bf16.msra.mxu0 0
      %4408 = vmatprep.subr.bf16.mxu0 0
      %4409 = vmatpush1.bf16.msra.mxu0 0
      %4410 = vmatprep.subr.bf16.mxu0 0
      %4411 = vmatpush1.bf16.msra.mxu0 0
      %4412 = vmatprep.mubr.bf16.mxu0 0
      %4413 = vmatmul.mubr.bf16.gmra.mrb[0].mxu0 %v4300
      %v4414 = vpop.f32.mrb[0].mxu0
      %v4415 = vadd.f32 0.0, %v4414
      %v4416 = vpop.f32.mrb[0].mxu0
      %v4417 = vpop.f32.mrb[0].mxu0
      %v4418 = vadd.f32 0.0, %v4417
      %v4419 = vpop.f32.mrb[0].mxu0
      %4420 = vmatprep.mubr.bf16.mxu0 0
      %4421 = vmatmul.mubr.bf16.gmra.mrb[0].mxu0 %v4301
      %v4422 = vpop.f32.mrb[0].mxu0
      %v4423 = vadd.f32 0.0, %v4422
      %v4424 = vpop.f32.mrb[0].mxu0
      %v4425 = vpop.f32.mrb[0].mxu0
      %v4426 = vadd.f32 0.0, %v4425
      %v4427 = vpop.f32.mrb[0].mxu0
      %4428 = vmatprep.mubr.bf16.mxu0 0
      %4429 = vmatmul.mubr.bf16.gmra.mrb[0].mxu0 %v4302
      %v4430 = vpop.f32.mrb[0].mxu0
      %v4431 = vadd.f32 0.0, %v4430
      %v4432 = vpop.f32.mrb[0].mxu0
      %v4433 = vpop.f32.mrb[0].mxu0
      %v4434 = vadd.f32 0.0, %v4433
      %v4435 = vpop.f32.mrb[0].mxu0
      %4436 = vmatprep.mubr.bf16.mxu0 0
      %4437 = vmatmul.mubr.bf16.gmra.mrb[0].mxu0 %v4303
      %v4438 = vpop.f32.mrb[0].mxu0
      %v4439 = vadd.f32 0.0, %v4438
      %v4440 = vpop.f32.mrb[0].mxu0
      %v4441 = vpop.f32.mrb[0].mxu0
      %v4442 = vadd.f32 0.0, %v4441
      %v4443 = vpop.f32.mrb[0].mxu0
      %4444 = vmatprep.mubr.bf16.mxu0 0
      %4445 = vmatmul.mubr.bf16.gmra.mrb[0].mxu0 %v4304
      %v4446 = vpop.f32.mrb[0].mxu0
      %v4447 = vadd.f32 0.0, %v4446
      %v4448 = vpop.f32.mrb[0].mxu0
      %v4449 = vpop.f32.mrb[0].mxu0
      %v4450 = vadd.f32 0.0, %v4449
      %v4451 = vpop.f32.mrb[0].mxu0
      %4452 = vmatprep.mubr.bf16.mxu0 0
      %4453 = vmatmul.mubr.bf16.gmra.mrb[0].mxu0 %v4305
      %v4454 = vpop.f32.mrb[0].mxu0
      %v4455 = vadd.f32 0.0, %v4454
      %v4456 = vpop.f32.mrb[0].mxu0
      %v4457 = vpop.f32.mrb[0].mxu0
      %v4458 = vadd.f32 0.0, %v4457
      %v4459 = vpop.f32.mrb[0].mxu0
      %4460 = vmatprep.mubr.bf16.mxu0 0
      %4461 = vmatmul.mubr.bf16.gmra.mrb[0].mxu0 %v4306
      %v4462 = vpop.f32.mrb[0].mxu0
      %v4463 = vadd.f32 0.0, %v4462
      %v4464 = vpop.f32.mrb[0].mxu0
      %v4465 = vpop.f32.mrb[0].mxu0
      %v4466 = vadd.f32 0.0, %v4465
      %v4467 = vpop.f32.mrb[0].mxu0
      %4468 = vmatprep.mubr.bf16.mxu0 0
      %4469 = vmatmul.mubr.bf16.gmra.mrb[0].mxu0 %v4307
      %v4470 = vpop.f32.mrb[0].mxu0
      %v4471 = vadd.f32 0.0, %v4470
      %v4472 = vpop.f32.mrb[0].mxu0
      %v4473 = vpop.f32.mrb[0].mxu0
      %v4474 = vadd.f32 0.0, %v4473
      %v4475 = vpop.f32.mrb[0].mxu0
      %4476 = vmatprep.mubr.bf16.mxu0 0
      %4477 = vmatmul.mubr.bf16.gmra.mrb[0].mxu0 %v4308
      %v4478 = vpop.f32.mrb[0].mxu0
      %v4479 = vadd.f32 0.0, %v4478
      %v4480 = vpop.f32.mrb[0].mxu0
      %v4481 = vpop.f32.mrb[0].mxu0
      %v4482 = vadd.f32 0.0, %v4481
      %v4483 = vpop.f32.mrb[0].mxu0
      %4484 = vmatprep.mubr.bf16.mxu0 0
      %4485 = vmatmul.mubr.bf16.gmra.mrb[0].mxu0 %v4309
      %v4486 = vpop.f32.mrb[0].mxu0
      %v4487 = vadd.f32 0.0, %v4486
      %v4488 = vpop.f32.mrb[0].mxu0
      %v4489 = vpop.f32.mrb[0].mxu0
      %v4490 = vadd.f32 0.0, %v4489
      %v4491 = vpop.f32.mrb[0].mxu0
      %4492 = vmatprep.mubr.bf16.mxu0 0
      %4493 = vmatmul.mubr.bf16.gmra.mrb[0].mxu0 %v4310
      %v4494 = vpop.f32.mrb[0].mxu0
      %v4495 = vadd.f32 0.0, %v4494
      %v4496 = vpop.f32.mrb[0].mxu0
      %v4497 = vpop.f32.mrb[0].mxu0
      %v4498 = vadd.f32 0.0, %v4497
      %v4499 = vpop.f32.mrb[0].mxu0
      %4500 = vmatprep.mubr.bf16.mxu0 0
      %4501 = vmatmul.mubr.bf16.gmra.mrb[0].mxu0 %v4311
      %v4502 = vpop.f32.mrb[0].mxu0
      %v4503 = vadd.f32 0.0, %v4502
      %v4504 = vpop.f32.mrb[0].mxu0
      %v4505 = vpop.f32.mrb[0].mxu0
      %v4506 = vadd.f32 0.0, %v4505
      %v4507 = vpop.f32.mrb[0].mxu0
      %4508 = vmatprep.mubr.bf16.mxu0 0
      %4509 = vmatmul.mubr.bf16.gmra.mrb[0].mxu0 %v4312
      %v4510 = vpop.f32.mrb[0].mxu0
      %v4511 = vadd.f32 0.0, %v4510
      %v4512 = vpop.f32.mrb[0].mxu0
      %v4513 = vpop.f32.mrb[0].mxu0
      %v4514 = vadd.f32 0.0, %v4513
      %v4515 = vpop.f32.mrb[0].mxu0
      %4516 = vmatprep.mubr.bf16.mxu0 0
      %4517 = vmatmul.mubr.bf16.gmra.mrb[0].mxu0 %v4313
      %v4518 = vpop.f32.mrb[0].mxu0
      %v4519 = vadd.f32 0.0, %v4518
      %v4520 = vpop.f32.mrb[0].mxu0
      %v4521 = vpop.f32.mrb[0].mxu0
      %v4522 = vadd.f32 0.0, %v4521
      %v4523 = vpop.f32.mrb[0].mxu0
      %4524 = vmatprep.mubr.bf16.mxu0 0
      %4525 = vmatmul.mubr.bf16.gmra.mrb[0].mxu0 %v4314
      %v4526 = vpop.f32.mrb[0].mxu0
      %v4527 = vadd.f32 0.0, %v4526
      %v4528 = vpop.f32.mrb[0].mxu0
      %v4529 = vpop.f32.mrb[0].mxu0
      %v4530 = vadd.f32 0.0, %v4529
      %v4531 = vpop.f32.mrb[0].mxu0
      %4532 = vmatprep.mubr.bf16.mxu0 0
      %4533 = vmatmul.mubr.bf16.gmra.mrb[0].mxu0 %v4315
      %v4534 = vpop.f32.mrb[0].mxu0
      %v4535 = vadd.f32 0.0, %v4534
      %v4536 = vpop.f32.mrb[0].mxu0
      %v4537 = vpop.f32.mrb[0].mxu0
      %v4538 = vadd.f32 0.0, %v4537
      %v4539 = vpop.f32.mrb[0].mxu0
      %4540 = vdwg.mxu0
      %v4541 = vadd.f32 %v4155, %v4415
      %v4542 = vadd.f32 %v4156, %v4418
      %v4543 = vadd.f32 %v4157, %v4423
      %v4544 = vadd.f32 %v4158, %v4426
      %v4545 = vadd.f32 %v4159, %v4431
      %v4546 = vadd.f32 %v4160, %v4434
      %v4547 = vadd.f32 %v4161, %v4439
      %v4548 = vadd.f32 %v4162, %v4442
      %v4549 = vadd.f32 %v4163, %v4447
      %v4550 = vadd.f32 %v4164, %v4450
      %v4551 = vadd.f32 %v4165, %v4455
      %v4552 = vadd.f32 %v4166, %v4458
      %v4553 = vadd.f32 %v4167, %v4463
      %v4554 = vadd.f32 %v4168, %v4466
      %v4555 = vadd.f32 %v4169, %v4471
      %v4556 = vadd.f32 %v4170, %v4474
      %v4557 = vadd.f32 %v4171, %v4479
      %v4558 = vadd.f32 %v4172, %v4482
      %v4559 = vadd.f32 %v4173, %v4487
      %v4560 = vadd.f32 %v4174, %v4490
      %v4561 = vadd.f32 %v4175, %v4495
      %v4562 = vadd.f32 %v4176, %v4498
      %v4563 = vadd.f32 %v4177, %v4503
      %v4564 = vadd.f32 %v4178, %v4506
      %v4565 = vadd.f32 %v4179, %v4511
      %v4566 = vadd.f32 %v4180, %v4514
      %v4567 = vadd.f32 %v4181, %v4519
      %v4568 = vadd.f32 %v4182, %v4522
      %v4569 = vadd.f32 %v4183, %v4527
      %v4570 = vadd.f32 %v4184, %v4530
      %v4571 = vadd.f32 %v4185, %v4535
      %v4572 = vadd.f32 %v4186, %v4538
      %v4573 = vld [vmem:[%s4187] sm:$0xf]
      %v4574 = vld [vmem:[%s4187 + $0x4] sm:$0xf]
      %v4575 = vld [vmem:[%s4187 + $0x8] sm:$0x1]
      %v4576 = vld [vmem:[%s4187 + $0xc] sm:$0xf]
      %v4577 = vld [vmem:[%s4187 + $0x10] sm:$0xf]
      %v4578 = vld [vmem:[%s4187 + $0x14] sm:$0x1]
      %v4579 = vld [vmem:[%s4187 + $0x18] sm:$0xf]
      %v4580 = vld [vmem:[%s4187 + $0x1c] sm:$0xf]
      %v4581 = vld [vmem:[%s4187 + $0x20] sm:$0x1]
      %v4582 = vld [vmem:[%s4187 + $0x24] sm:$0xf]
      %v4583 = vld [vmem:[%s4187 + $0x28] sm:$0xf]
      %v4584 = vld [vmem:[%s4187 + $0x2c] sm:$0x1]
      %v4585 = vld [vmem:[%s4187 + $0x30] sm:$0xf]
      %v4586 = vld [vmem:[%s4187 + $0x34] sm:$0xf]
      %v4587 = vld [vmem:[%s4187 + $0x38] sm:$0x1]
      %v4588 = vld [vmem:[%s4187 + $0x3c] sm:$0xf]
      %v4589 = vld [vmem:[%s4187 + $0x40] sm:$0xf]
      %v4590 = vld [vmem:[%s4187 + $0x44] sm:$0x1]
      %v4591 = vld [vmem:[%s4187 + $0x48] sm:$0xf]
      %v4592 = vld [vmem:[%s4187 + $0x4c] sm:$0xf]
      %v4593 = vld [vmem:[%s4187 + $0x50] sm:$0x1]
      %v4594 = vld [vmem:[%s4187 + $0x54] sm:$0xf]
      %v4595 = vld [vmem:[%s4187 + $0x58] sm:$0xf]
      %v4596 = vld [vmem:[%s4187 + $0x5c] sm:$0x1]
      %v4597 = vld [vmem:[%s4187 + $0x60] sm:$0xf]
      %v4598 = vld [vmem:[%s4187 + $0x64] sm:$0xf]
      %v4599 = vld [vmem:[%s4187 + $0x68] sm:$0x1]
      %v4600 = vld [vmem:[%s4187 + $0x6c] sm:$0xf]
      %v4601 = vld [vmem:[%s4187 + $0x70] sm:$0xf]
      %v4602 = vld [vmem:[%s4187 + $0x74] sm:$0x1]
      %v4603 = vld [vmem:[%s4187 + $0x78] sm:$0xf]
      %v4604 = vld [vmem:[%s4187 + $0x7c] sm:$0xf]
      %v4605 = vld [vmem:[%s4187 + $0x80] sm:$0x1]
      %v4606 = vld [vmem:[%s4187 + $0x84] sm:$0xf]
      %v4607 = vld [vmem:[%s4187 + $0x88] sm:$0xf]
      %v4608 = vld [vmem:[%s4187 + $0x8c] sm:$0x1]
      %v4609 = vld [vmem:[%s4187 + $0x90] sm:$0xf]
      %v4610 = vld [vmem:[%s4187 + $0x94] sm:$0xf]
      %v4611 = vld [vmem:[%s4187 + $0x98] sm:$0x1]
      %v4612 = vld [vmem:[%s4187 + $0x9c] sm:$0xf]
      %v4613 = vld [vmem:[%s4187 + $0xa0] sm:$0xf]
      %v4614 = vld [vmem:[%s4187 + $0xa4] sm:$0x1]
      %v4615 = vld [vmem:[%s4187 + $0xa8] sm:$0xf]
      %v4616 = vld [vmem:[%s4187 + $0xac] sm:$0xf]
      %v4617 = vld [vmem:[%s4187 + $0xb0] sm:$0x1]
      %v4618 = vld [vmem:[%s4187 + $0xb4] sm:$0xf]
      %v4619 = vld [vmem:[%s4187 + $0xb8] sm:$0xf]
      %v4620 = vld [vmem:[%s4187 + $0xbc] sm:$0x1]
      %v4622 = vshrl.u32 %v4573, 16
      %v4624 = vrot.slane %v4622, 4
      %v4625 = vshll.u32 %v4573, 16
      %v4627 = vrot.slane %v4625, 5
      %v4628 = vor.u32 %v4624, %v4627
      %v4629 = vrot.slane %v4628, 4
      %v4631 = vshll.u32 %v4574, 16
      %v4633 = vrot.slane %v4631, 5
      %v4634 = vsel %vm1089, %v4629, %v4633
      %v4635 = vshrl.u32 %v4574, 16
      %v4637 = vrot.slane %v4635, 4
      %v4638 = vor.u32 %v4637, %v4633
      %v4639 = vrot.slane %v4638, 4
      %v4641 = vshll.u32 %v4575, 16
      %v4643 = vrot.slane %v4641, 5
      %v4644 = vsel %vm1089, %v4639, %v4643
      %v4646 = vshrl.u32 %v4576, 16
      %v4648 = vrot.slane %v4646, 4
      %v4649 = vshll.u32 %v4576, 16
      %v4651 = vrot.slane %v4649, 5
      %v4652 = vor.u32 %v4648, %v4651
      %v4653 = vrot.slane %v4652, 4
      %v4655 = vshll.u32 %v4577, 16
      %v4657 = vrot.slane %v4655, 5
      %v4658 = vsel %vm1089, %v4653, %v4657
      %v4659 = vshrl.u32 %v4577, 16
      %v4661 = vrot.slane %v4659, 4
      %v4662 = vor.u32 %v4661, %v4657
      %v4663 = vrot.slane %v4662, 4
      %v4665 = vshll.u32 %v4578, 16
      %v4667 = vrot.slane %v4665, 5
      %v4668 = vsel %vm1089, %v4663, %v4667
      %v4670 = vshrl.u32 %v4579, 16
      %v4672 = vrot.slane %v4670, 4
      %v4673 = vshll.u32 %v4579, 16
      %v4675 = vrot.slane %v4673, 5
      %v4676 = vor.u32 %v4672, %v4675
      %v4677 = vrot.slane %v4676, 4
      %v4679 = vshll.u32 %v4580, 16
      %v4681 = vrot.slane %v4679, 5
      %v4682 = vsel %vm1089, %v4677, %v4681
      %v4683 = vshrl.u32 %v4580, 16
      %v4685 = vrot.slane %v4683, 4
      %v4686 = vor.u32 %v4685, %v4681
      %v4687 = vrot.slane %v4686, 4
      %v4689 = vshll.u32 %v4581, 16
      %v4691 = vrot.slane %v4689, 5
      %v4692 = vsel %vm1089, %v4687, %v4691
      %v4694 = vshrl.u32 %v4582, 16
      %v4696 = vrot.slane %v4694, 4
      %v4697 = vshll.u32 %v4582, 16
      %v4699 = vrot.slane %v4697, 5
      %v4700 = vor.u32 %v4696, %v4699
      %v4701 = vrot.slane %v4700, 4
      %v4703 = vshll.u32 %v4583, 16
      %v4705 = vrot.slane %v4703, 5
      %v4706 = vsel %vm1089, %v4701, %v4705
      %v4707 = vshrl.u32 %v4583, 16
      %v4709 = vrot.slane %v4707, 4
      %v4710 = vor.u32 %v4709, %v4705
      %v4711 = vrot.slane %v4710, 4
      %v4713 = vshll.u32 %v4584, 16
      %v4715 = vrot.slane %v4713, 5
      %v4716 = vsel %vm1089, %v4711, %v4715
      %v4718 = vshrl.u32 %v4585, 16
      %v4720 = vrot.slane %v4718, 4
      %v4721 = vshll.u32 %v4585, 16
      %v4723 = vrot.slane %v4721, 5
      %v4724 = vor.u32 %v4720, %v4723
      %v4725 = vrot.slane %v4724, 4
      %v4727 = vshll.u32 %v4586, 16
      %v4729 = vrot.slane %v4727, 5
      %v4730 = vsel %vm1089, %v4725, %v4729
      %v4731 = vshrl.u32 %v4586, 16
      %v4733 = vrot.slane %v4731, 4
      %v4734 = vor.u32 %v4733, %v4729
      %v4735 = vrot.slane %v4734, 4
      %v4737 = vshll.u32 %v4587, 16
      %v4739 = vrot.slane %v4737, 5
      %v4740 = vsel %vm1089, %v4735, %v4739
      %v4742 = vshrl.u32 %v4588, 16
      %v4744 = vrot.slane %v4742, 4
      %v4745 = vshll.u32 %v4588, 16
      %v4747 = vrot.slane %v4745, 5
      %v4748 = vor.u32 %v4744, %v4747
      %v4749 = vrot.slane %v4748, 4
      %v4751 = vshll.u32 %v4589, 16
      %v4753 = vrot.slane %v4751, 5
      %v4754 = vsel %vm1089, %v4749, %v4753
      %v4755 = vshrl.u32 %v4589, 16
      %v4757 = vrot.slane %v4755, 4
      %v4758 = vor.u32 %v4757, %v4753
      %v4759 = vrot.slane %v4758, 4
      %v4761 = vshll.u32 %v4590, 16
      %v4763 = vrot.slane %v4761, 5
      %v4764 = vsel %vm1089, %v4759, %v4763
      %v4766 = vshrl.u32 %v4591, 16
      %v4768 = vrot.slane %v4766, 4
      %v4769 = vshll.u32 %v4591, 16
      %v4771 = vrot.slane %v4769, 5
      %v4772 = vor.u32 %v4768, %v4771
      %v4773 = vrot.slane %v4772, 4
      %v4775 = vshll.u32 %v4592, 16
      %v4777 = vrot.slane %v4775, 5
      %v4778 = vsel %vm1089, %v4773, %v4777
      %v4779 = vshrl.u32 %v4592, 16
      %v4781 = vrot.slane %v4779, 4
      %v4782 = vor.u32 %v4781, %v4777
      %v4783 = vrot.slane %v4782, 4
      %v4785 = vshll.u32 %v4593, 16
      %v4787 = vrot.slane %v4785, 5
      %v4788 = vsel %vm1089, %v4783, %v4787
      %v4790 = vshrl.u32 %v4594, 16
      %v4792 = vrot.slane %v4790, 4
      %v4793 = vshll.u32 %v4594, 16
      %v4795 = vrot.slane %v4793, 5
      %v4796 = vor.u32 %v4792, %v4795
      %v4797 = vrot.slane %v4796, 4
      %v4799 = vshll.u32 %v4595, 16
      %v4801 = vrot.slane %v4799, 5
      %v4802 = vsel %vm1089, %v4797, %v4801
      %v4803 = vshrl.u32 %v4595, 16
      %v4805 = vrot.slane %v4803, 4
      %v4806 = vor.u32 %v4805, %v4801
      %v4807 = vrot.slane %v4806, 4
      %v4809 = vshll.u32 %v4596, 16
      %v4811 = vrot.slane %v4809, 5
      %v4812 = vsel %vm1089, %v4807, %v4811
      %v4814 = vshrl.u32 %v4597, 16
      %v4816 = vrot.slane %v4814, 4
      %v4817 = vshll.u32 %v4597, 16
      %v4819 = vrot.slane %v4817, 5
      %v4820 = vor.u32 %v4816, %v4819
      %v4821 = vrot.slane %v4820, 4
      %v4823 = vshll.u32 %v4598, 16
      %v4825 = vrot.slane %v4823, 5
      %v4826 = vsel %vm1089, %v4821, %v4825
      %v4827 = vshrl.u32 %v4598, 16
      %v4829 = vrot.slane %v4827, 4
      %v4830 = vor.u32 %v4829, %v4825
      %v4831 = vrot.slane %v4830, 4
      %v4833 = vshll.u32 %v4599, 16
      %v4835 = vrot.slane %v4833, 5
      %v4836 = vsel %vm1089, %v4831, %v4835
      %v4838 = vshrl.u32 %v4600, 16
      %v4840 = vrot.slane %v4838, 4
      %v4841 = vshll.u32 %v4600, 16
      %v4843 = vrot.slane %v4841, 5
      %v4844 = vor.u32 %v4840, %v4843
      %v4845 = vrot.slane %v4844, 4
      %v4847 = vshll.u32 %v4601, 16
      %v4849 = vrot.slane %v4847, 5
      %v4850 = vsel %vm1089, %v4845, %v4849
      %v4851 = vshrl.u32 %v4601, 16
      %v4853 = vrot.slane %v4851, 4
      %v4854 = vor.u32 %v4853, %v4849
      %v4855 = vrot.slane %v4854, 4
      %v4857 = vshll.u32 %v4602, 16
      %v4859 = vrot.slane %v4857, 5
      %v4860 = vsel %vm1089, %v4855, %v4859
      %v4862 = vshrl.u32 %v4603, 16
      %v4864 = vrot.slane %v4862, 4
      %v4865 = vshll.u32 %v4603, 16
      %v4867 = vrot.slane %v4865, 5
      %v4868 = vor.u32 %v4864, %v4867
      %v4869 = vrot.slane %v4868, 4
      %v4871 = vshll.u32 %v4604, 16
      %v4873 = vrot.slane %v4871, 5
      %v4874 = vsel %vm1089, %v4869, %v4873
      %v4875 = vshrl.u32 %v4604, 16
      %v4877 = vrot.slane %v4875, 4
      %v4878 = vor.u32 %v4877, %v4873
      %v4879 = vrot.slane %v4878, 4
      %v4881 = vshll.u32 %v4605, 16
      %v4883 = vrot.slane %v4881, 5
      %v4884 = vsel %vm1089, %v4879, %v4883
      %v4886 = vshrl.u32 %v4606, 16
      %v4888 = vrot.slane %v4886, 4
      %v4889 = vshll.u32 %v4606, 16
      %v4891 = vrot.slane %v4889, 5
      %v4892 = vor.u32 %v4888, %v4891
      %v4893 = vrot.slane %v4892, 4
      %v4895 = vshll.u32 %v4607, 16
      %v4897 = vrot.slane %v4895, 5
      %v4898 = vsel %vm1089, %v4893, %v4897
      %v4899 = vshrl.u32 %v4607, 16
      %v4901 = vrot.slane %v4899, 4
      %v4902 = vor.u32 %v4901, %v4897
      %v4903 = vrot.slane %v4902, 4
      %v4905 = vshll.u32 %v4608, 16
      %v4907 = vrot.slane %v4905, 5
      %v4908 = vsel %vm1089, %v4903, %v4907
      %v4910 = vshrl.u32 %v4609, 16
      %v4912 = vrot.slane %v4910, 4
      %v4913 = vshll.u32 %v4609, 16
      %v4915 = vrot.slane %v4913, 5
      %v4916 = vor.u32 %v4912, %v4915
      %v4917 = vrot.slane %v4916, 4
      %v4919 = vshll.u32 %v4610, 16
      %v4921 = vrot.slane %v4919, 5
      %v4922 = vsel %vm1089, %v4917, %v4921
      %v4923 = vshrl.u32 %v4610, 16
      %v4925 = vrot.slane %v4923, 4
      %v4926 = vor.u32 %v4925, %v4921
      %v4927 = vrot.slane %v4926, 4
      %v4929 = vshll.u32 %v4611, 16
      %v4931 = vrot.slane %v4929, 5
      %v4932 = vsel %vm1089, %v4927, %v4931
      %v4934 = vshrl.u32 %v4612, 16
      %v4936 = vrot.slane %v4934, 4
      %v4937 = vshll.u32 %v4612, 16
      %v4939 = vrot.slane %v4937, 5
      %v4940 = vor.u32 %v4936, %v4939
      %v4941 = vrot.slane %v4940, 4
      %v4943 = vshll.u32 %v4613, 16
      %v4945 = vrot.slane %v4943, 5
      %v4946 = vsel %vm1089, %v4941, %v4945
      %v4947 = vshrl.u32 %v4613, 16
      %v4949 = vrot.slane %v4947, 4
      %v4950 = vor.u32 %v4949, %v4945
      %v4951 = vrot.slane %v4950, 4
      %v4953 = vshll.u32 %v4614, 16
      %v4955 = vrot.slane %v4953, 5
      %v4956 = vsel %vm1089, %v4951, %v4955
      %v4958 = vshrl.u32 %v4615, 16
      %v4960 = vrot.slane %v4958, 4
      %v4961 = vshll.u32 %v4615, 16
      %v4963 = vrot.slane %v4961, 5
      %v4964 = vor.u32 %v4960, %v4963
      %v4965 = vrot.slane %v4964, 4
      %v4967 = vshll.u32 %v4616, 16
      %v4969 = vrot.slane %v4967, 5
      %v4970 = vsel %vm1089, %v4965, %v4969
      %v4971 = vshrl.u32 %v4616, 16
      %v4973 = vrot.slane %v4971, 4
      %v4974 = vor.u32 %v4973, %v4969
      %v4975 = vrot.slane %v4974, 4
      %v4977 = vshll.u32 %v4617, 16
      %v4979 = vrot.slane %v4977, 5
      %v4980 = vsel %vm1089, %v4975, %v4979
      %v4982 = vshrl.u32 %v4618, 16
      %v4984 = vrot.slane %v4982, 4
      %v4985 = vshll.u32 %v4618, 16
      %v4987 = vrot.slane %v4985, 5
      %v4988 = vor.u32 %v4984, %v4987
      %v4989 = vrot.slane %v4988, 4
      %v4991 = vshll.u32 %v4619, 16
      %v4993 = vrot.slane %v4991, 5
      %v4994 = vsel %vm1089, %v4989, %v4993
      %v4995 = vshrl.u32 %v4619, 16
      %v4997 = vrot.slane %v4995, 4
      %v4998 = vor.u32 %v4997, %v4993
      %v4999 = vrot.slane %v4998, 4
      %v5001 = vshll.u32 %v4620, 16
      %v5003 = vrot.slane %v5001, 5
      %v5004 = vsel %vm1089, %v4999, %v5003
      %v5005 = vld [vmem:[%s3 + $0x1c0] sm:$0xf]
      %v5006 = vld [vmem:[%s3 + $0x1c4] sm:$0xf]
      %v5007 = vld [vmem:[%s3 + $0x1c8] sm:$0xf]
      %v5008 = vld [vmem:[%s3 + $0x1cc] sm:$0xf]
      %v5009 = vld [vmem:[%s3 + $0x1d0] sm:$0xf]
      %v5010 = vld [vmem:[%s3 + $0x1d4] sm:$0xf]
      %v5011 = vld [vmem:[%s3 + $0x1d8] sm:$0xf]
      %v5012 = vld [vmem:[%s3 + $0x1dc] sm:$0xf]
      %v5013 = vld [vmem:[%s3 + $0x1e0] sm:$0xf]
      %v5014 = vld [vmem:[%s3 + $0x1e4] sm:$0xf]
      %v5015 = vld [vmem:[%s3 + $0x1e8] sm:$0xf]
      %v5016 = vld [vmem:[%s3 + $0x1ec] sm:$0xf]
      %v5017 = vld [vmem:[%s3 + $0x1f0] sm:$0xf]
      %v5018 = vld [vmem:[%s3 + $0x1f4] sm:$0xf]
      %v5019 = vld [vmem:[%s3 + $0x1f8] sm:$0xf]
      %v5020 = vld [vmem:[%s3 + $0x1fc] sm:$0xf]
      %v5021 = vunpack.c.l.b16 %v4634
      %v5022 = vunpack.c.l.b16 %v4644
      %v5023 = vunpack.c.l.b16 %v4658
      %v5024 = vunpack.c.l.b16 %v4668
      %v5025 = vunpack.c.l.b16 %v4682
      %v5026 = vunpack.c.l.b16 %v4692
      %v5027 = vunpack.c.l.b16 %v4706
      %v5028 = vunpack.c.l.b16 %v4716
      %v5029 = vunpack.c.l.b16 %v4730
      %v5030 = vunpack.c.l.b16 %v4740
      %v5031 = vunpack.c.l.b16 %v4754
      %v5032 = vunpack.c.l.b16 %v4764
      %v5033 = vunpack.c.l.b16 %v4778
      %v5034 = vunpack.c.l.b16 %v4788
      %v5035 = vunpack.c.l.b16 %v4802
      %v5036 = vunpack.c.l.b16 %v4812
      %v5037 = vunpack.c.l.b16 %v4826
      %v5038 = vunpack.c.l.b16 %v4836
      %v5039 = vunpack.c.l.b16 %v4850
      %v5040 = vunpack.c.l.b16 %v4860
      %v5041 = vunpack.c.l.b16 %v4874
      %v5042 = vunpack.c.l.b16 %v4884
      %v5043 = vunpack.c.l.b16 %v4898
      %v5044 = vunpack.c.l.b16 %v4908
      %v5045 = vunpack.c.l.b16 %v4922
      %v5046 = vunpack.c.l.b16 %v4932
      %v5047 = vunpack.c.l.b16 %v4946
      %v5048 = vunpack.c.l.b16 %v4956
      %v5049 = vunpack.c.l.b16 %v4970
      %v5050 = vunpack.c.l.b16 %v4980
      %v5051 = vunpack.c.l.b16 %v4994
      %v5052 = vunpack.c.l.b16 %v5004
      %v5053 = vpack.c.b16 %v5022, %v5021
      %v5054 = vpack.c.b16 %v5024, %v5023
      %v5055 = vpack.c.b16 %v5026, %v5025
      %v5056 = vpack.c.b16 %v5028, %v5027
      %v5057 = vpack.c.b16 %v5030, %v5029
      %v5058 = vpack.c.b16 %v5032, %v5031
      %v5059 = vpack.c.b16 %v5034, %v5033
      %v5060 = vpack.c.b16 %v5036, %v5035
      %v5061 = vpack.c.b16 %v5038, %v5037
      %v5062 = vpack.c.b16 %v5040, %v5039
      %v5063 = vpack.c.b16 %v5042, %v5041
      %v5064 = vpack.c.b16 %v5044, %v5043
      %v5065 = vpack.c.b16 %v5046, %v5045
      %v5066 = vpack.c.b16 %v5048, %v5047
      %v5067 = vpack.c.b16 %v5050, %v5049
      %v5068 = vpack.c.b16 %v5052, %v5051
      %v5101 = vunpack.c.l.b16 %v5005
      %v5102 = vunpack.c.l.b16 %v5006
      %v5103 = vunpack.c.l.b16 %v5007
      %v5104 = vunpack.c.l.b16 %v5008
      %v5105 = vunpack.c.l.b16 %v5009
      %v5106 = vunpack.c.l.b16 %v5010
      %v5107 = vunpack.c.l.b16 %v5011
      %v5108 = vunpack.c.l.b16 %v5012
      %v5109 = vunpack.c.l.b16 %v5013
      %v5110 = vunpack.c.l.b16 %v5014
      %v5111 = vunpack.c.l.b16 %v5015
      %v5112 = vunpack.c.l.b16 %v5016
      %v5113 = vunpack.c.l.b16 %v5017
      %v5114 = vunpack.c.l.b16 %v5018
      %v5115 = vunpack.c.l.b16 %v5019
      %v5116 = vunpack.c.l.b16 %v5020
      %v5117 = vpack.c.b16 %v5102, %v5101
      %v5118 = vpack.c.b16 %v5104, %v5103
      %v5119 = vpack.c.b16 %v5106, %v5105
      %v5120 = vpack.c.b16 %v5108, %v5107
      %v5121 = vpack.c.b16 %v5110, %v5109
      %v5122 = vpack.c.b16 %v5112, %v5111
      %v5123 = vpack.c.b16 %v5114, %v5113
      %v5124 = vpack.c.b16 %v5116, %v5115
      %5133 = vmatprep.subr.bf16.mxu0 0
      %5134 = vmatpush1.bf16.msra.mxu0 %v5117
      %5135 = vmatprep.subr.bf16.mxu0 0
      %5136 = vmatpush1.bf16.msra.mxu0 %v5118
      %5137 = vmatprep.subr.bf16.mxu0 0
      %5138 = vmatpush1.bf16.msra.mxu0 %v5119
      %5139 = vmatprep.subr.bf16.mxu0 0
      %5140 = vmatpush1.bf16.msra.mxu0 %v5120
      %5141 = vmatprep.subr.bf16.mxu0 0
      %5142 = vmatpush1.bf16.msra.mxu0 %v5121
      %5143 = vmatprep.subr.bf16.mxu0 0
      %5144 = vmatpush1.bf16.msra.mxu0 %v5122
      %5145 = vmatprep.subr.bf16.mxu0 0
      %5146 = vmatpush1.bf16.msra.mxu0 %v5123
      %5147 = vmatprep.subr.bf16.mxu0 0
      %5148 = vmatpush1.bf16.msra.mxu0 %v5124
      %5149 = vmatprep.subr.bf16.mxu0 0
      %5150 = vmatpush1.bf16.msra.mxu0 0
      %5151 = vmatprep.subr.bf16.mxu0 0
      %5152 = vmatpush1.bf16.msra.mxu0 0
      %5153 = vmatprep.subr.bf16.mxu0 0
      %5154 = vmatpush1.bf16.msra.mxu0 0
      %5155 = vmatprep.subr.bf16.mxu0 0
      %5156 = vmatpush1.bf16.msra.mxu0 0
      %5157 = vmatprep.subr.bf16.mxu0 0
      %5158 = vmatpush1.bf16.msra.mxu0 0
      %5159 = vmatprep.subr.bf16.mxu0 0
      %5160 = vmatpush1.bf16.msra.mxu0 0
      %5161 = vmatprep.subr.bf16.mxu0 0
      %5162 = vmatpush1.bf16.msra.mxu0 0
      %5163 = vmatprep.subr.bf16.mxu0 0
      %5164 = vmatpush1.bf16.msra.mxu0 0
      %5165 = vmatprep.mubr.bf16.mxu0 0
      %5166 = vmatmul.mubr.bf16.gmra.mrb[0].mxu0 %v5053
      %v5167 = vpop.f32.mrb[0].mxu0
      %v5168 = vadd.f32 0.0, %v5167
      %v5169 = vpop.f32.mrb[0].mxu0
      %v5170 = vpop.f32.mrb[0].mxu0
      %v5171 = vadd.f32 0.0, %v5170
      %v5172 = vpop.f32.mrb[0].mxu0
      %5173 = vmatprep.mubr.bf16.mxu0 0
      %5174 = vmatmul.mubr.bf16.gmra.mrb[0].mxu0 %v5054
      %v5175 = vpop.f32.mrb[0].mxu0
      %v5176 = vadd.f32 0.0, %v5175
      %v5177 = vpop.f32.mrb[0].mxu0
      %v5178 = vpop.f32.mrb[0].mxu0
      %v5179 = vadd.f32 0.0, %v5178
      %v5180 = vpop.f32.mrb[0].mxu0
      %5181 = vmatprep.mubr.bf16.mxu0 0
      %5182 = vmatmul.mubr.bf16.gmra.mrb[0].mxu0 %v5055
      %v5183 = vpop.f32.mrb[0].mxu0
      %v5184 = vadd.f32 0.0, %v5183
      %v5185 = vpop.f32.mrb[0].mxu0
      %v5186 = vpop.f32.mrb[0].mxu0
      %v5187 = vadd.f32 0.0, %v5186
      %v5188 = vpop.f32.mrb[0].mxu0
      %5189 = vmatprep.mubr.bf16.mxu0 0
      %5190 = vmatmul.mubr.bf16.gmra.mrb[0].mxu0 %v5056
      %v5191 = vpop.f32.mrb[0].mxu0
      %v5192 = vadd.f32 0.0, %v5191
      %v5193 = vpop.f32.mrb[0].mxu0
      %v5194 = vpop.f32.mrb[0].mxu0
      %v5195 = vadd.f32 0.0, %v5194
      %v5196 = vpop.f32.mrb[0].mxu0
      %5197 = vmatprep.mubr.bf16.mxu0 0
      %5198 = vmatmul.mubr.bf16.gmra.mrb[0].mxu0 %v5057
      %v5199 = vpop.f32.mrb[0].mxu0
      %v5200 = vadd.f32 0.0, %v5199
      %v5201 = vpop.f32.mrb[0].mxu0
      %v5202 = vpop.f32.mrb[0].mxu0
      %v5203 = vadd.f32 0.0, %v5202
      %v5204 = vpop.f32.mrb[0].mxu0
      %5205 = vmatprep.mubr.bf16.mxu0 0
      %5206 = vmatmul.mubr.bf16.gmra.mrb[0].mxu0 %v5058
      %v5207 = vpop.f32.mrb[0].mxu0
      %v5208 = vadd.f32 0.0, %v5207
      %v5209 = vpop.f32.mrb[0].mxu0
      %v5210 = vpop.f32.mrb[0].mxu0
      %v5211 = vadd.f32 0.0, %v5210
      %v5212 = vpop.f32.mrb[0].mxu0
      %5213 = vmatprep.mubr.bf16.mxu0 0
      %5214 = vmatmul.mubr.bf16.gmra.mrb[0].mxu0 %v5059
      %v5215 = vpop.f32.mrb[0].mxu0
      %v5216 = vadd.f32 0.0, %v5215
      %v5217 = vpop.f32.mrb[0].mxu0
      %v5218 = vpop.f32.mrb[0].mxu0
      %v5219 = vadd.f32 0.0, %v5218
      %v5220 = vpop.f32.mrb[0].mxu0
      %5221 = vmatprep.mubr.bf16.mxu0 0
      %5222 = vmatmul.mubr.bf16.gmra.mrb[0].mxu0 %v5060
      %v5223 = vpop.f32.mrb[0].mxu0
      %v5224 = vadd.f32 0.0, %v5223
      %v5225 = vpop.f32.mrb[0].mxu0
      %v5226 = vpop.f32.mrb[0].mxu0
      %v5227 = vadd.f32 0.0, %v5226
      %v5228 = vpop.f32.mrb[0].mxu0
      %5229 = vmatprep.mubr.bf16.mxu0 0
      %5230 = vmatmul.mubr.bf16.gmra.mrb[0].mxu0 %v5061
      %v5231 = vpop.f32.mrb[0].mxu0
      %v5232 = vadd.f32 0.0, %v5231
      %v5233 = vpop.f32.mrb[0].mxu0
      %v5234 = vpop.f32.mrb[0].mxu0
      %v5235 = vadd.f32 0.0, %v5234
      %v5236 = vpop.f32.mrb[0].mxu0
      %5237 = vmatprep.mubr.bf16.mxu0 0
      %5238 = vmatmul.mubr.bf16.gmra.mrb[0].mxu0 %v5062
      %v5239 = vpop.f32.mrb[0].mxu0
      %v5240 = vadd.f32 0.0, %v5239
      %v5241 = vpop.f32.mrb[0].mxu0
      %v5242 = vpop.f32.mrb[0].mxu0
      %v5243 = vadd.f32 0.0, %v5242
      %v5244 = vpop.f32.mrb[0].mxu0
      %5245 = vmatprep.mubr.bf16.mxu0 0
      %5246 = vmatmul.mubr.bf16.gmra.mrb[0].mxu0 %v5063
      %v5247 = vpop.f32.mrb[0].mxu0
      %v5248 = vadd.f32 0.0, %v5247
      %v5249 = vpop.f32.mrb[0].mxu0
      %v5250 = vpop.f32.mrb[0].mxu0
      %v5251 = vadd.f32 0.0, %v5250
      %v5252 = vpop.f32.mrb[0].mxu0
      %5253 = vmatprep.mubr.bf16.mxu0 0
      %5254 = vmatmul.mubr.bf16.gmra.mrb[0].mxu0 %v5064
      %v5255 = vpop.f32.mrb[0].mxu0
      %v5256 = vadd.f32 0.0, %v5255
      %v5257 = vpop.f32.mrb[0].mxu0
      %v5258 = vpop.f32.mrb[0].mxu0
      %v5259 = vadd.f32 0.0, %v5258
      %v5260 = vpop.f32.mrb[0].mxu0
      %5261 = vmatprep.mubr.bf16.mxu0 0
      %5262 = vmatmul.mubr.bf16.gmra.mrb[0].mxu0 %v5065
      %v5263 = vpop.f32.mrb[0].mxu0
      %v5264 = vadd.f32 0.0, %v5263
      %v5265 = vpop.f32.mrb[0].mxu0
      %v5266 = vpop.f32.mrb[0].mxu0
      %v5267 = vadd.f32 0.0, %v5266
      %v5268 = vpop.f32.mrb[0].mxu0
      %5269 = vmatprep.mubr.bf16.mxu0 0
      %5270 = vmatmul.mubr.bf16.gmra.mrb[0].mxu0 %v5066
      %v5271 = vpop.f32.mrb[0].mxu0
      %v5272 = vadd.f32 0.0, %v5271
      %v5273 = vpop.f32.mrb[0].mxu0
      %v5274 = vpop.f32.mrb[0].mxu0
      %v5275 = vadd.f32 0.0, %v5274
      %v5276 = vpop.f32.mrb[0].mxu0
      %5277 = vmatprep.mubr.bf16.mxu0 0
      %5278 = vmatmul.mubr.bf16.gmra.mrb[0].mxu0 %v5067
      %v5279 = vpop.f32.mrb[0].mxu0
      %v5280 = vadd.f32 0.0, %v5279
      %v5281 = vpop.f32.mrb[0].mxu0
      %v5282 = vpop.f32.mrb[0].mxu0
      %v5283 = vadd.f32 0.0, %v5282
      %v5284 = vpop.f32.mrb[0].mxu0
      %5285 = vmatprep.mubr.bf16.mxu0 0
      %5286 = vmatmul.mubr.bf16.gmra.mrb[0].mxu0 %v5068
      %v5287 = vpop.f32.mrb[0].mxu0
      %v5288 = vadd.f32 0.0, %v5287
      %v5289 = vpop.f32.mrb[0].mxu0
      %v5290 = vpop.f32.mrb[0].mxu0
      %v5291 = vadd.f32 0.0, %v5290
      %v5292 = vpop.f32.mrb[0].mxu0
      %5293 = vdwg.mxu0
      %v5294 = vadd.f32 %v4541, %v5168
      %v5295 = vadd.f32 %v4542, %v5171
      %v5296 = vadd.f32 %v4543, %v5176
      %v5297 = vadd.f32 %v4544, %v5179
      %v5298 = vadd.f32 %v4545, %v5184
      %v5299 = vadd.f32 %v4546, %v5187
      %v5300 = vadd.f32 %v4547, %v5192
      %v5301 = vadd.f32 %v4548, %v5195
      %v5302 = vadd.f32 %v4549, %v5200
      %v5303 = vadd.f32 %v4550, %v5203
      %v5304 = vadd.f32 %v4551, %v5208
      %v5305 = vadd.f32 %v4552, %v5211
      %v5306 = vadd.f32 %v4553, %v5216
      %v5307 = vadd.f32 %v4554, %v5219
      %v5308 = vadd.f32 %v4555, %v5224
      %v5309 = vadd.f32 %v4556, %v5227
      %v5310 = vadd.f32 %v4557, %v5232
      %v5311 = vadd.f32 %v4558, %v5235
      %v5312 = vadd.f32 %v4559, %v5240
      %v5313 = vadd.f32 %v4560, %v5243
      %v5314 = vadd.f32 %v4561, %v5248
      %v5315 = vadd.f32 %v4562, %v5251
      %v5316 = vadd.f32 %v4563, %v5256
      %v5317 = vadd.f32 %v4564, %v5259
      %v5318 = vadd.f32 %v4565, %v5264
      %v5319 = vadd.f32 %v4566, %v5267
      %v5320 = vadd.f32 %v4567, %v5272
      %v5321 = vadd.f32 %v4568, %v5275
      %v5322 = vadd.f32 %v4569, %v5280
      %v5323 = vadd.f32 %v4570, %v5283
      %v5324 = vadd.f32 %v4571, %v5288
      %v5325 = vadd.f32 %v4572, %v5291
      %v5326 = vld [vmem:[%s4187] sm:$0xe]
      %v5327 = vld [vmem:[%s4187 + $0xc] sm:$0xe]
      %v5328 = vld [vmem:[%s4187 + $0x18] sm:$0xe]
      %v5329 = vld [vmem:[%s4187 + $0x24] sm:$0xe]
      %v5330 = vld [vmem:[%s4187 + $0x30] sm:$0xe]
      %v5331 = vld [vmem:[%s4187 + $0x3c] sm:$0xe]
      %v5332 = vld [vmem:[%s4187 + $0x48] sm:$0xe]
      %v5333 = vld [vmem:[%s4187 + $0x54] sm:$0xe]
      %v5334 = vld [vmem:[%s4187 + $0x60] sm:$0xe]
      %v5335 = vld [vmem:[%s4187 + $0x6c] sm:$0xe]
      %v5336 = vld [vmem:[%s4187 + $0x78] sm:$0xe]
      %v5337 = vld [vmem:[%s4187 + $0x84] sm:$0xe]
      %v5338 = vld [vmem:[%s4187 + $0x90] sm:$0xe]
      %v5339 = vld [vmem:[%s4187 + $0x9c] sm:$0xe]
      %v5340 = vld [vmem:[%s4187 + $0xa8] sm:$0xe]
      %v5341 = vld [vmem:[%s4187 + $0xb4] sm:$0xe]
      %v5390 = vrot.slane %v5326, 5
      %v5391 = vrot.slane %v5390, 4
      %v5392 = vrot.slane %v4574, 5
      %v5393 = vsel %vm2118, %v5391, %v5392
      %v5394 = vrot.slane %v5392, 4
      %v5395 = vrot.slane %v4575, 5
      %v5396 = vsel %vm2118, %v5394, %v5395
      %v5397 = vrot.slane %v5327, 5
      %v5398 = vrot.slane %v5397, 4
      %v5399 = vrot.slane %v4577, 5
      %v5400 = vsel %vm2118, %v5398, %v5399
      %v5401 = vrot.slane %v5399, 4
      %v5402 = vrot.slane %v4578, 5
      %v5403 = vsel %vm2118, %v5401, %v5402
      %v5404 = vrot.slane %v5328, 5
      %v5405 = vrot.slane %v5404, 4
      %v5406 = vrot.slane %v4580, 5
      %v5407 = vsel %vm2118, %v5405, %v5406
      %v5408 = vrot.slane %v5406, 4
      %v5409 = vrot.slane %v4581, 5
      %v5410 = vsel %vm2118, %v5408, %v5409
      %v5411 = vrot.slane %v5329, 5
      %v5412 = vrot.slane %v5411, 4
      %v5413 = vrot.slane %v4583, 5
      %v5414 = vsel %vm2118, %v5412, %v5413
      %v5415 = vrot.slane %v5413, 4
      %v5416 = vrot.slane %v4584, 5
      %v5417 = vsel %vm2118, %v5415, %v5416
      %v5418 = vrot.slane %v5330, 5
      %v5419 = vrot.slane %v5418, 4
      %v5420 = vrot.slane %v4586, 5
      %v5421 = vsel %vm2118, %v5419, %v5420
      %v5422 = vrot.slane %v5420, 4
      %v5423 = vrot.slane %v4587, 5
      %v5424 = vsel %vm2118, %v5422, %v5423
      %v5425 = vrot.slane %v5331, 5
      %v5426 = vrot.slane %v5425, 4
      %v5427 = vrot.slane %v4589, 5
      %v5428 = vsel %vm2118, %v5426, %v5427
      %v5429 = vrot.slane %v5427, 4
      %v5430 = vrot.slane %v4590, 5
      %v5431 = vsel %vm2118, %v5429, %v5430
      %v5432 = vrot.slane %v5332, 5
      %v5433 = vrot.slane %v5432, 4
      %v5434 = vrot.slane %v4592, 5
      %v5435 = vsel %vm2118, %v5433, %v5434
      %v5436 = vrot.slane %v5434, 4
      %v5437 = vrot.slane %v4593, 5
      %v5438 = vsel %vm2118, %v5436, %v5437
      %v5439 = vrot.slane %v5333, 5
      %v5440 = vrot.slane %v5439, 4
      %v5441 = vrot.slane %v4595, 5
      %v5442 = vsel %vm2118, %v5440, %v5441
      %v5443 = vrot.slane %v5441, 4
      %v5444 = vrot.slane %v4596, 5
      %v5445 = vsel %vm2118, %v5443, %v5444
      %v5446 = vrot.slane %v5334, 5
      %v5447 = vrot.slane %v5446, 4
      %v5448 = vrot.slane %v4598, 5
      %v5449 = vsel %vm2118, %v5447, %v5448
      %v5450 = vrot.slane %v5448, 4
      %v5451 = vrot.slane %v4599, 5
      %v5452 = vsel %vm2118, %v5450, %v5451
      %v5453 = vrot.slane %v5335, 5
      %v5454 = vrot.slane %v5453, 4
      %v5455 = vrot.slane %v4601, 5
      %v5456 = vsel %vm2118, %v5454, %v5455
      %v5457 = vrot.slane %v5455, 4
      %v5458 = vrot.slane %v4602, 5
      %v5459 = vsel %vm2118, %v5457, %v5458
      %v5460 = vrot.slane %v5336, 5
      %v5461 = vrot.slane %v5460, 4
      %v5462 = vrot.slane %v4604, 5
      %v5463 = vsel %vm2118, %v5461, %v5462
      %v5464 = vrot.slane %v5462, 4
      %v5465 = vrot.slane %v4605, 5
      %v5466 = vsel %vm2118, %v5464, %v5465
      %v5467 = vrot.slane %v5337, 5
      %v5468 = vrot.slane %v5467, 4
      %v5469 = vrot.slane %v4607, 5
      %v5470 = vsel %vm2118, %v5468, %v5469
      %v5471 = vrot.slane %v5469, 4
      %v5472 = vrot.slane %v4608, 5
      %v5473 = vsel %vm2118, %v5471, %v5472
      %v5474 = vrot.slane %v5338, 5
      %v5475 = vrot.slane %v5474, 4
      %v5476 = vrot.slane %v4610, 5
      %v5477 = vsel %vm2118, %v5475, %v5476
      %v5478 = vrot.slane %v5476, 4
      %v5479 = vrot.slane %v4611, 5
      %v5480 = vsel %vm2118, %v5478, %v5479
      %v5481 = vrot.slane %v5339, 5
      %v5482 = vrot.slane %v5481, 4
      %v5483 = vrot.slane %v4613, 5
      %v5484 = vsel %vm2118, %v5482, %v5483
      %v5485 = vrot.slane %v5483, 4
      %v5486 = vrot.slane %v4614, 5
      %v5487 = vsel %vm2118, %v5485, %v5486
      %v5488 = vrot.slane %v5340, 5
      %v5489 = vrot.slane %v5488, 4
      %v5490 = vrot.slane %v4616, 5
      %v5491 = vsel %vm2118, %v5489, %v5490
      %v5492 = vrot.slane %v5490, 4
      %v5493 = vrot.slane %v4617, 5
      %v5494 = vsel %vm2118, %v5492, %v5493
      %v5495 = vrot.slane %v5341, 5
      %v5496 = vrot.slane %v5495, 4
      %v5497 = vrot.slane %v4619, 5
      %v5498 = vsel %vm2118, %v5496, %v5497
      %v5499 = vrot.slane %v5497, 4
      %v5500 = vrot.slane %v4620, 5
      %v5501 = vsel %vm2118, %v5499, %v5500
      %v5502 = vld [vmem:[%s3 + $0x200] sm:$0xf]
      %v5503 = vld [vmem:[%s3 + $0x204] sm:$0xf]
      %v5504 = vld [vmem:[%s3 + $0x208] sm:$0xf]
      %v5505 = vld [vmem:[%s3 + $0x20c] sm:$0xf]
      %v5506 = vld [vmem:[%s3 + $0x210] sm:$0xf]
      %v5507 = vld [vmem:[%s3 + $0x214] sm:$0xf]
      %v5508 = vld [vmem:[%s3 + $0x218] sm:$0xf]
      %v5509 = vld [vmem:[%s3 + $0x21c] sm:$0xf]
      %v5510 = vld [vmem:[%s3 + $0x220] sm:$0xf]
      %v5511 = vld [vmem:[%s3 + $0x224] sm:$0xf]
      %v5512 = vld [vmem:[%s3 + $0x228] sm:$0xf]
      %v5513 = vld [vmem:[%s3 + $0x22c] sm:$0xf]
      %v5514 = vld [vmem:[%s3 + $0x230] sm:$0xf]
      %v5515 = vld [vmem:[%s3 + $0x234] sm:$0xf]
      %v5516 = vld [vmem:[%s3 + $0x238] sm:$0xf]
      %v5517 = vld [vmem:[%s3 + $0x23c] sm:$0xf]
      %v5518 = vunpack.c.l.b16 %v5393
      %v5519 = vunpack.c.l.b16 %v5396
      %v5520 = vunpack.c.l.b16 %v5400
      %v5521 = vunpack.c.l.b16 %v5403
      %v5522 = vunpack.c.l.b16 %v5407
      %v5523 = vunpack.c.l.b16 %v5410
      %v5524 = vunpack.c.l.b16 %v5414
      %v5525 = vunpack.c.l.b16 %v5417
      %v5526 = vunpack.c.l.b16 %v5421
      %v5527 = vunpack.c.l.b16 %v5424
      %v5528 = vunpack.c.l.b16 %v5428
      %v5529 = vunpack.c.l.b16 %v5431
      %v5530 = vunpack.c.l.b16 %v5435
      %v5531 = vunpack.c.l.b16 %v5438
      %v5532 = vunpack.c.l.b16 %v5442
      %v5533 = vunpack.c.l.b16 %v5445
      %v5534 = vunpack.c.l.b16 %v5449
      %v5535 = vunpack.c.l.b16 %v5452
      %v5536 = vunpack.c.l.b16 %v5456
      %v5537 = vunpack.c.l.b16 %v5459
      %v5538 = vunpack.c.l.b16 %v5463
      %v5539 = vunpack.c.l.b16 %v5466
      %v5540 = vunpack.c.l.b16 %v5470
      %v5541 = vunpack.c.l.b16 %v5473
      %v5542 = vunpack.c.l.b16 %v5477
      %v5543 = vunpack.c.l.b16 %v5480
      %v5544 = vunpack.c.l.b16 %v5484
      %v5545 = vunpack.c.l.b16 %v5487
      %v5546 = vunpack.c.l.b16 %v5491
      %v5547 = vunpack.c.l.b16 %v5494
      %v5548 = vunpack.c.l.b16 %v5498
      %v5549 = vunpack.c.l.b16 %v5501
      %v5550 = vpack.c.b16 %v5519, %v5518
      %v5551 = vpack.c.b16 %v5521, %v5520
      %v5552 = vpack.c.b16 %v5523, %v5522
      %v5553 = vpack.c.b16 %v5525, %v5524
      %v5554 = vpack.c.b16 %v5527, %v5526
      %v5555 = vpack.c.b16 %v5529, %v5528
      %v5556 = vpack.c.b16 %v5531, %v5530
      %v5557 = vpack.c.b16 %v5533, %v5532
      %v5558 = vpack.c.b16 %v5535, %v5534
      %v5559 = vpack.c.b16 %v5537, %v5536
      %v5560 = vpack.c.b16 %v5539, %v5538
      %v5561 = vpack.c.b16 %v5541, %v5540
      %v5562 = vpack.c.b16 %v5543, %v5542
      %v5563 = vpack.c.b16 %v5545, %v5544
      %v5564 = vpack.c.b16 %v5547, %v5546
      %v5565 = vpack.c.b16 %v5549, %v5548
      %v5598 = vunpack.c.l.b16 %v5502
      %v5599 = vunpack.c.l.b16 %v5503
      %v5600 = vunpack.c.l.b16 %v5504
      %v5601 = vunpack.c.l.b16 %v5505
      %v5602 = vunpack.c.l.b16 %v5506
      %v5603 = vunpack.c.l.b16 %v5507
      %v5604 = vunpack.c.l.b16 %v5508
      %v5605 = vunpack.c.l.b16 %v5509
      %v5606 = vunpack.c.l.b16 %v5510
      %v5607 = vunpack.c.l.b16 %v5511
      %v5608 = vunpack.c.l.b16 %v5512
      %v5609 = vunpack.c.l.b16 %v5513
      %v5610 = vunpack.c.l.b16 %v5514
      %v5611 = vunpack.c.l.b16 %v5515
      %v5612 = vunpack.c.l.b16 %v5516
      %v5613 = vunpack.c.l.b16 %v5517
      %v5614 = vpack.c.b16 %v5599, %v5598
      %v5615 = vpack.c.b16 %v5601, %v5600
      %v5616 = vpack.c.b16 %v5603, %v5602
      %v5617 = vpack.c.b16 %v5605, %v5604
      %v5618 = vpack.c.b16 %v5607, %v5606
      %v5619 = vpack.c.b16 %v5609, %v5608
      %v5620 = vpack.c.b16 %v5611, %v5610
      %v5621 = vpack.c.b16 %v5613, %v5612
      %5630 = vmatprep.subr.bf16.mxu0 0
      %5631 = vmatpush1.bf16.msra.mxu0 %v5614
      %5632 = vmatprep.subr.bf16.mxu0 0
      %5633 = vmatpush1.bf16.msra.mxu0 %v5615
      %5634 = vmatprep.subr.bf16.mxu0 0
      %5635 = vmatpush1.bf16.msra.mxu0 %v5616
      %5636 = vmatprep.subr.bf16.mxu0 0
      %5637 = vmatpush1.bf16.msra.mxu0 %v5617
      %5638 = vmatprep.subr.bf16.mxu0 0
      %5639 = vmatpush1.bf16.msra.mxu0 %v5618
      %5640 = vmatprep.subr.bf16.mxu0 0
      %5641 = vmatpush1.bf16.msra.mxu0 %v5619
      %5642 = vmatprep.subr.bf16.mxu0 0
      %5643 = vmatpush1.bf16.msra.mxu0 %v5620
      %5644 = vmatprep.subr.bf16.mxu0 0
      %5645 = vmatpush1.bf16.msra.mxu0 %v5621
      %5646 = vmatprep.subr.bf16.mxu0 0
      %5647 = vmatpush1.bf16.msra.mxu0 0
      %5648 = vmatprep.subr.bf16.mxu0 0
      %5649 = vmatpush1.bf16.msra.mxu0 0
      %5650 = vmatprep.subr.bf16.mxu0 0
      %5651 = vmatpush1.bf16.msra.mxu0 0
      %5652 = vmatprep.subr.bf16.mxu0 0
      %5653 = vmatpush1.bf16.msra.mxu0 0
      %5654 = vmatprep.subr.bf16.mxu0 0
      %5655 = vmatpush1.bf16.msra.mxu0 0
      %5656 = vmatprep.subr.bf16.mxu0 0
      %5657 = vmatpush1.bf16.msra.mxu0 0
      %5658 = vmatprep.subr.bf16.mxu0 0
      %5659 = vmatpush1.bf16.msra.mxu0 0
      %5660 = vmatprep.subr.bf16.mxu0 0
      %5661 = vmatpush1.bf16.msra.mxu0 0
      %5662 = vmatprep.mubr.bf16.mxu0 0
      %5663 = vmatmul.mubr.bf16.gmra.mrb[0].mxu0 %v5550
      %v5664 = vpop.f32.mrb[0].mxu0
      %v5665 = vadd.f32 0.0, %v5664
      %v5666 = vpop.f32.mrb[0].mxu0
      %v5667 = vpop.f32.mrb[0].mxu0
      %v5668 = vadd.f32 0.0, %v5667
      %v5669 = vpop.f32.mrb[0].mxu0
      %5670 = vmatprep.mubr.bf16.mxu0 0
      %5671 = vmatmul.mubr.bf16.gmra.mrb[0].mxu0 %v5551
      %v5672 = vpop.f32.mrb[0].mxu0
      %v5673 = vadd.f32 0.0, %v5672
      %v5674 = vpop.f32.mrb[0].mxu0
      %v5675 = vpop.f32.mrb[0].mxu0
      %v5676 = vadd.f32 0.0, %v5675
      %v5677 = vpop.f32.mrb[0].mxu0
      %5678 = vmatprep.mubr.bf16.mxu0 0
      %5679 = vmatmul.mubr.bf16.gmra.mrb[0].mxu0 %v5552
      %v5680 = vpop.f32.mrb[0].mxu0
      %v5681 = vadd.f32 0.0, %v5680
      %v5682 = vpop.f32.mrb[0].mxu0
      %v5683 = vpop.f32.mrb[0].mxu0
      %v5684 = vadd.f32 0.0, %v5683
      %v5685 = vpop.f32.mrb[0].mxu0
      %5686 = vmatprep.mubr.bf16.mxu0 0
      %5687 = vmatmul.mubr.bf16.gmra.mrb[0].mxu0 %v5553
      %v5688 = vpop.f32.mrb[0].mxu0
      %v5689 = vadd.f32 0.0, %v5688
      %v5690 = vpop.f32.mrb[0].mxu0
      %v5691 = vpop.f32.mrb[0].mxu0
      %v5692 = vadd.f32 0.0, %v5691
      %v5693 = vpop.f32.mrb[0].mxu0
      %5694 = vmatprep.mubr.bf16.mxu0 0
      %5695 = vmatmul.mubr.bf16.gmra.mrb[0].mxu0 %v5554
      %v5696 = vpop.f32.mrb[0].mxu0
      %v5697 = vadd.f32 0.0, %v5696
      %v5698 = vpop.f32.mrb[0].mxu0
      %v5699 = vpop.f32.mrb[0].mxu0
      %v5700 = vadd.f32 0.0, %v5699
      %v5701 = vpop.f32.mrb[0].mxu0
      %5702 = vmatprep.mubr.bf16.mxu0 0
      %5703 = vmatmul.mubr.bf16.gmra.mrb[0].mxu0 %v5555
      %v5704 = vpop.f32.mrb[0].mxu0
      %v5705 = vadd.f32 0.0, %v5704
      %v5706 = vpop.f32.mrb[0].mxu0
      %v5707 = vpop.f32.mrb[0].mxu0
      %v5708 = vadd.f32 0.0, %v5707
      %v5709 = vpop.f32.mrb[0].mxu0
      %5710 = vmatprep.mubr.bf16.mxu0 0
      %5711 = vmatmul.mubr.bf16.gmra.mrb[0].mxu0 %v5556
      %v5712 = vpop.f32.mrb[0].mxu0
      %v5713 = vadd.f32 0.0, %v5712
      %v5714 = vpop.f32.mrb[0].mxu0
      %v5715 = vpop.f32.mrb[0].mxu0
      %v5716 = vadd.f32 0.0, %v5715
      %v5717 = vpop.f32.mrb[0].mxu0
      %5718 = vmatprep.mubr.bf16.mxu0 0
      %5719 = vmatmul.mubr.bf16.gmra.mrb[0].mxu0 %v5557
      %v5720 = vpop.f32.mrb[0].mxu0
      %v5721 = vadd.f32 0.0, %v5720
      %v5722 = vpop.f32.mrb[0].mxu0
      %v5723 = vpop.f32.mrb[0].mxu0
      %v5724 = vadd.f32 0.0, %v5723
      %v5725 = vpop.f32.mrb[0].mxu0
      %5726 = vmatprep.mubr.bf16.mxu0 0
      %5727 = vmatmul.mubr.bf16.gmra.mrb[0].mxu0 %v5558
      %v5728 = vpop.f32.mrb[0].mxu0
      %v5729 = vadd.f32 0.0, %v5728
      %v5730 = vpop.f32.mrb[0].mxu0
      %v5731 = vpop.f32.mrb[0].mxu0
      %v5732 = vadd.f32 0.0, %v5731
      %v5733 = vpop.f32.mrb[0].mxu0
      %5734 = vmatprep.mubr.bf16.mxu0 0
      %5735 = vmatmul.mubr.bf16.gmra.mrb[0].mxu0 %v5559
      %v5736 = vpop.f32.mrb[0].mxu0
      %v5737 = vadd.f32 0.0, %v5736
      %v5738 = vpop.f32.mrb[0].mxu0
      %v5739 = vpop.f32.mrb[0].mxu0
      %v5740 = vadd.f32 0.0, %v5739
      %v5741 = vpop.f32.mrb[0].mxu0
      %5742 = vmatprep.mubr.bf16.mxu0 0
      %5743 = vmatmul.mubr.bf16.gmra.mrb[0].mxu0 %v5560
      %v5744 = vpop.f32.mrb[0].mxu0
      %v5745 = vadd.f32 0.0, %v5744
      %v5746 = vpop.f32.mrb[0].mxu0
      %v5747 = vpop.f32.mrb[0].mxu0
      %v5748 = vadd.f32 0.0, %v5747
      %v5749 = vpop.f32.mrb[0].mxu0
      %5750 = vmatprep.mubr.bf16.mxu0 0
      %5751 = vmatmul.mubr.bf16.gmra.mrb[0].mxu0 %v5561
      %v5752 = vpop.f32.mrb[0].mxu0
      %v5753 = vadd.f32 0.0, %v5752
      %v5754 = vpop.f32.mrb[0].mxu0
      %v5755 = vpop.f32.mrb[0].mxu0
      %v5756 = vadd.f32 0.0, %v5755
      %v5757 = vpop.f32.mrb[0].mxu0
      %5758 = vmatprep.mubr.bf16.mxu0 0
      %5759 = vmatmul.mubr.bf16.gmra.mrb[0].mxu0 %v5562
      %v5760 = vpop.f32.mrb[0].mxu0
      %v5761 = vadd.f32 0.0, %v5760
      %v5762 = vpop.f32.mrb[0].mxu0
      %v5763 = vpop.f32.mrb[0].mxu0
      %v5764 = vadd.f32 0.0, %v5763
      %v5765 = vpop.f32.mrb[0].mxu0
      %5766 = vmatprep.mubr.bf16.mxu0 0
      %5767 = vmatmul.mubr.bf16.gmra.mrb[0].mxu0 %v5563
      %v5768 = vpop.f32.mrb[0].mxu0
      %v5769 = vadd.f32 0.0, %v5768
      %v5770 = vpop.f32.mrb[0].mxu0
      %v5771 = vpop.f32.mrb[0].mxu0
      %v5772 = vadd.f32 0.0, %v5771
      %v5773 = vpop.f32.mrb[0].mxu0
      %5774 = vmatprep.mubr.bf16.mxu0 0
      %5775 = vmatmul.mubr.bf16.gmra.mrb[0].mxu0 %v5564
      %v5776 = vpop.f32.mrb[0].mxu0
      %v5777 = vadd.f32 0.0, %v5776
      %v5778 = vpop.f32.mrb[0].mxu0
      %v5779 = vpop.f32.mrb[0].mxu0
      %v5780 = vadd.f32 0.0, %v5779
      %v5781 = vpop.f32.mrb[0].mxu0
      %5782 = vmatprep.mubr.bf16.mxu0 0
      %5783 = vmatmul.mubr.bf16.gmra.mrb[0].mxu0 %v5565
      %v5784 = vpop.f32.mrb[0].mxu0
      %v5785 = vadd.f32 0.0, %v5784
      %v5786 = vpop.f32.mrb[0].mxu0
      %v5787 = vpop.f32.mrb[0].mxu0
      %v5788 = vadd.f32 0.0, %v5787
      %v5789 = vpop.f32.mrb[0].mxu0
      %5790 = vdwg.mxu0
      %v5791 = vadd.f32 %v5294, %v5665
      %v5792 = vadd.f32 %v5295, %v5668
      %v5793 = vadd.f32 %v5296, %v5673
      %v5794 = vadd.f32 %v5297, %v5676
      %v5795 = vadd.f32 %v5298, %v5681
      %v5796 = vadd.f32 %v5299, %v5684
      %v5797 = vadd.f32 %v5300, %v5689
      %v5798 = vadd.f32 %v5301, %v5692
      %v5799 = vadd.f32 %v5302, %v5697
      %v5800 = vadd.f32 %v5303, %v5700
      %v5801 = vadd.f32 %v5304, %v5705
      %v5802 = vadd.f32 %v5305, %v5708
      %v5803 = vadd.f32 %v5306, %v5713
      %v5804 = vadd.f32 %v5307, %v5716
      %v5805 = vadd.f32 %v5308, %v5721
      %v5806 = vadd.f32 %v5309, %v5724
      %v5807 = vadd.f32 %v5310, %v5729
      %v5808 = vadd.f32 %v5311, %v5732
      %v5809 = vadd.f32 %v5312, %v5737
      %v5810 = vadd.f32 %v5313, %v5740
      %v5811 = vadd.f32 %v5314, %v5745
      %v5812 = vadd.f32 %v5315, %v5748
      %v5813 = vadd.f32 %v5316, %v5753
      %v5814 = vadd.f32 %v5317, %v5756
      %v5815 = vadd.f32 %v5318, %v5761
      %v5816 = vadd.f32 %v5319, %v5764
      %v5817 = vadd.f32 %v5320, %v5769
      %v5818 = vadd.f32 %v5321, %v5772
      %v5819 = vadd.f32 %v5322, %v5777
      %v5820 = vadd.f32 %v5323, %v5780
      %v5821 = vadd.f32 %v5324, %v5785
      %v5822 = vadd.f32 %v5325, %v5788
      %5823 = vst [vmem:[%s233] sm:$0xff] %v5791
      %5824 = vst [vmem:[%s233 + $0x8] sm:$0xff] %v5792
      %5825 = vst [vmem:[%s233 + $0x10] sm:$0xff] %v5793
      %5826 = vst [vmem:[%s233 + $0x18] sm:$0xff] %v5794
      %5827 = vst [vmem:[%s233 + $0x20] sm:$0xff] %v5795
      %5828 = vst [vmem:[%s233 + $0x28] sm:$0xff] %v5796
      %5829 = vst [vmem:[%s233 + $0x30] sm:$0xff] %v5797
      %5830 = vst [vmem:[%s233 + $0x38] sm:$0xff] %v5798
      %5831 = vst [vmem:[%s233 + $0x40] sm:$0xff] %v5799
      %5832 = vst [vmem:[%s233 + $0x48] sm:$0xff] %v5800
      %5833 = vst [vmem:[%s233 + $0x50] sm:$0xff] %v5801
      %5834 = vst [vmem:[%s233 + $0x58] sm:$0xff] %v5802
      %5835 = vst [vmem:[%s233 + $0x60] sm:$0xff] %v5803
      %5836 = vst [vmem:[%s233 + $0x68] sm:$0xff] %v5804
      %5837 = vst [vmem:[%s233 + $0x70] sm:$0xff] %v5805
      %5838 = vst [vmem:[%s233 + $0x78] sm:$0xff] %v5806
      %5839 = vst [vmem:[%s233 + $0x80] sm:$0xff] %v5807
      %5840 = vst [vmem:[%s233 + $0x88] sm:$0xff] %v5808
      %5841 = vst [vmem:[%s233 + $0x90] sm:$0xff] %v5809
      %5842 = vst [vmem:[%s233 + $0x98] sm:$0xff] %v5810
      %5843 = vst [vmem:[%s233 + $0xa0] sm:$0xff] %v5811
      %5844 = vst [vmem:[%s233 + $0xa8] sm:$0xff] %v5812
      %5845 = vst [vmem:[%s233 + $0xb0] sm:$0xff] %v5813
      %5846 = vst [vmem:[%s233 + $0xb8] sm:$0xff] %v5814
      %5847 = vst [vmem:[%s233 + $0xc0] sm:$0xff] %v5815
      %5848 = vst [vmem:[%s233 + $0xc8] sm:$0xff] %v5816
      %5849 = vst [vmem:[%s233 + $0xd0] sm:$0xff] %v5817
      %5850 = vst [vmem:[%s233 + $0xd8] sm:$0xff] %v5818
      %5851 = vst [vmem:[%s233 + $0xe0] sm:$0xff] %v5819
      %5852 = vst [vmem:[%s233 + $0xe8] sm:$0xff] %v5820
      %5853 = vst [vmem:[%s233 + $0xf0] sm:$0xff] %v5821
      %5854 = vst [vmem:[%s233 + $0xf8] sm:$0xff] %v5822
      %v5855 = vadd.f32 %v5791, %v5792
      %v5856 = vadd.f32 %v5855, %v5793
      %v5857 = vadd.f32 %v5856, %v5794
      %v5858 = vadd.f32 %v5857, %v5795
      %v5859 = vadd.f32 %v5858, %v5796
      %v5860 = vadd.f32 %v5859, %v5797
      %v5861 = vadd.f32 %v5860, %v5798
      %v5862 = vadd.f32 %v5861, %v5799
      %v5863 = vadd.f32 %v5862, %v5800
      %v5864 = vadd.f32 %v5863, %v5801
      %v5865 = vadd.f32 %v5864, %v5802
      %v5866 = vadd.f32 %v5865, %v5803
      %v5867 = vadd.f32 %v5866, %v5804
      %v5868 = vadd.f32 %v5867, %v5805
      %v5869 = vadd.f32 %v5868, %v5806
      %v5870 = vadd.f32 %v5869, %v5807
      %v5871 = vadd.f32 %v5870, %v5808
      %v5872 = vadd.f32 %v5871, %v5809
      %v5873 = vadd.f32 %v5872, %v5810
      %v5874 = vadd.f32 %v5873, %v5811
      %v5875 = vadd.f32 %v5874, %v5812
      %v5876 = vadd.f32 %v5875, %v5813
      %v5877 = vadd.f32 %v5876, %v5814
      %v5878 = vadd.f32 %v5877, %v5815
      %v5879 = vadd.f32 %v5878, %v5816
      %v5880 = vadd.f32 %v5879, %v5817
      %v5881 = vadd.f32 %v5880, %v5818
      %v5882 = vadd.f32 %v5881, %v5819
      %v5883 = vadd.f32 %v5882, %v5820
      %v5884 = vadd.f32 %v5883, %v5821
      %v5885 = vadd.f32 %v5884, %v5822
      %v5886 = vrot.slane %v5885, 4
      %v5887 = vadd.f32 %v5885, %v5886
      %v5888 = vrot.slane %v5887, 2
      %v5889 = vadd.f32 %v5887, %v5888
      %v5890 = vrot.slane %v5889, 1
      %v5891 = vadd.f32 %v5889, %v5890
      %v5892 = vmul.f32 %v5791, %v5791
      %v5893 = vmul.f32 %v5792, %v5792
      %v5894 = vmul.f32 %v5793, %v5793
      %v5895 = vmul.f32 %v5794, %v5794
      %v5896 = vmul.f32 %v5795, %v5795
      %v5897 = vmul.f32 %v5796, %v5796
      %v5898 = vmul.f32 %v5797, %v5797
      %v5899 = vmul.f32 %v5798, %v5798
      %v5900 = vmul.f32 %v5799, %v5799
      %v5901 = vmul.f32 %v5800, %v5800
      %v5902 = vmul.f32 %v5801, %v5801
      %v5903 = vmul.f32 %v5802, %v5802
      %v5904 = vmul.f32 %v5803, %v5803
      %v5905 = vmul.f32 %v5804, %v5804
      %v5906 = vmul.f32 %v5805, %v5805
      %v5907 = vmul.f32 %v5806, %v5806
      %v5908 = vmul.f32 %v5807, %v5807
      %v5909 = vmul.f32 %v5808, %v5808
      %v5910 = vmul.f32 %v5809, %v5809
      %v5911 = vmul.f32 %v5810, %v5810
      %v5912 = vmul.f32 %v5811, %v5811
      %v5913 = vmul.f32 %v5812, %v5812
      %v5914 = vmul.f32 %v5813, %v5813
      %v5915 = vmul.f32 %v5814, %v5814
      %v5916 = vmul.f32 %v5815, %v5815
      %v5917 = vmul.f32 %v5816, %v5816
      %v5918 = vmul.f32 %v5817, %v5817
      %v5919 = vmul.f32 %v5818, %v5818
      %v5920 = vmul.f32 %v5819, %v5819
      %v5921 = vmul.f32 %v5820, %v5820
      %v5922 = vmul.f32 %v5821, %v5821
      %v5923 = vmul.f32 %v5822, %v5822
      %v5924 = vadd.f32 %v5892, %v5893
      %v5925 = vadd.f32 %v5924, %v5894
      %v5926 = vadd.f32 %v5925, %v5895
      %v5927 = vadd.f32 %v5926, %v5896
      %v5928 = vadd.f32 %v5927, %v5897
      %v5929 = vadd.f32 %v5928, %v5898
      %v5930 = vadd.f32 %v5929, %v5899
      %v5931 = vadd.f32 %v5930, %v5900
      %v5932 = vadd.f32 %v5931, %v5901
      %v5933 = vadd.f32 %v5932, %v5902
      %v5934 = vadd.f32 %v5933, %v5903
      %v5935 = vadd.f32 %v5934, %v5904
      %v5936 = vadd.f32 %v5935, %v5905
      %v5937 = vadd.f32 %v5936, %v5906
      %v5938 = vadd.f32 %v5937, %v5907
      %v5939 = vadd.f32 %v5938, %v5908
      %v5940 = vadd.f32 %v5939, %v5909
      %v5941 = vadd.f32 %v5940, %v5910
      %v5942 = vadd.f32 %v5941, %v5911
      %v5943 = vadd.f32 %v5942, %v5912
      %v5944 = vadd.f32 %v5943, %v5913
      %v5945 = vadd.f32 %v5944, %v5914
      %v5946 = vadd.f32 %v5945, %v5915
      %v5947 = vadd.f32 %v5946, %v5916
      %v5948 = vadd.f32 %v5947, %v5917
      %v5949 = vadd.f32 %v5948, %v5918
      %v5950 = vadd.f32 %v5949, %v5919
      %v5951 = vadd.f32 %v5950, %v5920
      %v5952 = vadd.f32 %v5951, %v5921
      %v5953 = vadd.f32 %v5952, %v5922
      %v5954 = vadd.f32 %v5953, %v5923
      %v5955 = vrot.slane %v5954, 4
      %v5956 = vadd.f32 %v5954, %v5955
      %v5957 = vrot.slane %v5956, 2
      %v5958 = vadd.f32 %v5956, %v5957
      %v5959 = vrot.slane %v5958, 1
      %v5960 = vadd.f32 %v5958, %v5959
      %vm5961 = vcmask 1040384
      %v5962 = vsel %vm5961, %v5891, %v5960
      %5963 = vst [vmem:[%s238] sm:$0x3] %v5962
      %s5964 = smul.u32 32, %s17
      %p5965 = scmp.lt.s32.totalorder %s5964, 63
      %s5966 = scalar_select %p5965, %s5964, 63
      %s5967 = smul.addr %s5966, 8
      %s5968 = scalar_lea.vmem %s4, %s5967
      %p5969 = scmp.lt.s32.totalorder %s17, 1
      %s5970 = scalar_select %p5969, %s17, 1
      %s5971 = smul.addr %s5970, 2
      %s5972 = scalar_lea.vmem %s5, %s5971
      // Predicated region
      $region37: #{basic_block_forward.4} parent=35 // pred_check
        %p5973 = pneg %p124
      $region38: #{basic_block_forward.4} parent=35 // pred_check_branch
        %5975 = sbr.rel (%p5973) target = $region40
      $region39: #{basic_block_forward.4} parent=35 // pred_region
        %s5976 = smul.u32 32, %s17
      $region40: #{basic_block_forward.4} parent=35 // pred_fallthru
        _
      // Predicated region
      $region41: #{basic_block_forward.4} parent=35 // pred_check
        %p5977 = pneg %p150
      $region42: #{basic_block_forward.4} parent=35 // pred_check_branch
        %5979 = sbr.rel (%p5977) target = $region44
      $region43: #{basic_block_forward.4} parent=35 // pred_region
        _
      $region44: #{basic_block_forward.4} parent=35 // pred_fallthru
        _
    $region36: #{basic_block_forward.4} parent=5 // pred_fallthru
      _
    %p5980 = scmp.le.s32.totalorder 2, %s12
    // Predicated region
    $region45: #{basic_block_forward.4} parent=5 // pred_check
      %p5981 = pneg %p5980
    $region46: #{basic_block_forward.4} parent=5 // pred_check_branch
      %5983 = sbr.rel (%p5981) target = $region48
    $region47: #{basic_block_forward.4} parent=5 // pred_region
      %s5984 = ssub.s32 %s12, 2
      // Predicated region
      $region49: #{basic_block_forward.4} parent=47 // pred_check
        %p5985 = pneg %p130
      $region50: #{basic_block_forward.4} parent=47 // pred_check_branch
        %5987 = sbr.rel (%p5985) target = $region52
      $region51: #{basic_block_forward.4} parent=47 // pred_region
        %s5988 = smul.u32 32, %s18
        %p5989 = scmp.lt.s32.totalorder %s5988, 63
        %s5990 = scalar_select %p5989, %s5988, 63
        %s5991 = smul.addr %s5990, 8
        %s5992 = scalar_lea.vmem %s4, %s5991
      $region52: #{basic_block_forward.4} parent=47 // pred_fallthru
        _
      // Predicated region
      $region53: #{basic_block_forward.4} parent=47 // pred_check
        %p5993 = pneg %p156
      $region54: #{basic_block_forward.4} parent=47 // pred_check_branch
        %5995 = sbr.rel (%p5993) target = $region56
      $region55: #{basic_block_forward.4} parent=47 // pred_region
        %p5996 = scmp.lt.s32.totalorder %s18, 1
        %s5997 = scalar_select %p5996, %s18, 1
        %s5998 = smul.addr %s5997, 2
        %s5999 = scalar_lea.vmem %s5, %s5998
      $region56: #{basic_block_forward.4} parent=47 // pred_fallthru
        _
    $region48: #{basic_block_forward.4} parent=5 // pred_fallthru
      _
  $region6: #{basic_block_forward.4} parent=0 // loop_footer
    %s16 = sadd.s32 1, %s12
  $region7: #{basic_block_forward.4} parent=0 // loop_footer_branch
    %11 = sbr.rel target = $region3
  $region8: #{basic_block_forward.4} parent=0 // loop_exit
    _

</llo_original>
